<compile_context>
chip_gen: v7x
topology: tpu7x:2x2x1
jax: 0.10.0
libtpu: 0.0.40
codegen_flags: <defaults>
</compile_context>

<pallas_src>
import functools

import jax
import jax.numpy as jnp
import numpy as np
from jax import lax
from jax.experimental import pallas as pl
from jax.experimental.pallas import tpu as pltpu


# --------------------------------------------------------------------------- #
# Kernel
# --------------------------------------------------------------------------- #
def _odelstm_kernel(gx_ref, dt_ref,
                    whh_ref, w1_ref, b1_ref, w2_ref, b2_ref,
                    h_seq_ref,
                    h_sc, c_sc,
                    *, hidden_pad, block_t, matmul_dtype):
    Hp = hidden_pad

    # New batch block -> reset recurrent state.  (Relies on the time axis being
    # the innermost "arbitrary" grid axis — see NOTE in odelstm_forward.)
    @pl.when(pl.program_id(1) == 0)
    def _():
        h_sc[...] = jnp.zeros_like(h_sc)
        c_sc[...] = jnp.zeros_like(c_sc)

    # Weights are already in matmul_dtype (cast in the wrapper) — just load.
    whh = whh_ref[...]                              # (Hp, 4Hp)
    w1 = w1_ref[...]                                # (Hp, Hp)
    w2 = w2_ref[...]                                # (Hp, Hp)
    b1 = b1_ref[...]                                # (1, Hp) f32
    b2 = b2_ref[...]                                # (1, Hp) f32

    def f_node(y):
        hid = jnp.tanh(
            jnp.dot(y.astype(matmul_dtype), w1,
                    preferred_element_type=jnp.float32) + b1)
        return (jnp.dot(hid.astype(matmul_dtype), w2,
                        preferred_element_type=jnp.float32) + b2)

    def step(t, carry):
        h, c = carry

        # ---- torch.nn.LSTMCell (gate order i, f, g, o); the x-projection and
        # both biases were pre-folded into gx_ref outside the kernel. ----
        gates = gx_ref[t].astype(jnp.float32) + jnp.dot(
            h.astype(matmul_dtype), whh, preferred_element_type=jnp.float32)
        i_g = jax.nn.sigmoid(gates[:, 0 * Hp:1 * Hp])
        f_g = jax.nn.sigmoid(gates[:, 1 * Hp:2 * Hp])
        g_g = jnp.tanh(gates[:, 2 * Hp:3 * Hp])
        o_g = jax.nn.sigmoid(gates[:, 3 * Hp:4 * Hp])
        c_new = f_g * c + i_g * g_g
        y = o_g * jnp.tanh(c_new)

        # ---- solve_fixed: 3 RK4 steps with dt = ts/3 (dt precomputed in the
        # wrapper).  Hoist the (Bb,1)->(Bb,Hp) broadcasts: one lane splat, then
        # plain VPU scalings reused by all ~12 uses below (JAX does not CSE
        # broadcast_in_dim). ----
        dt_full = jnp.broadcast_to(dt_ref[t], y.shape)   # (Bb, Hp)
        half_dt = dt_full * 0.5
        dt_sixth = dt_full * (1.0 / 6.0)
        dt_third = dt_sixth * 2.0

        # fori_loop (not a static unroll) bounds live ranges; incremental
        # accumulation keeps only {y, acc, k} live instead of k1..k4.
        def rk4(_, yy):
            k = f_node(yy)                       # k1
            acc = yy + dt_sixth * k
            k = f_node(yy + half_dt * k)         # k2
            acc = acc + dt_third * k
            k = f_node(yy + half_dt * k)         # k3
            acc = acc + dt_third * k
            k = f_node(yy + dt_full * k)         # k4
            return acc + dt_sixth * k

        y = lax.fori_loop(0, 3, rk4, y)

        h_seq_ref[t] = y.astype(h_seq_ref.dtype)
        return y, c_new

    h, c = lax.fori_loop(0, block_t, step, (h_sc[...], c_sc[...]))
    h_sc[...] = h
    c_sc[...] = c


# --------------------------------------------------------------------------- #
# Wrapper
# --------------------------------------------------------------------------- #
def _round_up(v, m):
    return (v + m - 1) // m * m


def _pad_axis(a, axis, new_size):
    if a.shape[axis] == new_size:
        return a
    pad = [(0, 0)] * a.ndim
    pad[axis] = (0, new_size - a.shape[axis])
    return jnp.pad(a, pad)


def _pad_gate_axis(a, H, Hp):
    """(4H, ...) -> (4Hp, ...), zero-padding each of the i/f/g/o blocks to Hp."""
    if H == Hp:
        return a
    a4 = a.reshape(4, H, *a.shape[1:])
    a4 = _pad_axis(a4, 1, Hp)
    return a4.reshape(4 * Hp, *a.shape[1:])


def odelstm_forward(x, timespans, params, *, block_t=None, block_b=None,
                    matmul_dtype=None, stream_dtype=jnp.float32,
                    single_buffer_weights=True, vmem_limit_bytes=None):
    """x: (B, T, I), timespans: (B, T).  Returns (B, T, O) like the PyTorch
    module with return_sequences=True, mask=None."""
    B, T, _ = x.shape
    H = params["w_hh"].shape[1]

    # ---- pad hidden dim (and the 4H gate axis) to a multiple of 128 ----
    Hp = _round_up(H, 128)

    if matmul_dtype is None:
        # bf16 MXU operands only pay off once the MXU (not the EUP) binds.
        matmul_dtype = jnp.bfloat16 if H >= 256 else jnp.float32

    # ---- batch blocking: MXU-filling tiles; n_b >= 2 when possible so the
    # "parallel" axis can shard across v7x's two TensorCores. ----
    if block_b is None:
        if B >= 256 and B % 128 == 0:
            Bb = 128
        elif B >= 16 and B % 16 == 0:
            Bb = B // 2
        else:
            Bb = B
    else:
        Bb = block_b
    assert B % Bb == 0, "block_b must divide B"
    n_b = B // Bb

    # ---- explicit VMEM limit + budget-derived time tile ----
    if vmem_limit_bytes is None:
        try:
            phys = pltpu.get_tpu_info().vmem_capacity_bytes
        except Exception:
            phys = 64 * 1024 * 1024            # v7x-safe fallback
        vmem_limit_bytes = min(int(phys * 0.85), 112 * 1024 * 1024)

    sb = jnp.dtype(stream_dtype).itemsize
    wb = jnp.dtype(matmul_dtype).itemsize
    n_wbuf = 1 if single_buffer_weights else 2
    weights_bytes = n_wbuf * (6 * Hp * Hp * wb + 2 * 8 * Hp * 4)
    scratch_bytes = 2 * Bb * Hp * 4
    # double-buffered per-time-row bytes: gates_x + h_seq + dt (lane-padded).
    per_t_bytes = 2 * (Bb * 4 * Hp * sb + Bb * Hp * sb
                       + _round_up(Bb, 8) * 128 * 4)
    if block_t is None:
        budget = int(vmem_limit_bytes * 0.9) - weights_bytes - scratch_bytes
        Tb = int(max(1, min(T, budget // max(per_t_bytes, 1), 512)))
    else:
        Tb = max(1, min(block_t, T))
    n_tb = (T + Tb - 1) // Tb
    T_pad = n_tb * Tb

    # ---- zero-padded parameters (padded lanes provably stay zero) ----
    w_ih_p = _pad_gate_axis(params["w_ih"], H, Hp)                      # (4Hp, I)
    b_comb_p = _pad_gate_axis(params["b_ih"] + params["b_hh"], H, Hp)   # (4Hp,)
    w_hh_p = _pad_axis(_pad_gate_axis(params["w_hh"], H, Hp), 1, Hp)    # (4Hp, Hp)
    w1_p = _pad_axis(_pad_axis(params["w1"], 0, Hp), 1, Hp)
    w2_p = _pad_axis(_pad_axis(params["w2"], 0, Hp), 1, Hp)
    b1_p = _pad_axis(params["b1"], 0, Hp)
    b2_p = _pad_axis(params["b2"], 0, Hp)

    # ---- one big XLA matmul for the x-projection of every step; streamed to
    # the kernel in stream_dtype (bf16 halves the only big HBM streams). ----
    gates_x = (jnp.einsum("bti,gi->tbg", x, w_ih_p)
               + b_comb_p).astype(stream_dtype)                         # (T,B,4Hp)
    # dt = ts/3 precomputed once.  Trailing-1 VMEM padding of this stream is
    # ~128/(4*Hp) of the gates_x block — noise for Hp >= 128.
    # TODO(synk): fully lane-dense dt layout ((B,T) + dynamic lane slice).
    dt_tm = (jnp.transpose(timespans, (1, 0)) * (1.0 / 3.0))[:, :, None]  # (T,B,1)

    if T_pad != T:
        # Trailing pad runs zero-gate LSTM + RK4 on junk state; harmless since
        # state resets at the next batch block and we slice [:T] below.
        # TODO(synk): pl.when-skip fully padded tail steps to save the compute.
        gates_x = jnp.pad(gates_x, ((0, T_pad - T), (0, 0), (0, 0)))
        dt_tm = jnp.pad(dt_tm, ((0, T_pad - T), (0, 0), (0, 0)))

    # Weights pre-cast to matmul_dtype in the wrapper (no per-grid-step cast,
    # half the weight DMA); biases stay f32 (added to f32 accumulators).
    whh_T = jnp.transpose(w_hh_p).astype(matmul_dtype)      # (Hp, 4Hp)
    w1_T = jnp.transpose(w1_p).astype(matmul_dtype)         # (Hp, Hp)
    w2_T = jnp.transpose(w2_p).astype(matmul_dtype)         # (Hp, Hp)
    b1_r = b1_p[None, :]                                    # (1, Hp)
    b2_r = b2_p[None, :]                                    # (1, Hp)

    pipeline_mode = None
    if single_buffer_weights and hasattr(pl, "Buffered"):
        pipeline_mode = pl.Buffered(1)    # constant weights: 1 buffer, 1 DMA

    def const_spec(arr):
        idx = lambda b, t: (0,) * arr.ndim
        if pipeline_mode is not None:
            return pl.BlockSpec(arr.shape, idx, pipeline_mode=pipeline_mode)
        return pl.BlockSpec(arr.shape, idx)

    kernel = functools.partial(_odelstm_kernel, hidden_pad=Hp, block_t=Tb,
                               matmul_dtype=matmul_dtype)

    # NOTE: the VMEM-scratch h/c carry requires the time axis to be the
    # innermost ("arbitrary") grid axis and megacore sharding to only split the
    # leading "parallel" batch axis.  Keep the grid ordered (batch, time).
    h_seq = pl.pallas_call(
        kernel,
        out_shape=jax.ShapeDtypeStruct((T_pad, B, Hp), stream_dtype),
        grid_spec=pltpu.PrefetchScalarGridSpec(
            num_scalar_prefetch=0,
            grid=(n_b, n_tb),
            in_specs=[
                pl.BlockSpec((Tb, Bb, 4 * Hp), lambda b, t: (t, b, 0)),  # gates_x
                pl.BlockSpec((Tb, Bb, 1), lambda b, t: (t, b, 0)),       # dt
                const_spec(whh_T), const_spec(w1_T), const_spec(b1_r),
                const_spec(w2_T), const_spec(b2_r),
            ],
            out_specs=pl.BlockSpec((Tb, Bb, Hp), lambda b, t: (t, b, 0)),
            scratch_shapes=[
                pltpu.VMEM((Bb, Hp), jnp.float32),   # h (carried across time blocks)
                pltpu.VMEM((Bb, Hp), jnp.float32),   # c
            ],
        ),
        compiler_params=pltpu.CompilerParams(
            dimension_semantics=("parallel", "arbitrary"),
            vmem_limit_bytes=int(vmem_limit_bytes)),
    )(gates_x, dt_tm, whh_T, w1_T, b1_r, w2_T, b2_r)

    # fc hoisted out of the recurrence: one lane-dense (T*B,H)@(H,O) matmul.
    h_real = h_seq[:T, :, :H].astype(jnp.float32)
    out = jnp.einsum("tbh,oh->bto", h_real, params["w_fc"]) + params["b_fc"]
    return out


# --------------------------------------------------------------------------- #
# Pure-JAX reference (mirrors the PyTorch module) + params
# --------------------------------------------------------------------------- #
def odelstm_reference(x, timespans, params):
    B, T, _ = x.shape
    H = params["w_hh"].shape[1]

    def f_node(y):
        hid = jnp.tanh(y @ params["w1"].T + params["b1"])
        return hid @ params["w2"].T + params["b2"]

    def rk4(y, dt):
        k1 = f_node(y)
        k2 = f_node(y + k1 * dt * 0.5)
        k3 = f_node(y + k2 * dt * 0.5)
        k4 = f_node(y + k3 * dt)
        return y + dt * (k1 + 2 * k2 + 2 * k3 + k4) / 6.0

    h = jnp.zeros((B, H), jnp.float32)
    c = jnp.zeros((B, H), jnp.float32)
    outs = []
    for t in range(T):
        xt = x[:, t]
        ts = timespans[:, t].reshape(-1, 1)
        gates = (xt @ params["w_ih"].T + params["b_ih"]
                 + h @ params["w_hh"].T + params["b_hh"])
        i_g = jax.nn.sigmoid(gates[:, 0 * H:1 * H])
        f_g = jax.nn.sigmoid(gates[:, 1 * H:2 * H])
        g_g = jnp.tanh(gates[:, 2 * H:3 * H])
        o_g = jax.nn.sigmoid(gates[:, 3 * H:4 * H])
        c = f_g * c + i_g * g_g
        h = o_g * jnp.tanh(c)
        dt = ts * (1.0 / 3.0)
        for _ in range(3):
            h = rk4(h, dt)
        outs.append(h @ params["w_fc"].T + params["b_fc"])
    return jnp.stack(outs, axis=1)


def init_params(key, in_features, hidden_size, out_feature):
    ks = jax.random.split(key, 10)
    H, I, O = hidden_size, in_features, out_feature
    s = 1.0 / np.sqrt(H)
    u = lambda k, shp, sc: jax.random.uniform(k, shp, jnp.float32, -sc, sc)
    return {
        "w_ih": u(ks[0], (4 * H, I), s),
        "w_hh": u(ks[1], (4 * H, H), s),
        "b_ih": u(ks[2], (4 * H,), s),
        "b_hh": u(ks[3], (4 * H,), s),
        "w1": u(ks[4], (H, H), s),
        "b1": u(ks[5], (H,), s),
        "w2": u(ks[6], (H, H), s),
        "b2": u(ks[7], (H,), s),
        "w_fc": u(ks[8], (O, H), s),
        "b_fc": u(ks[9], (O,), s),
    }


if __name__ == "__main__":
    # Use the exact f32 matmul algorithm everywhere (reference, wrapper einsums
    # and in-kernel dots) so the parity check below is tight and stable.
    jax.config.update("jax_default_matmul_precision", "highest")

    B, T, I, H, O = 2, 8, 4, 32, 8
    key = jax.random.PRNGKey(0)
    k_x, k_ts, k_p = jax.random.split(key, 3)

    x = jax.random.normal(k_x, (B, T, I), jnp.float32)
    timespans = jax.random.uniform(k_ts, (B, T), jnp.float32, 0.1, 1.0)
    params = init_params(k_p, I, H, O)

    ref = jax.block_until_ready(odelstm_reference(x, timespans, params))

    # f32 streams + f32 matmuls; block_t=4 -> grid (1, 2), exercising the
    # cross-time-block h/c carry held in VMEM scratch.
    out = jax.block_until_ready(
        odelstm_forward(x, timespans, params, block_t=4))
    assert out.shape == (B, T, O), out.shape
    np.testing.assert_allclose(np.asarray(out), np.asarray(ref),
                               rtol=1e-2, atol=1e-2)

    # Production-style streaming config: bf16 gates_x/h_seq HBM streams and
    # auto block_t from the VMEM budget (recurrent state stays f32 in-kernel;
    # matmul_dtype auto-selects f32 here since H < 256).
    out_bf16 = jax.block_until_ready(
        odelstm_forward(x, timespans, params, stream_dtype=jnp.bfloat16))
    np.testing.assert_allclose(np.asarray(out_bf16), np.asarray(ref),
                               rtol=5e-2, atol=5e-2)

    print("KERNEL_OK")
</pallas_src>

<mosaic_0001>
module attributes {stable_mosaic.version = 11 : i64} {
  func.func @_odelstm_kernel(%arg0: i32, %arg1: i32, %arg2: memref<4x2x512xf32, #tpu.memory_space<vmem>>, %arg3: memref<4x2x1xf32, #tpu.memory_space<vmem>>, %arg4: memref<128x512xf32, #tpu.memory_space<vmem>>, %arg5: memref<128x128xf32, #tpu.memory_space<vmem>>, %arg6: memref<1x128xf32, #tpu.memory_space<vmem>>, %arg7: memref<128x128xf32, #tpu.memory_space<vmem>>, %arg8: memref<1x128xf32, #tpu.memory_space<vmem>>, %arg9: memref<4x2x128xf32, #tpu.memory_space<vmem>>, %arg10: memref<2x128xf32, #tpu.memory_space<vmem>>, %arg11: memref<2x128xf32, #tpu.memory_space<vmem>>) attributes {dimension_semantics = [#tpu.dimension_semantics<parallel>, #tpu.dimension_semantics<arbitrary>], iteration_bounds = array<i64: 1, 2>, scalar_prefetch = 0 : i64, scratch_operands = 2 : i64, tpu.core_type = #tpu.core_type<tc>, window_params = [{transform_indices = @transform_0, window_bounds = array<i64: 4, 2, 512>}, {transform_indices = @transform_1, window_bounds = array<i64: 4, 2, 1>}, {pipeline_mode = #tpu.pipeline_mode<synchronous>, transform_indices = @transform_2, window_bounds = array<i64: 128, 512>}, {pipeline_mode = #tpu.pipeline_mode<synchronous>, transform_indices = @transform_3, window_bounds = array<i64: 128, 128>}, {pipeline_mode = #tpu.pipeline_mode<synchronous>, transform_indices = @transform_4, window_bounds = array<i64: 1, 128>}, {pipeline_mode = #tpu.pipeline_mode<synchronous>, transform_indices = @transform_5, window_bounds = array<i64: 128, 128>}, {pipeline_mode = #tpu.pipeline_mode<synchronous>, transform_indices = @transform_6, window_bounds = array<i64: 1, 128>}, {transform_indices = @transform_7, window_bounds = array<i64: 4, 2, 128>}]} {
    %c0_i32 = arith.constant 0 : i32
    %0 = arith.cmpi eq, %arg1, %c0_i32 : i32
    %1 = arith.extui %0 : i1 to i32
    %c0_i32_0 = arith.constant 0 : i32
    %2 = arith.cmpi ne, %1, %c0_i32_0 : i32
    scf.if %2 {
      %cst = arith.constant 0.000000e+00 : f32
      %14 = vector.broadcast %cst : f32 to vector<2x128xf32>
      %c0_20 = arith.constant 0 : index
      %c0_21 = arith.constant 0 : index
      %15 = vector.load %arg10[%c0_20, %c0_21] : memref<2x128xf32, #tpu.memory_space<vmem>>, vector<2x128xf32>
      tpu.vector_store %arg10[%c0_20, %c0_21], %14 {strides = array<i32>} : memref<2x128xf32, #tpu.memory_space<vmem>>, vector<2x128xf32>,
      %cst_22 = arith.constant 0.000000e+00 : f32
      %16 = vector.broadcast %cst_22 : f32 to vector<2x128xf32>
      %c0_23 = arith.constant 0 : index
      %c0_24 = arith.constant 0 : index
      %17 = vector.load %arg11[%c0_23, %c0_24] : memref<2x128xf32, #tpu.memory_space<vmem>>, vector<2x128xf32>
      tpu.vector_store %arg11[%c0_23, %c0_24], %16 {strides = array<i32>} : memref<2x128xf32, #tpu.memory_space<vmem>>, vector<2x128xf32>,
    } else {
    }
    %c0 = arith.constant 0 : index
    %c0_1 = arith.constant 0 : index
    %3 = vector.load %arg4[%c0, %c0_1] : memref<128x512xf32, #tpu.memory_space<vmem>>, vector<128x512xf32>
    %c0_2 = arith.constant 0 : index
    %c0_3 = arith.constant 0 : index
    %4 = vector.load %arg5[%c0_2, %c0_3] : memref<128x128xf32, #tpu.memory_space<vmem>>, vector<128x128xf32>
    %c0_4 = arith.constant 0 : index
    %c0_5 = arith.constant 0 : index
    %5 = vector.load %arg7[%c0_4, %c0_5] : memref<128x128xf32, #tpu.memory_space<vmem>>, vector<128x128xf32>
    %c0_6 = arith.constant 0 : index
    %c0_7 = arith.constant 0 : index
    %6 = vector.load %arg6[%c0_6, %c0_7] : memref<1x128xf32, #tpu.memory_space<vmem>>, vector<1x128xf32>
    %c0_8 = arith.constant 0 : index
    %c0_9 = arith.constant 0 : index
    %7 = vector.load %arg8[%c0_8, %c0_9] : memref<1x128xf32, #tpu.memory_space<vmem>>, vector<1x128xf32>
    %c0_10 = arith.constant 0 : index
    %c0_11 = arith.constant 0 : index
    %8 = vector.load %arg10[%c0_10, %c0_11] : memref<2x128xf32, #tpu.memory_space<vmem>>, vector<2x128xf32>
    %c0_12 = arith.constant 0 : index
    %c0_13 = arith.constant 0 : index
    %9 = vector.load %arg11[%c0_12, %c0_13] : memref<2x128xf32, #tpu.memory_space<vmem>>, vector<2x128xf32>
    %c0_i32_14 = arith.constant 0 : i32
    %c4_i32 = arith.constant 4 : i32
    %10 = arith.addi %c0_i32_14, %c4_i32 : i32
    %c1_i32 = arith.constant 1 : i32
    %11:2 = scf.for %arg12 = %c0_i32_14 to %10 step %c1_i32 iter_args(%arg13 = %8, %arg14 = %9) -> (vector<2x128xf32>, vector<2x128xf32>)  : i32 {
      %14 = arith.index_cast %arg12 : i32 to index
      %c0_20 = arith.constant 0 : index
      %c0_21 = arith.constant 0 : index
      %15 = vector.load %arg2[%14, %c0_20, %c0_21] : memref<4x2x512xf32, #tpu.memory_space<vmem>>, vector<1x2x512xf32>
      %16 = vector.shape_cast %15 : vector<1x2x512xf32> to vector<2x512xf32>
      %cst = arith.constant dense<0.000000e+00> : vector<2x512xf32>
      %17 = tpu.matmul %arg13, %3, %cst {dimension_numbers = #tpu.dot_dimension_numbers<[1], [0], [0], [1], [0, 0, 1, 1], [], []>, precision = #tpu.contract_precision<fp32>} : vector<2x128xf32>, vector<128x512xf32>, vector<2x512xf32> -> vector<2x512xf32>
      %18 = arith.addf %16, %17 : vector<2x512xf32>
      %19 = vector.extract_strided_slice %18 {offsets = [0, 0], sizes = [2, 128], strides = [1, 1]} : vector<2x512xf32> to vector<2x128xf32>
      %20 = arith.negf %19 : vector<2x128xf32>
      %21 = math.exp %20 : vector<2x128xf32>
      %cst_22 = arith.constant 1.000000e+00 : f32
      %22 = vector.broadcast %cst_22 : f32 to vector<2x128xf32>
      %23 = arith.addf %22, %21 : vector<2x128xf32>
      %24 = arith.divf %22, %23 : vector<2x128xf32>
      %25 = vector.extract_strided_slice %18 {offsets = [0, 128], sizes = [2, 128], strides = [1, 1]} : vector<2x512xf32> to vector<2x128xf32>
      %26 = arith.negf %25 : vector<2x128xf32>
      %27 = math.exp %26 : vector<2x128xf32>
      %cst_23 = arith.constant 1.000000e+00 : f32
      %28 = vector.broadcast %cst_23 : f32 to vector<2x128xf32>
      %29 = arith.addf %28, %27 : vector<2x128xf32>
      %30 = arith.divf %28, %29 : vector<2x128xf32>
      %31 = vector.extract_strided_slice %18 {offsets = [0, 256], sizes = [2, 128], strides = [1, 1]} : vector<2x512xf32> to vector<2x128xf32>
      %32 = math.tanh %31 : vector<2x128xf32>
      %33 = vector.extract_strided_slice %18 {offsets = [0, 384], sizes = [2, 128], strides = [1, 1]} : vector<2x512xf32> to vector<2x128xf32>
      %34 = arith.negf %33 : vector<2x128xf32>
      %35 = math.exp %34 : vector<2x128xf32>
      %cst_24 = arith.constant 1.000000e+00 : f32
      %36 = vector.broadcast %cst_24 : f32 to vector<2x128xf32>
      %37 = arith.addf %36, %35 : vector<2x128xf32>
      %38 = arith.divf %36, %37 : vector<2x128xf32>
      %39 = arith.mulf %30, %arg14 : vector<2x128xf32>
      %40 = arith.mulf %24, %32 : vector<2x128xf32>
      %41 = arith.addf %39, %40 : vector<2x128xf32>
      %42 = math.tanh %41 : vector<2x128xf32>
      %43 = arith.mulf %38, %42 : vector<2x128xf32>
      %44 = arith.index_cast %arg12 : i32 to index
      %c0_25 = arith.constant 0 : index
      %c0_26 = arith.constant 0 : index
      %45 = vector.load %arg3[%44, %c0_25, %c0_26] : memref<4x2x1xf32, #tpu.memory_space<vmem>>, vector<1x2x1xf32>
      %46 = vector.shape_cast %45 : vector<1x2x1xf32> to vector<2x1xf32>
      %47 = vector.shape_cast %46 : vector<2x1xf32> to vector<2x1xf32>
      %48 = vector.broadcast %47 : vector<2x1xf32> to vector<2x128xf32>
      %cst_27 = arith.constant 5.000000e-01 : f32
      %49 = vector.broadcast %cst_27 : f32 to vector<2x128xf32>
      %50 = arith.mulf %48, %49 : vector<2x128xf32>
      %cst_28 = arith.constant 0.166666672 : f32
      %51 = vector.broadcast %cst_28 : f32 to vector<2x128xf32>
      %52 = arith.mulf %48, %51 : vector<2x128xf32>
      %cst_29 = arith.constant 2.000000e+00 : f32
      %53 = vector.broadcast %cst_29 : f32 to vector<2x128xf32>
      %54 = arith.mulf %52, %53 : vector<2x128xf32>
      %c0_i32_30 = arith.constant 0 : i32
      %c3_i32 = arith.constant 3 : i32
      %55 = arith.addi %c0_i32_30, %c3_i32 : i32
      %c1_i32_31 = arith.constant 1 : i32
      %56 = scf.for %arg15 = %c0_i32_30 to %55 step %c1_i32_31 iter_args(%arg16 = %43) -> (vector<2x128xf32>)  : i32 {
        %cst_34 = arith.constant dense<0.000000e+00> : vector<2x128xf32>
        %61 = tpu.matmul %arg16, %4, %cst_34 {dimension_numbers = #tpu.dot_dimension_numbers<[1], [0], [0], [1], [0, 0, 1, 1], [], []>, precision = #tpu.contract_precision<fp32>} : vector<2x128xf32>, vector<128x128xf32>, vector<2x128xf32> -> vector<2x128xf32>
        %62 = vector.broadcast %6 : vector<1x128xf32> to vector<2x128xf32>
        %63 = arith.addf %61, %62 : vector<2x128xf32>
        %64 = math.tanh %63 : vector<2x128xf32>
        %cst_35 = arith.constant dense<0.000000e+00> : vector<2x128xf32>
        %65 = tpu.matmul %64, %5, %cst_35 {dimension_numbers = #tpu.dot_dimension_numbers<[1], [0], [0], [1], [0, 0, 1, 1], [], []>, precision = #tpu.contract_precision<fp32>} : vector<2x128xf32>, vector<128x128xf32>, vector<2x128xf32> -> vector<2x128xf32>
        %66 = vector.broadcast %7 : vector<1x128xf32> to vector<2x128xf32>
        %67 = arith.addf %65, %66 : vector<2x128xf32>
        %68 = arith.mulf %52, %67 : vector<2x128xf32>
        %69 = arith.addf %arg16, %68 : vector<2x128xf32>
        %70 = arith.mulf %50, %67 : vector<2x128xf32>
        %71 = arith.addf %arg16, %70 : vector<2x128xf32>
        %cst_36 = arith.constant dense<0.000000e+00> : vector<2x128xf32>
        %72 = tpu.matmul %71, %4, %cst_36 {dimension_numbers = #tpu.dot_dimension_numbers<[1], [0], [0], [1], [0, 0, 1, 1], [], []>, precision = #tpu.contract_precision<fp32>} : vector<2x128xf32>, vector<128x128xf32>, vector<2x128xf32> -> vector<2x128xf32>
        %73 = vector.broadcast %6 : vector<1x128xf32> to vector<2x128xf32>
        %74 = arith.addf %72, %73 : vector<2x128xf32>
        %75 = math.tanh %74 : vector<2x128xf32>
        %cst_37 = arith.constant dense<0.000000e+00> : vector<2x128xf32>
        %76 = tpu.matmul %75, %5, %cst_37 {dimension_numbers = #tpu.dot_dimension_numbers<[1], [0], [0], [1], [0, 0, 1, 1], [], []>, precision = #tpu.contract_precision<fp32>} : vector<2x128xf32>, vector<128x128xf32>, vector<2x128xf32> -> vector<2x128xf32>
        %77 = vector.broadcast %7 : vector<1x128xf32> to vector<2x128xf32>
        %78 = arith.addf %76, %77 : vector<2x128xf32>
        %79 = arith.mulf %54, %78 : vector<2x128xf32>
        %80 = arith.addf %69, %79 : vector<2x128xf32>
        %81 = arith.mulf %50, %78 : vector<2x128xf32>
        %82 = arith.addf %arg16, %81 : vector<2x128xf32>
        %cst_38 = arith.constant dense<0.000000e+00> : vector<2x128xf32>
        %83 = tpu.matmul %82, %4, %cst_38 {dimension_numbers = #tpu.dot_dimension_numbers<[1], [0], [0], [1], [0, 0, 1, 1], [], []>, precision = #tpu.contract_precision<fp32>} : vector<2x128xf32>, vector<128x128xf32>, vector<2x128xf32> -> vector<2x128xf32>
        %84 = vector.broadcast %6 : vector<1x128xf32> to vector<2x128xf32>
        %85 = arith.addf %83, %84 : vector<2x128xf32>
        %86 = math.tanh %85 : vector<2x128xf32>
        %cst_39 = arith.constant dense<0.000000e+00> : vector<2x128xf32>
        %87 = tpu.matmul %86, %5, %cst_39 {dimension_numbers = #tpu.dot_dimension_numbers<[1], [0], [0], [1], [0, 0, 1, 1], [], []>, precision = #tpu.contract_precision<fp32>} : vector<2x128xf32>, vector<128x128xf32>, vector<2x128xf32> -> vector<2x128xf32>
        %88 = vector.broadcast %7 : vector<1x128xf32> to vector<2x128xf32>
        %89 = arith.addf %87, %88 : vector<2x128xf32>
        %90 = arith.mulf %54, %89 : vector<2x128xf32>
        %91 = arith.addf %80, %90 : vector<2x128xf32>
        %92 = arith.mulf %48, %89 : vector<2x128xf32>
        %93 = arith.addf %arg16, %92 : vector<2x128xf32>
        %cst_40 = arith.constant dense<0.000000e+00> : vector<2x128xf32>
        %94 = tpu.matmul %93, %4, %cst_40 {dimension_numbers = #tpu.dot_dimension_numbers<[1], [0], [0], [1], [0, 0, 1, 1], [], []>, precision = #tpu.contract_precision<fp32>} : vector<2x128xf32>, vector<128x128xf32>, vector<2x128xf32> -> vector<2x128xf32>
        %95 = vector.broadcast %6 : vector<1x128xf32> to vector<2x128xf32>
        %96 = arith.addf %94, %95 : vector<2x128xf32>
        %97 = math.tanh %96 : vector<2x128xf32>
        %cst_41 = arith.constant dense<0.000000e+00> : vector<2x128xf32>
        %98 = tpu.matmul %97, %5, %cst_41 {dimension_numbers = #tpu.dot_dimension_numbers<[1], [0], [0], [1], [0, 0, 1, 1], [], []>, precision = #tpu.contract_precision<fp32>} : vector<2x128xf32>, vector<128x128xf32>, vector<2x128xf32> -> vector<2x128xf32>
        %99 = vector.broadcast %7 : vector<1x128xf32> to vector<2x128xf32>
        %100 = arith.addf %98, %99 : vector<2x128xf32>
        %101 = arith.mulf %52, %100 : vector<2x128xf32>
        %102 = arith.addf %91, %101 : vector<2x128xf32>
        scf.yield %102 : vector<2x128xf32>
      }
      %57 = arith.index_cast %arg12 : i32 to index
      %c0_32 = arith.constant 0 : index
      %c0_33 = arith.constant 0 : index
      %58 = vector.load %arg9[%57, %c0_32, %c0_33] : memref<4x2x128xf32, #tpu.memory_space<vmem>>, vector<1x2x128xf32>
      %59 = vector.shape_cast %58 : vector<1x2x128xf32> to vector<2x128xf32>
      %60 = vector.shape_cast %56 : vector<2x128xf32> to vector<1x2x128xf32>
      tpu.vector_store %arg9[%57, %c0_32, %c0_33], %60 {strides = array<i32>} : memref<4x2x128xf32, #tpu.memory_space<vmem>>, vector<1x2x128xf32>,
      scf.yield %56, %41 : vector<2x128xf32>, vector<2x128xf32>
    }
    %c4_i32_15 = arith.constant 4 : i32
    %c0_16 = arith.constant 0 : index
    %c0_17 = arith.constant 0 : index
    %12 = vector.load %arg10[%c0_16, %c0_17] : memref<2x128xf32, #tpu.memory_space<vmem>>, vector<2x128xf32>
    tpu.vector_store %arg10[%c0_16, %c0_17], %11#0 {strides = array<i32>} : memref<2x128xf32, #tpu.memory_space<vmem>>, vector<2x128xf32>,
    %c0_18 = arith.constant 0 : index
    %c0_19 = arith.constant 0 : index
    %13 = vector.load %arg11[%c0_18, %c0_19] : memref<2x128xf32, #tpu.memory_space<vmem>>, vector<2x128xf32>
    tpu.vector_store %arg11[%c0_18, %c0_19], %11#1 {strides = array<i32>} : memref<2x128xf32, #tpu.memory_space<vmem>>, vector<2x128xf32>,
    return
  }
  func.func @transform_0(%arg0: i32, %arg1: i32) -> (i32, i32, i32) {
    %c0_i32 = arith.constant 0 : i32
    %c0_i32_0 = arith.constant 0 : i32
    return %arg1, %arg0, %c0_i32 : i32, i32, i32
  }
  func.func @transform_1(%arg0: i32, %arg1: i32) -> (i32, i32, i32) {
    %c0_i32 = arith.constant 0 : i32
    %c0_i32_0 = arith.constant 0 : i32
    return %arg1, %arg0, %c0_i32 : i32, i32, i32
  }
  func.func @transform_2(%arg0: i32, %arg1: i32) -> (i32, i32) {
    %c0_i32 = arith.constant 0 : i32
    %c0_i32_0 = arith.constant 0 : i32
    %c0_i32_1 = arith.constant 0 : i32
    return %c0_i32, %c0_i32_0 : i32, i32
  }
  func.func @transform_3(%arg0: i32, %arg1: i32) -> (i32, i32) {
    %c0_i32 = arith.constant 0 : i32
    %c0_i32_0 = arith.constant 0 : i32
    %c0_i32_1 = arith.constant 0 : i32
    return %c0_i32, %c0_i32_0 : i32, i32
  }
  func.func @transform_4(%arg0: i32, %arg1: i32) -> (i32, i32) {
    %c0_i32 = arith.constant 0 : i32
    %c0_i32_0 = arith.constant 0 : i32
    %c0_i32_1 = arith.constant 0 : i32
    return %c0_i32, %c0_i32_0 : i32, i32
  }
  func.func @transform_5(%arg0: i32, %arg1: i32) -> (i32, i32) {
    %c0_i32 = arith.constant 0 : i32
    %c0_i32_0 = arith.constant 0 : i32
    %c0_i32_1 = arith.constant 0 : i32
    return %c0_i32, %c0_i32_0 : i32, i32
  }
  func.func @transform_6(%arg0: i32, %arg1: i32) -> (i32, i32) {
    %c0_i32 = arith.constant 0 : i32
    %c0_i32_0 = arith.constant 0 : i32
    %c0_i32_1 = arith.constant 0 : i32
    return %c0_i32, %c0_i32_0 : i32, i32
  }
  func.func @transform_7(%arg0: i32, %arg1: i32) -> (i32, i32, i32) {
    %c0_i32 = arith.constant 0 : i32
    %c0_i32_0 = arith.constant 0 : i32
    return %arg1, %arg0, %c0_i32 : i32, i32, i32
  }
}

</mosaic_0001>

<llo_original>
// kernel: tpu_custom_call.1
$region0: #{tpu_custom_call.1}
  #allocation0 [shape = 'u32[]', space=smem, size = 0x4, offset = 0x4, fixed_abs, tag = 'smem constant byte address 0x4 - core index']
  #allocation1 [shape = 'u32[144,128]{1,0:T(1,128)}', space=vmem, size = 0x12000, scoped, tag = 'internal scratch']
  #allocation2 [shape = 'f32[2,128]{1,0:T(2,128)}', space=vmem, size = 0x400, scoped, tag = 'scratch operand']
  #allocation3 [shape = 'f32[2,128]{1,0:T(2,128)}', space=vmem, size = 0x400, scoped, tag = 'scratch operand']
  %s0 = inlined_call_operand.hbm [shape: f32[8,2,512], index: 0, kind: input, shape index: {}]
  %s1 = inlined_call_operand.vmem [shape: f32[8,2,1], index: 1, kind: input, shape index: {}]
  %s2 = inlined_call_operand.hbm [shape: f32[128,512], index: 2, kind: input, shape index: {}]
  %s3 = inlined_call_operand.hbm [shape: f32[128,128], index: 3, kind: input, shape index: {}]
  %s4 = inlined_call_operand.vmem [shape: f32[1,128], index: 4, kind: input, shape index: {}]
  %s5 = inlined_call_operand.hbm [shape: f32[128,128], index: 5, kind: input, shape index: {}]
  %s6 = inlined_call_operand.vmem [shape: f32[1,128], index: 6, kind: input, shape index: {}]
  %s7 = inlined_call_operand.hbm [shape: f32[8,2,128], index: 7, kind: output, shape index: {}]
  %s8 = sld [smem:[#allocation0]]
  $region95: #{tpu_custom_call.1} parent=0
    _
  %s10 = ssub.s32 1, %s8
  %s11 = scalar_select 0, %s10, %s8
  $region1: #{tpu_custom_call.1} parent=0
    #allocation4 [shape = 'u8[32768]{0}', space=vmem, size = 0x8000, scoped, tag = 'input window, operand 0']
    #allocation5 [shape = 's32[2]{0}', space=sflag, size = 0x8, scoped, tag = 'scoped memory for tpu_custom_call.1']
    #allocation6 [shape = 's32[2]{0}', space=sflag, size = 0x8, scoped, tag = 'scoped memory for tpu_custom_call.1']
    #allocation7 [shape = 'u8[262144]{0}', space=vmem, size = 0x40000, scoped, tag = 'input window, operand 2, single buffered']
    #allocation8 [shape = 's32[1]{0}', space=sflag, size = 0x4, scoped, tag = 'scoped memory for tpu_custom_call.1']
    #allocation9 [shape = 'u8[65536]{0}', space=vmem, size = 0x10000, scoped, tag = 'input window, operand 3, single buffered']
    #allocation10 [shape = 'u8[65536]{0}', space=vmem, size = 0x10000, scoped, tag = 'input window, operand 5, single buffered']
    #allocation11 [shape = 's32[1]{0}', space=sflag, size = 0x4, scoped, tag = 'scoped memory for tpu_custom_call.1']
    #allocation12 [shape = 'u8[8192]{0}', space=vmem, size = 0x2000, scoped, tag = 'output window, operand 0']
    %12 = vsyncpa [#allocation5], 0
    %s13 = scalar_lea.sflag [#allocation5], 1
    %14 = vsyncpa %s13, 0
    %15 = vsyncpa [#allocation8], 0
    %16 = vsyncpa [#allocation11], 0
    %17 = vsyncpa [#allocation6], 0
    %s18 = scalar_lea.sflag [#allocation6], 1
    %19 = vsyncpa %s18, 0
    loop: start=0, step=1, limit=4
    $region2: #{tpu_custom_call.1} parent=1 // loop_pre_header
      _
    $region3: #{tpu_custom_call.1} parent=1 // loop_header
      %s21 = sphi 0, %s25
      %p22 = scmp.ge.s32.totalorder %s21, 4
      %s28 = sphi 0, %s40
      %s29 = sphi 0, %s36
      %s30 = sphi 0, %s28
      %s31 = sphi 0, %s29
      %s32 = sphi 0, %s30
      %s33 = sphi 0, %s31
      %s45 = sphi 0, %s47
      %s48 = sphi 0, %s45
      %s49 = sphi 0, %s48
      %s65 = sphi 0, %s49
      %s73 = sphi 0, %s75
      %s76 = sphi 0, %s73
      %s77 = sphi 0, %s76
      %s93 = sphi 0, %s77
      %s97 = sphi 0, %s97
      %s99 = sphi 0, %s97
      %s100 = sphi 0, %s99
      %s114 = sphi 0, %s100
      %s118 = sphi 0, %s118
      %s120 = sphi 0, %s118
      %s121 = sphi 0, %s120
      %s135 = sphi 0, %s121
      %s139 = sphi 0, %s139
      %s141 = sphi 0, %s139
      %s142 = sphi 0, %s141
      %s156 = sphi 0, %s142
      %s160 = sphi 0, %s160
      %s162 = sphi 0, %s160
      %s163 = sphi 0, %s162
      %s177 = sphi 0, %s163
      %s181 = sphi 0, %s181
      %s183 = sphi 0, %s181
      %s184 = sphi 0, %s183
      %s198 = sphi 0, %s184
      %s206 = sphi 0, %s208
      %s209 = sphi 0, %s206
      %s210 = sphi 0, %s209
      %s226 = sphi 0, %s210
    $region4: #{tpu_custom_call.1} parent=1 // loop_header_branch
      %24 = sbr.rel (%p22) target = $region8
    $region5: #{tpu_custom_call.1} parent=1 // loop_body
      %s26 = ssub.s32 %s21, 1
      %s27 = ssub.s32 %s21, 2
      %s34 = sadd.s32 1, %s29
      %p35 = scmp.ge.s32.totalorder %s34, 2
      %s36 = scalar_select %p35, 0, %s34
      %s37 = sadd.s32 1, %s28
      %s38 = scalar_select %p35, %s37, %s28
      %p39 = scmp.ge.s32.totalorder %s38, 1
      %s40 = scalar_select %p39, 0, %s38
      %s41 = ssub.s32 %s29, %s36
      %s42 = ssub.s32 %s28, %s40
      %s43 = sor.u32 %s41, %s42
      %p44 = scmp.eq.s32.totalorder %s43, 0
      %s46 = sadd.s32 %s45, 1
      %s47 = scalar_select %p44, %s45, %s46
      %p50 = pneg %p44
      %p51 = scmp.eq.s32.totalorder %s21, 1
      %p52 = por %p50, %p51
      %p53 = scmp.ne.s32.totalorder %s45, %s48
      %p54 = scmp.eq.s32.totalorder %s21, 0
      %p55 = por %p53, %p54
      %p56 = scmp.ne.s32.totalorder %s45, %s48
      %p57 = scmp.eq.s32.totalorder %s26, 1
      %p58 = por %p56, %p57
      %p59 = scmp.ne.s32.totalorder %s48, %s49
      %p60 = scmp.eq.s32.totalorder %s26, 0
      %p61 = por %p59, %p60
      %p62 = scmp.ne.s32.totalorder %s48, %s49
      %p63 = scmp.eq.s32.totalorder %s27, 1
      %p64 = por %p62, %p63
      %p66 = scmp.ne.s32.totalorder %s49, %s65
      %p67 = scmp.eq.s32.totalorder %s27, 0
      %p68 = por %p66, %p67
      %s69 = ssub.s32 %s29, %s36
      %s70 = ssub.s32 %s28, %s40
      %s71 = sor.u32 %s69, %s70
      %p72 = scmp.eq.s32.totalorder %s71, 0
      %s74 = sadd.s32 %s73, 1
      %s75 = scalar_select %p72, %s73, %s74
      %p78 = pneg %p72
      %p79 = scmp.eq.s32.totalorder %s21, 1
      %p80 = por %p78, %p79
      %p81 = scmp.ne.s32.totalorder %s73, %s76
      %p82 = scmp.eq.s32.totalorder %s21, 0
      %p83 = por %p81, %p82
      %p84 = scmp.ne.s32.totalorder %s73, %s76
      %p85 = scmp.eq.s32.totalorder %s26, 1
      %p86 = por %p84, %p85
      %p87 = scmp.ne.s32.totalorder %s76, %s77
      %p88 = scmp.eq.s32.totalorder %s26, 0
      %p89 = por %p87, %p88
      %p90 = scmp.ne.s32.totalorder %s76, %s77
      %p91 = scmp.eq.s32.totalorder %s27, 1
      %p92 = por %p90, %p91
      %p94 = scmp.ne.s32.totalorder %s77, %s93
      %p95 = scmp.eq.s32.totalorder %s27, 0
      %p96 = por %p94, %p95
      %s98 = sadd.s32 %s97, 1
      %p101 = scmp.eq.s32.totalorder %s21, 1
      %p102 = scmp.ne.s32.totalorder %s97, %s99
      %p103 = scmp.eq.s32.totalorder %s21, 0
      %p104 = por %p102, %p103
      %p105 = scmp.ne.s32.totalorder %s97, %s99
      %p106 = scmp.eq.s32.totalorder %s26, 1
      %p107 = por %p105, %p106
      %p108 = scmp.ne.s32.totalorder %s99, %s100
      %p109 = scmp.eq.s32.totalorder %s26, 0
      %p110 = por %p108, %p109
      %p111 = scmp.ne.s32.totalorder %s99, %s100
      %p112 = scmp.eq.s32.totalorder %s27, 1
      %p113 = por %p111, %p112
      %p115 = scmp.ne.s32.totalorder %s100, %s114
      %p116 = scmp.eq.s32.totalorder %s27, 0
      %p117 = por %p115, %p116
      %s119 = sadd.s32 %s118, 1
      %p122 = scmp.eq.s32.totalorder %s21, 1
      %p123 = scmp.ne.s32.totalorder %s118, %s120
      %p124 = scmp.eq.s32.totalorder %s21, 0
      %p125 = por %p123, %p124
      %p126 = scmp.ne.s32.totalorder %s118, %s120
      %p127 = scmp.eq.s32.totalorder %s26, 1
      %p128 = por %p126, %p127
      %p129 = scmp.ne.s32.totalorder %s120, %s121
      %p130 = scmp.eq.s32.totalorder %s26, 0
      %p131 = por %p129, %p130
      %p132 = scmp.ne.s32.totalorder %s120, %s121
      %p133 = scmp.eq.s32.totalorder %s27, 1
      %p134 = por %p132, %p133
      %p136 = scmp.ne.s32.totalorder %s121, %s135
      %p137 = scmp.eq.s32.totalorder %s27, 0
      %p138 = por %p136, %p137
      %s140 = sadd.s32 %s139, 1
      %p143 = scmp.eq.s32.totalorder %s21, 1
      %p144 = scmp.ne.s32.totalorder %s139, %s141
      %p145 = scmp.eq.s32.totalorder %s21, 0
      %p146 = por %p144, %p145
      %p147 = scmp.ne.s32.totalorder %s139, %s141
      %p148 = scmp.eq.s32.totalorder %s26, 1
      %p149 = por %p147, %p148
      %p150 = scmp.ne.s32.totalorder %s141, %s142
      %p151 = scmp.eq.s32.totalorder %s26, 0
      %p152 = por %p150, %p151
      %p153 = scmp.ne.s32.totalorder %s141, %s142
      %p154 = scmp.eq.s32.totalorder %s27, 1
      %p155 = por %p153, %p154
      %p157 = scmp.ne.s32.totalorder %s142, %s156
      %p158 = scmp.eq.s32.totalorder %s27, 0
      %p159 = por %p157, %p158
      %s161 = sadd.s32 %s160, 1
      %p164 = scmp.eq.s32.totalorder %s21, 1
      %p165 = scmp.ne.s32.totalorder %s160, %s162
      %p166 = scmp.eq.s32.totalorder %s21, 0
      %p167 = por %p165, %p166
      %p168 = scmp.ne.s32.totalorder %s160, %s162
      %p169 = scmp.eq.s32.totalorder %s26, 1
      %p170 = por %p168, %p169
      %p171 = scmp.ne.s32.totalorder %s162, %s163
      %p172 = scmp.eq.s32.totalorder %s26, 0
      %p173 = por %p171, %p172
      %p174 = scmp.ne.s32.totalorder %s162, %s163
      %p175 = scmp.eq.s32.totalorder %s27, 1
      %p176 = por %p174, %p175
      %p178 = scmp.ne.s32.totalorder %s163, %s177
      %p179 = scmp.eq.s32.totalorder %s27, 0
      %p180 = por %p178, %p179
      %s182 = sadd.s32 %s181, 1
      %p185 = scmp.eq.s32.totalorder %s21, 1
      %p186 = scmp.ne.s32.totalorder %s181, %s183
      %p187 = scmp.eq.s32.totalorder %s21, 0
      %p188 = por %p186, %p187
      %p189 = scmp.ne.s32.totalorder %s181, %s183
      %p190 = scmp.eq.s32.totalorder %s26, 1
      %p191 = por %p189, %p190
      %p192 = scmp.ne.s32.totalorder %s183, %s184
      %p193 = scmp.eq.s32.totalorder %s26, 0
      %p194 = por %p192, %p193
      %p195 = scmp.ne.s32.totalorder %s183, %s184
      %p196 = scmp.eq.s32.totalorder %s27, 1
      %p197 = por %p195, %p196
      %p199 = scmp.ne.s32.totalorder %s184, %s198
      %p200 = scmp.eq.s32.totalorder %s27, 0
      %p201 = por %p199, %p200
      %s202 = ssub.s32 %s29, %s36
      %s203 = ssub.s32 %s28, %s40
      %s204 = sor.u32 %s202, %s203
      %p205 = scmp.eq.s32.totalorder %s204, 0
      %s207 = sadd.s32 %s206, 1
      %s208 = scalar_select %p205, %s206, %s207
      %p211 = pneg %p205
      %p212 = scmp.eq.s32.totalorder %s21, 1
      %p213 = por %p211, %p212
      %p214 = scmp.ne.s32.totalorder %s206, %s209
      %p215 = scmp.eq.s32.totalorder %s21, 0
      %p216 = por %p214, %p215
      %p217 = scmp.ne.s32.totalorder %s206, %s209
      %p218 = scmp.eq.s32.totalorder %s26, 1
      %p219 = por %p217, %p218
      %p220 = scmp.ne.s32.totalorder %s209, %s210
      %p221 = scmp.eq.s32.totalorder %s26, 0
      %p222 = por %p220, %p221
      %p223 = scmp.ne.s32.totalorder %s209, %s210
      %p224 = scmp.eq.s32.totalorder %s27, 1
      %p225 = por %p223, %p224
      %p227 = scmp.ne.s32.totalorder %s210, %s226
      %p228 = scmp.eq.s32.totalorder %s27, 0
      %p229 = por %p227, %p228
      %p230 = scmp.le.s32.totalorder 1, %s21
      %p231 = scmp.lt.s32.totalorder %s21, 3
      %p232 = pnand %p230, %p231
      %p233 = pneg %p232
      // Predicated region
      $region9: #{tpu_custom_call.1} parent=5 // pred_check
        _
      $region10: #{tpu_custom_call.1} parent=5 // pred_check_branch
        %235 = sbr.rel (%p232) target = $region12
      $region11: #{tpu_custom_call.1} parent=5 // pred_region
        %s236 = ssub.s32 %s21, 1
        // Predicated region
        $region13: #{tpu_custom_call.1} parent=11 // pred_check
          %p237 = pneg %p110
        $region14: #{tpu_custom_call.1} parent=11 // pred_check_branch
          %239 = sbr.rel (%p237) target = $region16
        $region15: #{tpu_custom_call.1} parent=11 // pred_region
          %s241 = ssub.s32 8192, 8192
          %242 = vsyncadd [#allocation8], %s241
          %s243 = sshll.u32 [#allocation7], 4
          %s244 = int_to_ptr.vmem [resolvable:$true] %s243
          %249 = dma.hbm_to_vmem [thread:$0]  %s2, 8192, %s244, [#allocation8], 512, 512, 32
        $region16: #{tpu_custom_call.1} parent=11 // pred_fallthru
          _
        // Predicated region
        $region17: #{tpu_custom_call.1} parent=11 // pred_check
          %p250 = pneg %p131
        $region18: #{tpu_custom_call.1} parent=11 // pred_check_branch
          %252 = sbr.rel (%p250) target = $region20
        $region19: #{tpu_custom_call.1} parent=11 // pred_region
          %s254 = ssub.s32 2048, 2048
          %255 = vsyncadd [#allocation8], %s254
          %s256 = sshll.u32 [#allocation9], 4
          %s257 = int_to_ptr.vmem [resolvable:$true] %s256
          %262 = dma.hbm_to_vmem [thread:$0]  %s3, 2048, %s257, [#allocation8], 128, 128, 8
        $region20: #{tpu_custom_call.1} parent=11 // pred_fallthru
          _
        // Predicated region
        $region21: #{tpu_custom_call.1} parent=11 // pred_check
          %p263 = pneg %p152
        $region22: #{tpu_custom_call.1} parent=11 // pred_check_branch
          %265 = sbr.rel (%p263) target = $region24
        $region23: #{tpu_custom_call.1} parent=11 // pred_region
          _
        $region24: #{tpu_custom_call.1} parent=11 // pred_fallthru
          _
        // Predicated region
        $region25: #{tpu_custom_call.1} parent=11 // pred_check
          %p266 = pneg %p173
        $region26: #{tpu_custom_call.1} parent=11 // pred_check_branch
          %268 = sbr.rel (%p266) target = $region28
        $region27: #{tpu_custom_call.1} parent=11 // pred_region
          %s270 = ssub.s32 2048, 2048
          %271 = vsyncadd [#allocation11], %s270
          %s272 = sshll.u32 [#allocation10], 4
          %s273 = int_to_ptr.vmem [resolvable:$true] %s272
          %278 = dma.hbm_to_vmem [thread:$0]  %s5, 2048, %s273, [#allocation11], 128, 128, 8
        $region28: #{tpu_custom_call.1} parent=11 // pred_fallthru
          _
        // Predicated region
        $region29: #{tpu_custom_call.1} parent=11 // pred_check
          %p279 = pneg %p194
        $region30: #{tpu_custom_call.1} parent=11 // pred_check_branch
          %281 = sbr.rel (%p279) target = $region32
        $region31: #{tpu_custom_call.1} parent=11 // pred_region
          _
        $region32: #{tpu_custom_call.1} parent=11 // pred_fallthru
          _
      $region12: #{tpu_custom_call.1} parent=5 // pred_fallthru
        _
      %p282 = scmp.lt.s32.totalorder %s21, 2
      // Predicated region
      $region33: #{tpu_custom_call.1} parent=5 // pred_check
        %p283 = pneg %p282
      $region34: #{tpu_custom_call.1} parent=5 // pred_check_branch
        %285 = sbr.rel (%p283) target = $region36
      $region35: #{tpu_custom_call.1} parent=5 // pred_region
        // Predicated region
        $region37: #{tpu_custom_call.1} parent=35 // pred_check
          %p286 = pneg %p55
        $region38: #{tpu_custom_call.1} parent=35 // pred_check_branch
          %288 = sbr.rel (%p286) target = $region40
        $region39: #{tpu_custom_call.1} parent=35 // pred_region
          %s289 = sand.u32 %s45, 1
          %s290 = scalar_lea.sflag [#allocation5], %s289
          %s291 = sand.u32 %s45, 1
          %s292 = smul.addr %s291, 32
          %s293 = scalar_lea.vmem [#allocation4], %s292
          %s294 = smul.u32 4, %s29
          %s296 = ssub.s32 512, 512
          %297 = vsyncadd %s290, %s296
          %s298 = smul.addr %s28, 4
          %s299 = smul.addr %s294, 4
          %s300 = sadd.s32 %s298, %s299
          %s301 = smul.addr %s300, 32
          %s302 = scalar_lea.hbm %s0, %s301
          %s303 = sshll.u32 %s293, 4
          %s304 = int_to_ptr.vmem [resolvable:$true] %s303
          %309 = dma.hbm_to_vmem [thread:$0]  %s302, 512, %s304, %s290, 128, 128, 8
        $region40: #{tpu_custom_call.1} parent=35 // pred_fallthru
          _
        // Predicated region
        $region41: #{tpu_custom_call.1} parent=35 // pred_check
          %p310 = pneg %p83
        $region42: #{tpu_custom_call.1} parent=35 // pred_check_branch
          %312 = sbr.rel (%p310) target = $region44
        $region43: #{tpu_custom_call.1} parent=35 // pred_region
          %s313 = smul.u32 4, %s29
          %p314 = scmp.lt.s32.totalorder %s313, 7
          %s315 = scalar_select %p314, %s313, 7
          %p316 = scmp.lt.s32.totalorder %s28, 0
          %s317 = scalar_select %p316, %s28, 0
          %s318 = sadd.s32 %s317, %s315
          %s319 = smul.addr %s318, 2
          %s320 = scalar_lea.vmem %s1, %s319
          %s321 = smul.u32 4, %s29
        $region44: #{tpu_custom_call.1} parent=35 // pred_fallthru
          _
      $region36: #{tpu_custom_call.1} parent=5 // pred_fallthru
        _
      %p322 = scmp.le.s32.totalorder 1, %s21
      %p323 = scmp.lt.s32.totalorder %s21, 3
      %p324 = pnand %p322, %p323
      %p325 = pneg %p324
      // Predicated region
      $region45: #{tpu_custom_call.1} parent=5 // pred_check
        _
      $region46: #{tpu_custom_call.1} parent=5 // pred_check_branch
        %327 = sbr.rel (%p324) target = $region48
      $region47: #{tpu_custom_call.1} parent=5 // pred_region
        %s328 = ssub.s32 %s21, 1
        %s329 = sand.u32 %s48, 1
        %s330 = scalar_lea.sflag [#allocation5], %s329
        %s331 = sand.u32 %s48, 1
        %s332 = smul.addr %s331, 32
        %s333 = scalar_lea.vmem [#allocation4], %s332
        // Predicated region
        $region49: #{tpu_custom_call.1} parent=47 // pred_check
          %p334 = pneg %p61
        $region50: #{tpu_custom_call.1} parent=47 // pred_check_branch
          %336 = sbr.rel (%p334) target = $region52
        $region51: #{tpu_custom_call.1} parent=47 // pred_region
          %337 = dma.done %s330, 512
        $region52: #{tpu_custom_call.1} parent=47 // pred_fallthru
          _
        // Predicated region
        $region53: #{tpu_custom_call.1} parent=47 // pred_check
          %p338 = pneg %p110
        $region54: #{tpu_custom_call.1} parent=47 // pred_check_branch
          %340 = sbr.rel (%p338) target = $region56
        $region55: #{tpu_custom_call.1} parent=47 // pred_region
          %341 = dma.done [#allocation8], 8192
        $region56: #{tpu_custom_call.1} parent=47 // pred_fallthru
          _
        // Predicated region
        $region57: #{tpu_custom_call.1} parent=47 // pred_check
          %p342 = pneg %p131
        $region58: #{tpu_custom_call.1} parent=47 // pred_check_branch
          %344 = sbr.rel (%p342) target = $region60
        $region59: #{tpu_custom_call.1} parent=47 // pred_region
          %345 = dma.done [#allocation8], 2048
        $region60: #{tpu_custom_call.1} parent=47 // pred_fallthru
          _
        // Predicated region
        $region61: #{tpu_custom_call.1} parent=47 // pred_check
          %p346 = pneg %p173
        $region62: #{tpu_custom_call.1} parent=47 // pred_check_branch
          %348 = sbr.rel (%p346) target = $region64
        $region63: #{tpu_custom_call.1} parent=47 // pred_region
          %349 = dma.done [#allocation11], 2048
        $region64: #{tpu_custom_call.1} parent=47 // pred_fallthru
          _
        %s350 = sand.u32 %s48, 1
        %s351 = scalar_lea.sflag [#allocation5], %s350
        %s352 = sand.u32 %s48, 1
        %s353 = smul.addr %s352, 32
        %s354 = scalar_lea.vmem [#allocation4], %s353
        %p355 = pneg %p61
        %p356 = pneg %p58
        %s357 = smul.u32 4, %s31
        %p358 = scmp.lt.s32.totalorder %s357, 7
        %s359 = scalar_select %p358, %s357, 7
        %p360 = scmp.lt.s32.totalorder %s30, 0
        %s361 = scalar_select %p360, %s30, 0
        %s362 = sadd.s32 %s361, %s359
        %s363 = smul.addr %s362, 2
        %s364 = scalar_lea.vmem %s1, %s363
        %p365 = pneg %p89
        %p366 = pneg %p86
        %p367 = pneg %p110
        %p368 = pneg %p107
        %p369 = pneg %p131
        %p370 = pneg %p128
        %p371 = pneg %p152
        %p372 = pneg %p149
        %p373 = pneg %p173
        %p374 = pneg %p170
        %p375 = pneg %p194
        %p376 = pneg %p191
        %p377 = pneg %p222
        %p378 = pneg %p219
        %s379 = sand.u32 %s209, 1
        %s380 = scalar_lea.sflag [#allocation6], %s379
        %s381 = sand.u32 %s209, 1
        %s382 = smul.addr %s381, 8
        %s383 = scalar_lea.vmem [#allocation12], %s382
        %s384 = smul.u32 4, %s31
        %s385 = smul.u32 4, %s31
        %p386 = scmp.lt.s32.totalorder %s385, 7
        %s387 = scalar_select %p386, %s385, 7
        %p388 = scmp.lt.s32.totalorder %s30, 0
        %s389 = scalar_select %p388, %s30, 0
        %s390 = sadd.s32 %s389, %s387
        %s391 = smul.addr %s390, 2
        %s392 = scalar_lea.vmem %s1, %s391
        %s393 = smul.u32 4, %s31
        %s394 = smul.u32 4, %s31
        %p395 = scmp.eq.s32.totalorder %s31, 0
        // Predicated region
        $region65: #{tpu_custom_call.1} parent=47 // pred_check
          %p396 = pneg %p395
        $region66: #{tpu_custom_call.1} parent=47 // pred_check_branch
          %398 = sbr.rel (%p396) target = $region68
        $region67: #{tpu_custom_call.1} parent=47 // pred_region
          %399 = vst [vmem:[#allocation2] sm:$0x3] 0.0
          %400 = vst [vmem:[#allocation3] sm:$0x3] 0.0
        $region68: #{tpu_custom_call.1} parent=47 // pred_fallthru
          _
        %v401 = vld [vmem:[#allocation7] sm:$0xff]
        %v402 = vld [vmem:[#allocation7 + $0x8] sm:$0xff]
        %v403 = vld [vmem:[#allocation7 + $0x10] sm:$0xff]
        %v404 = vld [vmem:[#allocation7 + $0x18] sm:$0xff]
        %v405 = vld [vmem:[#allocation7 + $0x20] sm:$0xff]
        %v406 = vld [vmem:[#allocation7 + $0x28] sm:$0xff]
        %v407 = vld [vmem:[#allocation7 + $0x30] sm:$0xff]
        %v408 = vld [vmem:[#allocation7 + $0x38] sm:$0xff]
        %v409 = vld [vmem:[#allocation7 + $0x40] sm:$0xff]
        %v410 = vld [vmem:[#allocation7 + $0x48] sm:$0xff]
        %v411 = vld [vmem:[#allocation7 + $0x50] sm:$0xff]
        %v412 = vld [vmem:[#allocation7 + $0x58] sm:$0xff]
        %v413 = vld [vmem:[#allocation7 + $0x60] sm:$0xff]
        %v414 = vld [vmem:[#allocation7 + $0x68] sm:$0xff]
        %v415 = vld [vmem:[#allocation7 + $0x70] sm:$0xff]
        %v416 = vld [vmem:[#allocation7 + $0x78] sm:$0xff]
        %v417 = vld [vmem:[#allocation7 + $0x80] sm:$0xff]
        %v418 = vld [vmem:[#allocation7 + $0x88] sm:$0xff]
        %v419 = vld [vmem:[#allocation7 + $0x90] sm:$0xff]
        %v420 = vld [vmem:[#allocation7 + $0x98] sm:$0xff]
        %v421 = vld [vmem:[#allocation7 + $0xa0] sm:$0xff]
        %v422 = vld [vmem:[#allocation7 + $0xa8] sm:$0xff]
        %v423 = vld [vmem:[#allocation7 + $0xb0] sm:$0xff]
        %v424 = vld [vmem:[#allocation7 + $0xb8] sm:$0xff]
        %v425 = vld [vmem:[#allocation7 + $0xc0] sm:$0xff]
        %v426 = vld [vmem:[#allocation7 + $0xc8] sm:$0xff]
        %v427 = vld [vmem:[#allocation7 + $0xd0] sm:$0xff]
        %v428 = vld [vmem:[#allocation7 + $0xd8] sm:$0xff]
        %v429 = vld [vmem:[#allocation7 + $0xe0] sm:$0xff]
        %v430 = vld [vmem:[#allocation7 + $0xe8] sm:$0xff]
        %v431 = vld [vmem:[#allocation7 + $0xf0] sm:$0xff]
        %v432 = vld [vmem:[#allocation7 + $0xf8] sm:$0xff]
        %v433 = vld [vmem:[#allocation7 + $0x100] sm:$0xff]
        %v434 = vld [vmem:[#allocation7 + $0x108] sm:$0xff]
        %v435 = vld [vmem:[#allocation7 + $0x110] sm:$0xff]
        %v436 = vld [vmem:[#allocation7 + $0x118] sm:$0xff]
        %v437 = vld [vmem:[#allocation7 + $0x120] sm:$0xff]
        %v438 = vld [vmem:[#allocation7 + $0x128] sm:$0xff]
        %v439 = vld [vmem:[#allocation7 + $0x130] sm:$0xff]
        %v440 = vld [vmem:[#allocation7 + $0x138] sm:$0xff]
        %v441 = vld [vmem:[#allocation7 + $0x140] sm:$0xff]
        %v442 = vld [vmem:[#allocation7 + $0x148] sm:$0xff]
        %v443 = vld [vmem:[#allocation7 + $0x150] sm:$0xff]
        %v444 = vld [vmem:[#allocation7 + $0x158] sm:$0xff]
        %v445 = vld [vmem:[#allocation7 + $0x160] sm:$0xff]
        %v446 = vld [vmem:[#allocation7 + $0x168] sm:$0xff]
        %v447 = vld [vmem:[#allocation7 + $0x170] sm:$0xff]
        %v448 = vld [vmem:[#allocation7 + $0x178] sm:$0xff]
        %v449 = vld [vmem:[#allocation7 + $0x180] sm:$0xff]
        %v450 = vld [vmem:[#allocation7 + $0x188] sm:$0xff]
        %v451 = vld [vmem:[#allocation7 + $0x190] sm:$0xff]
        %v452 = vld [vmem:[#allocation7 + $0x198] sm:$0xff]
        %v453 = vld [vmem:[#allocation7 + $0x1a0] sm:$0xff]
        %v454 = vld [vmem:[#allocation7 + $0x1a8] sm:$0xff]
        %v455 = vld [vmem:[#allocation7 + $0x1b0] sm:$0xff]
        %v456 = vld [vmem:[#allocation7 + $0x1b8] sm:$0xff]
        %v457 = vld [vmem:[#allocation7 + $0x1c0] sm:$0xff]
        %v458 = vld [vmem:[#allocation7 + $0x1c8] sm:$0xff]
        %v459 = vld [vmem:[#allocation7 + $0x1d0] sm:$0xff]
        %v460 = vld [vmem:[#allocation7 + $0x1d8] sm:$0xff]
        %v461 = vld [vmem:[#allocation7 + $0x1e0] sm:$0xff]
        %v462 = vld [vmem:[#allocation7 + $0x1e8] sm:$0xff]
        %v463 = vld [vmem:[#allocation7 + $0x1f0] sm:$0xff]
        %v464 = vld [vmem:[#allocation7 + $0x1f8] sm:$0xff]
        %v465 = vld [vmem:[#allocation9] sm:$0xff]
        %v466 = vld [vmem:[#allocation9 + $0x8] sm:$0xff]
        %v467 = vld [vmem:[#allocation9 + $0x10] sm:$0xff]
        %v468 = vld [vmem:[#allocation9 + $0x18] sm:$0xff]
        %v469 = vld [vmem:[#allocation9 + $0x20] sm:$0xff]
        %v470 = vld [vmem:[#allocation9 + $0x28] sm:$0xff]
        %v471 = vld [vmem:[#allocation9 + $0x30] sm:$0xff]
        %v472 = vld [vmem:[#allocation9 + $0x38] sm:$0xff]
        %v473 = vld [vmem:[#allocation9 + $0x40] sm:$0xff]
        %v474 = vld [vmem:[#allocation9 + $0x48] sm:$0xff]
        %v475 = vld [vmem:[#allocation9 + $0x50] sm:$0xff]
        %v476 = vld [vmem:[#allocation9 + $0x58] sm:$0xff]
        %v477 = vld [vmem:[#allocation9 + $0x60] sm:$0xff]
        %v478 = vld [vmem:[#allocation9 + $0x68] sm:$0xff]
        %v479 = vld [vmem:[#allocation9 + $0x70] sm:$0xff]
        %v480 = vld [vmem:[#allocation9 + $0x78] sm:$0xff]
        %v481 = vld [vmem:[#allocation10] sm:$0xff]
        %v482 = vld [vmem:[#allocation10 + $0x8] sm:$0xff]
        %v483 = vld [vmem:[#allocation10 + $0x10] sm:$0xff]
        %v484 = vld [vmem:[#allocation10 + $0x18] sm:$0xff]
        %v485 = vld [vmem:[#allocation10 + $0x20] sm:$0xff]
        %v486 = vld [vmem:[#allocation10 + $0x28] sm:$0xff]
        %v487 = vld [vmem:[#allocation10 + $0x30] sm:$0xff]
        %v488 = vld [vmem:[#allocation10 + $0x38] sm:$0xff]
        %v489 = vld [vmem:[#allocation10 + $0x40] sm:$0xff]
        %v490 = vld [vmem:[#allocation10 + $0x48] sm:$0xff]
        %v491 = vld [vmem:[#allocation10 + $0x50] sm:$0xff]
        %v492 = vld [vmem:[#allocation10 + $0x58] sm:$0xff]
        %v493 = vld [vmem:[#allocation10 + $0x60] sm:$0xff]
        %v494 = vld [vmem:[#allocation10 + $0x68] sm:$0xff]
        %v495 = vld [vmem:[#allocation10 + $0x70] sm:$0xff]
        %v496 = vld [vmem:[#allocation10 + $0x78] sm:$0xff]
        %v497 = vld [vmem:[%s4] sm:$0x1]
        %v498 = vld [vmem:[%s6] sm:$0x1]
        %v499 = vld [vmem:[#allocation2] sm:$0x3]
        %v500 = vld [vmem:[#allocation3] sm:$0x3]
        loop: start=0, step=1, limit=4
        $region69: #{tpu_custom_call.1} parent=47 // loop_pre_header
          _
        $region70: #{tpu_custom_call.1} parent=47 // loop_header
          %s502 = sphi 0, %s506
          %p503 = scmp.ge.s32.totalorder %s502, 4
          %v507 = vphi %v499, %v2294
          %v508 = vphi %v500, %v2274
        $region71: #{tpu_custom_call.1} parent=47 // loop_header_branch
          %505 = sbr.rel (%p503) target = $region75
        $region72: #{tpu_custom_call.1} parent=47 // loop_body
          %s509 = smul.u32 %s502, 4
          %s510 = smul.addr %s509, 2
          %s511 = scalar_lea.vmem %s333, %s510 [#allocation4]
          %v512 = vld [vmem:[%s511] sm:$0xff]
          %v513 = vand.u32 %v402, 4294901760
          %514 = vmatprep.subr.mxu0 %v513
          %v515 = vand.u32 %v401, 4294901760
          %516 = vmatpush1.msra.mxu0 %v515
          %v517 = vand.u32 %v406, 4294901760
          %518 = vmatprep.subr.mxu0 %v517
          %v519 = vand.u32 %v405, 4294901760
          %520 = vmatpush1.msra.mxu0 %v519
          %v521 = vand.u32 %v410, 4294901760
          %522 = vmatprep.subr.mxu0 %v521
          %v523 = vand.u32 %v409, 4294901760
          %524 = vmatpush1.msra.mxu0 %v523
          %v525 = vand.u32 %v414, 4294901760
          %526 = vmatprep.subr.mxu0 %v525
          %v527 = vand.u32 %v413, 4294901760
          %528 = vmatpush1.msra.mxu0 %v527
          %v529 = vand.u32 %v418, 4294901760
          %530 = vmatprep.subr.mxu0 %v529
          %v531 = vand.u32 %v417, 4294901760
          %532 = vmatpush1.msra.mxu0 %v531
          %v533 = vand.u32 %v422, 4294901760
          %534 = vmatprep.subr.mxu0 %v533
          %v535 = vand.u32 %v421, 4294901760
          %536 = vmatpush1.msra.mxu0 %v535
          %v537 = vand.u32 %v426, 4294901760
          %538 = vmatprep.subr.mxu0 %v537
          %v539 = vand.u32 %v425, 4294901760
          %540 = vmatpush1.msra.mxu0 %v539
          %v541 = vand.u32 %v430, 4294901760
          %542 = vmatprep.subr.mxu0 %v541
          %v543 = vand.u32 %v429, 4294901760
          %544 = vmatpush1.msra.mxu0 %v543
          %v545 = vand.u32 %v434, 4294901760
          %546 = vmatprep.subr.mxu0 %v545
          %v547 = vand.u32 %v433, 4294901760
          %548 = vmatpush1.msra.mxu0 %v547
          %v549 = vand.u32 %v438, 4294901760
          %550 = vmatprep.subr.mxu0 %v549
          %v551 = vand.u32 %v437, 4294901760
          %552 = vmatpush1.msra.mxu0 %v551
          %v553 = vand.u32 %v442, 4294901760
          %554 = vmatprep.subr.mxu0 %v553
          %v555 = vand.u32 %v441, 4294901760
          %556 = vmatpush1.msra.mxu0 %v555
          %v557 = vand.u32 %v446, 4294901760
          %558 = vmatprep.subr.mxu0 %v557
          %v559 = vand.u32 %v445, 4294901760
          %560 = vmatpush1.msra.mxu0 %v559
          %v561 = vand.u32 %v450, 4294901760
          %562 = vmatprep.subr.mxu0 %v561
          %v563 = vand.u32 %v449, 4294901760
          %564 = vmatpush1.msra.mxu0 %v563
          %v565 = vand.u32 %v454, 4294901760
          %566 = vmatprep.subr.mxu0 %v565
          %v567 = vand.u32 %v453, 4294901760
          %568 = vmatpush1.msra.mxu0 %v567
          %v569 = vand.u32 %v458, 4294901760
          %570 = vmatprep.subr.mxu0 %v569
          %v571 = vand.u32 %v457, 4294901760
          %572 = vmatpush1.msra.mxu0 %v571
          %v573 = vand.u32 %v462, 4294901760
          %574 = vmatprep.subr.mxu0 %v573
          %v575 = vand.u32 %v461, 4294901760
          %576 = vmatpush1.msra.mxu0 %v575
          %577 = vmatprep.subr.mxu0 0.0
          %578 = vmatpush1.msra.mxu0 0.0
          %579 = vmatprep.subr.mxu0 0.0
          %580 = vmatpush1.msra.mxu0 0.0
          %581 = vmatprep.subr.mxu0 0.0
          %582 = vmatpush1.msra.mxu0 0.0
          %583 = vmatprep.subr.mxu0 0.0
          %584 = vmatpush1.msra.mxu0 0.0
          %585 = vmatprep.subr.mxu0 0.0
          %586 = vmatpush1.msra.mxu0 0.0
          %587 = vmatprep.subr.mxu0 0.0
          %588 = vmatpush1.msra.mxu0 0.0
          %589 = vmatprep.subr.mxu0 0.0
          %590 = vmatpush1.msra.mxu0 0.0
          %591 = vmatprep.subr.mxu0 0.0
          %592 = vmatpush1.msra.mxu0 0.0
          %593 = vmatprep.subr.mxu0 0.0
          %594 = vmatpush1.msra.mxu0 0.0
          %595 = vmatprep.subr.mxu0 0.0
          %596 = vmatpush1.msra.mxu0 0.0
          %597 = vmatprep.subr.mxu0 0.0
          %598 = vmatpush1.msra.mxu0 0.0
          %599 = vmatprep.subr.mxu0 0.0
          %600 = vmatpush1.msra.mxu0 0.0
          %601 = vmatprep.subr.mxu0 0.0
          %602 = vmatpush1.msra.mxu0 0.0
          %603 = vmatprep.subr.mxu0 0.0
          %604 = vmatpush1.msra.mxu0 0.0
          %605 = vmatprep.subr.mxu0 0.0
          %606 = vmatpush1.msra.mxu0 0.0
          %607 = vmatprep.subr.mxu0 0.0
          %608 = vmatpush1.msra.mxu0 0.0
          %609 = vmatprep.mubr.f32.mxu0 0.0
          %v610 = vand.u32 %v507, 4294901760
          %v611 = vsub.f32 %v507, %v610
          %v612 = vand.u32 %v611, 4294901760
          %v613 = vsub.f32 %v611, %v612
          %v614 = vand.u32 %v613, 4294901760
          %615 = vmatmul.mubr.f32.gmra.mrb[0].mxu0 %v614
          %v616 = vpop.f32.mrb[0].mxu0
          %v617 = vadd.f32 0.0, %v616
          %v618 = vpop.f32.mrb[0].mxu0
          %v619 = vadd.f32 0.0, %v618
          %620 = vdwg.mxu0
          %v621 = vand.u32 %v402, 4294901760
          %v622 = vsub.f32 %v402, %v621
          %v623 = vand.u32 %v622, 4294901760
          %v624 = vsub.f32 %v622, %v623
          %v625 = vand.u32 %v624, 4294901760
          %626 = vmatprep.subr.mxu0 %v625
          %v627 = vand.u32 %v401, 4294901760
          %v628 = vsub.f32 %v401, %v627
          %v629 = vand.u32 %v628, 4294901760
          %v630 = vsub.f32 %v628, %v629
          %v631 = vand.u32 %v630, 4294901760
          %632 = vmatpush1.msra.mxu0 %v631
          %v633 = vand.u32 %v406, 4294901760
          %v634 = vsub.f32 %v406, %v633
          %v635 = vand.u32 %v634, 4294901760
          %v636 = vsub.f32 %v634, %v635
          %v637 = vand.u32 %v636, 4294901760
          %638 = vmatprep.subr.mxu0 %v637
          %v639 = vand.u32 %v405, 4294901760
          %v640 = vsub.f32 %v405, %v639
          %v641 = vand.u32 %v640, 4294901760
          %v642 = vsub.f32 %v640, %v641
          %v643 = vand.u32 %v642, 4294901760
          %644 = vmatpush1.msra.mxu0 %v643
          %v645 = vand.u32 %v410, 4294901760
          %v646 = vsub.f32 %v410, %v645
          %v647 = vand.u32 %v646, 4294901760
          %v648 = vsub.f32 %v646, %v647
          %v649 = vand.u32 %v648, 4294901760
          %650 = vmatprep.subr.mxu0 %v649
          %v651 = vand.u32 %v409, 4294901760
          %v652 = vsub.f32 %v409, %v651
          %v653 = vand.u32 %v652, 4294901760
          %v654 = vsub.f32 %v652, %v653
          %v655 = vand.u32 %v654, 4294901760
          %656 = vmatpush1.msra.mxu0 %v655
          %v657 = vand.u32 %v414, 4294901760
          %v658 = vsub.f32 %v414, %v657
          %v659 = vand.u32 %v658, 4294901760
          %v660 = vsub.f32 %v658, %v659
          %v661 = vand.u32 %v660, 4294901760
          %662 = vmatprep.subr.mxu0 %v661
          %v663 = vand.u32 %v413, 4294901760
          %v664 = vsub.f32 %v413, %v663
          %v665 = vand.u32 %v664, 4294901760
          %v666 = vsub.f32 %v664, %v665
          %v667 = vand.u32 %v666, 4294901760
          %668 = vmatpush1.msra.mxu0 %v667
          %v669 = vand.u32 %v418, 4294901760
          %v670 = vsub.f32 %v418, %v669
          %v671 = vand.u32 %v670, 4294901760
          %v672 = vsub.f32 %v670, %v671
          %v673 = vand.u32 %v672, 4294901760
          %674 = vmatprep.subr.mxu0 %v673
          %v675 = vand.u32 %v417, 4294901760
          %v676 = vsub.f32 %v417, %v675
          %v677 = vand.u32 %v676, 4294901760
          %v678 = vsub.f32 %v676, %v677
          %v679 = vand.u32 %v678, 4294901760
          %680 = vmatpush1.msra.mxu0 %v679
          %v681 = vand.u32 %v422, 4294901760
          %v682 = vsub.f32 %v422, %v681
          %v683 = vand.u32 %v682, 4294901760
          %v684 = vsub.f32 %v682, %v683
          %v685 = vand.u32 %v684, 4294901760
          %686 = vmatprep.subr.mxu0 %v685
          %v687 = vand.u32 %v421, 4294901760
          %v688 = vsub.f32 %v421, %v687
          %v689 = vand.u32 %v688, 4294901760
          %v690 = vsub.f32 %v688, %v689
          %v691 = vand.u32 %v690, 4294901760
          %692 = vmatpush1.msra.mxu0 %v691
          %v693 = vand.u32 %v426, 4294901760
          %v694 = vsub.f32 %v426, %v693
          %v695 = vand.u32 %v694, 4294901760
          %v696 = vsub.f32 %v694, %v695
          %v697 = vand.u32 %v696, 4294901760
          %698 = vmatprep.subr.mxu0 %v697
          %v699 = vand.u32 %v425, 4294901760
          %v700 = vsub.f32 %v425, %v699
          %v701 = vand.u32 %v700, 4294901760
          %v702 = vsub.f32 %v700, %v701
          %v703 = vand.u32 %v702, 4294901760
          %704 = vmatpush1.msra.mxu0 %v703
          %v705 = vand.u32 %v430, 4294901760
          %v706 = vsub.f32 %v430, %v705
          %v707 = vand.u32 %v706, 4294901760
          %v708 = vsub.f32 %v706, %v707
          %v709 = vand.u32 %v708, 4294901760
          %710 = vmatprep.subr.mxu0 %v709
          %v711 = vand.u32 %v429, 4294901760
          %v712 = vsub.f32 %v429, %v711
          %v713 = vand.u32 %v712, 4294901760
          %v714 = vsub.f32 %v712, %v713
          %v715 = vand.u32 %v714, 4294901760
          %716 = vmatpush1.msra.mxu0 %v715
          %v717 = vand.u32 %v434, 4294901760
          %v718 = vsub.f32 %v434, %v717
          %v719 = vand.u32 %v718, 4294901760
          %v720 = vsub.f32 %v718, %v719
          %v721 = vand.u32 %v720, 4294901760
          %722 = vmatprep.subr.mxu0 %v721
          %v723 = vand.u32 %v433, 4294901760
          %v724 = vsub.f32 %v433, %v723
          %v725 = vand.u32 %v724, 4294901760
          %v726 = vsub.f32 %v724, %v725
          %v727 = vand.u32 %v726, 4294901760
          %728 = vmatpush1.msra.mxu0 %v727
          %v729 = vand.u32 %v438, 4294901760
          %v730 = vsub.f32 %v438, %v729
          %v731 = vand.u32 %v730, 4294901760
          %v732 = vsub.f32 %v730, %v731
          %v733 = vand.u32 %v732, 4294901760
          %734 = vmatprep.subr.mxu0 %v733
          %v735 = vand.u32 %v437, 4294901760
          %v736 = vsub.f32 %v437, %v735
          %v737 = vand.u32 %v736, 4294901760
          %v738 = vsub.f32 %v736, %v737
          %v739 = vand.u32 %v738, 4294901760
          %740 = vmatpush1.msra.mxu0 %v739
          %v741 = vand.u32 %v442, 4294901760
          %v742 = vsub.f32 %v442, %v741
          %v743 = vand.u32 %v742, 4294901760
          %v744 = vsub.f32 %v742, %v743
          %v745 = vand.u32 %v744, 4294901760
          %746 = vmatprep.subr.mxu0 %v745
          %v747 = vand.u32 %v441, 4294901760
          %v748 = vsub.f32 %v441, %v747
          %v749 = vand.u32 %v748, 4294901760
          %v750 = vsub.f32 %v748, %v749
          %v751 = vand.u32 %v750, 4294901760
          %752 = vmatpush1.msra.mxu0 %v751
          %v753 = vand.u32 %v446, 4294901760
          %v754 = vsub.f32 %v446, %v753
          %v755 = vand.u32 %v754, 4294901760
          %v756 = vsub.f32 %v754, %v755
          %v757 = vand.u32 %v756, 4294901760
          %758 = vmatprep.subr.mxu0 %v757
          %v759 = vand.u32 %v445, 4294901760
          %v760 = vsub.f32 %v445, %v759
          %v761 = vand.u32 %v760, 4294901760
          %v762 = vsub.f32 %v760, %v761
          %v763 = vand.u32 %v762, 4294901760
          %764 = vmatpush1.msra.mxu0 %v763
          %v765 = vand.u32 %v450, 4294901760
          %v766 = vsub.f32 %v450, %v765
          %v767 = vand.u32 %v766, 4294901760
          %v768 = vsub.f32 %v766, %v767
          %v769 = vand.u32 %v768, 4294901760
          %770 = vmatprep.subr.mxu0 %v769
          %v771 = vand.u32 %v449, 4294901760
          %v772 = vsub.f32 %v449, %v771
          %v773 = vand.u32 %v772, 4294901760
          %v774 = vsub.f32 %v772, %v773
          %v775 = vand.u32 %v774, 4294901760
          %776 = vmatpush1.msra.mxu0 %v775
          %v777 = vand.u32 %v454, 4294901760
          %v778 = vsub.f32 %v454, %v777
          %v779 = vand.u32 %v778, 4294901760
          %v780 = vsub.f32 %v778, %v779
          %v781 = vand.u32 %v780, 4294901760
          %782 = vmatprep.subr.mxu0 %v781
          %v783 = vand.u32 %v453, 4294901760
          %v784 = vsub.f32 %v453, %v783
          %v785 = vand.u32 %v784, 4294901760
          %v786 = vsub.f32 %v784, %v785
          %v787 = vand.u32 %v786, 4294901760
          %788 = vmatpush1.msra.mxu0 %v787
          %v789 = vand.u32 %v458, 4294901760
          %v790 = vsub.f32 %v458, %v789
          %v791 = vand.u32 %v790, 4294901760
          %v792 = vsub.f32 %v790, %v791
          %v793 = vand.u32 %v792, 4294901760
          %794 = vmatprep.subr.mxu0 %v793
          %v795 = vand.u32 %v457, 4294901760
          %v796 = vsub.f32 %v457, %v795
          %v797 = vand.u32 %v796, 4294901760
          %v798 = vsub.f32 %v796, %v797
          %v799 = vand.u32 %v798, 4294901760
          %800 = vmatpush1.msra.mxu0 %v799
          %v801 = vand.u32 %v462, 4294901760
          %v802 = vsub.f32 %v462, %v801
          %v803 = vand.u32 %v802, 4294901760
          %v804 = vsub.f32 %v802, %v803
          %v805 = vand.u32 %v804, 4294901760
          %806 = vmatprep.subr.mxu0 %v805
          %v807 = vand.u32 %v461, 4294901760
          %v808 = vsub.f32 %v461, %v807
          %v809 = vand.u32 %v808, 4294901760
          %v810 = vsub.f32 %v808, %v809
          %v811 = vand.u32 %v810, 4294901760
          %812 = vmatpush1.msra.mxu0 %v811
          %813 = vmatprep.subr.mxu0 0.0
          %814 = vmatpush1.msra.mxu0 0.0
          %815 = vmatprep.subr.mxu0 0.0
          %816 = vmatpush1.msra.mxu0 0.0
          %817 = vmatprep.subr.mxu0 0.0
          %818 = vmatpush1.msra.mxu0 0.0
          %819 = vmatprep.subr.mxu0 0.0
          %820 = vmatpush1.msra.mxu0 0.0
          %821 = vmatprep.subr.mxu0 0.0
          %822 = vmatpush1.msra.mxu0 0.0
          %823 = vmatprep.subr.mxu0 0.0
          %824 = vmatpush1.msra.mxu0 0.0
          %825 = vmatprep.subr.mxu0 0.0
          %826 = vmatpush1.msra.mxu0 0.0
          %827 = vmatprep.subr.mxu0 0.0
          %828 = vmatpush1.msra.mxu0 0.0
          %829 = vmatprep.subr.mxu0 0.0
          %830 = vmatpush1.msra.mxu0 0.0
          %831 = vmatprep.subr.mxu0 0.0
          %832 = vmatpush1.msra.mxu0 0.0
          %833 = vmatprep.subr.mxu0 0.0
          %834 = vmatpush1.msra.mxu0 0.0
          %835 = vmatprep.subr.mxu0 0.0
          %836 = vmatpush1.msra.mxu0 0.0
          %837 = vmatprep.subr.mxu0 0.0
          %838 = vmatpush1.msra.mxu0 0.0
          %839 = vmatprep.subr.mxu0 0.0
          %840 = vmatpush1.msra.mxu0 0.0
          %841 = vmatprep.subr.mxu0 0.0
          %842 = vmatpush1.msra.mxu0 0.0
          %843 = vmatprep.subr.mxu0 0.0
          %844 = vmatpush1.msra.mxu0 0.0
          %845 = vmatprep.mubr.f32.mxu0 0.0
          %v846 = vand.u32 %v507, 4294901760
          %847 = vmatmul.mubr.f32.gmra.mrb[0].mxu0 %v846
          %v848 = vpop.f32.mrb[0].mxu0
          %v849 = vadd.f32 %v617, %v848
          %v850 = vpop.f32.mrb[0].mxu0
          %v851 = vadd.f32 %v619, %v850
          %852 = vdwg.mxu0
          %v853 = vand.u32 %v402, 4294901760
          %v854 = vsub.f32 %v402, %v853
          %855 = vmatprep.subr.mxu0 %v854
          %v856 = vand.u32 %v401, 4294901760
          %v857 = vsub.f32 %v401, %v856
          %858 = vmatpush1.msra.mxu0 %v857
          %v859 = vand.u32 %v406, 4294901760
          %v860 = vsub.f32 %v406, %v859
          %861 = vmatprep.subr.mxu0 %v860
          %v862 = vand.u32 %v405, 4294901760
          %v863 = vsub.f32 %v405, %v862
          %864 = vmatpush1.msra.mxu0 %v863
          %v865 = vand.u32 %v410, 4294901760
          %v866 = vsub.f32 %v410, %v865
          %867 = vmatprep.subr.mxu0 %v866
          %v868 = vand.u32 %v409, 4294901760
          %v869 = vsub.f32 %v409, %v868
          %870 = vmatpush1.msra.mxu0 %v869
          %v871 = vand.u32 %v414, 4294901760
          %v872 = vsub.f32 %v414, %v871
          %873 = vmatprep.subr.mxu0 %v872
          %v874 = vand.u32 %v413, 4294901760
          %v875 = vsub.f32 %v413, %v874
          %876 = vmatpush1.msra.mxu0 %v875
          %v877 = vand.u32 %v418, 4294901760
          %v878 = vsub.f32 %v418, %v877
          %879 = vmatprep.subr.mxu0 %v878
          %v880 = vand.u32 %v417, 4294901760
          %v881 = vsub.f32 %v417, %v880
          %882 = vmatpush1.msra.mxu0 %v881
          %v883 = vand.u32 %v422, 4294901760
          %v884 = vsub.f32 %v422, %v883
          %885 = vmatprep.subr.mxu0 %v884
          %v886 = vand.u32 %v421, 4294901760
          %v887 = vsub.f32 %v421, %v886
          %888 = vmatpush1.msra.mxu0 %v887
          %v889 = vand.u32 %v426, 4294901760
          %v890 = vsub.f32 %v426, %v889
          %891 = vmatprep.subr.mxu0 %v890
          %v892 = vand.u32 %v425, 4294901760
          %v893 = vsub.f32 %v425, %v892
          %894 = vmatpush1.msra.mxu0 %v893
          %v895 = vand.u32 %v430, 4294901760
          %v896 = vsub.f32 %v430, %v895
          %897 = vmatprep.subr.mxu0 %v896
          %v898 = vand.u32 %v429, 4294901760
          %v899 = vsub.f32 %v429, %v898
          %900 = vmatpush1.msra.mxu0 %v899
          %v901 = vand.u32 %v434, 4294901760
          %v902 = vsub.f32 %v434, %v901
          %903 = vmatprep.subr.mxu0 %v902
          %v904 = vand.u32 %v433, 4294901760
          %v905 = vsub.f32 %v433, %v904
          %906 = vmatpush1.msra.mxu0 %v905
          %v907 = vand.u32 %v438, 4294901760
          %v908 = vsub.f32 %v438, %v907
          %909 = vmatprep.subr.mxu0 %v908
          %v910 = vand.u32 %v437, 4294901760
          %v911 = vsub.f32 %v437, %v910
          %912 = vmatpush1.msra.mxu0 %v911
          %v913 = vand.u32 %v442, 4294901760
          %v914 = vsub.f32 %v442, %v913
          %915 = vmatprep.subr.mxu0 %v914
          %v916 = vand.u32 %v441, 4294901760
          %v917 = vsub.f32 %v441, %v916
          %918 = vmatpush1.msra.mxu0 %v917
          %v919 = vand.u32 %v446, 4294901760
          %v920 = vsub.f32 %v446, %v919
          %921 = vmatprep.subr.mxu0 %v920
          %v922 = vand.u32 %v445, 4294901760
          %v923 = vsub.f32 %v445, %v922
          %924 = vmatpush1.msra.mxu0 %v923
          %v925 = vand.u32 %v450, 4294901760
          %v926 = vsub.f32 %v450, %v925
          %927 = vmatprep.subr.mxu0 %v926
          %v928 = vand.u32 %v449, 4294901760
          %v929 = vsub.f32 %v449, %v928
          %930 = vmatpush1.msra.mxu0 %v929
          %v931 = vand.u32 %v454, 4294901760
          %v932 = vsub.f32 %v454, %v931
          %933 = vmatprep.subr.mxu0 %v932
          %v934 = vand.u32 %v453, 4294901760
          %v935 = vsub.f32 %v453, %v934
          %936 = vmatpush1.msra.mxu0 %v935
          %v937 = vand.u32 %v458, 4294901760
          %v938 = vsub.f32 %v458, %v937
          %939 = vmatprep.subr.mxu0 %v938
          %v940 = vand.u32 %v457, 4294901760
          %v941 = vsub.f32 %v457, %v940
          %942 = vmatpush1.msra.mxu0 %v941
          %v943 = vand.u32 %v462, 4294901760
          %v944 = vsub.f32 %v462, %v943
          %945 = vmatprep.subr.mxu0 %v944
          %v946 = vand.u32 %v461, 4294901760
          %v947 = vsub.f32 %v461, %v946
          %948 = vmatpush1.msra.mxu0 %v947
          %949 = vmatprep.subr.mxu0 0.0
          %950 = vmatpush1.msra.mxu0 0.0
          %951 = vmatprep.subr.mxu0 0.0
          %952 = vmatpush1.msra.mxu0 0.0
          %953 = vmatprep.subr.mxu0 0.0
          %954 = vmatpush1.msra.mxu0 0.0
          %955 = vmatprep.subr.mxu0 0.0
          %956 = vmatpush1.msra.mxu0 0.0
          %957 = vmatprep.subr.mxu0 0.0
          %958 = vmatpush1.msra.mxu0 0.0
          %959 = vmatprep.subr.mxu0 0.0
          %960 = vmatpush1.msra.mxu0 0.0
          %961 = vmatprep.subr.mxu0 0.0
          %962 = vmatpush1.msra.mxu0 0.0
          %963 = vmatprep.subr.mxu0 0.0
          %964 = vmatpush1.msra.mxu0 0.0
          %965 = vmatprep.subr.mxu0 0.0
          %966 = vmatpush1.msra.mxu0 0.0
          %967 = vmatprep.subr.mxu0 0.0
          %968 = vmatpush1.msra.mxu0 0.0
          %969 = vmatprep.subr.mxu0 0.0
          %970 = vmatpush1.msra.mxu0 0.0
          %971 = vmatprep.subr.mxu0 0.0
          %972 = vmatpush1.msra.mxu0 0.0
          %973 = vmatprep.subr.mxu0 0.0
          %974 = vmatpush1.msra.mxu0 0.0
          %975 = vmatprep.subr.mxu0 0.0
          %976 = vmatpush1.msra.mxu0 0.0
          %977 = vmatprep.subr.mxu0 0.0
          %978 = vmatpush1.msra.mxu0 0.0
          %979 = vmatprep.subr.mxu0 0.0
          %980 = vmatpush1.msra.mxu0 0.0
          %981 = vmatprep.mubr.f32.mxu0 0.0
          %v982 = vand.u32 %v507, 4294901760
          %v983 = vsub.f32 %v507, %v982
          %984 = vmatmul.mubr.f32.gmra.mrb[0].mxu0 %v983
          %v985 = vpop.f32.mrb[0].mxu0
          %v986 = vadd.f32 %v849, %v985
          %v987 = vpop.f32.mrb[0].mxu0
          %v988 = vadd.f32 %v851, %v987
          %989 = vdwg.mxu0
          %v990 = vand.u32 %v402, 4294901760
          %991 = vmatprep.subr.mxu0 %v990
          %v992 = vand.u32 %v401, 4294901760
          %993 = vmatpush1.msra.mxu0 %v992
          %v994 = vand.u32 %v406, 4294901760
          %995 = vmatprep.subr.mxu0 %v994
          %v996 = vand.u32 %v405, 4294901760
          %997 = vmatpush1.msra.mxu0 %v996
          %v998 = vand.u32 %v410, 4294901760
          %999 = vmatprep.subr.mxu0 %v998
          %v1000 = vand.u32 %v409, 4294901760
          %1001 = vmatpush1.msra.mxu0 %v1000
          %v1002 = vand.u32 %v414, 4294901760
          %1003 = vmatprep.subr.mxu0 %v1002
          %v1004 = vand.u32 %v413, 4294901760
          %1005 = vmatpush1.msra.mxu0 %v1004
          %v1006 = vand.u32 %v418, 4294901760
          %1007 = vmatprep.subr.mxu0 %v1006
          %v1008 = vand.u32 %v417, 4294901760
          %1009 = vmatpush1.msra.mxu0 %v1008
          %v1010 = vand.u32 %v422, 4294901760
          %1011 = vmatprep.subr.mxu0 %v1010
          %v1012 = vand.u32 %v421, 4294901760
          %1013 = vmatpush1.msra.mxu0 %v1012
          %v1014 = vand.u32 %v426, 4294901760
          %1015 = vmatprep.subr.mxu0 %v1014
          %v1016 = vand.u32 %v425, 4294901760
          %1017 = vmatpush1.msra.mxu0 %v1016
          %v1018 = vand.u32 %v430, 4294901760
          %1019 = vmatprep.subr.mxu0 %v1018
          %v1020 = vand.u32 %v429, 4294901760
          %1021 = vmatpush1.msra.mxu0 %v1020
          %v1022 = vand.u32 %v434, 4294901760
          %1023 = vmatprep.subr.mxu0 %v1022
          %v1024 = vand.u32 %v433, 4294901760
          %1025 = vmatpush1.msra.mxu0 %v1024
          %v1026 = vand.u32 %v438, 4294901760
          %1027 = vmatprep.subr.mxu0 %v1026
          %v1028 = vand.u32 %v437, 4294901760
          %1029 = vmatpush1.msra.mxu0 %v1028
          %v1030 = vand.u32 %v442, 4294901760
          %1031 = vmatprep.subr.mxu0 %v1030
          %v1032 = vand.u32 %v441, 4294901760
          %1033 = vmatpush1.msra.mxu0 %v1032
          %v1034 = vand.u32 %v446, 4294901760
          %1035 = vmatprep.subr.mxu0 %v1034
          %v1036 = vand.u32 %v445, 4294901760
          %1037 = vmatpush1.msra.mxu0 %v1036
          %v1038 = vand.u32 %v450, 4294901760
          %1039 = vmatprep.subr.mxu0 %v1038
          %v1040 = vand.u32 %v449, 4294901760
          %1041 = vmatpush1.msra.mxu0 %v1040
          %v1042 = vand.u32 %v454, 4294901760
          %1043 = vmatprep.subr.mxu0 %v1042
          %v1044 = vand.u32 %v453, 4294901760
          %1045 = vmatpush1.msra.mxu0 %v1044
          %v1046 = vand.u32 %v458, 4294901760
          %1047 = vmatprep.subr.mxu0 %v1046
          %v1048 = vand.u32 %v457, 4294901760
          %1049 = vmatpush1.msra.mxu0 %v1048
          %v1050 = vand.u32 %v462, 4294901760
          %1051 = vmatprep.subr.mxu0 %v1050
          %v1052 = vand.u32 %v461, 4294901760
          %1053 = vmatpush1.msra.mxu0 %v1052
          %1054 = vmatprep.subr.mxu0 0.0
          %1055 = vmatpush1.msra.mxu0 0.0
          %1056 = vmatprep.subr.mxu0 0.0
          %1057 = vmatpush1.msra.mxu0 0.0
          %1058 = vmatprep.subr.mxu0 0.0
          %1059 = vmatpush1.msra.mxu0 0.0
          %1060 = vmatprep.subr.mxu0 0.0
          %1061 = vmatpush1.msra.mxu0 0.0
          %1062 = vmatprep.subr.mxu0 0.0
          %1063 = vmatpush1.msra.mxu0 0.0
          %1064 = vmatprep.subr.mxu0 0.0
          %1065 = vmatpush1.msra.mxu0 0.0
          %1066 = vmatprep.subr.mxu0 0.0
          %1067 = vmatpush1.msra.mxu0 0.0
          %1068 = vmatprep.subr.mxu0 0.0
          %1069 = vmatpush1.msra.mxu0 0.0
          %1070 = vmatprep.subr.mxu0 0.0
          %1071 = vmatpush1.msra.mxu0 0.0
          %1072 = vmatprep.subr.mxu0 0.0
          %1073 = vmatpush1.msra.mxu0 0.0
          %1074 = vmatprep.subr.mxu0 0.0
          %1075 = vmatpush1.msra.mxu0 0.0
          %1076 = vmatprep.subr.mxu0 0.0
          %1077 = vmatpush1.msra.mxu0 0.0
          %1078 = vmatprep.subr.mxu0 0.0
          %1079 = vmatpush1.msra.mxu0 0.0
          %1080 = vmatprep.subr.mxu0 0.0
          %1081 = vmatpush1.msra.mxu0 0.0
          %1082 = vmatprep.subr.mxu0 0.0
          %1083 = vmatpush1.msra.mxu0 0.0
          %1084 = vmatprep.subr.mxu0 0.0
          %1085 = vmatpush1.msra.mxu0 0.0
          %1086 = vmatprep.mubr.f32.mxu0 0.0
          %v1087 = vand.u32 %v507, 4294901760
          %v1088 = vsub.f32 %v507, %v1087
          %v1089 = vand.u32 %v1088, 4294901760
          %1090 = vmatmul.mubr.f32.gmra.mrb[0].mxu0 %v1089
          %v1091 = vpop.f32.mrb[0].mxu0
          %v1092 = vadd.f32 %v986, %v1091
          %v1093 = vpop.f32.mrb[0].mxu0
          %v1094 = vadd.f32 %v988, %v1093
          %1095 = vdwg.mxu0
          %v1096 = vand.u32 %v402, 4294901760
          %v1097 = vsub.f32 %v402, %v1096
          %v1098 = vand.u32 %v1097, 4294901760
          %1099 = vmatprep.subr.mxu0 %v1098
          %v1100 = vand.u32 %v401, 4294901760
          %v1101 = vsub.f32 %v401, %v1100
          %v1102 = vand.u32 %v1101, 4294901760
          %1103 = vmatpush1.msra.mxu0 %v1102
          %v1104 = vand.u32 %v406, 4294901760
          %v1105 = vsub.f32 %v406, %v1104
          %v1106 = vand.u32 %v1105, 4294901760
          %1107 = vmatprep.subr.mxu0 %v1106
          %v1108 = vand.u32 %v405, 4294901760
          %v1109 = vsub.f32 %v405, %v1108
          %v1110 = vand.u32 %v1109, 4294901760
          %1111 = vmatpush1.msra.mxu0 %v1110
          %v1112 = vand.u32 %v410, 4294901760
          %v1113 = vsub.f32 %v410, %v1112
          %v1114 = vand.u32 %v1113, 4294901760
          %1115 = vmatprep.subr.mxu0 %v1114
          %v1116 = vand.u32 %v409, 4294901760
          %v1117 = vsub.f32 %v409, %v1116
          %v1118 = vand.u32 %v1117, 4294901760
          %1119 = vmatpush1.msra.mxu0 %v1118
          %v1120 = vand.u32 %v414, 4294901760
          %v1121 = vsub.f32 %v414, %v1120
          %v1122 = vand.u32 %v1121, 4294901760
          %1123 = vmatprep.subr.mxu0 %v1122
          %v1124 = vand.u32 %v413, 4294901760
          %v1125 = vsub.f32 %v413, %v1124
          %v1126 = vand.u32 %v1125, 4294901760
          %1127 = vmatpush1.msra.mxu0 %v1126
          %v1128 = vand.u32 %v418, 4294901760
          %v1129 = vsub.f32 %v418, %v1128
          %v1130 = vand.u32 %v1129, 4294901760
          %1131 = vmatprep.subr.mxu0 %v1130
          %v1132 = vand.u32 %v417, 4294901760
          %v1133 = vsub.f32 %v417, %v1132
          %v1134 = vand.u32 %v1133, 4294901760
          %1135 = vmatpush1.msra.mxu0 %v1134
          %v1136 = vand.u32 %v422, 4294901760
          %v1137 = vsub.f32 %v422, %v1136
          %v1138 = vand.u32 %v1137, 4294901760
          %1139 = vmatprep.subr.mxu0 %v1138
          %v1140 = vand.u32 %v421, 4294901760
          %v1141 = vsub.f32 %v421, %v1140
          %v1142 = vand.u32 %v1141, 4294901760
          %1143 = vmatpush1.msra.mxu0 %v1142
          %v1144 = vand.u32 %v426, 4294901760
          %v1145 = vsub.f32 %v426, %v1144
          %v1146 = vand.u32 %v1145, 4294901760
          %1147 = vmatprep.subr.mxu0 %v1146
          %v1148 = vand.u32 %v425, 4294901760
          %v1149 = vsub.f32 %v425, %v1148
          %v1150 = vand.u32 %v1149, 4294901760
          %1151 = vmatpush1.msra.mxu0 %v1150
          %v1152 = vand.u32 %v430, 4294901760
          %v1153 = vsub.f32 %v430, %v1152
          %v1154 = vand.u32 %v1153, 4294901760
          %1155 = vmatprep.subr.mxu0 %v1154
          %v1156 = vand.u32 %v429, 4294901760
          %v1157 = vsub.f32 %v429, %v1156
          %v1158 = vand.u32 %v1157, 4294901760
          %1159 = vmatpush1.msra.mxu0 %v1158
          %v1160 = vand.u32 %v434, 4294901760
          %v1161 = vsub.f32 %v434, %v1160
          %v1162 = vand.u32 %v1161, 4294901760
          %1163 = vmatprep.subr.mxu0 %v1162
          %v1164 = vand.u32 %v433, 4294901760
          %v1165 = vsub.f32 %v433, %v1164
          %v1166 = vand.u32 %v1165, 4294901760
          %1167 = vmatpush1.msra.mxu0 %v1166
          %v1168 = vand.u32 %v438, 4294901760
          %v1169 = vsub.f32 %v438, %v1168
          %v1170 = vand.u32 %v1169, 4294901760
          %1171 = vmatprep.subr.mxu0 %v1170
          %v1172 = vand.u32 %v437, 4294901760
          %v1173 = vsub.f32 %v437, %v1172
          %v1174 = vand.u32 %v1173, 4294901760
          %1175 = vmatpush1.msra.mxu0 %v1174
          %v1176 = vand.u32 %v442, 4294901760
          %v1177 = vsub.f32 %v442, %v1176
          %v1178 = vand.u32 %v1177, 4294901760
          %1179 = vmatprep.subr.mxu0 %v1178
          %v1180 = vand.u32 %v441, 4294901760
          %v1181 = vsub.f32 %v441, %v1180
          %v1182 = vand.u32 %v1181, 4294901760
          %1183 = vmatpush1.msra.mxu0 %v1182
          %v1184 = vand.u32 %v446, 4294901760
          %v1185 = vsub.f32 %v446, %v1184
          %v1186 = vand.u32 %v1185, 4294901760
          %1187 = vmatprep.subr.mxu0 %v1186
          %v1188 = vand.u32 %v445, 4294901760
          %v1189 = vsub.f32 %v445, %v1188
          %v1190 = vand.u32 %v1189, 4294901760
          %1191 = vmatpush1.msra.mxu0 %v1190
          %v1192 = vand.u32 %v450, 4294901760
          %v1193 = vsub.f32 %v450, %v1192
          %v1194 = vand.u32 %v1193, 4294901760
          %1195 = vmatprep.subr.mxu0 %v1194
          %v1196 = vand.u32 %v449, 4294901760
          %v1197 = vsub.f32 %v449, %v1196
          %v1198 = vand.u32 %v1197, 4294901760
          %1199 = vmatpush1.msra.mxu0 %v1198
          %v1200 = vand.u32 %v454, 4294901760
          %v1201 = vsub.f32 %v454, %v1200
          %v1202 = vand.u32 %v1201, 4294901760
          %1203 = vmatprep.subr.mxu0 %v1202
          %v1204 = vand.u32 %v453, 4294901760
          %v1205 = vsub.f32 %v453, %v1204
          %v1206 = vand.u32 %v1205, 4294901760
          %1207 = vmatpush1.msra.mxu0 %v1206
          %v1208 = vand.u32 %v458, 4294901760
          %v1209 = vsub.f32 %v458, %v1208
          %v1210 = vand.u32 %v1209, 4294901760
          %1211 = vmatprep.subr.mxu0 %v1210
          %v1212 = vand.u32 %v457, 4294901760
          %v1213 = vsub.f32 %v457, %v1212
          %v1214 = vand.u32 %v1213, 4294901760
          %1215 = vmatpush1.msra.mxu0 %v1214
          %v1216 = vand.u32 %v462, 4294901760
          %v1217 = vsub.f32 %v462, %v1216
          %v1218 = vand.u32 %v1217, 4294901760
          %1219 = vmatprep.subr.mxu0 %v1218
          %v1220 = vand.u32 %v461, 4294901760
          %v1221 = vsub.f32 %v461, %v1220
          %v1222 = vand.u32 %v1221, 4294901760
          %1223 = vmatpush1.msra.mxu0 %v1222
          %1224 = vmatprep.subr.mxu0 0.0
          %1225 = vmatpush1.msra.mxu0 0.0
          %1226 = vmatprep.subr.mxu0 0.0
          %1227 = vmatpush1.msra.mxu0 0.0
          %1228 = vmatprep.subr.mxu0 0.0
          %1229 = vmatpush1.msra.mxu0 0.0
          %1230 = vmatprep.subr.mxu0 0.0
          %1231 = vmatpush1.msra.mxu0 0.0
          %1232 = vmatprep.subr.mxu0 0.0
          %1233 = vmatpush1.msra.mxu0 0.0
          %1234 = vmatprep.subr.mxu0 0.0
          %1235 = vmatpush1.msra.mxu0 0.0
          %1236 = vmatprep.subr.mxu0 0.0
          %1237 = vmatpush1.msra.mxu0 0.0
          %1238 = vmatprep.subr.mxu0 0.0
          %1239 = vmatpush1.msra.mxu0 0.0
          %1240 = vmatprep.subr.mxu0 0.0
          %1241 = vmatpush1.msra.mxu0 0.0
          %1242 = vmatprep.subr.mxu0 0.0
          %1243 = vmatpush1.msra.mxu0 0.0
          %1244 = vmatprep.subr.mxu0 0.0
          %1245 = vmatpush1.msra.mxu0 0.0
          %1246 = vmatprep.subr.mxu0 0.0
          %1247 = vmatpush1.msra.mxu0 0.0
          %1248 = vmatprep.subr.mxu0 0.0
          %1249 = vmatpush1.msra.mxu0 0.0
          %1250 = vmatprep.subr.mxu0 0.0
          %1251 = vmatpush1.msra.mxu0 0.0
          %1252 = vmatprep.subr.mxu0 0.0
          %1253 = vmatpush1.msra.mxu0 0.0
          %1254 = vmatprep.subr.mxu0 0.0
          %1255 = vmatpush1.msra.mxu0 0.0
          %1256 = vmatprep.mubr.f32.mxu0 0.0
          %v1257 = vand.u32 %v507, 4294901760
          %1258 = vmatmul.mubr.f32.gmra.mrb[0].mxu0 %v1257
          %v1259 = vpop.f32.mrb[0].mxu0
          %v1260 = vadd.f32 %v1092, %v1259
          %v1261 = vpop.f32.mrb[0].mxu0
          %v1262 = vadd.f32 %v1094, %v1261
          %1263 = vdwg.mxu0
          %v1264 = vand.u32 %v402, 4294901760
          %1265 = vmatprep.subr.mxu0 %v1264
          %v1266 = vand.u32 %v401, 4294901760
          %1267 = vmatpush1.msra.mxu0 %v1266
          %v1268 = vand.u32 %v406, 4294901760
          %1269 = vmatprep.subr.mxu0 %v1268
          %v1270 = vand.u32 %v405, 4294901760
          %1271 = vmatpush1.msra.mxu0 %v1270
          %v1272 = vand.u32 %v410, 4294901760
          %1273 = vmatprep.subr.mxu0 %v1272
          %v1274 = vand.u32 %v409, 4294901760
          %1275 = vmatpush1.msra.mxu0 %v1274
          %v1276 = vand.u32 %v414, 4294901760
          %1277 = vmatprep.subr.mxu0 %v1276
          %v1278 = vand.u32 %v413, 4294901760
          %1279 = vmatpush1.msra.mxu0 %v1278
          %v1280 = vand.u32 %v418, 4294901760
          %1281 = vmatprep.subr.mxu0 %v1280
          %v1282 = vand.u32 %v417, 4294901760
          %1283 = vmatpush1.msra.mxu0 %v1282
          %v1284 = vand.u32 %v422, 4294901760
          %1285 = vmatprep.subr.mxu0 %v1284
          %v1286 = vand.u32 %v421, 4294901760
          %1287 = vmatpush1.msra.mxu0 %v1286
          %v1288 = vand.u32 %v426, 4294901760
          %1289 = vmatprep.subr.mxu0 %v1288
          %v1290 = vand.u32 %v425, 4294901760
          %1291 = vmatpush1.msra.mxu0 %v1290
          %v1292 = vand.u32 %v430, 4294901760
          %1293 = vmatprep.subr.mxu0 %v1292
          %v1294 = vand.u32 %v429, 4294901760
          %1295 = vmatpush1.msra.mxu0 %v1294
          %v1296 = vand.u32 %v434, 4294901760
          %1297 = vmatprep.subr.mxu0 %v1296
          %v1298 = vand.u32 %v433, 4294901760
          %1299 = vmatpush1.msra.mxu0 %v1298
          %v1300 = vand.u32 %v438, 4294901760
          %1301 = vmatprep.subr.mxu0 %v1300
          %v1302 = vand.u32 %v437, 4294901760
          %1303 = vmatpush1.msra.mxu0 %v1302
          %v1304 = vand.u32 %v442, 4294901760
          %1305 = vmatprep.subr.mxu0 %v1304
          %v1306 = vand.u32 %v441, 4294901760
          %1307 = vmatpush1.msra.mxu0 %v1306
          %v1308 = vand.u32 %v446, 4294901760
          %1309 = vmatprep.subr.mxu0 %v1308
          %v1310 = vand.u32 %v445, 4294901760
          %1311 = vmatpush1.msra.mxu0 %v1310
          %v1312 = vand.u32 %v450, 4294901760
          %1313 = vmatprep.subr.mxu0 %v1312
          %v1314 = vand.u32 %v449, 4294901760
          %1315 = vmatpush1.msra.mxu0 %v1314
          %v1316 = vand.u32 %v454, 4294901760
          %1317 = vmatprep.subr.mxu0 %v1316
          %v1318 = vand.u32 %v453, 4294901760
          %1319 = vmatpush1.msra.mxu0 %v1318
          %v1320 = vand.u32 %v458, 4294901760
          %1321 = vmatprep.subr.mxu0 %v1320
          %v1322 = vand.u32 %v457, 4294901760
          %1323 = vmatpush1.msra.mxu0 %v1322
          %v1324 = vand.u32 %v462, 4294901760
          %1325 = vmatprep.subr.mxu0 %v1324
          %v1326 = vand.u32 %v461, 4294901760
          %1327 = vmatpush1.msra.mxu0 %v1326
          %1328 = vmatprep.subr.mxu0 0.0
          %1329 = vmatpush1.msra.mxu0 0.0
          %1330 = vmatprep.subr.mxu0 0.0
          %1331 = vmatpush1.msra.mxu0 0.0
          %1332 = vmatprep.subr.mxu0 0.0
          %1333 = vmatpush1.msra.mxu0 0.0
          %1334 = vmatprep.subr.mxu0 0.0
          %1335 = vmatpush1.msra.mxu0 0.0
          %1336 = vmatprep.subr.mxu0 0.0
          %1337 = vmatpush1.msra.mxu0 0.0
          %1338 = vmatprep.subr.mxu0 0.0
          %1339 = vmatpush1.msra.mxu0 0.0
          %1340 = vmatprep.subr.mxu0 0.0
          %1341 = vmatpush1.msra.mxu0 0.0
          %1342 = vmatprep.subr.mxu0 0.0
          %1343 = vmatpush1.msra.mxu0 0.0
          %1344 = vmatprep.subr.mxu0 0.0
          %1345 = vmatpush1.msra.mxu0 0.0
          %1346 = vmatprep.subr.mxu0 0.0
          %1347 = vmatpush1.msra.mxu0 0.0
          %1348 = vmatprep.subr.mxu0 0.0
          %1349 = vmatpush1.msra.mxu0 0.0
          %1350 = vmatprep.subr.mxu0 0.0
          %1351 = vmatpush1.msra.mxu0 0.0
          %1352 = vmatprep.subr.mxu0 0.0
          %1353 = vmatpush1.msra.mxu0 0.0
          %1354 = vmatprep.subr.mxu0 0.0
          %1355 = vmatpush1.msra.mxu0 0.0
          %1356 = vmatprep.subr.mxu0 0.0
          %1357 = vmatpush1.msra.mxu0 0.0
          %1358 = vmatprep.subr.mxu0 0.0
          %1359 = vmatpush1.msra.mxu0 0.0
          %1360 = vmatprep.mubr.f32.mxu0 0.0
          %v1361 = vand.u32 %v507, 4294901760
          %1362 = vmatmul.mubr.f32.gmra.mrb[0].mxu0 %v1361
          %v1363 = vpop.f32.mrb[0].mxu0
          %v1364 = vadd.f32 %v1260, %v1363
          %v1365 = vpop.f32.mrb[0].mxu0
          %v1366 = vadd.f32 %v1262, %v1365
          %1367 = vdwg.mxu0
          %v1368 = vand.u32 %v404, 4294901760
          %1369 = vmatprep.subr.mxu0 %v1368
          %v1370 = vand.u32 %v403, 4294901760
          %1371 = vmatpush1.msra.mxu0 %v1370
          %v1372 = vand.u32 %v408, 4294901760
          %1373 = vmatprep.subr.mxu0 %v1372
          %v1374 = vand.u32 %v407, 4294901760
          %1375 = vmatpush1.msra.mxu0 %v1374
          %v1376 = vand.u32 %v412, 4294901760
          %1377 = vmatprep.subr.mxu0 %v1376
          %v1378 = vand.u32 %v411, 4294901760
          %1379 = vmatpush1.msra.mxu0 %v1378
          %v1380 = vand.u32 %v416, 4294901760
          %1381 = vmatprep.subr.mxu0 %v1380
          %v1382 = vand.u32 %v415, 4294901760
          %1383 = vmatpush1.msra.mxu0 %v1382
          %v1384 = vand.u32 %v420, 4294901760
          %1385 = vmatprep.subr.mxu0 %v1384
          %v1386 = vand.u32 %v419, 4294901760
          %1387 = vmatpush1.msra.mxu0 %v1386
          %v1388 = vand.u32 %v424, 4294901760
          %1389 = vmatprep.subr.mxu0 %v1388
          %v1390 = vand.u32 %v423, 4294901760
          %1391 = vmatpush1.msra.mxu0 %v1390
          %v1392 = vand.u32 %v428, 4294901760
          %1393 = vmatprep.subr.mxu0 %v1392
          %v1394 = vand.u32 %v427, 4294901760
          %1395 = vmatpush1.msra.mxu0 %v1394
          %v1396 = vand.u32 %v432, 4294901760
          %1397 = vmatprep.subr.mxu0 %v1396
          %v1398 = vand.u32 %v431, 4294901760
          %1399 = vmatpush1.msra.mxu0 %v1398
          %v1400 = vand.u32 %v436, 4294901760
          %1401 = vmatprep.subr.mxu0 %v1400
          %v1402 = vand.u32 %v435, 4294901760
          %1403 = vmatpush1.msra.mxu0 %v1402
          %v1404 = vand.u32 %v440, 4294901760
          %1405 = vmatprep.subr.mxu0 %v1404
          %v1406 = vand.u32 %v439, 4294901760
          %1407 = vmatpush1.msra.mxu0 %v1406
          %v1408 = vand.u32 %v444, 4294901760
          %1409 = vmatprep.subr.mxu0 %v1408
          %v1410 = vand.u32 %v443, 4294901760
          %1411 = vmatpush1.msra.mxu0 %v1410
          %v1412 = vand.u32 %v448, 4294901760
          %1413 = vmatprep.subr.mxu0 %v1412
          %v1414 = vand.u32 %v447, 4294901760
          %1415 = vmatpush1.msra.mxu0 %v1414
          %v1416 = vand.u32 %v452, 4294901760
          %1417 = vmatprep.subr.mxu0 %v1416
          %v1418 = vand.u32 %v451, 4294901760
          %1419 = vmatpush1.msra.mxu0 %v1418
          %v1420 = vand.u32 %v456, 4294901760
          %1421 = vmatprep.subr.mxu0 %v1420
          %v1422 = vand.u32 %v455, 4294901760
          %1423 = vmatpush1.msra.mxu0 %v1422
          %v1424 = vand.u32 %v460, 4294901760
          %1425 = vmatprep.subr.mxu0 %v1424
          %v1426 = vand.u32 %v459, 4294901760
          %1427 = vmatpush1.msra.mxu0 %v1426
          %v1428 = vand.u32 %v464, 4294901760
          %1429 = vmatprep.subr.mxu0 %v1428
          %v1430 = vand.u32 %v463, 4294901760
          %1431 = vmatpush1.msra.mxu0 %v1430
          %1432 = vmatprep.subr.mxu0 0.0
          %1433 = vmatpush1.msra.mxu0 0.0
          %1434 = vmatprep.subr.mxu0 0.0
          %1435 = vmatpush1.msra.mxu0 0.0
          %1436 = vmatprep.subr.mxu0 0.0
          %1437 = vmatpush1.msra.mxu0 0.0
          %1438 = vmatprep.subr.mxu0 0.0
          %1439 = vmatpush1.msra.mxu0 0.0
          %1440 = vmatprep.subr.mxu0 0.0
          %1441 = vmatpush1.msra.mxu0 0.0
          %1442 = vmatprep.subr.mxu0 0.0
          %1443 = vmatpush1.msra.mxu0 0.0
          %1444 = vmatprep.subr.mxu0 0.0
          %1445 = vmatpush1.msra.mxu0 0.0
          %1446 = vmatprep.subr.mxu0 0.0
          %1447 = vmatpush1.msra.mxu0 0.0
          %1448 = vmatprep.subr.mxu0 0.0
          %1449 = vmatpush1.msra.mxu0 0.0
          %1450 = vmatprep.subr.mxu0 0.0
          %1451 = vmatpush1.msra.mxu0 0.0
          %1452 = vmatprep.subr.mxu0 0.0
          %1453 = vmatpush1.msra.mxu0 0.0
          %1454 = vmatprep.subr.mxu0 0.0
          %1455 = vmatpush1.msra.mxu0 0.0
          %1456 = vmatprep.subr.mxu0 0.0
          %1457 = vmatpush1.msra.mxu0 0.0
          %1458 = vmatprep.subr.mxu0 0.0
          %1459 = vmatpush1.msra.mxu0 0.0
          %1460 = vmatprep.subr.mxu0 0.0
          %1461 = vmatpush1.msra.mxu0 0.0
          %1462 = vmatprep.subr.mxu0 0.0
          %1463 = vmatpush1.msra.mxu0 0.0
          %1464 = vmatprep.mubr.f32.mxu0 0.0
          %v1465 = vand.u32 %v507, 4294901760
          %v1466 = vsub.f32 %v507, %v1465
          %v1467 = vand.u32 %v1466, 4294901760
          %v1468 = vsub.f32 %v1466, %v1467
          %v1469 = vand.u32 %v1468, 4294901760
          %1470 = vmatmul.mubr.f32.gmra.mrb[0].mxu0 %v1469
          %v1471 = vpop.f32.mrb[0].mxu0
          %v1472 = vadd.f32 0.0, %v1471
          %v1473 = vpop.f32.mrb[0].mxu0
          %v1474 = vadd.f32 0.0, %v1473
          %1475 = vdwg.mxu0
          %v1476 = vand.u32 %v404, 4294901760
          %v1477 = vsub.f32 %v404, %v1476
          %v1478 = vand.u32 %v1477, 4294901760
          %v1479 = vsub.f32 %v1477, %v1478
          %v1480 = vand.u32 %v1479, 4294901760
          %1481 = vmatprep.subr.mxu0 %v1480
          %v1482 = vand.u32 %v403, 4294901760
          %v1483 = vsub.f32 %v403, %v1482
          %v1484 = vand.u32 %v1483, 4294901760
          %v1485 = vsub.f32 %v1483, %v1484
          %v1486 = vand.u32 %v1485, 4294901760
          %1487 = vmatpush1.msra.mxu0 %v1486
          %v1488 = vand.u32 %v408, 4294901760
          %v1489 = vsub.f32 %v408, %v1488
          %v1490 = vand.u32 %v1489, 4294901760
          %v1491 = vsub.f32 %v1489, %v1490
          %v1492 = vand.u32 %v1491, 4294901760
          %1493 = vmatprep.subr.mxu0 %v1492
          %v1494 = vand.u32 %v407, 4294901760
          %v1495 = vsub.f32 %v407, %v1494
          %v1496 = vand.u32 %v1495, 4294901760
          %v1497 = vsub.f32 %v1495, %v1496
          %v1498 = vand.u32 %v1497, 4294901760
          %1499 = vmatpush1.msra.mxu0 %v1498
          %v1500 = vand.u32 %v412, 4294901760
          %v1501 = vsub.f32 %v412, %v1500
          %v1502 = vand.u32 %v1501, 4294901760
          %v1503 = vsub.f32 %v1501, %v1502
          %v1504 = vand.u32 %v1503, 4294901760
          %1505 = vmatprep.subr.mxu0 %v1504
          %v1506 = vand.u32 %v411, 4294901760
          %v1507 = vsub.f32 %v411, %v1506
          %v1508 = vand.u32 %v1507, 4294901760
          %v1509 = vsub.f32 %v1507, %v1508
          %v1510 = vand.u32 %v1509, 4294901760
          %1511 = vmatpush1.msra.mxu0 %v1510
          %v1512 = vand.u32 %v416, 4294901760
          %v1513 = vsub.f32 %v416, %v1512
          %v1514 = vand.u32 %v1513, 4294901760
          %v1515 = vsub.f32 %v1513, %v1514
          %v1516 = vand.u32 %v1515, 4294901760
          %1517 = vmatprep.subr.mxu0 %v1516
          %v1518 = vand.u32 %v415, 4294901760
          %v1519 = vsub.f32 %v415, %v1518
          %v1520 = vand.u32 %v1519, 4294901760
          %v1521 = vsub.f32 %v1519, %v1520
          %v1522 = vand.u32 %v1521, 4294901760
          %1523 = vmatpush1.msra.mxu0 %v1522
          %v1524 = vand.u32 %v420, 4294901760
          %v1525 = vsub.f32 %v420, %v1524
          %v1526 = vand.u32 %v1525, 4294901760
          %v1527 = vsub.f32 %v1525, %v1526
          %v1528 = vand.u32 %v1527, 4294901760
          %1529 = vmatprep.subr.mxu0 %v1528
          %v1530 = vand.u32 %v419, 4294901760
          %v1531 = vsub.f32 %v419, %v1530
          %v1532 = vand.u32 %v1531, 4294901760
          %v1533 = vsub.f32 %v1531, %v1532
          %v1534 = vand.u32 %v1533, 4294901760
          %1535 = vmatpush1.msra.mxu0 %v1534
          %v1536 = vand.u32 %v424, 4294901760
          %v1537 = vsub.f32 %v424, %v1536
          %v1538 = vand.u32 %v1537, 4294901760
          %v1539 = vsub.f32 %v1537, %v1538
          %v1540 = vand.u32 %v1539, 4294901760
          %1541 = vmatprep.subr.mxu0 %v1540
          %v1542 = vand.u32 %v423, 4294901760
          %v1543 = vsub.f32 %v423, %v1542
          %v1544 = vand.u32 %v1543, 4294901760
          %v1545 = vsub.f32 %v1543, %v1544
          %v1546 = vand.u32 %v1545, 4294901760
          %1547 = vmatpush1.msra.mxu0 %v1546
          %v1548 = vand.u32 %v428, 4294901760
          %v1549 = vsub.f32 %v428, %v1548
          %v1550 = vand.u32 %v1549, 4294901760
          %v1551 = vsub.f32 %v1549, %v1550
          %v1552 = vand.u32 %v1551, 4294901760
          %1553 = vmatprep.subr.mxu0 %v1552
          %v1554 = vand.u32 %v427, 4294901760
          %v1555 = vsub.f32 %v427, %v1554
          %v1556 = vand.u32 %v1555, 4294901760
          %v1557 = vsub.f32 %v1555, %v1556
          %v1558 = vand.u32 %v1557, 4294901760
          %1559 = vmatpush1.msra.mxu0 %v1558
          %v1560 = vand.u32 %v432, 4294901760
          %v1561 = vsub.f32 %v432, %v1560
          %v1562 = vand.u32 %v1561, 4294901760
          %v1563 = vsub.f32 %v1561, %v1562
          %v1564 = vand.u32 %v1563, 4294901760
          %1565 = vmatprep.subr.mxu0 %v1564
          %v1566 = vand.u32 %v431, 4294901760
          %v1567 = vsub.f32 %v431, %v1566
          %v1568 = vand.u32 %v1567, 4294901760
          %v1569 = vsub.f32 %v1567, %v1568
          %v1570 = vand.u32 %v1569, 4294901760
          %1571 = vmatpush1.msra.mxu0 %v1570
          %v1572 = vand.u32 %v436, 4294901760
          %v1573 = vsub.f32 %v436, %v1572
          %v1574 = vand.u32 %v1573, 4294901760
          %v1575 = vsub.f32 %v1573, %v1574
          %v1576 = vand.u32 %v1575, 4294901760
          %1577 = vmatprep.subr.mxu0 %v1576
          %v1578 = vand.u32 %v435, 4294901760
          %v1579 = vsub.f32 %v435, %v1578
          %v1580 = vand.u32 %v1579, 4294901760
          %v1581 = vsub.f32 %v1579, %v1580
          %v1582 = vand.u32 %v1581, 4294901760
          %1583 = vmatpush1.msra.mxu0 %v1582
          %v1584 = vand.u32 %v440, 4294901760
          %v1585 = vsub.f32 %v440, %v1584
          %v1586 = vand.u32 %v1585, 4294901760
          %v1587 = vsub.f32 %v1585, %v1586
          %v1588 = vand.u32 %v1587, 4294901760
          %1589 = vmatprep.subr.mxu0 %v1588
          %v1590 = vand.u32 %v439, 4294901760
          %v1591 = vsub.f32 %v439, %v1590
          %v1592 = vand.u32 %v1591, 4294901760
          %v1593 = vsub.f32 %v1591, %v1592
          %v1594 = vand.u32 %v1593, 4294901760
          %1595 = vmatpush1.msra.mxu0 %v1594
          %v1596 = vand.u32 %v444, 4294901760
          %v1597 = vsub.f32 %v444, %v1596
          %v1598 = vand.u32 %v1597, 4294901760
          %v1599 = vsub.f32 %v1597, %v1598
          %v1600 = vand.u32 %v1599, 4294901760
          %1601 = vmatprep.subr.mxu0 %v1600
          %v1602 = vand.u32 %v443, 4294901760
          %v1603 = vsub.f32 %v443, %v1602
          %v1604 = vand.u32 %v1603, 4294901760
          %v1605 = vsub.f32 %v1603, %v1604
          %v1606 = vand.u32 %v1605, 4294901760
          %1607 = vmatpush1.msra.mxu0 %v1606
          %v1608 = vand.u32 %v448, 4294901760
          %v1609 = vsub.f32 %v448, %v1608
          %v1610 = vand.u32 %v1609, 4294901760
          %v1611 = vsub.f32 %v1609, %v1610
          %v1612 = vand.u32 %v1611, 4294901760
          %1613 = vmatprep.subr.mxu0 %v1612
          %v1614 = vand.u32 %v447, 4294901760
          %v1615 = vsub.f32 %v447, %v1614
          %v1616 = vand.u32 %v1615, 4294901760
          %v1617 = vsub.f32 %v1615, %v1616
          %v1618 = vand.u32 %v1617, 4294901760
          %1619 = vmatpush1.msra.mxu0 %v1618
          %v1620 = vand.u32 %v452, 4294901760
          %v1621 = vsub.f32 %v452, %v1620
          %v1622 = vand.u32 %v1621, 4294901760
          %v1623 = vsub.f32 %v1621, %v1622
          %v1624 = vand.u32 %v1623, 4294901760
          %1625 = vmatprep.subr.mxu0 %v1624
          %v1626 = vand.u32 %v451, 4294901760
          %v1627 = vsub.f32 %v451, %v1626
          %v1628 = vand.u32 %v1627, 4294901760
          %v1629 = vsub.f32 %v1627, %v1628
          %v1630 = vand.u32 %v1629, 4294901760
          %1631 = vmatpush1.msra.mxu0 %v1630
          %v1632 = vand.u32 %v456, 4294901760
          %v1633 = vsub.f32 %v456, %v1632
          %v1634 = vand.u32 %v1633, 4294901760
          %v1635 = vsub.f32 %v1633, %v1634
          %v1636 = vand.u32 %v1635, 4294901760
          %1637 = vmatprep.subr.mxu0 %v1636
          %v1638 = vand.u32 %v455, 4294901760
          %v1639 = vsub.f32 %v455, %v1638
          %v1640 = vand.u32 %v1639, 4294901760
          %v1641 = vsub.f32 %v1639, %v1640
          %v1642 = vand.u32 %v1641, 4294901760
          %1643 = vmatpush1.msra.mxu0 %v1642
          %v1644 = vand.u32 %v460, 4294901760
          %v1645 = vsub.f32 %v460, %v1644
          %v1646 = vand.u32 %v1645, 4294901760
          %v1647 = vsub.f32 %v1645, %v1646
          %v1648 = vand.u32 %v1647, 4294901760
          %1649 = vmatprep.subr.mxu0 %v1648
          %v1650 = vand.u32 %v459, 4294901760
          %v1651 = vsub.f32 %v459, %v1650
          %v1652 = vand.u32 %v1651, 4294901760
          %v1653 = vsub.f32 %v1651, %v1652
          %v1654 = vand.u32 %v1653, 4294901760
          %1655 = vmatpush1.msra.mxu0 %v1654
          %v1656 = vand.u32 %v464, 4294901760
          %v1657 = vsub.f32 %v464, %v1656
          %v1658 = vand.u32 %v1657, 4294901760
          %v1659 = vsub.f32 %v1657, %v1658
          %v1660 = vand.u32 %v1659, 4294901760
          %1661 = vmatprep.subr.mxu0 %v1660
          %v1662 = vand.u32 %v463, 4294901760
          %v1663 = vsub.f32 %v463, %v1662
          %v1664 = vand.u32 %v1663, 4294901760
          %v1665 = vsub.f32 %v1663, %v1664
          %v1666 = vand.u32 %v1665, 4294901760
          %1667 = vmatpush1.msra.mxu0 %v1666
          %1668 = vmatprep.subr.mxu0 0.0
          %1669 = vmatpush1.msra.mxu0 0.0
          %1670 = vmatprep.subr.mxu0 0.0
          %1671 = vmatpush1.msra.mxu0 0.0
          %1672 = vmatprep.subr.mxu0 0.0
          %1673 = vmatpush1.msra.mxu0 0.0
          %1674 = vmatprep.subr.mxu0 0.0
          %1675 = vmatpush1.msra.mxu0 0.0
          %1676 = vmatprep.subr.mxu0 0.0
          %1677 = vmatpush1.msra.mxu0 0.0
          %1678 = vmatprep.subr.mxu0 0.0
          %1679 = vmatpush1.msra.mxu0 0.0
          %1680 = vmatprep.subr.mxu0 0.0
          %1681 = vmatpush1.msra.mxu0 0.0
          %1682 = vmatprep.subr.mxu0 0.0
          %1683 = vmatpush1.msra.mxu0 0.0
          %1684 = vmatprep.subr.mxu0 0.0
          %1685 = vmatpush1.msra.mxu0 0.0
          %1686 = vmatprep.subr.mxu0 0.0
          %1687 = vmatpush1.msra.mxu0 0.0
          %1688 = vmatprep.subr.mxu0 0.0
          %1689 = vmatpush1.msra.mxu0 0.0
          %1690 = vmatprep.subr.mxu0 0.0
          %1691 = vmatpush1.msra.mxu0 0.0
          %1692 = vmatprep.subr.mxu0 0.0
          %1693 = vmatpush1.msra.mxu0 0.0
          %1694 = vmatprep.subr.mxu0 0.0
          %1695 = vmatpush1.msra.mxu0 0.0
          %1696 = vmatprep.subr.mxu0 0.0
          %1697 = vmatpush1.msra.mxu0 0.0
          %1698 = vmatprep.subr.mxu0 0.0
          %1699 = vmatpush1.msra.mxu0 0.0
          %1700 = vmatprep.mubr.f32.mxu0 0.0
          %v1701 = vand.u32 %v507, 4294901760
          %1702 = vmatmul.mubr.f32.gmra.mrb[0].mxu0 %v1701
          %v1703 = vpop.f32.mrb[0].mxu0
          %v1704 = vadd.f32 %v1472, %v1703
          %v1705 = vpop.f32.mrb[0].mxu0
          %v1706 = vadd.f32 %v1474, %v1705
          %1707 = vdwg.mxu0
          %v1708 = vand.u32 %v404, 4294901760
          %v1709 = vsub.f32 %v404, %v1708
          %1710 = vmatprep.subr.mxu0 %v1709
          %v1711 = vand.u32 %v403, 4294901760
          %v1712 = vsub.f32 %v403, %v1711
          %1713 = vmatpush1.msra.mxu0 %v1712
          %v1714 = vand.u32 %v408, 4294901760
          %v1715 = vsub.f32 %v408, %v1714
          %1716 = vmatprep.subr.mxu0 %v1715
          %v1717 = vand.u32 %v407, 4294901760
          %v1718 = vsub.f32 %v407, %v1717
          %1719 = vmatpush1.msra.mxu0 %v1718
          %v1720 = vand.u32 %v412, 4294901760
          %v1721 = vsub.f32 %v412, %v1720
          %1722 = vmatprep.subr.mxu0 %v1721
          %v1723 = vand.u32 %v411, 4294901760
          %v1724 = vsub.f32 %v411, %v1723
          %1725 = vmatpush1.msra.mxu0 %v1724
          %v1726 = vand.u32 %v416, 4294901760
          %v1727 = vsub.f32 %v416, %v1726
          %1728 = vmatprep.subr.mxu0 %v1727
          %v1729 = vand.u32 %v415, 4294901760
          %v1730 = vsub.f32 %v415, %v1729
          %1731 = vmatpush1.msra.mxu0 %v1730
          %v1732 = vand.u32 %v420, 4294901760
          %v1733 = vsub.f32 %v420, %v1732
          %1734 = vmatprep.subr.mxu0 %v1733
          %v1735 = vand.u32 %v419, 4294901760
          %v1736 = vsub.f32 %v419, %v1735
          %1737 = vmatpush1.msra.mxu0 %v1736
          %v1738 = vand.u32 %v424, 4294901760
          %v1739 = vsub.f32 %v424, %v1738
          %1740 = vmatprep.subr.mxu0 %v1739
          %v1741 = vand.u32 %v423, 4294901760
          %v1742 = vsub.f32 %v423, %v1741
          %1743 = vmatpush1.msra.mxu0 %v1742
          %v1744 = vand.u32 %v428, 4294901760
          %v1745 = vsub.f32 %v428, %v1744
          %1746 = vmatprep.subr.mxu0 %v1745
          %v1747 = vand.u32 %v427, 4294901760
          %v1748 = vsub.f32 %v427, %v1747
          %1749 = vmatpush1.msra.mxu0 %v1748
          %v1750 = vand.u32 %v432, 4294901760
          %v1751 = vsub.f32 %v432, %v1750
          %1752 = vmatprep.subr.mxu0 %v1751
          %v1753 = vand.u32 %v431, 4294901760
          %v1754 = vsub.f32 %v431, %v1753
          %1755 = vmatpush1.msra.mxu0 %v1754
          %v1756 = vand.u32 %v436, 4294901760
          %v1757 = vsub.f32 %v436, %v1756
          %1758 = vmatprep.subr.mxu0 %v1757
          %v1759 = vand.u32 %v435, 4294901760
          %v1760 = vsub.f32 %v435, %v1759
          %1761 = vmatpush1.msra.mxu0 %v1760
          %v1762 = vand.u32 %v440, 4294901760
          %v1763 = vsub.f32 %v440, %v1762
          %1764 = vmatprep.subr.mxu0 %v1763
          %v1765 = vand.u32 %v439, 4294901760
          %v1766 = vsub.f32 %v439, %v1765
          %1767 = vmatpush1.msra.mxu0 %v1766
          %v1768 = vand.u32 %v444, 4294901760
          %v1769 = vsub.f32 %v444, %v1768
          %1770 = vmatprep.subr.mxu0 %v1769
          %v1771 = vand.u32 %v443, 4294901760
          %v1772 = vsub.f32 %v443, %v1771
          %1773 = vmatpush1.msra.mxu0 %v1772
          %v1774 = vand.u32 %v448, 4294901760
          %v1775 = vsub.f32 %v448, %v1774
          %1776 = vmatprep.subr.mxu0 %v1775
          %v1777 = vand.u32 %v447, 4294901760
          %v1778 = vsub.f32 %v447, %v1777
          %1779 = vmatpush1.msra.mxu0 %v1778
          %v1780 = vand.u32 %v452, 4294901760
          %v1781 = vsub.f32 %v452, %v1780
          %1782 = vmatprep.subr.mxu0 %v1781
          %v1783 = vand.u32 %v451, 4294901760
          %v1784 = vsub.f32 %v451, %v1783
          %1785 = vmatpush1.msra.mxu0 %v1784
          %v1786 = vand.u32 %v456, 4294901760
          %v1787 = vsub.f32 %v456, %v1786
          %1788 = vmatprep.subr.mxu0 %v1787
          %v1789 = vand.u32 %v455, 4294901760
          %v1790 = vsub.f32 %v455, %v1789
          %1791 = vmatpush1.msra.mxu0 %v1790
          %v1792 = vand.u32 %v460, 4294901760
          %v1793 = vsub.f32 %v460, %v1792
          %1794 = vmatprep.subr.mxu0 %v1793
          %v1795 = vand.u32 %v459, 4294901760
          %v1796 = vsub.f32 %v459, %v1795
          %1797 = vmatpush1.msra.mxu0 %v1796
          %v1798 = vand.u32 %v464, 4294901760
          %v1799 = vsub.f32 %v464, %v1798
          %1800 = vmatprep.subr.mxu0 %v1799
          %v1801 = vand.u32 %v463, 4294901760
          %v1802 = vsub.f32 %v463, %v1801
          %1803 = vmatpush1.msra.mxu0 %v1802
          %1804 = vmatprep.subr.mxu0 0.0
          %1805 = vmatpush1.msra.mxu0 0.0
          %1806 = vmatprep.subr.mxu0 0.0
          %1807 = vmatpush1.msra.mxu0 0.0
          %1808 = vmatprep.subr.mxu0 0.0
          %1809 = vmatpush1.msra.mxu0 0.0
          %1810 = vmatprep.subr.mxu0 0.0
          %1811 = vmatpush1.msra.mxu0 0.0
          %1812 = vmatprep.subr.mxu0 0.0
          %1813 = vmatpush1.msra.mxu0 0.0
          %1814 = vmatprep.subr.mxu0 0.0
          %1815 = vmatpush1.msra.mxu0 0.0
          %1816 = vmatprep.subr.mxu0 0.0
          %1817 = vmatpush1.msra.mxu0 0.0
          %1818 = vmatprep.subr.mxu0 0.0
          %1819 = vmatpush1.msra.mxu0 0.0
          %1820 = vmatprep.subr.mxu0 0.0
          %1821 = vmatpush1.msra.mxu0 0.0
          %1822 = vmatprep.subr.mxu0 0.0
          %1823 = vmatpush1.msra.mxu0 0.0
          %1824 = vmatprep.subr.mxu0 0.0
          %1825 = vmatpush1.msra.mxu0 0.0
          %1826 = vmatprep.subr.mxu0 0.0
          %1827 = vmatpush1.msra.mxu0 0.0
          %1828 = vmatprep.subr.mxu0 0.0
          %1829 = vmatpush1.msra.mxu0 0.0
          %1830 = vmatprep.subr.mxu0 0.0
          %1831 = vmatpush1.msra.mxu0 0.0
          %1832 = vmatprep.subr.mxu0 0.0
          %1833 = vmatpush1.msra.mxu0 0.0
          %1834 = vmatprep.subr.mxu0 0.0
          %1835 = vmatpush1.msra.mxu0 0.0
          %1836 = vmatprep.mubr.f32.mxu0 0.0
          %v1837 = vand.u32 %v507, 4294901760
          %v1838 = vsub.f32 %v507, %v1837
          %1839 = vmatmul.mubr.f32.gmra.mrb[0].mxu0 %v1838
          %v1840 = vpop.f32.mrb[0].mxu0
          %v1841 = vadd.f32 %v1704, %v1840
          %v1842 = vpop.f32.mrb[0].mxu0
          %v1843 = vadd.f32 %v1706, %v1842
          %1844 = vdwg.mxu0
          %v1845 = vand.u32 %v404, 4294901760
          %1846 = vmatprep.subr.mxu0 %v1845
          %v1847 = vand.u32 %v403, 4294901760
          %1848 = vmatpush1.msra.mxu0 %v1847
          %v1849 = vand.u32 %v408, 4294901760
          %1850 = vmatprep.subr.mxu0 %v1849
          %v1851 = vand.u32 %v407, 4294901760
          %1852 = vmatpush1.msra.mxu0 %v1851
          %v1853 = vand.u32 %v412, 4294901760
          %1854 = vmatprep.subr.mxu0 %v1853
          %v1855 = vand.u32 %v411, 4294901760
          %1856 = vmatpush1.msra.mxu0 %v1855
          %v1857 = vand.u32 %v416, 4294901760
          %1858 = vmatprep.subr.mxu0 %v1857
          %v1859 = vand.u32 %v415, 4294901760
          %1860 = vmatpush1.msra.mxu0 %v1859
          %v1861 = vand.u32 %v420, 4294901760
          %1862 = vmatprep.subr.mxu0 %v1861
          %v1863 = vand.u32 %v419, 4294901760
          %1864 = vmatpush1.msra.mxu0 %v1863
          %v1865 = vand.u32 %v424, 4294901760
          %1866 = vmatprep.subr.mxu0 %v1865
          %v1867 = vand.u32 %v423, 4294901760
          %1868 = vmatpush1.msra.mxu0 %v1867
          %v1869 = vand.u32 %v428, 4294901760
          %1870 = vmatprep.subr.mxu0 %v1869
          %v1871 = vand.u32 %v427, 4294901760
          %1872 = vmatpush1.msra.mxu0 %v1871
          %v1873 = vand.u32 %v432, 4294901760
          %1874 = vmatprep.subr.mxu0 %v1873
          %v1875 = vand.u32 %v431, 4294901760
          %1876 = vmatpush1.msra.mxu0 %v1875
          %v1877 = vand.u32 %v436, 4294901760
          %1878 = vmatprep.subr.mxu0 %v1877
          %v1879 = vand.u32 %v435, 4294901760
          %1880 = vmatpush1.msra.mxu0 %v1879
          %v1881 = vand.u32 %v440, 4294901760
          %1882 = vmatprep.subr.mxu0 %v1881
          %v1883 = vand.u32 %v439, 4294901760
          %1884 = vmatpush1.msra.mxu0 %v1883
          %v1885 = vand.u32 %v444, 4294901760
          %1886 = vmatprep.subr.mxu0 %v1885
          %v1887 = vand.u32 %v443, 4294901760
          %1888 = vmatpush1.msra.mxu0 %v1887
          %v1889 = vand.u32 %v448, 4294901760
          %1890 = vmatprep.subr.mxu0 %v1889
          %v1891 = vand.u32 %v447, 4294901760
          %1892 = vmatpush1.msra.mxu0 %v1891
          %v1893 = vand.u32 %v452, 4294901760
          %1894 = vmatprep.subr.mxu0 %v1893
          %v1895 = vand.u32 %v451, 4294901760
          %1896 = vmatpush1.msra.mxu0 %v1895
          %v1897 = vand.u32 %v456, 4294901760
          %1898 = vmatprep.subr.mxu0 %v1897
          %v1899 = vand.u32 %v455, 4294901760
          %1900 = vmatpush1.msra.mxu0 %v1899
          %v1901 = vand.u32 %v460, 4294901760
          %1902 = vmatprep.subr.mxu0 %v1901
          %v1903 = vand.u32 %v459, 4294901760
          %1904 = vmatpush1.msra.mxu0 %v1903
          %v1905 = vand.u32 %v464, 4294901760
          %1906 = vmatprep.subr.mxu0 %v1905
          %v1907 = vand.u32 %v463, 4294901760
          %1908 = vmatpush1.msra.mxu0 %v1907
          %1909 = vmatprep.subr.mxu0 0.0
          %1910 = vmatpush1.msra.mxu0 0.0
          %1911 = vmatprep.subr.mxu0 0.0
          %1912 = vmatpush1.msra.mxu0 0.0
          %1913 = vmatprep.subr.mxu0 0.0
          %1914 = vmatpush1.msra.mxu0 0.0
          %1915 = vmatprep.subr.mxu0 0.0
          %1916 = vmatpush1.msra.mxu0 0.0
          %1917 = vmatprep.subr.mxu0 0.0
          %1918 = vmatpush1.msra.mxu0 0.0
          %1919 = vmatprep.subr.mxu0 0.0
          %1920 = vmatpush1.msra.mxu0 0.0
          %1921 = vmatprep.subr.mxu0 0.0
          %1922 = vmatpush1.msra.mxu0 0.0
          %1923 = vmatprep.subr.mxu0 0.0
          %1924 = vmatpush1.msra.mxu0 0.0
          %1925 = vmatprep.subr.mxu0 0.0
          %1926 = vmatpush1.msra.mxu0 0.0
          %1927 = vmatprep.subr.mxu0 0.0
          %1928 = vmatpush1.msra.mxu0 0.0
          %1929 = vmatprep.subr.mxu0 0.0
          %1930 = vmatpush1.msra.mxu0 0.0
          %1931 = vmatprep.subr.mxu0 0.0
          %1932 = vmatpush1.msra.mxu0 0.0
          %1933 = vmatprep.subr.mxu0 0.0
          %1934 = vmatpush1.msra.mxu0 0.0
          %1935 = vmatprep.subr.mxu0 0.0
          %1936 = vmatpush1.msra.mxu0 0.0
          %1937 = vmatprep.subr.mxu0 0.0
          %1938 = vmatpush1.msra.mxu0 0.0
          %1939 = vmatprep.subr.mxu0 0.0
          %1940 = vmatpush1.msra.mxu0 0.0
          %1941 = vmatprep.mubr.f32.mxu0 0.0
          %v1942 = vand.u32 %v507, 4294901760
          %v1943 = vsub.f32 %v507, %v1942
          %v1944 = vand.u32 %v1943, 4294901760
          %1945 = vmatmul.mubr.f32.gmra.mrb[0].mxu0 %v1944
          %v1946 = vpop.f32.mrb[0].mxu0
          %v1947 = vadd.f32 %v1841, %v1946
          %v1948 = vpop.f32.mrb[0].mxu0
          %v1949 = vadd.f32 %v1843, %v1948
          %1950 = vdwg.mxu0
          %v1951 = vand.u32 %v404, 4294901760
          %v1952 = vsub.f32 %v404, %v1951
          %v1953 = vand.u32 %v1952, 4294901760
          %1954 = vmatprep.subr.mxu0 %v1953
          %v1955 = vand.u32 %v403, 4294901760
          %v1956 = vsub.f32 %v403, %v1955
          %v1957 = vand.u32 %v1956, 4294901760
          %1958 = vmatpush1.msra.mxu0 %v1957
          %v1959 = vand.u32 %v408, 4294901760
          %v1960 = vsub.f32 %v408, %v1959
          %v1961 = vand.u32 %v1960, 4294901760
          %1962 = vmatprep.subr.mxu0 %v1961
          %v1963 = vand.u32 %v407, 4294901760
          %v1964 = vsub.f32 %v407, %v1963
          %v1965 = vand.u32 %v1964, 4294901760
          %1966 = vmatpush1.msra.mxu0 %v1965
          %v1967 = vand.u32 %v412, 4294901760
          %v1968 = vsub.f32 %v412, %v1967
          %v1969 = vand.u32 %v1968, 4294901760
          %1970 = vmatprep.subr.mxu0 %v1969
          %v1971 = vand.u32 %v411, 4294901760
          %v1972 = vsub.f32 %v411, %v1971
          %v1973 = vand.u32 %v1972, 4294901760
          %1974 = vmatpush1.msra.mxu0 %v1973
          %v1975 = vand.u32 %v416, 4294901760
          %v1976 = vsub.f32 %v416, %v1975
          %v1977 = vand.u32 %v1976, 4294901760
          %1978 = vmatprep.subr.mxu0 %v1977
          %v1979 = vand.u32 %v415, 4294901760
          %v1980 = vsub.f32 %v415, %v1979
          %v1981 = vand.u32 %v1980, 4294901760
          %1982 = vmatpush1.msra.mxu0 %v1981
          %v1983 = vand.u32 %v420, 4294901760
          %v1984 = vsub.f32 %v420, %v1983
          %v1985 = vand.u32 %v1984, 4294901760
          %1986 = vmatprep.subr.mxu0 %v1985
          %v1987 = vand.u32 %v419, 4294901760
          %v1988 = vsub.f32 %v419, %v1987
          %v1989 = vand.u32 %v1988, 4294901760
          %1990 = vmatpush1.msra.mxu0 %v1989
          %v1991 = vand.u32 %v424, 4294901760
          %v1992 = vsub.f32 %v424, %v1991
          %v1993 = vand.u32 %v1992, 4294901760
          %1994 = vmatprep.subr.mxu0 %v1993
          %v1995 = vand.u32 %v423, 4294901760
          %v1996 = vsub.f32 %v423, %v1995
          %v1997 = vand.u32 %v1996, 4294901760
          %1998 = vmatpush1.msra.mxu0 %v1997
          %v1999 = vand.u32 %v428, 4294901760
          %v2000 = vsub.f32 %v428, %v1999
          %v2001 = vand.u32 %v2000, 4294901760
          %2002 = vmatprep.subr.mxu0 %v2001
          %v2003 = vand.u32 %v427, 4294901760
          %v2004 = vsub.f32 %v427, %v2003
          %v2005 = vand.u32 %v2004, 4294901760
          %2006 = vmatpush1.msra.mxu0 %v2005
          %v2007 = vand.u32 %v432, 4294901760
          %v2008 = vsub.f32 %v432, %v2007
          %v2009 = vand.u32 %v2008, 4294901760
          %2010 = vmatprep.subr.mxu0 %v2009
          %v2011 = vand.u32 %v431, 4294901760
          %v2012 = vsub.f32 %v431, %v2011
          %v2013 = vand.u32 %v2012, 4294901760
          %2014 = vmatpush1.msra.mxu0 %v2013
          %v2015 = vand.u32 %v436, 4294901760
          %v2016 = vsub.f32 %v436, %v2015
          %v2017 = vand.u32 %v2016, 4294901760
          %2018 = vmatprep.subr.mxu0 %v2017
          %v2019 = vand.u32 %v435, 4294901760
          %v2020 = vsub.f32 %v435, %v2019
          %v2021 = vand.u32 %v2020, 4294901760
          %2022 = vmatpush1.msra.mxu0 %v2021
          %v2023 = vand.u32 %v440, 4294901760
          %v2024 = vsub.f32 %v440, %v2023
          %v2025 = vand.u32 %v2024, 4294901760
          %2026 = vmatprep.subr.mxu0 %v2025
          %v2027 = vand.u32 %v439, 4294901760
          %v2028 = vsub.f32 %v439, %v2027
          %v2029 = vand.u32 %v2028, 4294901760
          %2030 = vmatpush1.msra.mxu0 %v2029
          %v2031 = vand.u32 %v444, 4294901760
          %v2032 = vsub.f32 %v444, %v2031
          %v2033 = vand.u32 %v2032, 4294901760
          %2034 = vmatprep.subr.mxu0 %v2033
          %v2035 = vand.u32 %v443, 4294901760
          %v2036 = vsub.f32 %v443, %v2035
          %v2037 = vand.u32 %v2036, 4294901760
          %2038 = vmatpush1.msra.mxu0 %v2037
          %v2039 = vand.u32 %v448, 4294901760
          %v2040 = vsub.f32 %v448, %v2039
          %v2041 = vand.u32 %v2040, 4294901760
          %2042 = vmatprep.subr.mxu0 %v2041
          %v2043 = vand.u32 %v447, 4294901760
          %v2044 = vsub.f32 %v447, %v2043
          %v2045 = vand.u32 %v2044, 4294901760
          %2046 = vmatpush1.msra.mxu0 %v2045
          %v2047 = vand.u32 %v452, 4294901760
          %v2048 = vsub.f32 %v452, %v2047
          %v2049 = vand.u32 %v2048, 4294901760
          %2050 = vmatprep.subr.mxu0 %v2049
          %v2051 = vand.u32 %v451, 4294901760
          %v2052 = vsub.f32 %v451, %v2051
          %v2053 = vand.u32 %v2052, 4294901760
          %2054 = vmatpush1.msra.mxu0 %v2053
          %v2055 = vand.u32 %v456, 4294901760
          %v2056 = vsub.f32 %v456, %v2055
          %v2057 = vand.u32 %v2056, 4294901760
          %2058 = vmatprep.subr.mxu0 %v2057
          %v2059 = vand.u32 %v455, 4294901760
          %v2060 = vsub.f32 %v455, %v2059
          %v2061 = vand.u32 %v2060, 4294901760
          %2062 = vmatpush1.msra.mxu0 %v2061
          %v2063 = vand.u32 %v460, 4294901760
          %v2064 = vsub.f32 %v460, %v2063
          %v2065 = vand.u32 %v2064, 4294901760
          %2066 = vmatprep.subr.mxu0 %v2065
          %v2067 = vand.u32 %v459, 4294901760
          %v2068 = vsub.f32 %v459, %v2067
          %v2069 = vand.u32 %v2068, 4294901760
          %2070 = vmatpush1.msra.mxu0 %v2069
          %v2071 = vand.u32 %v464, 4294901760
          %v2072 = vsub.f32 %v464, %v2071
          %v2073 = vand.u32 %v2072, 4294901760
          %2074 = vmatprep.subr.mxu0 %v2073
          %v2075 = vand.u32 %v463, 4294901760
          %v2076 = vsub.f32 %v463, %v2075
          %v2077 = vand.u32 %v2076, 4294901760
          %2078 = vmatpush1.msra.mxu0 %v2077
          %2079 = vmatprep.subr.mxu0 0.0
          %2080 = vmatpush1.msra.mxu0 0.0
          %2081 = vmatprep.subr.mxu0 0.0
          %2082 = vmatpush1.msra.mxu0 0.0
          %2083 = vmatprep.subr.mxu0 0.0
          %2084 = vmatpush1.msra.mxu0 0.0
          %2085 = vmatprep.subr.mxu0 0.0
          %2086 = vmatpush1.msra.mxu0 0.0
          %2087 = vmatprep.subr.mxu0 0.0
          %2088 = vmatpush1.msra.mxu0 0.0
          %2089 = vmatprep.subr.mxu0 0.0
          %2090 = vmatpush1.msra.mxu0 0.0
          %2091 = vmatprep.subr.mxu0 0.0
          %2092 = vmatpush1.msra.mxu0 0.0
          %2093 = vmatprep.subr.mxu0 0.0
          %2094 = vmatpush1.msra.mxu0 0.0
          %2095 = vmatprep.subr.mxu0 0.0
          %2096 = vmatpush1.msra.mxu0 0.0
          %2097 = vmatprep.subr.mxu0 0.0
          %2098 = vmatpush1.msra.mxu0 0.0
          %2099 = vmatprep.subr.mxu0 0.0
          %2100 = vmatpush1.msra.mxu0 0.0
          %2101 = vmatprep.subr.mxu0 0.0
          %2102 = vmatpush1.msra.mxu0 0.0
          %2103 = vmatprep.subr.mxu0 0.0
          %2104 = vmatpush1.msra.mxu0 0.0
          %2105 = vmatprep.subr.mxu0 0.0
          %2106 = vmatpush1.msra.mxu0 0.0
          %2107 = vmatprep.subr.mxu0 0.0
          %2108 = vmatpush1.msra.mxu0 0.0
          %2109 = vmatprep.subr.mxu0 0.0
          %2110 = vmatpush1.msra.mxu0 0.0
          %2111 = vmatprep.mubr.f32.mxu0 0.0
          %v2112 = vand.u32 %v507, 4294901760
          %2113 = vmatmul.mubr.f32.gmra.mrb[0].mxu0 %v2112
          %v2114 = vpop.f32.mrb[0].mxu0
          %v2115 = vadd.f32 %v1947, %v2114
          %v2116 = vpop.f32.mrb[0].mxu0
          %v2117 = vadd.f32 %v1949, %v2116
          %2118 = vdwg.mxu0
          %v2119 = vand.u32 %v404, 4294901760
          %2120 = vmatprep.subr.mxu0 %v2119
          %v2121 = vand.u32 %v403, 4294901760
          %2122 = vmatpush1.msra.mxu0 %v2121
          %v2123 = vand.u32 %v408, 4294901760
          %2124 = vmatprep.subr.mxu0 %v2123
          %v2125 = vand.u32 %v407, 4294901760
          %2126 = vmatpush1.msra.mxu0 %v2125
          %v2127 = vand.u32 %v412, 4294901760
          %2128 = vmatprep.subr.mxu0 %v2127
          %v2129 = vand.u32 %v411, 4294901760
          %2130 = vmatpush1.msra.mxu0 %v2129
          %v2131 = vand.u32 %v416, 4294901760
          %2132 = vmatprep.subr.mxu0 %v2131
          %v2133 = vand.u32 %v415, 4294901760
          %2134 = vmatpush1.msra.mxu0 %v2133
          %v2135 = vand.u32 %v420, 4294901760
          %2136 = vmatprep.subr.mxu0 %v2135
          %v2137 = vand.u32 %v419, 4294901760
          %2138 = vmatpush1.msra.mxu0 %v2137
          %v2139 = vand.u32 %v424, 4294901760
          %2140 = vmatprep.subr.mxu0 %v2139
          %v2141 = vand.u32 %v423, 4294901760
          %2142 = vmatpush1.msra.mxu0 %v2141
          %v2143 = vand.u32 %v428, 4294901760
          %2144 = vmatprep.subr.mxu0 %v2143
          %v2145 = vand.u32 %v427, 4294901760
          %2146 = vmatpush1.msra.mxu0 %v2145
          %v2147 = vand.u32 %v432, 4294901760
          %2148 = vmatprep.subr.mxu0 %v2147
          %v2149 = vand.u32 %v431, 4294901760
          %2150 = vmatpush1.msra.mxu0 %v2149
          %v2151 = vand.u32 %v436, 4294901760
          %2152 = vmatprep.subr.mxu0 %v2151
          %v2153 = vand.u32 %v435, 4294901760
          %2154 = vmatpush1.msra.mxu0 %v2153
          %v2155 = vand.u32 %v440, 4294901760
          %2156 = vmatprep.subr.mxu0 %v2155
          %v2157 = vand.u32 %v439, 4294901760
          %2158 = vmatpush1.msra.mxu0 %v2157
          %v2159 = vand.u32 %v444, 4294901760
          %2160 = vmatprep.subr.mxu0 %v2159
          %v2161 = vand.u32 %v443, 4294901760
          %2162 = vmatpush1.msra.mxu0 %v2161
          %v2163 = vand.u32 %v448, 4294901760
          %2164 = vmatprep.subr.mxu0 %v2163
          %v2165 = vand.u32 %v447, 4294901760
          %2166 = vmatpush1.msra.mxu0 %v2165
          %v2167 = vand.u32 %v452, 4294901760
          %2168 = vmatprep.subr.mxu0 %v2167
          %v2169 = vand.u32 %v451, 4294901760
          %2170 = vmatpush1.msra.mxu0 %v2169
          %v2171 = vand.u32 %v456, 4294901760
          %2172 = vmatprep.subr.mxu0 %v2171
          %v2173 = vand.u32 %v455, 4294901760
          %2174 = vmatpush1.msra.mxu0 %v2173
          %v2175 = vand.u32 %v460, 4294901760
          %2176 = vmatprep.subr.mxu0 %v2175
          %v2177 = vand.u32 %v459, 4294901760
          %2178 = vmatpush1.msra.mxu0 %v2177
          %v2179 = vand.u32 %v464, 4294901760
          %2180 = vmatprep.subr.mxu0 %v2179
          %v2181 = vand.u32 %v463, 4294901760
          %2182 = vmatpush1.msra.mxu0 %v2181
          %2183 = vmatprep.subr.mxu0 0.0
          %2184 = vmatpush1.msra.mxu0 0.0
          %2185 = vmatprep.subr.mxu0 0.0
          %2186 = vmatpush1.msra.mxu0 0.0
          %2187 = vmatprep.subr.mxu0 0.0
          %2188 = vmatpush1.msra.mxu0 0.0
          %2189 = vmatprep.subr.mxu0 0.0
          %2190 = vmatpush1.msra.mxu0 0.0
          %2191 = vmatprep.subr.mxu0 0.0
          %2192 = vmatpush1.msra.mxu0 0.0
          %2193 = vmatprep.subr.mxu0 0.0
          %2194 = vmatpush1.msra.mxu0 0.0
          %2195 = vmatprep.subr.mxu0 0.0
          %2196 = vmatpush1.msra.mxu0 0.0
          %2197 = vmatprep.subr.mxu0 0.0
          %2198 = vmatpush1.msra.mxu0 0.0
          %2199 = vmatprep.subr.mxu0 0.0
          %2200 = vmatpush1.msra.mxu0 0.0
          %2201 = vmatprep.subr.mxu0 0.0
          %2202 = vmatpush1.msra.mxu0 0.0
          %2203 = vmatprep.subr.mxu0 0.0
          %2204 = vmatpush1.msra.mxu0 0.0
          %2205 = vmatprep.subr.mxu0 0.0
          %2206 = vmatpush1.msra.mxu0 0.0
          %2207 = vmatprep.subr.mxu0 0.0
          %2208 = vmatpush1.msra.mxu0 0.0
          %2209 = vmatprep.subr.mxu0 0.0
          %2210 = vmatpush1.msra.mxu0 0.0
          %2211 = vmatprep.subr.mxu0 0.0
          %2212 = vmatpush1.msra.mxu0 0.0
          %2213 = vmatprep.subr.mxu0 0.0
          %2214 = vmatpush1.msra.mxu0 0.0
          %2215 = vmatprep.mubr.f32.mxu0 0.0
          %v2216 = vand.u32 %v507, 4294901760
          %2217 = vmatmul.mubr.f32.gmra.mrb[0].mxu0 %v2216
          %v2218 = vpop.f32.mrb[0].mxu0
          %v2219 = vadd.f32 %v2115, %v2218
          %v2220 = vpop.f32.mrb[0].mxu0
          %v2221 = vadd.f32 %v2117, %v2220
          %2222 = vdwg.mxu0
          %v2227 = vcombine.low %v1364, %v1366
          %v2228 = vcombine.low %v2219, %v2221
          %v2230 = vunpack.c.l.s4 1983009808
          %v2231 = vunpack.c.0.s8 %v2230
          %v2232 = vlaneseq
          %v2233 = vshrl.u32 %v2232, 7
          %v2234 = vsub.s32 %v2231, %v2233
          %v2235 = vrot.slane %v2227, %v2234
          %v2237 = vunpack.c.l.s4 1983009808
          %v2238 = vunpack.c.0.s8 %v2237
          %v2239 = vlaneseq
          %v2240 = vshrl.u32 %v2239, 7
          %v2241 = vsub.s32 %v2238, %v2240
          %v2242 = vrot.slane %v2228, %v2241
          %v2243 = vcombine.low %v2235, %v2242
          %v2245 = vadd.f32 %v512, %v2243
          %v2246 = vxor.u32 %v2245, 2147483648
          %v2247 = vmul.f32 %v2246, 1.442695
          %v2248 = vpow.pop %v2247
          %v2249 = vadd.f32 %v2248, 1.0
          %v2250 = vrcp.pop %v2249
          %v2251 = vmul.f32 1.0, %v2250
          %v2253 = vrot.slane %v2245, 2
          %v2255 = vxor.u32 %v2253, 2147483648
          %v2256 = vmul.f32 %v2255, 1.442695
          %v2257 = vpow.pop %v2256
          %v2258 = vadd.f32 %v2257, 1.0
          %v2259 = vrcp.pop %v2258
          %v2260 = vmul.f32 1.0, %v2259
          %v2261 = vrot.slane %v2245, 4
          %v2263 = vtanh.pop %v2261
          %v2264 = vrot.slane %v2245, 6
          %v2266 = vxor.u32 %v2264, 2147483648
          %v2267 = vmul.f32 %v2266, 1.442695
          %v2268 = vpow.pop %v2267
          %v2269 = vadd.f32 %v2268, 1.0
          %v2270 = vrcp.pop %v2269
          %v2271 = vmul.f32 1.0, %v2270
          %v2272 = vmul.f32 %v2260, %v508
          %v2273 = vmul.f32 %v2251, %v2263
          %v2274 = vadd.f32 %v2272, %v2273
          %v2275 = vtanh.pop %v2274
          %v2276 = vmul.f32 %v2271, %v2275
          %s2277 = smul.u32 %s502, 2
          %s2278 = scalar_lea.vmem %s392, %s2277
          %v2279 = vld [vmem:[%s2278] sm:$0x3]
          %2281 = vset.pattern.permute.xlu0 0
          %2282 = vperm.xlu0 %2281, %v2279
          %v2283 = vpop.permute.xlu0 %2282
          %v2285 = vmul.f32 %v2283, 0.5
          %v2286 = vmul.f32 %v2283, 0.16666667
          %v2287 = vmul.f32 %v2286, 2.0
          loop: start=0, step=1, limit=3
          $region76: #{tpu_custom_call.1} parent=72 // loop_pre_header
            _
          $region77: #{tpu_custom_call.1} parent=72 // loop_header
            %s2289 = sphi 0, %s2293
            %p2290 = scmp.ge.s32.totalorder %s2289, 3
            %v2294 = vphi %v2276, %v7452
          $region78: #{tpu_custom_call.1} parent=72 // loop_header_branch
            %2292 = sbr.rel (%p2290) target = $region82
          $region79: #{tpu_custom_call.1} parent=72 // loop_body
            %v2296 = vlaneseq
            %v2297 = vshrl.u32 %v2296, 7
            %v2298 = vsub.s32 0, %v2297
            %v2299 = vrot.slane %v497, %v2298
            %2301 = vmatprep.subr.mxu0 0.0
            %v2302 = vand.u32 %v465, 4294901760
            %2303 = vmatpush1.msra.mxu0 %v2302
            %2304 = vmatprep.subr.mxu0 0.0
            %v2305 = vand.u32 %v466, 4294901760
            %2306 = vmatpush1.msra.mxu0 %v2305
            %2307 = vmatprep.subr.mxu0 0.0
            %v2308 = vand.u32 %v467, 4294901760
            %2309 = vmatpush1.msra.mxu0 %v2308
            %2310 = vmatprep.subr.mxu0 0.0
            %v2311 = vand.u32 %v468, 4294901760
            %2312 = vmatpush1.msra.mxu0 %v2311
            %2313 = vmatprep.subr.mxu0 0.0
            %v2314 = vand.u32 %v469, 4294901760
            %2315 = vmatpush1.msra.mxu0 %v2314
            %2316 = vmatprep.subr.mxu0 0.0
            %v2317 = vand.u32 %v470, 4294901760
            %2318 = vmatpush1.msra.mxu0 %v2317
            %2319 = vmatprep.subr.mxu0 0.0
            %v2320 = vand.u32 %v471, 4294901760
            %2321 = vmatpush1.msra.mxu0 %v2320
            %2322 = vmatprep.subr.mxu0 0.0
            %v2323 = vand.u32 %v472, 4294901760
            %2324 = vmatpush1.msra.mxu0 %v2323
            %2325 = vmatprep.subr.mxu0 0.0
            %v2326 = vand.u32 %v473, 4294901760
            %2327 = vmatpush1.msra.mxu0 %v2326
            %2328 = vmatprep.subr.mxu0 0.0
            %v2329 = vand.u32 %v474, 4294901760
            %2330 = vmatpush1.msra.mxu0 %v2329
            %2331 = vmatprep.subr.mxu0 0.0
            %v2332 = vand.u32 %v475, 4294901760
            %2333 = vmatpush1.msra.mxu0 %v2332
            %2334 = vmatprep.subr.mxu0 0.0
            %v2335 = vand.u32 %v476, 4294901760
            %2336 = vmatpush1.msra.mxu0 %v2335
            %2337 = vmatprep.subr.mxu0 0.0
            %v2338 = vand.u32 %v477, 4294901760
            %2339 = vmatpush1.msra.mxu0 %v2338
            %2340 = vmatprep.subr.mxu0 0.0
            %v2341 = vand.u32 %v478, 4294901760
            %2342 = vmatpush1.msra.mxu0 %v2341
            %2343 = vmatprep.subr.mxu0 0.0
            %v2344 = vand.u32 %v479, 4294901760
            %2345 = vmatpush1.msra.mxu0 %v2344
            %2346 = vmatprep.subr.mxu0 0.0
            %v2347 = vand.u32 %v480, 4294901760
            %2348 = vmatpush1.msra.mxu0 %v2347
            %2349 = vmatprep.subr.mxu0 0.0
            %2350 = vmatpush1.msra.mxu0 0.0
            %2351 = vmatprep.subr.mxu0 0.0
            %2352 = vmatpush1.msra.mxu0 0.0
            %2353 = vmatprep.subr.mxu0 0.0
            %2354 = vmatpush1.msra.mxu0 0.0
            %2355 = vmatprep.subr.mxu0 0.0
            %2356 = vmatpush1.msra.mxu0 0.0
            %2357 = vmatprep.subr.mxu0 0.0
            %2358 = vmatpush1.msra.mxu0 0.0
            %2359 = vmatprep.subr.mxu0 0.0
            %2360 = vmatpush1.msra.mxu0 0.0
            %2361 = vmatprep.subr.mxu0 0.0
            %2362 = vmatpush1.msra.mxu0 0.0
            %2363 = vmatprep.subr.mxu0 0.0
            %2364 = vmatpush1.msra.mxu0 0.0
            %2365 = vmatprep.subr.mxu0 0.0
            %2366 = vmatpush1.msra.mxu0 0.0
            %2367 = vmatprep.subr.mxu0 0.0
            %2368 = vmatpush1.msra.mxu0 0.0
            %2369 = vmatprep.subr.mxu0 0.0
            %2370 = vmatpush1.msra.mxu0 0.0
            %2371 = vmatprep.subr.mxu0 0.0
            %2372 = vmatpush1.msra.mxu0 0.0
            %2373 = vmatprep.subr.mxu0 0.0
            %2374 = vmatpush1.msra.mxu0 0.0
            %2375 = vmatprep.subr.mxu0 0.0
            %2376 = vmatpush1.msra.mxu0 0.0
            %2377 = vmatprep.subr.mxu0 0.0
            %2378 = vmatpush1.msra.mxu0 0.0
            %2379 = vmatprep.subr.mxu0 0.0
            %2380 = vmatpush1.msra.mxu0 0.0
            %2381 = vmatprep.mubr.f32.mxu0 0.0
            %v2382 = vand.u32 %v2294, 4294901760
            %v2383 = vsub.f32 %v2294, %v2382
            %v2384 = vand.u32 %v2383, 4294901760
            %v2385 = vsub.f32 %v2383, %v2384
            %v2386 = vand.u32 %v2385, 4294901760
            %2387 = vmatmul.mubr.f32.gmra.mrb[0].mxu0 %v2386
            %v2388 = vpop.f32.mrb[0].mxu0
            %v2389 = vadd.f32 %v2299, %v2388
            %v2390 = vpop.f32.mrb[0].mxu0
            %2391 = vdwg.mxu0
            %2392 = vmatprep.subr.mxu0 0.0
            %v2393 = vand.u32 %v465, 4294901760
            %v2394 = vsub.f32 %v465, %v2393
            %v2395 = vand.u32 %v2394, 4294901760
            %v2396 = vsub.f32 %v2394, %v2395
            %v2397 = vand.u32 %v2396, 4294901760
            %2398 = vmatpush1.msra.mxu0 %v2397
            %2399 = vmatprep.subr.mxu0 0.0
            %v2400 = vand.u32 %v466, 4294901760
            %v2401 = vsub.f32 %v466, %v2400
            %v2402 = vand.u32 %v2401, 4294901760
            %v2403 = vsub.f32 %v2401, %v2402
            %v2404 = vand.u32 %v2403, 4294901760
            %2405 = vmatpush1.msra.mxu0 %v2404
            %2406 = vmatprep.subr.mxu0 0.0
            %v2407 = vand.u32 %v467, 4294901760
            %v2408 = vsub.f32 %v467, %v2407
            %v2409 = vand.u32 %v2408, 4294901760
            %v2410 = vsub.f32 %v2408, %v2409
            %v2411 = vand.u32 %v2410, 4294901760
            %2412 = vmatpush1.msra.mxu0 %v2411
            %2413 = vmatprep.subr.mxu0 0.0
            %v2414 = vand.u32 %v468, 4294901760
            %v2415 = vsub.f32 %v468, %v2414
            %v2416 = vand.u32 %v2415, 4294901760
            %v2417 = vsub.f32 %v2415, %v2416
            %v2418 = vand.u32 %v2417, 4294901760
            %2419 = vmatpush1.msra.mxu0 %v2418
            %2420 = vmatprep.subr.mxu0 0.0
            %v2421 = vand.u32 %v469, 4294901760
            %v2422 = vsub.f32 %v469, %v2421
            %v2423 = vand.u32 %v2422, 4294901760
            %v2424 = vsub.f32 %v2422, %v2423
            %v2425 = vand.u32 %v2424, 4294901760
            %2426 = vmatpush1.msra.mxu0 %v2425
            %2427 = vmatprep.subr.mxu0 0.0
            %v2428 = vand.u32 %v470, 4294901760
            %v2429 = vsub.f32 %v470, %v2428
            %v2430 = vand.u32 %v2429, 4294901760
            %v2431 = vsub.f32 %v2429, %v2430
            %v2432 = vand.u32 %v2431, 4294901760
            %2433 = vmatpush1.msra.mxu0 %v2432
            %2434 = vmatprep.subr.mxu0 0.0
            %v2435 = vand.u32 %v471, 4294901760
            %v2436 = vsub.f32 %v471, %v2435
            %v2437 = vand.u32 %v2436, 4294901760
            %v2438 = vsub.f32 %v2436, %v2437
            %v2439 = vand.u32 %v2438, 4294901760
            %2440 = vmatpush1.msra.mxu0 %v2439
            %2441 = vmatprep.subr.mxu0 0.0
            %v2442 = vand.u32 %v472, 4294901760
            %v2443 = vsub.f32 %v472, %v2442
            %v2444 = vand.u32 %v2443, 4294901760
            %v2445 = vsub.f32 %v2443, %v2444
            %v2446 = vand.u32 %v2445, 4294901760
            %2447 = vmatpush1.msra.mxu0 %v2446
            %2448 = vmatprep.subr.mxu0 0.0
            %v2449 = vand.u32 %v473, 4294901760
            %v2450 = vsub.f32 %v473, %v2449
            %v2451 = vand.u32 %v2450, 4294901760
            %v2452 = vsub.f32 %v2450, %v2451
            %v2453 = vand.u32 %v2452, 4294901760
            %2454 = vmatpush1.msra.mxu0 %v2453
            %2455 = vmatprep.subr.mxu0 0.0
            %v2456 = vand.u32 %v474, 4294901760
            %v2457 = vsub.f32 %v474, %v2456
            %v2458 = vand.u32 %v2457, 4294901760
            %v2459 = vsub.f32 %v2457, %v2458
            %v2460 = vand.u32 %v2459, 4294901760
            %2461 = vmatpush1.msra.mxu0 %v2460
            %2462 = vmatprep.subr.mxu0 0.0
            %v2463 = vand.u32 %v475, 4294901760
            %v2464 = vsub.f32 %v475, %v2463
            %v2465 = vand.u32 %v2464, 4294901760
            %v2466 = vsub.f32 %v2464, %v2465
            %v2467 = vand.u32 %v2466, 4294901760
            %2468 = vmatpush1.msra.mxu0 %v2467
            %2469 = vmatprep.subr.mxu0 0.0
            %v2470 = vand.u32 %v476, 4294901760
            %v2471 = vsub.f32 %v476, %v2470
            %v2472 = vand.u32 %v2471, 4294901760
            %v2473 = vsub.f32 %v2471, %v2472
            %v2474 = vand.u32 %v2473, 4294901760
            %2475 = vmatpush1.msra.mxu0 %v2474
            %2476 = vmatprep.subr.mxu0 0.0
            %v2477 = vand.u32 %v477, 4294901760
            %v2478 = vsub.f32 %v477, %v2477
            %v2479 = vand.u32 %v2478, 4294901760
            %v2480 = vsub.f32 %v2478, %v2479
            %v2481 = vand.u32 %v2480, 4294901760
            %2482 = vmatpush1.msra.mxu0 %v2481
            %2483 = vmatprep.subr.mxu0 0.0
            %v2484 = vand.u32 %v478, 4294901760
            %v2485 = vsub.f32 %v478, %v2484
            %v2486 = vand.u32 %v2485, 4294901760
            %v2487 = vsub.f32 %v2485, %v2486
            %v2488 = vand.u32 %v2487, 4294901760
            %2489 = vmatpush1.msra.mxu0 %v2488
            %2490 = vmatprep.subr.mxu0 0.0
            %v2491 = vand.u32 %v479, 4294901760
            %v2492 = vsub.f32 %v479, %v2491
            %v2493 = vand.u32 %v2492, 4294901760
            %v2494 = vsub.f32 %v2492, %v2493
            %v2495 = vand.u32 %v2494, 4294901760
            %2496 = vmatpush1.msra.mxu0 %v2495
            %2497 = vmatprep.subr.mxu0 0.0
            %v2498 = vand.u32 %v480, 4294901760
            %v2499 = vsub.f32 %v480, %v2498
            %v2500 = vand.u32 %v2499, 4294901760
            %v2501 = vsub.f32 %v2499, %v2500
            %v2502 = vand.u32 %v2501, 4294901760
            %2503 = vmatpush1.msra.mxu0 %v2502
            %2504 = vmatprep.subr.mxu0 0.0
            %2505 = vmatpush1.msra.mxu0 0.0
            %2506 = vmatprep.subr.mxu0 0.0
            %2507 = vmatpush1.msra.mxu0 0.0
            %2508 = vmatprep.subr.mxu0 0.0
            %2509 = vmatpush1.msra.mxu0 0.0
            %2510 = vmatprep.subr.mxu0 0.0
            %2511 = vmatpush1.msra.mxu0 0.0
            %2512 = vmatprep.subr.mxu0 0.0
            %2513 = vmatpush1.msra.mxu0 0.0
            %2514 = vmatprep.subr.mxu0 0.0
            %2515 = vmatpush1.msra.mxu0 0.0
            %2516 = vmatprep.subr.mxu0 0.0
            %2517 = vmatpush1.msra.mxu0 0.0
            %2518 = vmatprep.subr.mxu0 0.0
            %2519 = vmatpush1.msra.mxu0 0.0
            %2520 = vmatprep.subr.mxu0 0.0
            %2521 = vmatpush1.msra.mxu0 0.0
            %2522 = vmatprep.subr.mxu0 0.0
            %2523 = vmatpush1.msra.mxu0 0.0
            %2524 = vmatprep.subr.mxu0 0.0
            %2525 = vmatpush1.msra.mxu0 0.0
            %2526 = vmatprep.subr.mxu0 0.0
            %2527 = vmatpush1.msra.mxu0 0.0
            %2528 = vmatprep.subr.mxu0 0.0
            %2529 = vmatpush1.msra.mxu0 0.0
            %2530 = vmatprep.subr.mxu0 0.0
            %2531 = vmatpush1.msra.mxu0 0.0
            %2532 = vmatprep.subr.mxu0 0.0
            %2533 = vmatpush1.msra.mxu0 0.0
            %2534 = vmatprep.subr.mxu0 0.0
            %2535 = vmatpush1.msra.mxu0 0.0
            %2536 = vmatprep.mubr.f32.mxu0 0.0
            %v2537 = vand.u32 %v2294, 4294901760
            %2538 = vmatmul.mubr.f32.gmra.mrb[0].mxu0 %v2537
            %v2539 = vpop.f32.mrb[0].mxu0
            %v2540 = vadd.f32 %v2389, %v2539
            %v2541 = vpop.f32.mrb[0].mxu0
            %2542 = vdwg.mxu0
            %2543 = vmatprep.subr.mxu0 0.0
            %v2544 = vand.u32 %v465, 4294901760
            %v2545 = vsub.f32 %v465, %v2544
            %2546 = vmatpush1.msra.mxu0 %v2545
            %2547 = vmatprep.subr.mxu0 0.0
            %v2548 = vand.u32 %v466, 4294901760
            %v2549 = vsub.f32 %v466, %v2548
            %2550 = vmatpush1.msra.mxu0 %v2549
            %2551 = vmatprep.subr.mxu0 0.0
            %v2552 = vand.u32 %v467, 4294901760
            %v2553 = vsub.f32 %v467, %v2552
            %2554 = vmatpush1.msra.mxu0 %v2553
            %2555 = vmatprep.subr.mxu0 0.0
            %v2556 = vand.u32 %v468, 4294901760
            %v2557 = vsub.f32 %v468, %v2556
            %2558 = vmatpush1.msra.mxu0 %v2557
            %2559 = vmatprep.subr.mxu0 0.0
            %v2560 = vand.u32 %v469, 4294901760
            %v2561 = vsub.f32 %v469, %v2560
            %2562 = vmatpush1.msra.mxu0 %v2561
            %2563 = vmatprep.subr.mxu0 0.0
            %v2564 = vand.u32 %v470, 4294901760
            %v2565 = vsub.f32 %v470, %v2564
            %2566 = vmatpush1.msra.mxu0 %v2565
            %2567 = vmatprep.subr.mxu0 0.0
            %v2568 = vand.u32 %v471, 4294901760
            %v2569 = vsub.f32 %v471, %v2568
            %2570 = vmatpush1.msra.mxu0 %v2569
            %2571 = vmatprep.subr.mxu0 0.0
            %v2572 = vand.u32 %v472, 4294901760
            %v2573 = vsub.f32 %v472, %v2572
            %2574 = vmatpush1.msra.mxu0 %v2573
            %2575 = vmatprep.subr.mxu0 0.0
            %v2576 = vand.u32 %v473, 4294901760
            %v2577 = vsub.f32 %v473, %v2576
            %2578 = vmatpush1.msra.mxu0 %v2577
            %2579 = vmatprep.subr.mxu0 0.0
            %v2580 = vand.u32 %v474, 4294901760
            %v2581 = vsub.f32 %v474, %v2580
            %2582 = vmatpush1.msra.mxu0 %v2581
            %2583 = vmatprep.subr.mxu0 0.0
            %v2584 = vand.u32 %v475, 4294901760
            %v2585 = vsub.f32 %v475, %v2584
            %2586 = vmatpush1.msra.mxu0 %v2585
            %2587 = vmatprep.subr.mxu0 0.0
            %v2588 = vand.u32 %v476, 4294901760
            %v2589 = vsub.f32 %v476, %v2588
            %2590 = vmatpush1.msra.mxu0 %v2589
            %2591 = vmatprep.subr.mxu0 0.0
            %v2592 = vand.u32 %v477, 4294901760
            %v2593 = vsub.f32 %v477, %v2592
            %2594 = vmatpush1.msra.mxu0 %v2593
            %2595 = vmatprep.subr.mxu0 0.0
            %v2596 = vand.u32 %v478, 4294901760
            %v2597 = vsub.f32 %v478, %v2596
            %2598 = vmatpush1.msra.mxu0 %v2597
            %2599 = vmatprep.subr.mxu0 0.0
            %v2600 = vand.u32 %v479, 4294901760
            %v2601 = vsub.f32 %v479, %v2600
            %2602 = vmatpush1.msra.mxu0 %v2601
            %2603 = vmatprep.subr.mxu0 0.0
            %v2604 = vand.u32 %v480, 4294901760
            %v2605 = vsub.f32 %v480, %v2604
            %2606 = vmatpush1.msra.mxu0 %v2605
            %2607 = vmatprep.subr.mxu0 0.0
            %2608 = vmatpush1.msra.mxu0 0.0
            %2609 = vmatprep.subr.mxu0 0.0
            %2610 = vmatpush1.msra.mxu0 0.0
            %2611 = vmatprep.subr.mxu0 0.0
            %2612 = vmatpush1.msra.mxu0 0.0
            %2613 = vmatprep.subr.mxu0 0.0
            %2614 = vmatpush1.msra.mxu0 0.0
            %2615 = vmatprep.subr.mxu0 0.0
            %2616 = vmatpush1.msra.mxu0 0.0
            %2617 = vmatprep.subr.mxu0 0.0
            %2618 = vmatpush1.msra.mxu0 0.0
            %2619 = vmatprep.subr.mxu0 0.0
            %2620 = vmatpush1.msra.mxu0 0.0
            %2621 = vmatprep.subr.mxu0 0.0
            %2622 = vmatpush1.msra.mxu0 0.0
            %2623 = vmatprep.subr.mxu0 0.0
            %2624 = vmatpush1.msra.mxu0 0.0
            %2625 = vmatprep.subr.mxu0 0.0
            %2626 = vmatpush1.msra.mxu0 0.0
            %2627 = vmatprep.subr.mxu0 0.0
            %2628 = vmatpush1.msra.mxu0 0.0
            %2629 = vmatprep.subr.mxu0 0.0
            %2630 = vmatpush1.msra.mxu0 0.0
            %2631 = vmatprep.subr.mxu0 0.0
            %2632 = vmatpush1.msra.mxu0 0.0
            %2633 = vmatprep.subr.mxu0 0.0
            %2634 = vmatpush1.msra.mxu0 0.0
            %2635 = vmatprep.subr.mxu0 0.0
            %2636 = vmatpush1.msra.mxu0 0.0
            %2637 = vmatprep.subr.mxu0 0.0
            %2638 = vmatpush1.msra.mxu0 0.0
            %2639 = vmatprep.mubr.f32.mxu0 0.0
            %v2640 = vand.u32 %v2294, 4294901760
            %v2641 = vsub.f32 %v2294, %v2640
            %2642 = vmatmul.mubr.f32.gmra.mrb[0].mxu0 %v2641
            %v2643 = vpop.f32.mrb[0].mxu0
            %v2644 = vadd.f32 %v2540, %v2643
            %v2645 = vpop.f32.mrb[0].mxu0
            %2646 = vdwg.mxu0
            %2647 = vmatprep.subr.mxu0 0.0
            %v2648 = vand.u32 %v465, 4294901760
            %2649 = vmatpush1.msra.mxu0 %v2648
            %2650 = vmatprep.subr.mxu0 0.0
            %v2651 = vand.u32 %v466, 4294901760
            %2652 = vmatpush1.msra.mxu0 %v2651
            %2653 = vmatprep.subr.mxu0 0.0
            %v2654 = vand.u32 %v467, 4294901760
            %2655 = vmatpush1.msra.mxu0 %v2654
            %2656 = vmatprep.subr.mxu0 0.0
            %v2657 = vand.u32 %v468, 4294901760
            %2658 = vmatpush1.msra.mxu0 %v2657
            %2659 = vmatprep.subr.mxu0 0.0
            %v2660 = vand.u32 %v469, 4294901760
            %2661 = vmatpush1.msra.mxu0 %v2660
            %2662 = vmatprep.subr.mxu0 0.0
            %v2663 = vand.u32 %v470, 4294901760
            %2664 = vmatpush1.msra.mxu0 %v2663
            %2665 = vmatprep.subr.mxu0 0.0
            %v2666 = vand.u32 %v471, 4294901760
            %2667 = vmatpush1.msra.mxu0 %v2666
            %2668 = vmatprep.subr.mxu0 0.0
            %v2669 = vand.u32 %v472, 4294901760
            %2670 = vmatpush1.msra.mxu0 %v2669
            %2671 = vmatprep.subr.mxu0 0.0
            %v2672 = vand.u32 %v473, 4294901760
            %2673 = vmatpush1.msra.mxu0 %v2672
            %2674 = vmatprep.subr.mxu0 0.0
            %v2675 = vand.u32 %v474, 4294901760
            %2676 = vmatpush1.msra.mxu0 %v2675
            %2677 = vmatprep.subr.mxu0 0.0
            %v2678 = vand.u32 %v475, 4294901760
            %2679 = vmatpush1.msra.mxu0 %v2678
            %2680 = vmatprep.subr.mxu0 0.0
            %v2681 = vand.u32 %v476, 4294901760
            %2682 = vmatpush1.msra.mxu0 %v2681
            %2683 = vmatprep.subr.mxu0 0.0
            %v2684 = vand.u32 %v477, 4294901760
            %2685 = vmatpush1.msra.mxu0 %v2684
            %2686 = vmatprep.subr.mxu0 0.0
            %v2687 = vand.u32 %v478, 4294901760
            %2688 = vmatpush1.msra.mxu0 %v2687
            %2689 = vmatprep.subr.mxu0 0.0
            %v2690 = vand.u32 %v479, 4294901760
            %2691 = vmatpush1.msra.mxu0 %v2690
            %2692 = vmatprep.subr.mxu0 0.0
            %v2693 = vand.u32 %v480, 4294901760
            %2694 = vmatpush1.msra.mxu0 %v2693
            %2695 = vmatprep.subr.mxu0 0.0
            %2696 = vmatpush1.msra.mxu0 0.0
            %2697 = vmatprep.subr.mxu0 0.0
            %2698 = vmatpush1.msra.mxu0 0.0
            %2699 = vmatprep.subr.mxu0 0.0
            %2700 = vmatpush1.msra.mxu0 0.0
            %2701 = vmatprep.subr.mxu0 0.0
            %2702 = vmatpush1.msra.mxu0 0.0
            %2703 = vmatprep.subr.mxu0 0.0
            %2704 = vmatpush1.msra.mxu0 0.0
            %2705 = vmatprep.subr.mxu0 0.0
            %2706 = vmatpush1.msra.mxu0 0.0
            %2707 = vmatprep.subr.mxu0 0.0
            %2708 = vmatpush1.msra.mxu0 0.0
            %2709 = vmatprep.subr.mxu0 0.0
            %2710 = vmatpush1.msra.mxu0 0.0
            %2711 = vmatprep.subr.mxu0 0.0
            %2712 = vmatpush1.msra.mxu0 0.0
            %2713 = vmatprep.subr.mxu0 0.0
            %2714 = vmatpush1.msra.mxu0 0.0
            %2715 = vmatprep.subr.mxu0 0.0
            %2716 = vmatpush1.msra.mxu0 0.0
            %2717 = vmatprep.subr.mxu0 0.0
            %2718 = vmatpush1.msra.mxu0 0.0
            %2719 = vmatprep.subr.mxu0 0.0
            %2720 = vmatpush1.msra.mxu0 0.0
            %2721 = vmatprep.subr.mxu0 0.0
            %2722 = vmatpush1.msra.mxu0 0.0
            %2723 = vmatprep.subr.mxu0 0.0
            %2724 = vmatpush1.msra.mxu0 0.0
            %2725 = vmatprep.subr.mxu0 0.0
            %2726 = vmatpush1.msra.mxu0 0.0
            %2727 = vmatprep.mubr.f32.mxu0 0.0
            %v2728 = vand.u32 %v2294, 4294901760
            %v2729 = vsub.f32 %v2294, %v2728
            %v2730 = vand.u32 %v2729, 4294901760
            %2731 = vmatmul.mubr.f32.gmra.mrb[0].mxu0 %v2730
            %v2732 = vpop.f32.mrb[0].mxu0
            %v2733 = vadd.f32 %v2644, %v2732
            %v2734 = vpop.f32.mrb[0].mxu0
            %2735 = vdwg.mxu0
            %2736 = vmatprep.subr.mxu0 0.0
            %v2737 = vand.u32 %v465, 4294901760
            %v2738 = vsub.f32 %v465, %v2737
            %v2739 = vand.u32 %v2738, 4294901760
            %2740 = vmatpush1.msra.mxu0 %v2739
            %2741 = vmatprep.subr.mxu0 0.0
            %v2742 = vand.u32 %v466, 4294901760
            %v2743 = vsub.f32 %v466, %v2742
            %v2744 = vand.u32 %v2743, 4294901760
            %2745 = vmatpush1.msra.mxu0 %v2744
            %2746 = vmatprep.subr.mxu0 0.0
            %v2747 = vand.u32 %v467, 4294901760
            %v2748 = vsub.f32 %v467, %v2747
            %v2749 = vand.u32 %v2748, 4294901760
            %2750 = vmatpush1.msra.mxu0 %v2749
            %2751 = vmatprep.subr.mxu0 0.0
            %v2752 = vand.u32 %v468, 4294901760
            %v2753 = vsub.f32 %v468, %v2752
            %v2754 = vand.u32 %v2753, 4294901760
            %2755 = vmatpush1.msra.mxu0 %v2754
            %2756 = vmatprep.subr.mxu0 0.0
            %v2757 = vand.u32 %v469, 4294901760
            %v2758 = vsub.f32 %v469, %v2757
            %v2759 = vand.u32 %v2758, 4294901760
            %2760 = vmatpush1.msra.mxu0 %v2759
            %2761 = vmatprep.subr.mxu0 0.0
            %v2762 = vand.u32 %v470, 4294901760
            %v2763 = vsub.f32 %v470, %v2762
            %v2764 = vand.u32 %v2763, 4294901760
            %2765 = vmatpush1.msra.mxu0 %v2764
            %2766 = vmatprep.subr.mxu0 0.0
            %v2767 = vand.u32 %v471, 4294901760
            %v2768 = vsub.f32 %v471, %v2767
            %v2769 = vand.u32 %v2768, 4294901760
            %2770 = vmatpush1.msra.mxu0 %v2769
            %2771 = vmatprep.subr.mxu0 0.0
            %v2772 = vand.u32 %v472, 4294901760
            %v2773 = vsub.f32 %v472, %v2772
            %v2774 = vand.u32 %v2773, 4294901760
            %2775 = vmatpush1.msra.mxu0 %v2774
            %2776 = vmatprep.subr.mxu0 0.0
            %v2777 = vand.u32 %v473, 4294901760
            %v2778 = vsub.f32 %v473, %v2777
            %v2779 = vand.u32 %v2778, 4294901760
            %2780 = vmatpush1.msra.mxu0 %v2779
            %2781 = vmatprep.subr.mxu0 0.0
            %v2782 = vand.u32 %v474, 4294901760
            %v2783 = vsub.f32 %v474, %v2782
            %v2784 = vand.u32 %v2783, 4294901760
            %2785 = vmatpush1.msra.mxu0 %v2784
            %2786 = vmatprep.subr.mxu0 0.0
            %v2787 = vand.u32 %v475, 4294901760
            %v2788 = vsub.f32 %v475, %v2787
            %v2789 = vand.u32 %v2788, 4294901760
            %2790 = vmatpush1.msra.mxu0 %v2789
            %2791 = vmatprep.subr.mxu0 0.0
            %v2792 = vand.u32 %v476, 4294901760
            %v2793 = vsub.f32 %v476, %v2792
            %v2794 = vand.u32 %v2793, 4294901760
            %2795 = vmatpush1.msra.mxu0 %v2794
            %2796 = vmatprep.subr.mxu0 0.0
            %v2797 = vand.u32 %v477, 4294901760
            %v2798 = vsub.f32 %v477, %v2797
            %v2799 = vand.u32 %v2798, 4294901760
            %2800 = vmatpush1.msra.mxu0 %v2799
            %2801 = vmatprep.subr.mxu0 0.0
            %v2802 = vand.u32 %v478, 4294901760
            %v2803 = vsub.f32 %v478, %v2802
            %v2804 = vand.u32 %v2803, 4294901760
            %2805 = vmatpush1.msra.mxu0 %v2804
            %2806 = vmatprep.subr.mxu0 0.0
            %v2807 = vand.u32 %v479, 4294901760
            %v2808 = vsub.f32 %v479, %v2807
            %v2809 = vand.u32 %v2808, 4294901760
            %2810 = vmatpush1.msra.mxu0 %v2809
            %2811 = vmatprep.subr.mxu0 0.0
            %v2812 = vand.u32 %v480, 4294901760
            %v2813 = vsub.f32 %v480, %v2812
            %v2814 = vand.u32 %v2813, 4294901760
            %2815 = vmatpush1.msra.mxu0 %v2814
            %2816 = vmatprep.subr.mxu0 0.0
            %2817 = vmatpush1.msra.mxu0 0.0
            %2818 = vmatprep.subr.mxu0 0.0
            %2819 = vmatpush1.msra.mxu0 0.0
            %2820 = vmatprep.subr.mxu0 0.0
            %2821 = vmatpush1.msra.mxu0 0.0
            %2822 = vmatprep.subr.mxu0 0.0
            %2823 = vmatpush1.msra.mxu0 0.0
            %2824 = vmatprep.subr.mxu0 0.0
            %2825 = vmatpush1.msra.mxu0 0.0
            %2826 = vmatprep.subr.mxu0 0.0
            %2827 = vmatpush1.msra.mxu0 0.0
            %2828 = vmatprep.subr.mxu0 0.0
            %2829 = vmatpush1.msra.mxu0 0.0
            %2830 = vmatprep.subr.mxu0 0.0
            %2831 = vmatpush1.msra.mxu0 0.0
            %2832 = vmatprep.subr.mxu0 0.0
            %2833 = vmatpush1.msra.mxu0 0.0
            %2834 = vmatprep.subr.mxu0 0.0
            %2835 = vmatpush1.msra.mxu0 0.0
            %2836 = vmatprep.subr.mxu0 0.0
            %2837 = vmatpush1.msra.mxu0 0.0
            %2838 = vmatprep.subr.mxu0 0.0
            %2839 = vmatpush1.msra.mxu0 0.0
            %2840 = vmatprep.subr.mxu0 0.0
            %2841 = vmatpush1.msra.mxu0 0.0
            %2842 = vmatprep.subr.mxu0 0.0
            %2843 = vmatpush1.msra.mxu0 0.0
            %2844 = vmatprep.subr.mxu0 0.0
            %2845 = vmatpush1.msra.mxu0 0.0
            %2846 = vmatprep.subr.mxu0 0.0
            %2847 = vmatpush1.msra.mxu0 0.0
            %2848 = vmatprep.mubr.f32.mxu0 0.0
            %v2849 = vand.u32 %v2294, 4294901760
            %2850 = vmatmul.mubr.f32.gmra.mrb[0].mxu0 %v2849
            %v2851 = vpop.f32.mrb[0].mxu0
            %v2852 = vadd.f32 %v2733, %v2851
            %v2853 = vpop.f32.mrb[0].mxu0
            %2854 = vdwg.mxu0
            %2855 = vmatprep.subr.mxu0 0.0
            %v2856 = vand.u32 %v465, 4294901760
            %2857 = vmatpush1.msra.mxu0 %v2856
            %2858 = vmatprep.subr.mxu0 0.0
            %v2859 = vand.u32 %v466, 4294901760
            %2860 = vmatpush1.msra.mxu0 %v2859
            %2861 = vmatprep.subr.mxu0 0.0
            %v2862 = vand.u32 %v467, 4294901760
            %2863 = vmatpush1.msra.mxu0 %v2862
            %2864 = vmatprep.subr.mxu0 0.0
            %v2865 = vand.u32 %v468, 4294901760
            %2866 = vmatpush1.msra.mxu0 %v2865
            %2867 = vmatprep.subr.mxu0 0.0
            %v2868 = vand.u32 %v469, 4294901760
            %2869 = vmatpush1.msra.mxu0 %v2868
            %2870 = vmatprep.subr.mxu0 0.0
            %v2871 = vand.u32 %v470, 4294901760
            %2872 = vmatpush1.msra.mxu0 %v2871
            %2873 = vmatprep.subr.mxu0 0.0
            %v2874 = vand.u32 %v471, 4294901760
            %2875 = vmatpush1.msra.mxu0 %v2874
            %2876 = vmatprep.subr.mxu0 0.0
            %v2877 = vand.u32 %v472, 4294901760
            %2878 = vmatpush1.msra.mxu0 %v2877
            %2879 = vmatprep.subr.mxu0 0.0
            %v2880 = vand.u32 %v473, 4294901760
            %2881 = vmatpush1.msra.mxu0 %v2880
            %2882 = vmatprep.subr.mxu0 0.0
            %v2883 = vand.u32 %v474, 4294901760
            %2884 = vmatpush1.msra.mxu0 %v2883
            %2885 = vmatprep.subr.mxu0 0.0
            %v2886 = vand.u32 %v475, 4294901760
            %2887 = vmatpush1.msra.mxu0 %v2886
            %2888 = vmatprep.subr.mxu0 0.0
            %v2889 = vand.u32 %v476, 4294901760
            %2890 = vmatpush1.msra.mxu0 %v2889
            %2891 = vmatprep.subr.mxu0 0.0
            %v2892 = vand.u32 %v477, 4294901760
            %2893 = vmatpush1.msra.mxu0 %v2892
            %2894 = vmatprep.subr.mxu0 0.0
            %v2895 = vand.u32 %v478, 4294901760
            %2896 = vmatpush1.msra.mxu0 %v2895
            %2897 = vmatprep.subr.mxu0 0.0
            %v2898 = vand.u32 %v479, 4294901760
            %2899 = vmatpush1.msra.mxu0 %v2898
            %2900 = vmatprep.subr.mxu0 0.0
            %v2901 = vand.u32 %v480, 4294901760
            %2902 = vmatpush1.msra.mxu0 %v2901
            %2903 = vmatprep.subr.mxu0 0.0
            %2904 = vmatpush1.msra.mxu0 0.0
            %2905 = vmatprep.subr.mxu0 0.0
            %2906 = vmatpush1.msra.mxu0 0.0
            %2907 = vmatprep.subr.mxu0 0.0
            %2908 = vmatpush1.msra.mxu0 0.0
            %2909 = vmatprep.subr.mxu0 0.0
            %2910 = vmatpush1.msra.mxu0 0.0
            %2911 = vmatprep.subr.mxu0 0.0
            %2912 = vmatpush1.msra.mxu0 0.0
            %2913 = vmatprep.subr.mxu0 0.0
            %2914 = vmatpush1.msra.mxu0 0.0
            %2915 = vmatprep.subr.mxu0 0.0
            %2916 = vmatpush1.msra.mxu0 0.0
            %2917 = vmatprep.subr.mxu0 0.0
            %2918 = vmatpush1.msra.mxu0 0.0
            %2919 = vmatprep.subr.mxu0 0.0
            %2920 = vmatpush1.msra.mxu0 0.0
            %2921 = vmatprep.subr.mxu0 0.0
            %2922 = vmatpush1.msra.mxu0 0.0
            %2923 = vmatprep.subr.mxu0 0.0
            %2924 = vmatpush1.msra.mxu0 0.0
            %2925 = vmatprep.subr.mxu0 0.0
            %2926 = vmatpush1.msra.mxu0 0.0
            %2927 = vmatprep.subr.mxu0 0.0
            %2928 = vmatpush1.msra.mxu0 0.0
            %2929 = vmatprep.subr.mxu0 0.0
            %2930 = vmatpush1.msra.mxu0 0.0
            %2931 = vmatprep.subr.mxu0 0.0
            %2932 = vmatpush1.msra.mxu0 0.0
            %2933 = vmatprep.subr.mxu0 0.0
            %2934 = vmatpush1.msra.mxu0 0.0
            %2935 = vmatprep.mubr.f32.mxu0 0.0
            %v2936 = vand.u32 %v2294, 4294901760
            %2937 = vmatmul.mubr.f32.gmra.mrb[0].mxu0 %v2936
            %v2938 = vpop.f32.mrb[0].mxu0
            %v2939 = vadd.f32 %v2852, %v2938
            %v2940 = vpop.f32.mrb[0].mxu0
            %2941 = vdwg.mxu0
            %v2942 = vtanh.pop %v2939
            %v2944 = vlaneseq
            %v2945 = vshrl.u32 %v2944, 7
            %v2946 = vsub.s32 0, %v2945
            %v2947 = vrot.slane %v498, %v2946
            %2949 = vmatprep.subr.mxu0 0.0
            %v2950 = vand.u32 %v481, 4294901760
            %2951 = vmatpush1.msra.mxu0 %v2950
            %2952 = vmatprep.subr.mxu0 0.0
            %v2953 = vand.u32 %v482, 4294901760
            %2954 = vmatpush1.msra.mxu0 %v2953
            %2955 = vmatprep.subr.mxu0 0.0
            %v2956 = vand.u32 %v483, 4294901760
            %2957 = vmatpush1.msra.mxu0 %v2956
            %2958 = vmatprep.subr.mxu0 0.0
            %v2959 = vand.u32 %v484, 4294901760
            %2960 = vmatpush1.msra.mxu0 %v2959
            %2961 = vmatprep.subr.mxu0 0.0
            %v2962 = vand.u32 %v485, 4294901760
            %2963 = vmatpush1.msra.mxu0 %v2962
            %2964 = vmatprep.subr.mxu0 0.0
            %v2965 = vand.u32 %v486, 4294901760
            %2966 = vmatpush1.msra.mxu0 %v2965
            %2967 = vmatprep.subr.mxu0 0.0
            %v2968 = vand.u32 %v487, 4294901760
            %2969 = vmatpush1.msra.mxu0 %v2968
            %2970 = vmatprep.subr.mxu0 0.0
            %v2971 = vand.u32 %v488, 4294901760
            %2972 = vmatpush1.msra.mxu0 %v2971
            %2973 = vmatprep.subr.mxu0 0.0
            %v2974 = vand.u32 %v489, 4294901760
            %2975 = vmatpush1.msra.mxu0 %v2974
            %2976 = vmatprep.subr.mxu0 0.0
            %v2977 = vand.u32 %v490, 4294901760
            %2978 = vmatpush1.msra.mxu0 %v2977
            %2979 = vmatprep.subr.mxu0 0.0
            %v2980 = vand.u32 %v491, 4294901760
            %2981 = vmatpush1.msra.mxu0 %v2980
            %2982 = vmatprep.subr.mxu0 0.0
            %v2983 = vand.u32 %v492, 4294901760
            %2984 = vmatpush1.msra.mxu0 %v2983
            %2985 = vmatprep.subr.mxu0 0.0
            %v2986 = vand.u32 %v493, 4294901760
            %2987 = vmatpush1.msra.mxu0 %v2986
            %2988 = vmatprep.subr.mxu0 0.0
            %v2989 = vand.u32 %v494, 4294901760
            %2990 = vmatpush1.msra.mxu0 %v2989
            %2991 = vmatprep.subr.mxu0 0.0
            %v2992 = vand.u32 %v495, 4294901760
            %2993 = vmatpush1.msra.mxu0 %v2992
            %2994 = vmatprep.subr.mxu0 0.0
            %v2995 = vand.u32 %v496, 4294901760
            %2996 = vmatpush1.msra.mxu0 %v2995
            %2997 = vmatprep.subr.mxu0 0.0
            %2998 = vmatpush1.msra.mxu0 0.0
            %2999 = vmatprep.subr.mxu0 0.0
            %3000 = vmatpush1.msra.mxu0 0.0
            %3001 = vmatprep.subr.mxu0 0.0
            %3002 = vmatpush1.msra.mxu0 0.0
            %3003 = vmatprep.subr.mxu0 0.0
            %3004 = vmatpush1.msra.mxu0 0.0
            %3005 = vmatprep.subr.mxu0 0.0
            %3006 = vmatpush1.msra.mxu0 0.0
            %3007 = vmatprep.subr.mxu0 0.0
            %3008 = vmatpush1.msra.mxu0 0.0
            %3009 = vmatprep.subr.mxu0 0.0
            %3010 = vmatpush1.msra.mxu0 0.0
            %3011 = vmatprep.subr.mxu0 0.0
            %3012 = vmatpush1.msra.mxu0 0.0
            %3013 = vmatprep.subr.mxu0 0.0
            %3014 = vmatpush1.msra.mxu0 0.0
            %3015 = vmatprep.subr.mxu0 0.0
            %3016 = vmatpush1.msra.mxu0 0.0
            %3017 = vmatprep.subr.mxu0 0.0
            %3018 = vmatpush1.msra.mxu0 0.0
            %3019 = vmatprep.subr.mxu0 0.0
            %3020 = vmatpush1.msra.mxu0 0.0
            %3021 = vmatprep.subr.mxu0 0.0
            %3022 = vmatpush1.msra.mxu0 0.0
            %3023 = vmatprep.subr.mxu0 0.0
            %3024 = vmatpush1.msra.mxu0 0.0
            %3025 = vmatprep.subr.mxu0 0.0
            %3026 = vmatpush1.msra.mxu0 0.0
            %3027 = vmatprep.subr.mxu0 0.0
            %3028 = vmatpush1.msra.mxu0 0.0
            %3029 = vmatprep.mubr.f32.mxu0 0.0
            %v3030 = vand.u32 %v2942, 4294901760
            %v3031 = vsub.f32 %v2942, %v3030
            %v3032 = vand.u32 %v3031, 4294901760
            %v3033 = vsub.f32 %v3031, %v3032
            %v3034 = vand.u32 %v3033, 4294901760
            %3035 = vmatmul.mubr.f32.gmra.mrb[0].mxu0 %v3034
            %v3036 = vpop.f32.mrb[0].mxu0
            %v3037 = vadd.f32 %v2947, %v3036
            %v3038 = vpop.f32.mrb[0].mxu0
            %3039 = vdwg.mxu0
            %3040 = vmatprep.subr.mxu0 0.0
            %v3041 = vand.u32 %v481, 4294901760
            %v3042 = vsub.f32 %v481, %v3041
            %v3043 = vand.u32 %v3042, 4294901760
            %v3044 = vsub.f32 %v3042, %v3043
            %v3045 = vand.u32 %v3044, 4294901760
            %3046 = vmatpush1.msra.mxu0 %v3045
            %3047 = vmatprep.subr.mxu0 0.0
            %v3048 = vand.u32 %v482, 4294901760
            %v3049 = vsub.f32 %v482, %v3048
            %v3050 = vand.u32 %v3049, 4294901760
            %v3051 = vsub.f32 %v3049, %v3050
            %v3052 = vand.u32 %v3051, 4294901760
            %3053 = vmatpush1.msra.mxu0 %v3052
            %3054 = vmatprep.subr.mxu0 0.0
            %v3055 = vand.u32 %v483, 4294901760
            %v3056 = vsub.f32 %v483, %v3055
            %v3057 = vand.u32 %v3056, 4294901760
            %v3058 = vsub.f32 %v3056, %v3057
            %v3059 = vand.u32 %v3058, 4294901760
            %3060 = vmatpush1.msra.mxu0 %v3059
            %3061 = vmatprep.subr.mxu0 0.0
            %v3062 = vand.u32 %v484, 4294901760
            %v3063 = vsub.f32 %v484, %v3062
            %v3064 = vand.u32 %v3063, 4294901760
            %v3065 = vsub.f32 %v3063, %v3064
            %v3066 = vand.u32 %v3065, 4294901760
            %3067 = vmatpush1.msra.mxu0 %v3066
            %3068 = vmatprep.subr.mxu0 0.0
            %v3069 = vand.u32 %v485, 4294901760
            %v3070 = vsub.f32 %v485, %v3069
            %v3071 = vand.u32 %v3070, 4294901760
            %v3072 = vsub.f32 %v3070, %v3071
            %v3073 = vand.u32 %v3072, 4294901760
            %3074 = vmatpush1.msra.mxu0 %v3073
            %3075 = vmatprep.subr.mxu0 0.0
            %v3076 = vand.u32 %v486, 4294901760
            %v3077 = vsub.f32 %v486, %v3076
            %v3078 = vand.u32 %v3077, 4294901760
            %v3079 = vsub.f32 %v3077, %v3078
            %v3080 = vand.u32 %v3079, 4294901760
            %3081 = vmatpush1.msra.mxu0 %v3080
            %3082 = vmatprep.subr.mxu0 0.0
            %v3083 = vand.u32 %v487, 4294901760
            %v3084 = vsub.f32 %v487, %v3083
            %v3085 = vand.u32 %v3084, 4294901760
            %v3086 = vsub.f32 %v3084, %v3085
            %v3087 = vand.u32 %v3086, 4294901760
            %3088 = vmatpush1.msra.mxu0 %v3087
            %3089 = vmatprep.subr.mxu0 0.0
            %v3090 = vand.u32 %v488, 4294901760
            %v3091 = vsub.f32 %v488, %v3090
            %v3092 = vand.u32 %v3091, 4294901760
            %v3093 = vsub.f32 %v3091, %v3092
            %v3094 = vand.u32 %v3093, 4294901760
            %3095 = vmatpush1.msra.mxu0 %v3094
            %3096 = vmatprep.subr.mxu0 0.0
            %v3097 = vand.u32 %v489, 4294901760
            %v3098 = vsub.f32 %v489, %v3097
            %v3099 = vand.u32 %v3098, 4294901760
            %v3100 = vsub.f32 %v3098, %v3099
            %v3101 = vand.u32 %v3100, 4294901760
            %3102 = vmatpush1.msra.mxu0 %v3101
            %3103 = vmatprep.subr.mxu0 0.0
            %v3104 = vand.u32 %v490, 4294901760
            %v3105 = vsub.f32 %v490, %v3104
            %v3106 = vand.u32 %v3105, 4294901760
            %v3107 = vsub.f32 %v3105, %v3106
            %v3108 = vand.u32 %v3107, 4294901760
            %3109 = vmatpush1.msra.mxu0 %v3108
            %3110 = vmatprep.subr.mxu0 0.0
            %v3111 = vand.u32 %v491, 4294901760
            %v3112 = vsub.f32 %v491, %v3111
            %v3113 = vand.u32 %v3112, 4294901760
            %v3114 = vsub.f32 %v3112, %v3113
            %v3115 = vand.u32 %v3114, 4294901760
            %3116 = vmatpush1.msra.mxu0 %v3115
            %3117 = vmatprep.subr.mxu0 0.0
            %v3118 = vand.u32 %v492, 4294901760
            %v3119 = vsub.f32 %v492, %v3118
            %v3120 = vand.u32 %v3119, 4294901760
            %v3121 = vsub.f32 %v3119, %v3120
            %v3122 = vand.u32 %v3121, 4294901760
            %3123 = vmatpush1.msra.mxu0 %v3122
            %3124 = vmatprep.subr.mxu0 0.0
            %v3125 = vand.u32 %v493, 4294901760
            %v3126 = vsub.f32 %v493, %v3125
            %v3127 = vand.u32 %v3126, 4294901760
            %v3128 = vsub.f32 %v3126, %v3127
            %v3129 = vand.u32 %v3128, 4294901760
            %3130 = vmatpush1.msra.mxu0 %v3129
            %3131 = vmatprep.subr.mxu0 0.0
            %v3132 = vand.u32 %v494, 4294901760
            %v3133 = vsub.f32 %v494, %v3132
            %v3134 = vand.u32 %v3133, 4294901760
            %v3135 = vsub.f32 %v3133, %v3134
            %v3136 = vand.u32 %v3135, 4294901760
            %3137 = vmatpush1.msra.mxu0 %v3136
            %3138 = vmatprep.subr.mxu0 0.0
            %v3139 = vand.u32 %v495, 4294901760
            %v3140 = vsub.f32 %v495, %v3139
            %v3141 = vand.u32 %v3140, 4294901760
            %v3142 = vsub.f32 %v3140, %v3141
            %v3143 = vand.u32 %v3142, 4294901760
            %3144 = vmatpush1.msra.mxu0 %v3143
            %3145 = vmatprep.subr.mxu0 0.0
            %v3146 = vand.u32 %v496, 4294901760
            %v3147 = vsub.f32 %v496, %v3146
            %v3148 = vand.u32 %v3147, 4294901760
            %v3149 = vsub.f32 %v3147, %v3148
            %v3150 = vand.u32 %v3149, 4294901760
            %3151 = vmatpush1.msra.mxu0 %v3150
            %3152 = vmatprep.subr.mxu0 0.0
            %3153 = vmatpush1.msra.mxu0 0.0
            %3154 = vmatprep.subr.mxu0 0.0
            %3155 = vmatpush1.msra.mxu0 0.0
            %3156 = vmatprep.subr.mxu0 0.0
            %3157 = vmatpush1.msra.mxu0 0.0
            %3158 = vmatprep.subr.mxu0 0.0
            %3159 = vmatpush1.msra.mxu0 0.0
            %3160 = vmatprep.subr.mxu0 0.0
            %3161 = vmatpush1.msra.mxu0 0.0
            %3162 = vmatprep.subr.mxu0 0.0
            %3163 = vmatpush1.msra.mxu0 0.0
            %3164 = vmatprep.subr.mxu0 0.0
            %3165 = vmatpush1.msra.mxu0 0.0
            %3166 = vmatprep.subr.mxu0 0.0
            %3167 = vmatpush1.msra.mxu0 0.0
            %3168 = vmatprep.subr.mxu0 0.0
            %3169 = vmatpush1.msra.mxu0 0.0
            %3170 = vmatprep.subr.mxu0 0.0
            %3171 = vmatpush1.msra.mxu0 0.0
            %3172 = vmatprep.subr.mxu0 0.0
            %3173 = vmatpush1.msra.mxu0 0.0
            %3174 = vmatprep.subr.mxu0 0.0
            %3175 = vmatpush1.msra.mxu0 0.0
            %3176 = vmatprep.subr.mxu0 0.0
            %3177 = vmatpush1.msra.mxu0 0.0
            %3178 = vmatprep.subr.mxu0 0.0
            %3179 = vmatpush1.msra.mxu0 0.0
            %3180 = vmatprep.subr.mxu0 0.0
            %3181 = vmatpush1.msra.mxu0 0.0
            %3182 = vmatprep.subr.mxu0 0.0
            %3183 = vmatpush1.msra.mxu0 0.0
            %3184 = vmatprep.mubr.f32.mxu0 0.0
            %v3185 = vand.u32 %v2942, 4294901760
            %3186 = vmatmul.mubr.f32.gmra.mrb[0].mxu0 %v3185
            %v3187 = vpop.f32.mrb[0].mxu0
            %v3188 = vadd.f32 %v3037, %v3187
            %v3189 = vpop.f32.mrb[0].mxu0
            %3190 = vdwg.mxu0
            %3191 = vmatprep.subr.mxu0 0.0
            %v3192 = vand.u32 %v481, 4294901760
            %v3193 = vsub.f32 %v481, %v3192
            %3194 = vmatpush1.msra.mxu0 %v3193
            %3195 = vmatprep.subr.mxu0 0.0
            %v3196 = vand.u32 %v482, 4294901760
            %v3197 = vsub.f32 %v482, %v3196
            %3198 = vmatpush1.msra.mxu0 %v3197
            %3199 = vmatprep.subr.mxu0 0.0
            %v3200 = vand.u32 %v483, 4294901760
            %v3201 = vsub.f32 %v483, %v3200
            %3202 = vmatpush1.msra.mxu0 %v3201
            %3203 = vmatprep.subr.mxu0 0.0
            %v3204 = vand.u32 %v484, 4294901760
            %v3205 = vsub.f32 %v484, %v3204
            %3206 = vmatpush1.msra.mxu0 %v3205
            %3207 = vmatprep.subr.mxu0 0.0
            %v3208 = vand.u32 %v485, 4294901760
            %v3209 = vsub.f32 %v485, %v3208
            %3210 = vmatpush1.msra.mxu0 %v3209
            %3211 = vmatprep.subr.mxu0 0.0
            %v3212 = vand.u32 %v486, 4294901760
            %v3213 = vsub.f32 %v486, %v3212
            %3214 = vmatpush1.msra.mxu0 %v3213
            %3215 = vmatprep.subr.mxu0 0.0
            %v3216 = vand.u32 %v487, 4294901760
            %v3217 = vsub.f32 %v487, %v3216
            %3218 = vmatpush1.msra.mxu0 %v3217
            %3219 = vmatprep.subr.mxu0 0.0
            %v3220 = vand.u32 %v488, 4294901760
            %v3221 = vsub.f32 %v488, %v3220
            %3222 = vmatpush1.msra.mxu0 %v3221
            %3223 = vmatprep.subr.mxu0 0.0
            %v3224 = vand.u32 %v489, 4294901760
            %v3225 = vsub.f32 %v489, %v3224
            %3226 = vmatpush1.msra.mxu0 %v3225
            %3227 = vmatprep.subr.mxu0 0.0
            %v3228 = vand.u32 %v490, 4294901760
            %v3229 = vsub.f32 %v490, %v3228
            %3230 = vmatpush1.msra.mxu0 %v3229
            %3231 = vmatprep.subr.mxu0 0.0
            %v3232 = vand.u32 %v491, 4294901760
            %v3233 = vsub.f32 %v491, %v3232
            %3234 = vmatpush1.msra.mxu0 %v3233
            %3235 = vmatprep.subr.mxu0 0.0
            %v3236 = vand.u32 %v492, 4294901760
            %v3237 = vsub.f32 %v492, %v3236
            %3238 = vmatpush1.msra.mxu0 %v3237
            %3239 = vmatprep.subr.mxu0 0.0
            %v3240 = vand.u32 %v493, 4294901760
            %v3241 = vsub.f32 %v493, %v3240
            %3242 = vmatpush1.msra.mxu0 %v3241
            %3243 = vmatprep.subr.mxu0 0.0
            %v3244 = vand.u32 %v494, 4294901760
            %v3245 = vsub.f32 %v494, %v3244
            %3246 = vmatpush1.msra.mxu0 %v3245
            %3247 = vmatprep.subr.mxu0 0.0
            %v3248 = vand.u32 %v495, 4294901760
            %v3249 = vsub.f32 %v495, %v3248
            %3250 = vmatpush1.msra.mxu0 %v3249
            %3251 = vmatprep.subr.mxu0 0.0
            %v3252 = vand.u32 %v496, 4294901760
            %v3253 = vsub.f32 %v496, %v3252
            %3254 = vmatpush1.msra.mxu0 %v3253
            %3255 = vmatprep.subr.mxu0 0.0
            %3256 = vmatpush1.msra.mxu0 0.0
            %3257 = vmatprep.subr.mxu0 0.0
            %3258 = vmatpush1.msra.mxu0 0.0
            %3259 = vmatprep.subr.mxu0 0.0
            %3260 = vmatpush1.msra.mxu0 0.0
            %3261 = vmatprep.subr.mxu0 0.0
            %3262 = vmatpush1.msra.mxu0 0.0
            %3263 = vmatprep.subr.mxu0 0.0
            %3264 = vmatpush1.msra.mxu0 0.0
            %3265 = vmatprep.subr.mxu0 0.0
            %3266 = vmatpush1.msra.mxu0 0.0
            %3267 = vmatprep.subr.mxu0 0.0
            %3268 = vmatpush1.msra.mxu0 0.0
            %3269 = vmatprep.subr.mxu0 0.0
            %3270 = vmatpush1.msra.mxu0 0.0
            %3271 = vmatprep.subr.mxu0 0.0
            %3272 = vmatpush1.msra.mxu0 0.0
            %3273 = vmatprep.subr.mxu0 0.0
            %3274 = vmatpush1.msra.mxu0 0.0
            %3275 = vmatprep.subr.mxu0 0.0
            %3276 = vmatpush1.msra.mxu0 0.0
            %3277 = vmatprep.subr.mxu0 0.0
            %3278 = vmatpush1.msra.mxu0 0.0
            %3279 = vmatprep.subr.mxu0 0.0
            %3280 = vmatpush1.msra.mxu0 0.0
            %3281 = vmatprep.subr.mxu0 0.0
            %3282 = vmatpush1.msra.mxu0 0.0
            %3283 = vmatprep.subr.mxu0 0.0
            %3284 = vmatpush1.msra.mxu0 0.0
            %3285 = vmatprep.subr.mxu0 0.0
            %3286 = vmatpush1.msra.mxu0 0.0
            %3287 = vmatprep.mubr.f32.mxu0 0.0
            %v3288 = vand.u32 %v2942, 4294901760
            %v3289 = vsub.f32 %v2942, %v3288
            %3290 = vmatmul.mubr.f32.gmra.mrb[0].mxu0 %v3289
            %v3291 = vpop.f32.mrb[0].mxu0
            %v3292 = vadd.f32 %v3188, %v3291
            %v3293 = vpop.f32.mrb[0].mxu0
            %3294 = vdwg.mxu0
            %3295 = vmatprep.subr.mxu0 0.0
            %v3296 = vand.u32 %v481, 4294901760
            %3297 = vmatpush1.msra.mxu0 %v3296
            %3298 = vmatprep.subr.mxu0 0.0
            %v3299 = vand.u32 %v482, 4294901760
            %3300 = vmatpush1.msra.mxu0 %v3299
            %3301 = vmatprep.subr.mxu0 0.0
            %v3302 = vand.u32 %v483, 4294901760
            %3303 = vmatpush1.msra.mxu0 %v3302
            %3304 = vmatprep.subr.mxu0 0.0
            %v3305 = vand.u32 %v484, 4294901760
            %3306 = vmatpush1.msra.mxu0 %v3305
            %3307 = vmatprep.subr.mxu0 0.0
            %v3308 = vand.u32 %v485, 4294901760
            %3309 = vmatpush1.msra.mxu0 %v3308
            %3310 = vmatprep.subr.mxu0 0.0
            %v3311 = vand.u32 %v486, 4294901760
            %3312 = vmatpush1.msra.mxu0 %v3311
            %3313 = vmatprep.subr.mxu0 0.0
            %v3314 = vand.u32 %v487, 4294901760
            %3315 = vmatpush1.msra.mxu0 %v3314
            %3316 = vmatprep.subr.mxu0 0.0
            %v3317 = vand.u32 %v488, 4294901760
            %3318 = vmatpush1.msra.mxu0 %v3317
            %3319 = vmatprep.subr.mxu0 0.0
            %v3320 = vand.u32 %v489, 4294901760
            %3321 = vmatpush1.msra.mxu0 %v3320
            %3322 = vmatprep.subr.mxu0 0.0
            %v3323 = vand.u32 %v490, 4294901760
            %3324 = vmatpush1.msra.mxu0 %v3323
            %3325 = vmatprep.subr.mxu0 0.0
            %v3326 = vand.u32 %v491, 4294901760
            %3327 = vmatpush1.msra.mxu0 %v3326
            %3328 = vmatprep.subr.mxu0 0.0
            %v3329 = vand.u32 %v492, 4294901760
            %3330 = vmatpush1.msra.mxu0 %v3329
            %3331 = vmatprep.subr.mxu0 0.0
            %v3332 = vand.u32 %v493, 4294901760
            %3333 = vmatpush1.msra.mxu0 %v3332
            %3334 = vmatprep.subr.mxu0 0.0
            %v3335 = vand.u32 %v494, 4294901760
            %3336 = vmatpush1.msra.mxu0 %v3335
            %3337 = vmatprep.subr.mxu0 0.0
            %v3338 = vand.u32 %v495, 4294901760
            %3339 = vmatpush1.msra.mxu0 %v3338
            %3340 = vmatprep.subr.mxu0 0.0
            %v3341 = vand.u32 %v496, 4294901760
            %3342 = vmatpush1.msra.mxu0 %v3341
            %3343 = vmatprep.subr.mxu0 0.0
            %3344 = vmatpush1.msra.mxu0 0.0
            %3345 = vmatprep.subr.mxu0 0.0
            %3346 = vmatpush1.msra.mxu0 0.0
            %3347 = vmatprep.subr.mxu0 0.0
            %3348 = vmatpush1.msra.mxu0 0.0
            %3349 = vmatprep.subr.mxu0 0.0
            %3350 = vmatpush1.msra.mxu0 0.0
            %3351 = vmatprep.subr.mxu0 0.0
            %3352 = vmatpush1.msra.mxu0 0.0
            %3353 = vmatprep.subr.mxu0 0.0
            %3354 = vmatpush1.msra.mxu0 0.0
            %3355 = vmatprep.subr.mxu0 0.0
            %3356 = vmatpush1.msra.mxu0 0.0
            %3357 = vmatprep.subr.mxu0 0.0
            %3358 = vmatpush1.msra.mxu0 0.0
            %3359 = vmatprep.subr.mxu0 0.0
            %3360 = vmatpush1.msra.mxu0 0.0
            %3361 = vmatprep.subr.mxu0 0.0
            %3362 = vmatpush1.msra.mxu0 0.0
            %3363 = vmatprep.subr.mxu0 0.0
            %3364 = vmatpush1.msra.mxu0 0.0
            %3365 = vmatprep.subr.mxu0 0.0
            %3366 = vmatpush1.msra.mxu0 0.0
            %3367 = vmatprep.subr.mxu0 0.0
            %3368 = vmatpush1.msra.mxu0 0.0
            %3369 = vmatprep.subr.mxu0 0.0
            %3370 = vmatpush1.msra.mxu0 0.0
            %3371 = vmatprep.subr.mxu0 0.0
            %3372 = vmatpush1.msra.mxu0 0.0
            %3373 = vmatprep.subr.mxu0 0.0
            %3374 = vmatpush1.msra.mxu0 0.0
            %3375 = vmatprep.mubr.f32.mxu0 0.0
            %v3376 = vand.u32 %v2942, 4294901760
            %v3377 = vsub.f32 %v2942, %v3376
            %v3378 = vand.u32 %v3377, 4294901760
            %3379 = vmatmul.mubr.f32.gmra.mrb[0].mxu0 %v3378
            %v3380 = vpop.f32.mrb[0].mxu0
            %v3381 = vadd.f32 %v3292, %v3380
            %v3382 = vpop.f32.mrb[0].mxu0
            %3383 = vdwg.mxu0
            %3384 = vmatprep.subr.mxu0 0.0
            %v3385 = vand.u32 %v481, 4294901760
            %v3386 = vsub.f32 %v481, %v3385
            %v3387 = vand.u32 %v3386, 4294901760
            %3388 = vmatpush1.msra.mxu0 %v3387
            %3389 = vmatprep.subr.mxu0 0.0
            %v3390 = vand.u32 %v482, 4294901760
            %v3391 = vsub.f32 %v482, %v3390
            %v3392 = vand.u32 %v3391, 4294901760
            %3393 = vmatpush1.msra.mxu0 %v3392
            %3394 = vmatprep.subr.mxu0 0.0
            %v3395 = vand.u32 %v483, 4294901760
            %v3396 = vsub.f32 %v483, %v3395
            %v3397 = vand.u32 %v3396, 4294901760
            %3398 = vmatpush1.msra.mxu0 %v3397
            %3399 = vmatprep.subr.mxu0 0.0
            %v3400 = vand.u32 %v484, 4294901760
            %v3401 = vsub.f32 %v484, %v3400
            %v3402 = vand.u32 %v3401, 4294901760
            %3403 = vmatpush1.msra.mxu0 %v3402
            %3404 = vmatprep.subr.mxu0 0.0
            %v3405 = vand.u32 %v485, 4294901760
            %v3406 = vsub.f32 %v485, %v3405
            %v3407 = vand.u32 %v3406, 4294901760
            %3408 = vmatpush1.msra.mxu0 %v3407
            %3409 = vmatprep.subr.mxu0 0.0
            %v3410 = vand.u32 %v486, 4294901760
            %v3411 = vsub.f32 %v486, %v3410
            %v3412 = vand.u32 %v3411, 4294901760
            %3413 = vmatpush1.msra.mxu0 %v3412
            %3414 = vmatprep.subr.mxu0 0.0
            %v3415 = vand.u32 %v487, 4294901760
            %v3416 = vsub.f32 %v487, %v3415
            %v3417 = vand.u32 %v3416, 4294901760
            %3418 = vmatpush1.msra.mxu0 %v3417
            %3419 = vmatprep.subr.mxu0 0.0
            %v3420 = vand.u32 %v488, 4294901760
            %v3421 = vsub.f32 %v488, %v3420
            %v3422 = vand.u32 %v3421, 4294901760
            %3423 = vmatpush1.msra.mxu0 %v3422
            %3424 = vmatprep.subr.mxu0 0.0
            %v3425 = vand.u32 %v489, 4294901760
            %v3426 = vsub.f32 %v489, %v3425
            %v3427 = vand.u32 %v3426, 4294901760
            %3428 = vmatpush1.msra.mxu0 %v3427
            %3429 = vmatprep.subr.mxu0 0.0
            %v3430 = vand.u32 %v490, 4294901760
            %v3431 = vsub.f32 %v490, %v3430
            %v3432 = vand.u32 %v3431, 4294901760
            %3433 = vmatpush1.msra.mxu0 %v3432
            %3434 = vmatprep.subr.mxu0 0.0
            %v3435 = vand.u32 %v491, 4294901760
            %v3436 = vsub.f32 %v491, %v3435
            %v3437 = vand.u32 %v3436, 4294901760
            %3438 = vmatpush1.msra.mxu0 %v3437
            %3439 = vmatprep.subr.mxu0 0.0
            %v3440 = vand.u32 %v492, 4294901760
            %v3441 = vsub.f32 %v492, %v3440
            %v3442 = vand.u32 %v3441, 4294901760
            %3443 = vmatpush1.msra.mxu0 %v3442
            %3444 = vmatprep.subr.mxu0 0.0
            %v3445 = vand.u32 %v493, 4294901760
            %v3446 = vsub.f32 %v493, %v3445
            %v3447 = vand.u32 %v3446, 4294901760
            %3448 = vmatpush1.msra.mxu0 %v3447
            %3449 = vmatprep.subr.mxu0 0.0
            %v3450 = vand.u32 %v494, 4294901760
            %v3451 = vsub.f32 %v494, %v3450
            %v3452 = vand.u32 %v3451, 4294901760
            %3453 = vmatpush1.msra.mxu0 %v3452
            %3454 = vmatprep.subr.mxu0 0.0
            %v3455 = vand.u32 %v495, 4294901760
            %v3456 = vsub.f32 %v495, %v3455
            %v3457 = vand.u32 %v3456, 4294901760
            %3458 = vmatpush1.msra.mxu0 %v3457
            %3459 = vmatprep.subr.mxu0 0.0
            %v3460 = vand.u32 %v496, 4294901760
            %v3461 = vsub.f32 %v496, %v3460
            %v3462 = vand.u32 %v3461, 4294901760
            %3463 = vmatpush1.msra.mxu0 %v3462
            %3464 = vmatprep.subr.mxu0 0.0
            %3465 = vmatpush1.msra.mxu0 0.0
            %3466 = vmatprep.subr.mxu0 0.0
            %3467 = vmatpush1.msra.mxu0 0.0
            %3468 = vmatprep.subr.mxu0 0.0
            %3469 = vmatpush1.msra.mxu0 0.0
            %3470 = vmatprep.subr.mxu0 0.0
            %3471 = vmatpush1.msra.mxu0 0.0
            %3472 = vmatprep.subr.mxu0 0.0
            %3473 = vmatpush1.msra.mxu0 0.0
            %3474 = vmatprep.subr.mxu0 0.0
            %3475 = vmatpush1.msra.mxu0 0.0
            %3476 = vmatprep.subr.mxu0 0.0
            %3477 = vmatpush1.msra.mxu0 0.0
            %3478 = vmatprep.subr.mxu0 0.0
            %3479 = vmatpush1.msra.mxu0 0.0
            %3480 = vmatprep.subr.mxu0 0.0
            %3481 = vmatpush1.msra.mxu0 0.0
            %3482 = vmatprep.subr.mxu0 0.0
            %3483 = vmatpush1.msra.mxu0 0.0
            %3484 = vmatprep.subr.mxu0 0.0
            %3485 = vmatpush1.msra.mxu0 0.0
            %3486 = vmatprep.subr.mxu0 0.0
            %3487 = vmatpush1.msra.mxu0 0.0
            %3488 = vmatprep.subr.mxu0 0.0
            %3489 = vmatpush1.msra.mxu0 0.0
            %3490 = vmatprep.subr.mxu0 0.0
            %3491 = vmatpush1.msra.mxu0 0.0
            %3492 = vmatprep.subr.mxu0 0.0
            %3493 = vmatpush1.msra.mxu0 0.0
            %3494 = vmatprep.subr.mxu0 0.0
            %3495 = vmatpush1.msra.mxu0 0.0
            %3496 = vmatprep.mubr.f32.mxu0 0.0
            %v3497 = vand.u32 %v2942, 4294901760
            %3498 = vmatmul.mubr.f32.gmra.mrb[0].mxu0 %v3497
            %v3499 = vpop.f32.mrb[0].mxu0
            %v3500 = vadd.f32 %v3381, %v3499
            %v3501 = vpop.f32.mrb[0].mxu0
            %3502 = vdwg.mxu0
            %3503 = vmatprep.subr.mxu0 0.0
            %v3504 = vand.u32 %v481, 4294901760
            %3505 = vmatpush1.msra.mxu0 %v3504
            %3506 = vmatprep.subr.mxu0 0.0
            %v3507 = vand.u32 %v482, 4294901760
            %3508 = vmatpush1.msra.mxu0 %v3507
            %3509 = vmatprep.subr.mxu0 0.0
            %v3510 = vand.u32 %v483, 4294901760
            %3511 = vmatpush1.msra.mxu0 %v3510
            %3512 = vmatprep.subr.mxu0 0.0
            %v3513 = vand.u32 %v484, 4294901760
            %3514 = vmatpush1.msra.mxu0 %v3513
            %3515 = vmatprep.subr.mxu0 0.0
            %v3516 = vand.u32 %v485, 4294901760
            %3517 = vmatpush1.msra.mxu0 %v3516
            %3518 = vmatprep.subr.mxu0 0.0
            %v3519 = vand.u32 %v486, 4294901760
            %3520 = vmatpush1.msra.mxu0 %v3519
            %3521 = vmatprep.subr.mxu0 0.0
            %v3522 = vand.u32 %v487, 4294901760
            %3523 = vmatpush1.msra.mxu0 %v3522
            %3524 = vmatprep.subr.mxu0 0.0
            %v3525 = vand.u32 %v488, 4294901760
            %3526 = vmatpush1.msra.mxu0 %v3525
            %3527 = vmatprep.subr.mxu0 0.0
            %v3528 = vand.u32 %v489, 4294901760
            %3529 = vmatpush1.msra.mxu0 %v3528
            %3530 = vmatprep.subr.mxu0 0.0
            %v3531 = vand.u32 %v490, 4294901760
            %3532 = vmatpush1.msra.mxu0 %v3531
            %3533 = vmatprep.subr.mxu0 0.0
            %v3534 = vand.u32 %v491, 4294901760
            %3535 = vmatpush1.msra.mxu0 %v3534
            %3536 = vmatprep.subr.mxu0 0.0
            %v3537 = vand.u32 %v492, 4294901760
            %3538 = vmatpush1.msra.mxu0 %v3537
            %3539 = vmatprep.subr.mxu0 0.0
            %v3540 = vand.u32 %v493, 4294901760
            %3541 = vmatpush1.msra.mxu0 %v3540
            %3542 = vmatprep.subr.mxu0 0.0
            %v3543 = vand.u32 %v494, 4294901760
            %3544 = vmatpush1.msra.mxu0 %v3543
            %3545 = vmatprep.subr.mxu0 0.0
            %v3546 = vand.u32 %v495, 4294901760
            %3547 = vmatpush1.msra.mxu0 %v3546
            %3548 = vmatprep.subr.mxu0 0.0
            %v3549 = vand.u32 %v496, 4294901760
            %3550 = vmatpush1.msra.mxu0 %v3549
            %3551 = vmatprep.subr.mxu0 0.0
            %3552 = vmatpush1.msra.mxu0 0.0
            %3553 = vmatprep.subr.mxu0 0.0
            %3554 = vmatpush1.msra.mxu0 0.0
            %3555 = vmatprep.subr.mxu0 0.0
            %3556 = vmatpush1.msra.mxu0 0.0
            %3557 = vmatprep.subr.mxu0 0.0
            %3558 = vmatpush1.msra.mxu0 0.0
            %3559 = vmatprep.subr.mxu0 0.0
            %3560 = vmatpush1.msra.mxu0 0.0
            %3561 = vmatprep.subr.mxu0 0.0
            %3562 = vmatpush1.msra.mxu0 0.0
            %3563 = vmatprep.subr.mxu0 0.0
            %3564 = vmatpush1.msra.mxu0 0.0
            %3565 = vmatprep.subr.mxu0 0.0
            %3566 = vmatpush1.msra.mxu0 0.0
            %3567 = vmatprep.subr.mxu0 0.0
            %3568 = vmatpush1.msra.mxu0 0.0
            %3569 = vmatprep.subr.mxu0 0.0
            %3570 = vmatpush1.msra.mxu0 0.0
            %3571 = vmatprep.subr.mxu0 0.0
            %3572 = vmatpush1.msra.mxu0 0.0
            %3573 = vmatprep.subr.mxu0 0.0
            %3574 = vmatpush1.msra.mxu0 0.0
            %3575 = vmatprep.subr.mxu0 0.0
            %3576 = vmatpush1.msra.mxu0 0.0
            %3577 = vmatprep.subr.mxu0 0.0
            %3578 = vmatpush1.msra.mxu0 0.0
            %3579 = vmatprep.subr.mxu0 0.0
            %3580 = vmatpush1.msra.mxu0 0.0
            %3581 = vmatprep.subr.mxu0 0.0
            %3582 = vmatpush1.msra.mxu0 0.0
            %3583 = vmatprep.mubr.f32.mxu0 0.0
            %v3584 = vand.u32 %v2942, 4294901760
            %3585 = vmatmul.mubr.f32.gmra.mrb[0].mxu0 %v3584
            %v3586 = vpop.f32.mrb[0].mxu0
            %v3587 = vadd.f32 %v3500, %v3586
            %v3588 = vpop.f32.mrb[0].mxu0
            %3589 = vdwg.mxu0
            %v3590 = vmul.f32 %v2286, %v3587
            %v3591 = vadd.f32 %v2294, %v3590
            %v3592 = vmul.f32 %v2285, %v3587
            %v3593 = vadd.f32 %v2294, %v3592
            %3594 = vmatprep.subr.mxu0 0.0
            %v3595 = vand.u32 %v465, 4294901760
            %3596 = vmatpush1.msra.mxu0 %v3595
            %3597 = vmatprep.subr.mxu0 0.0
            %v3598 = vand.u32 %v466, 4294901760
            %3599 = vmatpush1.msra.mxu0 %v3598
            %3600 = vmatprep.subr.mxu0 0.0
            %v3601 = vand.u32 %v467, 4294901760
            %3602 = vmatpush1.msra.mxu0 %v3601
            %3603 = vmatprep.subr.mxu0 0.0
            %v3604 = vand.u32 %v468, 4294901760
            %3605 = vmatpush1.msra.mxu0 %v3604
            %3606 = vmatprep.subr.mxu0 0.0
            %v3607 = vand.u32 %v469, 4294901760
            %3608 = vmatpush1.msra.mxu0 %v3607
            %3609 = vmatprep.subr.mxu0 0.0
            %v3610 = vand.u32 %v470, 4294901760
            %3611 = vmatpush1.msra.mxu0 %v3610
            %3612 = vmatprep.subr.mxu0 0.0
            %v3613 = vand.u32 %v471, 4294901760
            %3614 = vmatpush1.msra.mxu0 %v3613
            %3615 = vmatprep.subr.mxu0 0.0
            %v3616 = vand.u32 %v472, 4294901760
            %3617 = vmatpush1.msra.mxu0 %v3616
            %3618 = vmatprep.subr.mxu0 0.0
            %v3619 = vand.u32 %v473, 4294901760
            %3620 = vmatpush1.msra.mxu0 %v3619
            %3621 = vmatprep.subr.mxu0 0.0
            %v3622 = vand.u32 %v474, 4294901760
            %3623 = vmatpush1.msra.mxu0 %v3622
            %3624 = vmatprep.subr.mxu0 0.0
            %v3625 = vand.u32 %v475, 4294901760
            %3626 = vmatpush1.msra.mxu0 %v3625
            %3627 = vmatprep.subr.mxu0 0.0
            %v3628 = vand.u32 %v476, 4294901760
            %3629 = vmatpush1.msra.mxu0 %v3628
            %3630 = vmatprep.subr.mxu0 0.0
            %v3631 = vand.u32 %v477, 4294901760
            %3632 = vmatpush1.msra.mxu0 %v3631
            %3633 = vmatprep.subr.mxu0 0.0
            %v3634 = vand.u32 %v478, 4294901760
            %3635 = vmatpush1.msra.mxu0 %v3634
            %3636 = vmatprep.subr.mxu0 0.0
            %v3637 = vand.u32 %v479, 4294901760
            %3638 = vmatpush1.msra.mxu0 %v3637
            %3639 = vmatprep.subr.mxu0 0.0
            %v3640 = vand.u32 %v480, 4294901760
            %3641 = vmatpush1.msra.mxu0 %v3640
            %3642 = vmatprep.subr.mxu0 0.0
            %3643 = vmatpush1.msra.mxu0 0.0
            %3644 = vmatprep.subr.mxu0 0.0
            %3645 = vmatpush1.msra.mxu0 0.0
            %3646 = vmatprep.subr.mxu0 0.0
            %3647 = vmatpush1.msra.mxu0 0.0
            %3648 = vmatprep.subr.mxu0 0.0
            %3649 = vmatpush1.msra.mxu0 0.0
            %3650 = vmatprep.subr.mxu0 0.0
            %3651 = vmatpush1.msra.mxu0 0.0
            %3652 = vmatprep.subr.mxu0 0.0
            %3653 = vmatpush1.msra.mxu0 0.0
            %3654 = vmatprep.subr.mxu0 0.0
            %3655 = vmatpush1.msra.mxu0 0.0
            %3656 = vmatprep.subr.mxu0 0.0
            %3657 = vmatpush1.msra.mxu0 0.0
            %3658 = vmatprep.subr.mxu0 0.0
            %3659 = vmatpush1.msra.mxu0 0.0
            %3660 = vmatprep.subr.mxu0 0.0
            %3661 = vmatpush1.msra.mxu0 0.0
            %3662 = vmatprep.subr.mxu0 0.0
            %3663 = vmatpush1.msra.mxu0 0.0
            %3664 = vmatprep.subr.mxu0 0.0
            %3665 = vmatpush1.msra.mxu0 0.0
            %3666 = vmatprep.subr.mxu0 0.0
            %3667 = vmatpush1.msra.mxu0 0.0
            %3668 = vmatprep.subr.mxu0 0.0
            %3669 = vmatpush1.msra.mxu0 0.0
            %3670 = vmatprep.subr.mxu0 0.0
            %3671 = vmatpush1.msra.mxu0 0.0
            %3672 = vmatprep.subr.mxu0 0.0
            %3673 = vmatpush1.msra.mxu0 0.0
            %3674 = vmatprep.mubr.f32.mxu0 0.0
            %v3675 = vand.u32 %v3593, 4294901760
            %v3676 = vsub.f32 %v3593, %v3675
            %v3677 = vand.u32 %v3676, 4294901760
            %v3678 = vsub.f32 %v3676, %v3677
            %v3679 = vand.u32 %v3678, 4294901760
            %3680 = vmatmul.mubr.f32.gmra.mrb[0].mxu0 %v3679
            %v3681 = vpop.f32.mrb[0].mxu0
            %v3682 = vadd.f32 %v2299, %v3681
            %v3683 = vpop.f32.mrb[0].mxu0
            %3684 = vdwg.mxu0
            %3685 = vmatprep.subr.mxu0 0.0
            %v3686 = vand.u32 %v465, 4294901760
            %v3687 = vsub.f32 %v465, %v3686
            %v3688 = vand.u32 %v3687, 4294901760
            %v3689 = vsub.f32 %v3687, %v3688
            %v3690 = vand.u32 %v3689, 4294901760
            %3691 = vmatpush1.msra.mxu0 %v3690
            %3692 = vmatprep.subr.mxu0 0.0
            %v3693 = vand.u32 %v466, 4294901760
            %v3694 = vsub.f32 %v466, %v3693
            %v3695 = vand.u32 %v3694, 4294901760
            %v3696 = vsub.f32 %v3694, %v3695
            %v3697 = vand.u32 %v3696, 4294901760
            %3698 = vmatpush1.msra.mxu0 %v3697
            %3699 = vmatprep.subr.mxu0 0.0
            %v3700 = vand.u32 %v467, 4294901760
            %v3701 = vsub.f32 %v467, %v3700
            %v3702 = vand.u32 %v3701, 4294901760
            %v3703 = vsub.f32 %v3701, %v3702
            %v3704 = vand.u32 %v3703, 4294901760
            %3705 = vmatpush1.msra.mxu0 %v3704
            %3706 = vmatprep.subr.mxu0 0.0
            %v3707 = vand.u32 %v468, 4294901760
            %v3708 = vsub.f32 %v468, %v3707
            %v3709 = vand.u32 %v3708, 4294901760
            %v3710 = vsub.f32 %v3708, %v3709
            %v3711 = vand.u32 %v3710, 4294901760
            %3712 = vmatpush1.msra.mxu0 %v3711
            %3713 = vmatprep.subr.mxu0 0.0
            %v3714 = vand.u32 %v469, 4294901760
            %v3715 = vsub.f32 %v469, %v3714
            %v3716 = vand.u32 %v3715, 4294901760
            %v3717 = vsub.f32 %v3715, %v3716
            %v3718 = vand.u32 %v3717, 4294901760
            %3719 = vmatpush1.msra.mxu0 %v3718
            %3720 = vmatprep.subr.mxu0 0.0
            %v3721 = vand.u32 %v470, 4294901760
            %v3722 = vsub.f32 %v470, %v3721
            %v3723 = vand.u32 %v3722, 4294901760
            %v3724 = vsub.f32 %v3722, %v3723
            %v3725 = vand.u32 %v3724, 4294901760
            %3726 = vmatpush1.msra.mxu0 %v3725
            %3727 = vmatprep.subr.mxu0 0.0
            %v3728 = vand.u32 %v471, 4294901760
            %v3729 = vsub.f32 %v471, %v3728
            %v3730 = vand.u32 %v3729, 4294901760
            %v3731 = vsub.f32 %v3729, %v3730
            %v3732 = vand.u32 %v3731, 4294901760
            %3733 = vmatpush1.msra.mxu0 %v3732
            %3734 = vmatprep.subr.mxu0 0.0
            %v3735 = vand.u32 %v472, 4294901760
            %v3736 = vsub.f32 %v472, %v3735
            %v3737 = vand.u32 %v3736, 4294901760
            %v3738 = vsub.f32 %v3736, %v3737
            %v3739 = vand.u32 %v3738, 4294901760
            %3740 = vmatpush1.msra.mxu0 %v3739
            %3741 = vmatprep.subr.mxu0 0.0
            %v3742 = vand.u32 %v473, 4294901760
            %v3743 = vsub.f32 %v473, %v3742
            %v3744 = vand.u32 %v3743, 4294901760
            %v3745 = vsub.f32 %v3743, %v3744
            %v3746 = vand.u32 %v3745, 4294901760
            %3747 = vmatpush1.msra.mxu0 %v3746
            %3748 = vmatprep.subr.mxu0 0.0
            %v3749 = vand.u32 %v474, 4294901760
            %v3750 = vsub.f32 %v474, %v3749
            %v3751 = vand.u32 %v3750, 4294901760
            %v3752 = vsub.f32 %v3750, %v3751
            %v3753 = vand.u32 %v3752, 4294901760
            %3754 = vmatpush1.msra.mxu0 %v3753
            %3755 = vmatprep.subr.mxu0 0.0
            %v3756 = vand.u32 %v475, 4294901760
            %v3757 = vsub.f32 %v475, %v3756
            %v3758 = vand.u32 %v3757, 4294901760
            %v3759 = vsub.f32 %v3757, %v3758
            %v3760 = vand.u32 %v3759, 4294901760
            %3761 = vmatpush1.msra.mxu0 %v3760
            %3762 = vmatprep.subr.mxu0 0.0
            %v3763 = vand.u32 %v476, 4294901760
            %v3764 = vsub.f32 %v476, %v3763
            %v3765 = vand.u32 %v3764, 4294901760
            %v3766 = vsub.f32 %v3764, %v3765
            %v3767 = vand.u32 %v3766, 4294901760
            %3768 = vmatpush1.msra.mxu0 %v3767
            %3769 = vmatprep.subr.mxu0 0.0
            %v3770 = vand.u32 %v477, 4294901760
            %v3771 = vsub.f32 %v477, %v3770
            %v3772 = vand.u32 %v3771, 4294901760
            %v3773 = vsub.f32 %v3771, %v3772
            %v3774 = vand.u32 %v3773, 4294901760
            %3775 = vmatpush1.msra.mxu0 %v3774
            %3776 = vmatprep.subr.mxu0 0.0
            %v3777 = vand.u32 %v478, 4294901760
            %v3778 = vsub.f32 %v478, %v3777
            %v3779 = vand.u32 %v3778, 4294901760
            %v3780 = vsub.f32 %v3778, %v3779
            %v3781 = vand.u32 %v3780, 4294901760
            %3782 = vmatpush1.msra.mxu0 %v3781
            %3783 = vmatprep.subr.mxu0 0.0
            %v3784 = vand.u32 %v479, 4294901760
            %v3785 = vsub.f32 %v479, %v3784
            %v3786 = vand.u32 %v3785, 4294901760
            %v3787 = vsub.f32 %v3785, %v3786
            %v3788 = vand.u32 %v3787, 4294901760
            %3789 = vmatpush1.msra.mxu0 %v3788
            %3790 = vmatprep.subr.mxu0 0.0
            %v3791 = vand.u32 %v480, 4294901760
            %v3792 = vsub.f32 %v480, %v3791
            %v3793 = vand.u32 %v3792, 4294901760
            %v3794 = vsub.f32 %v3792, %v3793
            %v3795 = vand.u32 %v3794, 4294901760
            %3796 = vmatpush1.msra.mxu0 %v3795
            %3797 = vmatprep.subr.mxu0 0.0
            %3798 = vmatpush1.msra.mxu0 0.0
            %3799 = vmatprep.subr.mxu0 0.0
            %3800 = vmatpush1.msra.mxu0 0.0
            %3801 = vmatprep.subr.mxu0 0.0
            %3802 = vmatpush1.msra.mxu0 0.0
            %3803 = vmatprep.subr.mxu0 0.0
            %3804 = vmatpush1.msra.mxu0 0.0
            %3805 = vmatprep.subr.mxu0 0.0
            %3806 = vmatpush1.msra.mxu0 0.0
            %3807 = vmatprep.subr.mxu0 0.0
            %3808 = vmatpush1.msra.mxu0 0.0
            %3809 = vmatprep.subr.mxu0 0.0
            %3810 = vmatpush1.msra.mxu0 0.0
            %3811 = vmatprep.subr.mxu0 0.0
            %3812 = vmatpush1.msra.mxu0 0.0
            %3813 = vmatprep.subr.mxu0 0.0
            %3814 = vmatpush1.msra.mxu0 0.0
            %3815 = vmatprep.subr.mxu0 0.0
            %3816 = vmatpush1.msra.mxu0 0.0
            %3817 = vmatprep.subr.mxu0 0.0
            %3818 = vmatpush1.msra.mxu0 0.0
            %3819 = vmatprep.subr.mxu0 0.0
            %3820 = vmatpush1.msra.mxu0 0.0
            %3821 = vmatprep.subr.mxu0 0.0
            %3822 = vmatpush1.msra.mxu0 0.0
            %3823 = vmatprep.subr.mxu0 0.0
            %3824 = vmatpush1.msra.mxu0 0.0
            %3825 = vmatprep.subr.mxu0 0.0
            %3826 = vmatpush1.msra.mxu0 0.0
            %3827 = vmatprep.subr.mxu0 0.0
            %3828 = vmatpush1.msra.mxu0 0.0
            %3829 = vmatprep.mubr.f32.mxu0 0.0
            %v3830 = vand.u32 %v3593, 4294901760
            %3831 = vmatmul.mubr.f32.gmra.mrb[0].mxu0 %v3830
            %v3832 = vpop.f32.mrb[0].mxu0
            %v3833 = vadd.f32 %v3682, %v3832
            %v3834 = vpop.f32.mrb[0].mxu0
            %3835 = vdwg.mxu0
            %3836 = vmatprep.subr.mxu0 0.0
            %v3837 = vand.u32 %v465, 4294901760
            %v3838 = vsub.f32 %v465, %v3837
            %3839 = vmatpush1.msra.mxu0 %v3838
            %3840 = vmatprep.subr.mxu0 0.0
            %v3841 = vand.u32 %v466, 4294901760
            %v3842 = vsub.f32 %v466, %v3841
            %3843 = vmatpush1.msra.mxu0 %v3842
            %3844 = vmatprep.subr.mxu0 0.0
            %v3845 = vand.u32 %v467, 4294901760
            %v3846 = vsub.f32 %v467, %v3845
            %3847 = vmatpush1.msra.mxu0 %v3846
            %3848 = vmatprep.subr.mxu0 0.0
            %v3849 = vand.u32 %v468, 4294901760
            %v3850 = vsub.f32 %v468, %v3849
            %3851 = vmatpush1.msra.mxu0 %v3850
            %3852 = vmatprep.subr.mxu0 0.0
            %v3853 = vand.u32 %v469, 4294901760
            %v3854 = vsub.f32 %v469, %v3853
            %3855 = vmatpush1.msra.mxu0 %v3854
            %3856 = vmatprep.subr.mxu0 0.0
            %v3857 = vand.u32 %v470, 4294901760
            %v3858 = vsub.f32 %v470, %v3857
            %3859 = vmatpush1.msra.mxu0 %v3858
            %3860 = vmatprep.subr.mxu0 0.0
            %v3861 = vand.u32 %v471, 4294901760
            %v3862 = vsub.f32 %v471, %v3861
            %3863 = vmatpush1.msra.mxu0 %v3862
            %3864 = vmatprep.subr.mxu0 0.0
            %v3865 = vand.u32 %v472, 4294901760
            %v3866 = vsub.f32 %v472, %v3865
            %3867 = vmatpush1.msra.mxu0 %v3866
            %3868 = vmatprep.subr.mxu0 0.0
            %v3869 = vand.u32 %v473, 4294901760
            %v3870 = vsub.f32 %v473, %v3869
            %3871 = vmatpush1.msra.mxu0 %v3870
            %3872 = vmatprep.subr.mxu0 0.0
            %v3873 = vand.u32 %v474, 4294901760
            %v3874 = vsub.f32 %v474, %v3873
            %3875 = vmatpush1.msra.mxu0 %v3874
            %3876 = vmatprep.subr.mxu0 0.0
            %v3877 = vand.u32 %v475, 4294901760
            %v3878 = vsub.f32 %v475, %v3877
            %3879 = vmatpush1.msra.mxu0 %v3878
            %3880 = vmatprep.subr.mxu0 0.0
            %v3881 = vand.u32 %v476, 4294901760
            %v3882 = vsub.f32 %v476, %v3881
            %3883 = vmatpush1.msra.mxu0 %v3882
            %3884 = vmatprep.subr.mxu0 0.0
            %v3885 = vand.u32 %v477, 4294901760
            %v3886 = vsub.f32 %v477, %v3885
            %3887 = vmatpush1.msra.mxu0 %v3886
            %3888 = vmatprep.subr.mxu0 0.0
            %v3889 = vand.u32 %v478, 4294901760
            %v3890 = vsub.f32 %v478, %v3889
            %3891 = vmatpush1.msra.mxu0 %v3890
            %3892 = vmatprep.subr.mxu0 0.0
            %v3893 = vand.u32 %v479, 4294901760
            %v3894 = vsub.f32 %v479, %v3893
            %3895 = vmatpush1.msra.mxu0 %v3894
            %3896 = vmatprep.subr.mxu0 0.0
            %v3897 = vand.u32 %v480, 4294901760
            %v3898 = vsub.f32 %v480, %v3897
            %3899 = vmatpush1.msra.mxu0 %v3898
            %3900 = vmatprep.subr.mxu0 0.0
            %3901 = vmatpush1.msra.mxu0 0.0
            %3902 = vmatprep.subr.mxu0 0.0
            %3903 = vmatpush1.msra.mxu0 0.0
            %3904 = vmatprep.subr.mxu0 0.0
            %3905 = vmatpush1.msra.mxu0 0.0
            %3906 = vmatprep.subr.mxu0 0.0
            %3907 = vmatpush1.msra.mxu0 0.0
            %3908 = vmatprep.subr.mxu0 0.0
            %3909 = vmatpush1.msra.mxu0 0.0
            %3910 = vmatprep.subr.mxu0 0.0
            %3911 = vmatpush1.msra.mxu0 0.0
            %3912 = vmatprep.subr.mxu0 0.0
            %3913 = vmatpush1.msra.mxu0 0.0
            %3914 = vmatprep.subr.mxu0 0.0
            %3915 = vmatpush1.msra.mxu0 0.0
            %3916 = vmatprep.subr.mxu0 0.0
            %3917 = vmatpush1.msra.mxu0 0.0
            %3918 = vmatprep.subr.mxu0 0.0
            %3919 = vmatpush1.msra.mxu0 0.0
            %3920 = vmatprep.subr.mxu0 0.0
            %3921 = vmatpush1.msra.mxu0 0.0
            %3922 = vmatprep.subr.mxu0 0.0
            %3923 = vmatpush1.msra.mxu0 0.0
            %3924 = vmatprep.subr.mxu0 0.0
            %3925 = vmatpush1.msra.mxu0 0.0
            %3926 = vmatprep.subr.mxu0 0.0
            %3927 = vmatpush1.msra.mxu0 0.0
            %3928 = vmatprep.subr.mxu0 0.0
            %3929 = vmatpush1.msra.mxu0 0.0
            %3930 = vmatprep.subr.mxu0 0.0
            %3931 = vmatpush1.msra.mxu0 0.0
            %3932 = vmatprep.mubr.f32.mxu0 0.0
            %v3933 = vand.u32 %v3593, 4294901760
            %v3934 = vsub.f32 %v3593, %v3933
            %3935 = vmatmul.mubr.f32.gmra.mrb[0].mxu0 %v3934
            %v3936 = vpop.f32.mrb[0].mxu0
            %v3937 = vadd.f32 %v3833, %v3936
            %v3938 = vpop.f32.mrb[0].mxu0
            %3939 = vdwg.mxu0
            %3940 = vmatprep.subr.mxu0 0.0
            %v3941 = vand.u32 %v465, 4294901760
            %3942 = vmatpush1.msra.mxu0 %v3941
            %3943 = vmatprep.subr.mxu0 0.0
            %v3944 = vand.u32 %v466, 4294901760
            %3945 = vmatpush1.msra.mxu0 %v3944
            %3946 = vmatprep.subr.mxu0 0.0
            %v3947 = vand.u32 %v467, 4294901760
            %3948 = vmatpush1.msra.mxu0 %v3947
            %3949 = vmatprep.subr.mxu0 0.0
            %v3950 = vand.u32 %v468, 4294901760
            %3951 = vmatpush1.msra.mxu0 %v3950
            %3952 = vmatprep.subr.mxu0 0.0
            %v3953 = vand.u32 %v469, 4294901760
            %3954 = vmatpush1.msra.mxu0 %v3953
            %3955 = vmatprep.subr.mxu0 0.0
            %v3956 = vand.u32 %v470, 4294901760
            %3957 = vmatpush1.msra.mxu0 %v3956
            %3958 = vmatprep.subr.mxu0 0.0
            %v3959 = vand.u32 %v471, 4294901760
            %3960 = vmatpush1.msra.mxu0 %v3959
            %3961 = vmatprep.subr.mxu0 0.0
            %v3962 = vand.u32 %v472, 4294901760
            %3963 = vmatpush1.msra.mxu0 %v3962
            %3964 = vmatprep.subr.mxu0 0.0
            %v3965 = vand.u32 %v473, 4294901760
            %3966 = vmatpush1.msra.mxu0 %v3965
            %3967 = vmatprep.subr.mxu0 0.0
            %v3968 = vand.u32 %v474, 4294901760
            %3969 = vmatpush1.msra.mxu0 %v3968
            %3970 = vmatprep.subr.mxu0 0.0
            %v3971 = vand.u32 %v475, 4294901760
            %3972 = vmatpush1.msra.mxu0 %v3971
            %3973 = vmatprep.subr.mxu0 0.0
            %v3974 = vand.u32 %v476, 4294901760
            %3975 = vmatpush1.msra.mxu0 %v3974
            %3976 = vmatprep.subr.mxu0 0.0
            %v3977 = vand.u32 %v477, 4294901760
            %3978 = vmatpush1.msra.mxu0 %v3977
            %3979 = vmatprep.subr.mxu0 0.0
            %v3980 = vand.u32 %v478, 4294901760
            %3981 = vmatpush1.msra.mxu0 %v3980
            %3982 = vmatprep.subr.mxu0 0.0
            %v3983 = vand.u32 %v479, 4294901760
            %3984 = vmatpush1.msra.mxu0 %v3983
            %3985 = vmatprep.subr.mxu0 0.0
            %v3986 = vand.u32 %v480, 4294901760
            %3987 = vmatpush1.msra.mxu0 %v3986
            %3988 = vmatprep.subr.mxu0 0.0
            %3989 = vmatpush1.msra.mxu0 0.0
            %3990 = vmatprep.subr.mxu0 0.0
            %3991 = vmatpush1.msra.mxu0 0.0
            %3992 = vmatprep.subr.mxu0 0.0
            %3993 = vmatpush1.msra.mxu0 0.0
            %3994 = vmatprep.subr.mxu0 0.0
            %3995 = vmatpush1.msra.mxu0 0.0
            %3996 = vmatprep.subr.mxu0 0.0
            %3997 = vmatpush1.msra.mxu0 0.0
            %3998 = vmatprep.subr.mxu0 0.0
            %3999 = vmatpush1.msra.mxu0 0.0
            %4000 = vmatprep.subr.mxu0 0.0
            %4001 = vmatpush1.msra.mxu0 0.0
            %4002 = vmatprep.subr.mxu0 0.0
            %4003 = vmatpush1.msra.mxu0 0.0
            %4004 = vmatprep.subr.mxu0 0.0
            %4005 = vmatpush1.msra.mxu0 0.0
            %4006 = vmatprep.subr.mxu0 0.0
            %4007 = vmatpush1.msra.mxu0 0.0
            %4008 = vmatprep.subr.mxu0 0.0
            %4009 = vmatpush1.msra.mxu0 0.0
            %4010 = vmatprep.subr.mxu0 0.0
            %4011 = vmatpush1.msra.mxu0 0.0
            %4012 = vmatprep.subr.mxu0 0.0
            %4013 = vmatpush1.msra.mxu0 0.0
            %4014 = vmatprep.subr.mxu0 0.0
            %4015 = vmatpush1.msra.mxu0 0.0
            %4016 = vmatprep.subr.mxu0 0.0
            %4017 = vmatpush1.msra.mxu0 0.0
            %4018 = vmatprep.subr.mxu0 0.0
            %4019 = vmatpush1.msra.mxu0 0.0
            %4020 = vmatprep.mubr.f32.mxu0 0.0
            %v4021 = vand.u32 %v3593, 4294901760
            %v4022 = vsub.f32 %v3593, %v4021
            %v4023 = vand.u32 %v4022, 4294901760
            %4024 = vmatmul.mubr.f32.gmra.mrb[0].mxu0 %v4023
            %v4025 = vpop.f32.mrb[0].mxu0
            %v4026 = vadd.f32 %v3937, %v4025
            %v4027 = vpop.f32.mrb[0].mxu0
            %4028 = vdwg.mxu0
            %4029 = vmatprep.subr.mxu0 0.0
            %v4030 = vand.u32 %v465, 4294901760
            %v4031 = vsub.f32 %v465, %v4030
            %v4032 = vand.u32 %v4031, 4294901760
            %4033 = vmatpush1.msra.mxu0 %v4032
            %4034 = vmatprep.subr.mxu0 0.0
            %v4035 = vand.u32 %v466, 4294901760
            %v4036 = vsub.f32 %v466, %v4035
            %v4037 = vand.u32 %v4036, 4294901760
            %4038 = vmatpush1.msra.mxu0 %v4037
            %4039 = vmatprep.subr.mxu0 0.0
            %v4040 = vand.u32 %v467, 4294901760
            %v4041 = vsub.f32 %v467, %v4040
            %v4042 = vand.u32 %v4041, 4294901760
            %4043 = vmatpush1.msra.mxu0 %v4042
            %4044 = vmatprep.subr.mxu0 0.0
            %v4045 = vand.u32 %v468, 4294901760
            %v4046 = vsub.f32 %v468, %v4045
            %v4047 = vand.u32 %v4046, 4294901760
            %4048 = vmatpush1.msra.mxu0 %v4047
            %4049 = vmatprep.subr.mxu0 0.0
            %v4050 = vand.u32 %v469, 4294901760
            %v4051 = vsub.f32 %v469, %v4050
            %v4052 = vand.u32 %v4051, 4294901760
            %4053 = vmatpush1.msra.mxu0 %v4052
            %4054 = vmatprep.subr.mxu0 0.0
            %v4055 = vand.u32 %v470, 4294901760
            %v4056 = vsub.f32 %v470, %v4055
            %v4057 = vand.u32 %v4056, 4294901760
            %4058 = vmatpush1.msra.mxu0 %v4057
            %4059 = vmatprep.subr.mxu0 0.0
            %v4060 = vand.u32 %v471, 4294901760
            %v4061 = vsub.f32 %v471, %v4060
            %v4062 = vand.u32 %v4061, 4294901760
            %4063 = vmatpush1.msra.mxu0 %v4062
            %4064 = vmatprep.subr.mxu0 0.0
            %v4065 = vand.u32 %v472, 4294901760
            %v4066 = vsub.f32 %v472, %v4065
            %v4067 = vand.u32 %v4066, 4294901760
            %4068 = vmatpush1.msra.mxu0 %v4067
            %4069 = vmatprep.subr.mxu0 0.0
            %v4070 = vand.u32 %v473, 4294901760
            %v4071 = vsub.f32 %v473, %v4070
            %v4072 = vand.u32 %v4071, 4294901760
            %4073 = vmatpush1.msra.mxu0 %v4072
            %4074 = vmatprep.subr.mxu0 0.0
            %v4075 = vand.u32 %v474, 4294901760
            %v4076 = vsub.f32 %v474, %v4075
            %v4077 = vand.u32 %v4076, 4294901760
            %4078 = vmatpush1.msra.mxu0 %v4077
            %4079 = vmatprep.subr.mxu0 0.0
            %v4080 = vand.u32 %v475, 4294901760
            %v4081 = vsub.f32 %v475, %v4080
            %v4082 = vand.u32 %v4081, 4294901760
            %4083 = vmatpush1.msra.mxu0 %v4082
            %4084 = vmatprep.subr.mxu0 0.0
            %v4085 = vand.u32 %v476, 4294901760
            %v4086 = vsub.f32 %v476, %v4085
            %v4087 = vand.u32 %v4086, 4294901760
            %4088 = vmatpush1.msra.mxu0 %v4087
            %4089 = vmatprep.subr.mxu0 0.0
            %v4090 = vand.u32 %v477, 4294901760
            %v4091 = vsub.f32 %v477, %v4090
            %v4092 = vand.u32 %v4091, 4294901760
            %4093 = vmatpush1.msra.mxu0 %v4092
            %4094 = vmatprep.subr.mxu0 0.0
            %v4095 = vand.u32 %v478, 4294901760
            %v4096 = vsub.f32 %v478, %v4095
            %v4097 = vand.u32 %v4096, 4294901760
            %4098 = vmatpush1.msra.mxu0 %v4097
            %4099 = vmatprep.subr.mxu0 0.0
            %v4100 = vand.u32 %v479, 4294901760
            %v4101 = vsub.f32 %v479, %v4100
            %v4102 = vand.u32 %v4101, 4294901760
            %4103 = vmatpush1.msra.mxu0 %v4102
            %4104 = vmatprep.subr.mxu0 0.0
            %v4105 = vand.u32 %v480, 4294901760
            %v4106 = vsub.f32 %v480, %v4105
            %v4107 = vand.u32 %v4106, 4294901760
            %4108 = vmatpush1.msra.mxu0 %v4107
            %4109 = vmatprep.subr.mxu0 0.0
            %4110 = vmatpush1.msra.mxu0 0.0
            %4111 = vmatprep.subr.mxu0 0.0
            %4112 = vmatpush1.msra.mxu0 0.0
            %4113 = vmatprep.subr.mxu0 0.0
            %4114 = vmatpush1.msra.mxu0 0.0
            %4115 = vmatprep.subr.mxu0 0.0
            %4116 = vmatpush1.msra.mxu0 0.0
            %4117 = vmatprep.subr.mxu0 0.0
            %4118 = vmatpush1.msra.mxu0 0.0
            %4119 = vmatprep.subr.mxu0 0.0
            %4120 = vmatpush1.msra.mxu0 0.0
            %4121 = vmatprep.subr.mxu0 0.0
            %4122 = vmatpush1.msra.mxu0 0.0
            %4123 = vmatprep.subr.mxu0 0.0
            %4124 = vmatpush1.msra.mxu0 0.0
            %4125 = vmatprep.subr.mxu0 0.0
            %4126 = vmatpush1.msra.mxu0 0.0
            %4127 = vmatprep.subr.mxu0 0.0
            %4128 = vmatpush1.msra.mxu0 0.0
            %4129 = vmatprep.subr.mxu0 0.0
            %4130 = vmatpush1.msra.mxu0 0.0
            %4131 = vmatprep.subr.mxu0 0.0
            %4132 = vmatpush1.msra.mxu0 0.0
            %4133 = vmatprep.subr.mxu0 0.0
            %4134 = vmatpush1.msra.mxu0 0.0
            %4135 = vmatprep.subr.mxu0 0.0
            %4136 = vmatpush1.msra.mxu0 0.0
            %4137 = vmatprep.subr.mxu0 0.0
            %4138 = vmatpush1.msra.mxu0 0.0
            %4139 = vmatprep.subr.mxu0 0.0
            %4140 = vmatpush1.msra.mxu0 0.0
            %4141 = vmatprep.mubr.f32.mxu0 0.0
            %v4142 = vand.u32 %v3593, 4294901760
            %4143 = vmatmul.mubr.f32.gmra.mrb[0].mxu0 %v4142
            %v4144 = vpop.f32.mrb[0].mxu0
            %v4145 = vadd.f32 %v4026, %v4144
            %v4146 = vpop.f32.mrb[0].mxu0
            %4147 = vdwg.mxu0
            %4148 = vmatprep.subr.mxu0 0.0
            %v4149 = vand.u32 %v465, 4294901760
            %4150 = vmatpush1.msra.mxu0 %v4149
            %4151 = vmatprep.subr.mxu0 0.0
            %v4152 = vand.u32 %v466, 4294901760
            %4153 = vmatpush1.msra.mxu0 %v4152
            %4154 = vmatprep.subr.mxu0 0.0
            %v4155 = vand.u32 %v467, 4294901760
            %4156 = vmatpush1.msra.mxu0 %v4155
            %4157 = vmatprep.subr.mxu0 0.0
            %v4158 = vand.u32 %v468, 4294901760
            %4159 = vmatpush1.msra.mxu0 %v4158
            %4160 = vmatprep.subr.mxu0 0.0
            %v4161 = vand.u32 %v469, 4294901760
            %4162 = vmatpush1.msra.mxu0 %v4161
            %4163 = vmatprep.subr.mxu0 0.0
            %v4164 = vand.u32 %v470, 4294901760
            %4165 = vmatpush1.msra.mxu0 %v4164
            %4166 = vmatprep.subr.mxu0 0.0
            %v4167 = vand.u32 %v471, 4294901760
            %4168 = vmatpush1.msra.mxu0 %v4167
            %4169 = vmatprep.subr.mxu0 0.0
            %v4170 = vand.u32 %v472, 4294901760
            %4171 = vmatpush1.msra.mxu0 %v4170
            %4172 = vmatprep.subr.mxu0 0.0
            %v4173 = vand.u32 %v473, 4294901760
            %4174 = vmatpush1.msra.mxu0 %v4173
            %4175 = vmatprep.subr.mxu0 0.0
            %v4176 = vand.u32 %v474, 4294901760
            %4177 = vmatpush1.msra.mxu0 %v4176
            %4178 = vmatprep.subr.mxu0 0.0
            %v4179 = vand.u32 %v475, 4294901760
            %4180 = vmatpush1.msra.mxu0 %v4179
            %4181 = vmatprep.subr.mxu0 0.0
            %v4182 = vand.u32 %v476, 4294901760
            %4183 = vmatpush1.msra.mxu0 %v4182
            %4184 = vmatprep.subr.mxu0 0.0
            %v4185 = vand.u32 %v477, 4294901760
            %4186 = vmatpush1.msra.mxu0 %v4185
            %4187 = vmatprep.subr.mxu0 0.0
            %v4188 = vand.u32 %v478, 4294901760
            %4189 = vmatpush1.msra.mxu0 %v4188
            %4190 = vmatprep.subr.mxu0 0.0
            %v4191 = vand.u32 %v479, 4294901760
            %4192 = vmatpush1.msra.mxu0 %v4191
            %4193 = vmatprep.subr.mxu0 0.0
            %v4194 = vand.u32 %v480, 4294901760
            %4195 = vmatpush1.msra.mxu0 %v4194
            %4196 = vmatprep.subr.mxu0 0.0
            %4197 = vmatpush1.msra.mxu0 0.0
            %4198 = vmatprep.subr.mxu0 0.0
            %4199 = vmatpush1.msra.mxu0 0.0
            %4200 = vmatprep.subr.mxu0 0.0
            %4201 = vmatpush1.msra.mxu0 0.0
            %4202 = vmatprep.subr.mxu0 0.0
            %4203 = vmatpush1.msra.mxu0 0.0
            %4204 = vmatprep.subr.mxu0 0.0
            %4205 = vmatpush1.msra.mxu0 0.0
            %4206 = vmatprep.subr.mxu0 0.0
            %4207 = vmatpush1.msra.mxu0 0.0
            %4208 = vmatprep.subr.mxu0 0.0
            %4209 = vmatpush1.msra.mxu0 0.0
            %4210 = vmatprep.subr.mxu0 0.0
            %4211 = vmatpush1.msra.mxu0 0.0
            %4212 = vmatprep.subr.mxu0 0.0
            %4213 = vmatpush1.msra.mxu0 0.0
            %4214 = vmatprep.subr.mxu0 0.0
            %4215 = vmatpush1.msra.mxu0 0.0
            %4216 = vmatprep.subr.mxu0 0.0
            %4217 = vmatpush1.msra.mxu0 0.0
            %4218 = vmatprep.subr.mxu0 0.0
            %4219 = vmatpush1.msra.mxu0 0.0
            %4220 = vmatprep.subr.mxu0 0.0
            %4221 = vmatpush1.msra.mxu0 0.0
            %4222 = vmatprep.subr.mxu0 0.0
            %4223 = vmatpush1.msra.mxu0 0.0
            %4224 = vmatprep.subr.mxu0 0.0
            %4225 = vmatpush1.msra.mxu0 0.0
            %4226 = vmatprep.subr.mxu0 0.0
            %4227 = vmatpush1.msra.mxu0 0.0
            %4228 = vmatprep.mubr.f32.mxu0 0.0
            %v4229 = vand.u32 %v3593, 4294901760
            %4230 = vmatmul.mubr.f32.gmra.mrb[0].mxu0 %v4229
            %v4231 = vpop.f32.mrb[0].mxu0
            %v4232 = vadd.f32 %v4145, %v4231
            %v4233 = vpop.f32.mrb[0].mxu0
            %4234 = vdwg.mxu0
            %v4235 = vtanh.pop %v4232
            %4236 = vmatprep.subr.mxu0 0.0
            %v4237 = vand.u32 %v481, 4294901760
            %4238 = vmatpush1.msra.mxu0 %v4237
            %4239 = vmatprep.subr.mxu0 0.0
            %v4240 = vand.u32 %v482, 4294901760
            %4241 = vmatpush1.msra.mxu0 %v4240
            %4242 = vmatprep.subr.mxu0 0.0
            %v4243 = vand.u32 %v483, 4294901760
            %4244 = vmatpush1.msra.mxu0 %v4243
            %4245 = vmatprep.subr.mxu0 0.0
            %v4246 = vand.u32 %v484, 4294901760
            %4247 = vmatpush1.msra.mxu0 %v4246
            %4248 = vmatprep.subr.mxu0 0.0
            %v4249 = vand.u32 %v485, 4294901760
            %4250 = vmatpush1.msra.mxu0 %v4249
            %4251 = vmatprep.subr.mxu0 0.0
            %v4252 = vand.u32 %v486, 4294901760
            %4253 = vmatpush1.msra.mxu0 %v4252
            %4254 = vmatprep.subr.mxu0 0.0
            %v4255 = vand.u32 %v487, 4294901760
            %4256 = vmatpush1.msra.mxu0 %v4255
            %4257 = vmatprep.subr.mxu0 0.0
            %v4258 = vand.u32 %v488, 4294901760
            %4259 = vmatpush1.msra.mxu0 %v4258
            %4260 = vmatprep.subr.mxu0 0.0
            %v4261 = vand.u32 %v489, 4294901760
            %4262 = vmatpush1.msra.mxu0 %v4261
            %4263 = vmatprep.subr.mxu0 0.0
            %v4264 = vand.u32 %v490, 4294901760
            %4265 = vmatpush1.msra.mxu0 %v4264
            %4266 = vmatprep.subr.mxu0 0.0
            %v4267 = vand.u32 %v491, 4294901760
            %4268 = vmatpush1.msra.mxu0 %v4267
            %4269 = vmatprep.subr.mxu0 0.0
            %v4270 = vand.u32 %v492, 4294901760
            %4271 = vmatpush1.msra.mxu0 %v4270
            %4272 = vmatprep.subr.mxu0 0.0
            %v4273 = vand.u32 %v493, 4294901760
            %4274 = vmatpush1.msra.mxu0 %v4273
            %4275 = vmatprep.subr.mxu0 0.0
            %v4276 = vand.u32 %v494, 4294901760
            %4277 = vmatpush1.msra.mxu0 %v4276
            %4278 = vmatprep.subr.mxu0 0.0
            %v4279 = vand.u32 %v495, 4294901760
            %4280 = vmatpush1.msra.mxu0 %v4279
            %4281 = vmatprep.subr.mxu0 0.0
            %v4282 = vand.u32 %v496, 4294901760
            %4283 = vmatpush1.msra.mxu0 %v4282
            %4284 = vmatprep.subr.mxu0 0.0
            %4285 = vmatpush1.msra.mxu0 0.0
            %4286 = vmatprep.subr.mxu0 0.0
            %4287 = vmatpush1.msra.mxu0 0.0
            %4288 = vmatprep.subr.mxu0 0.0
            %4289 = vmatpush1.msra.mxu0 0.0
            %4290 = vmatprep.subr.mxu0 0.0
            %4291 = vmatpush1.msra.mxu0 0.0
            %4292 = vmatprep.subr.mxu0 0.0
            %4293 = vmatpush1.msra.mxu0 0.0
            %4294 = vmatprep.subr.mxu0 0.0
            %4295 = vmatpush1.msra.mxu0 0.0
            %4296 = vmatprep.subr.mxu0 0.0
            %4297 = vmatpush1.msra.mxu0 0.0
            %4298 = vmatprep.subr.mxu0 0.0
            %4299 = vmatpush1.msra.mxu0 0.0
            %4300 = vmatprep.subr.mxu0 0.0
            %4301 = vmatpush1.msra.mxu0 0.0
            %4302 = vmatprep.subr.mxu0 0.0
            %4303 = vmatpush1.msra.mxu0 0.0
            %4304 = vmatprep.subr.mxu0 0.0
            %4305 = vmatpush1.msra.mxu0 0.0
            %4306 = vmatprep.subr.mxu0 0.0
            %4307 = vmatpush1.msra.mxu0 0.0
            %4308 = vmatprep.subr.mxu0 0.0
            %4309 = vmatpush1.msra.mxu0 0.0
            %4310 = vmatprep.subr.mxu0 0.0
            %4311 = vmatpush1.msra.mxu0 0.0
            %4312 = vmatprep.subr.mxu0 0.0
            %4313 = vmatpush1.msra.mxu0 0.0
            %4314 = vmatprep.subr.mxu0 0.0
            %4315 = vmatpush1.msra.mxu0 0.0
            %4316 = vmatprep.mubr.f32.mxu0 0.0
            %v4317 = vand.u32 %v4235, 4294901760
            %v4318 = vsub.f32 %v4235, %v4317
            %v4319 = vand.u32 %v4318, 4294901760
            %v4320 = vsub.f32 %v4318, %v4319
            %v4321 = vand.u32 %v4320, 4294901760
            %4322 = vmatmul.mubr.f32.gmra.mrb[0].mxu0 %v4321
            %v4323 = vpop.f32.mrb[0].mxu0
            %v4324 = vadd.f32 %v2947, %v4323
            %v4325 = vpop.f32.mrb[0].mxu0
            %4326 = vdwg.mxu0
            %4327 = vmatprep.subr.mxu0 0.0
            %v4328 = vand.u32 %v481, 4294901760
            %v4329 = vsub.f32 %v481, %v4328
            %v4330 = vand.u32 %v4329, 4294901760
            %v4331 = vsub.f32 %v4329, %v4330
            %v4332 = vand.u32 %v4331, 4294901760
            %4333 = vmatpush1.msra.mxu0 %v4332
            %4334 = vmatprep.subr.mxu0 0.0
            %v4335 = vand.u32 %v482, 4294901760
            %v4336 = vsub.f32 %v482, %v4335
            %v4337 = vand.u32 %v4336, 4294901760
            %v4338 = vsub.f32 %v4336, %v4337
            %v4339 = vand.u32 %v4338, 4294901760
            %4340 = vmatpush1.msra.mxu0 %v4339
            %4341 = vmatprep.subr.mxu0 0.0
            %v4342 = vand.u32 %v483, 4294901760
            %v4343 = vsub.f32 %v483, %v4342
            %v4344 = vand.u32 %v4343, 4294901760
            %v4345 = vsub.f32 %v4343, %v4344
            %v4346 = vand.u32 %v4345, 4294901760
            %4347 = vmatpush1.msra.mxu0 %v4346
            %4348 = vmatprep.subr.mxu0 0.0
            %v4349 = vand.u32 %v484, 4294901760
            %v4350 = vsub.f32 %v484, %v4349
            %v4351 = vand.u32 %v4350, 4294901760
            %v4352 = vsub.f32 %v4350, %v4351
            %v4353 = vand.u32 %v4352, 4294901760
            %4354 = vmatpush1.msra.mxu0 %v4353
            %4355 = vmatprep.subr.mxu0 0.0
            %v4356 = vand.u32 %v485, 4294901760
            %v4357 = vsub.f32 %v485, %v4356
            %v4358 = vand.u32 %v4357, 4294901760
            %v4359 = vsub.f32 %v4357, %v4358
            %v4360 = vand.u32 %v4359, 4294901760
            %4361 = vmatpush1.msra.mxu0 %v4360
            %4362 = vmatprep.subr.mxu0 0.0
            %v4363 = vand.u32 %v486, 4294901760
            %v4364 = vsub.f32 %v486, %v4363
            %v4365 = vand.u32 %v4364, 4294901760
            %v4366 = vsub.f32 %v4364, %v4365
            %v4367 = vand.u32 %v4366, 4294901760
            %4368 = vmatpush1.msra.mxu0 %v4367
            %4369 = vmatprep.subr.mxu0 0.0
            %v4370 = vand.u32 %v487, 4294901760
            %v4371 = vsub.f32 %v487, %v4370
            %v4372 = vand.u32 %v4371, 4294901760
            %v4373 = vsub.f32 %v4371, %v4372
            %v4374 = vand.u32 %v4373, 4294901760
            %4375 = vmatpush1.msra.mxu0 %v4374
            %4376 = vmatprep.subr.mxu0 0.0
            %v4377 = vand.u32 %v488, 4294901760
            %v4378 = vsub.f32 %v488, %v4377
            %v4379 = vand.u32 %v4378, 4294901760
            %v4380 = vsub.f32 %v4378, %v4379
            %v4381 = vand.u32 %v4380, 4294901760
            %4382 = vmatpush1.msra.mxu0 %v4381
            %4383 = vmatprep.subr.mxu0 0.0
            %v4384 = vand.u32 %v489, 4294901760
            %v4385 = vsub.f32 %v489, %v4384
            %v4386 = vand.u32 %v4385, 4294901760
            %v4387 = vsub.f32 %v4385, %v4386
            %v4388 = vand.u32 %v4387, 4294901760
            %4389 = vmatpush1.msra.mxu0 %v4388
            %4390 = vmatprep.subr.mxu0 0.0
            %v4391 = vand.u32 %v490, 4294901760
            %v4392 = vsub.f32 %v490, %v4391
            %v4393 = vand.u32 %v4392, 4294901760
            %v4394 = vsub.f32 %v4392, %v4393
            %v4395 = vand.u32 %v4394, 4294901760
            %4396 = vmatpush1.msra.mxu0 %v4395
            %4397 = vmatprep.subr.mxu0 0.0
            %v4398 = vand.u32 %v491, 4294901760
            %v4399 = vsub.f32 %v491, %v4398
            %v4400 = vand.u32 %v4399, 4294901760
            %v4401 = vsub.f32 %v4399, %v4400
            %v4402 = vand.u32 %v4401, 4294901760
            %4403 = vmatpush1.msra.mxu0 %v4402
            %4404 = vmatprep.subr.mxu0 0.0
            %v4405 = vand.u32 %v492, 4294901760
            %v4406 = vsub.f32 %v492, %v4405
            %v4407 = vand.u32 %v4406, 4294901760
            %v4408 = vsub.f32 %v4406, %v4407
            %v4409 = vand.u32 %v4408, 4294901760
            %4410 = vmatpush1.msra.mxu0 %v4409
            %4411 = vmatprep.subr.mxu0 0.0
            %v4412 = vand.u32 %v493, 4294901760
            %v4413 = vsub.f32 %v493, %v4412
            %v4414 = vand.u32 %v4413, 4294901760
            %v4415 = vsub.f32 %v4413, %v4414
            %v4416 = vand.u32 %v4415, 4294901760
            %4417 = vmatpush1.msra.mxu0 %v4416
            %4418 = vmatprep.subr.mxu0 0.0
            %v4419 = vand.u32 %v494, 4294901760
            %v4420 = vsub.f32 %v494, %v4419
            %v4421 = vand.u32 %v4420, 4294901760
            %v4422 = vsub.f32 %v4420, %v4421
            %v4423 = vand.u32 %v4422, 4294901760
            %4424 = vmatpush1.msra.mxu0 %v4423
            %4425 = vmatprep.subr.mxu0 0.0
            %v4426 = vand.u32 %v495, 4294901760
            %v4427 = vsub.f32 %v495, %v4426
            %v4428 = vand.u32 %v4427, 4294901760
            %v4429 = vsub.f32 %v4427, %v4428
            %v4430 = vand.u32 %v4429, 4294901760
            %4431 = vmatpush1.msra.mxu0 %v4430
            %4432 = vmatprep.subr.mxu0 0.0
            %v4433 = vand.u32 %v496, 4294901760
            %v4434 = vsub.f32 %v496, %v4433
            %v4435 = vand.u32 %v4434, 4294901760
            %v4436 = vsub.f32 %v4434, %v4435
            %v4437 = vand.u32 %v4436, 4294901760
            %4438 = vmatpush1.msra.mxu0 %v4437
            %4439 = vmatprep.subr.mxu0 0.0
            %4440 = vmatpush1.msra.mxu0 0.0
            %4441 = vmatprep.subr.mxu0 0.0
            %4442 = vmatpush1.msra.mxu0 0.0
            %4443 = vmatprep.subr.mxu0 0.0
            %4444 = vmatpush1.msra.mxu0 0.0
            %4445 = vmatprep.subr.mxu0 0.0
            %4446 = vmatpush1.msra.mxu0 0.0
            %4447 = vmatprep.subr.mxu0 0.0
            %4448 = vmatpush1.msra.mxu0 0.0
            %4449 = vmatprep.subr.mxu0 0.0
            %4450 = vmatpush1.msra.mxu0 0.0
            %4451 = vmatprep.subr.mxu0 0.0
            %4452 = vmatpush1.msra.mxu0 0.0
            %4453 = vmatprep.subr.mxu0 0.0
            %4454 = vmatpush1.msra.mxu0 0.0
            %4455 = vmatprep.subr.mxu0 0.0
            %4456 = vmatpush1.msra.mxu0 0.0
            %4457 = vmatprep.subr.mxu0 0.0
            %4458 = vmatpush1.msra.mxu0 0.0
            %4459 = vmatprep.subr.mxu0 0.0
            %4460 = vmatpush1.msra.mxu0 0.0
            %4461 = vmatprep.subr.mxu0 0.0
            %4462 = vmatpush1.msra.mxu0 0.0
            %4463 = vmatprep.subr.mxu0 0.0
            %4464 = vmatpush1.msra.mxu0 0.0
            %4465 = vmatprep.subr.mxu0 0.0
            %4466 = vmatpush1.msra.mxu0 0.0
            %4467 = vmatprep.subr.mxu0 0.0
            %4468 = vmatpush1.msra.mxu0 0.0
            %4469 = vmatprep.subr.mxu0 0.0
            %4470 = vmatpush1.msra.mxu0 0.0
            %4471 = vmatprep.mubr.f32.mxu0 0.0
            %v4472 = vand.u32 %v4235, 4294901760
            %4473 = vmatmul.mubr.f32.gmra.mrb[0].mxu0 %v4472
            %v4474 = vpop.f32.mrb[0].mxu0
            %v4475 = vadd.f32 %v4324, %v4474
            %v4476 = vpop.f32.mrb[0].mxu0
            %4477 = vdwg.mxu0
            %4478 = vmatprep.subr.mxu0 0.0
            %v4479 = vand.u32 %v481, 4294901760
            %v4480 = vsub.f32 %v481, %v4479
            %4481 = vmatpush1.msra.mxu0 %v4480
            %4482 = vmatprep.subr.mxu0 0.0
            %v4483 = vand.u32 %v482, 4294901760
            %v4484 = vsub.f32 %v482, %v4483
            %4485 = vmatpush1.msra.mxu0 %v4484
            %4486 = vmatprep.subr.mxu0 0.0
            %v4487 = vand.u32 %v483, 4294901760
            %v4488 = vsub.f32 %v483, %v4487
            %4489 = vmatpush1.msra.mxu0 %v4488
            %4490 = vmatprep.subr.mxu0 0.0
            %v4491 = vand.u32 %v484, 4294901760
            %v4492 = vsub.f32 %v484, %v4491
            %4493 = vmatpush1.msra.mxu0 %v4492
            %4494 = vmatprep.subr.mxu0 0.0
            %v4495 = vand.u32 %v485, 4294901760
            %v4496 = vsub.f32 %v485, %v4495
            %4497 = vmatpush1.msra.mxu0 %v4496
            %4498 = vmatprep.subr.mxu0 0.0
            %v4499 = vand.u32 %v486, 4294901760
            %v4500 = vsub.f32 %v486, %v4499
            %4501 = vmatpush1.msra.mxu0 %v4500
            %4502 = vmatprep.subr.mxu0 0.0
            %v4503 = vand.u32 %v487, 4294901760
            %v4504 = vsub.f32 %v487, %v4503
            %4505 = vmatpush1.msra.mxu0 %v4504
            %4506 = vmatprep.subr.mxu0 0.0
            %v4507 = vand.u32 %v488, 4294901760
            %v4508 = vsub.f32 %v488, %v4507
            %4509 = vmatpush1.msra.mxu0 %v4508
            %4510 = vmatprep.subr.mxu0 0.0
            %v4511 = vand.u32 %v489, 4294901760
            %v4512 = vsub.f32 %v489, %v4511
            %4513 = vmatpush1.msra.mxu0 %v4512
            %4514 = vmatprep.subr.mxu0 0.0
            %v4515 = vand.u32 %v490, 4294901760
            %v4516 = vsub.f32 %v490, %v4515
            %4517 = vmatpush1.msra.mxu0 %v4516
            %4518 = vmatprep.subr.mxu0 0.0
            %v4519 = vand.u32 %v491, 4294901760
            %v4520 = vsub.f32 %v491, %v4519
            %4521 = vmatpush1.msra.mxu0 %v4520
            %4522 = vmatprep.subr.mxu0 0.0
            %v4523 = vand.u32 %v492, 4294901760
            %v4524 = vsub.f32 %v492, %v4523
            %4525 = vmatpush1.msra.mxu0 %v4524
            %4526 = vmatprep.subr.mxu0 0.0
            %v4527 = vand.u32 %v493, 4294901760
            %v4528 = vsub.f32 %v493, %v4527
            %4529 = vmatpush1.msra.mxu0 %v4528
            %4530 = vmatprep.subr.mxu0 0.0
            %v4531 = vand.u32 %v494, 4294901760
            %v4532 = vsub.f32 %v494, %v4531
            %4533 = vmatpush1.msra.mxu0 %v4532
            %4534 = vmatprep.subr.mxu0 0.0
            %v4535 = vand.u32 %v495, 4294901760
            %v4536 = vsub.f32 %v495, %v4535
            %4537 = vmatpush1.msra.mxu0 %v4536
            %4538 = vmatprep.subr.mxu0 0.0
            %v4539 = vand.u32 %v496, 4294901760
            %v4540 = vsub.f32 %v496, %v4539
            %4541 = vmatpush1.msra.mxu0 %v4540
            %4542 = vmatprep.subr.mxu0 0.0
            %4543 = vmatpush1.msra.mxu0 0.0
            %4544 = vmatprep.subr.mxu0 0.0
            %4545 = vmatpush1.msra.mxu0 0.0
            %4546 = vmatprep.subr.mxu0 0.0
            %4547 = vmatpush1.msra.mxu0 0.0
            %4548 = vmatprep.subr.mxu0 0.0
            %4549 = vmatpush1.msra.mxu0 0.0
            %4550 = vmatprep.subr.mxu0 0.0
            %4551 = vmatpush1.msra.mxu0 0.0
            %4552 = vmatprep.subr.mxu0 0.0
            %4553 = vmatpush1.msra.mxu0 0.0
            %4554 = vmatprep.subr.mxu0 0.0
            %4555 = vmatpush1.msra.mxu0 0.0
            %4556 = vmatprep.subr.mxu0 0.0
            %4557 = vmatpush1.msra.mxu0 0.0
            %4558 = vmatprep.subr.mxu0 0.0
            %4559 = vmatpush1.msra.mxu0 0.0
            %4560 = vmatprep.subr.mxu0 0.0
            %4561 = vmatpush1.msra.mxu0 0.0
            %4562 = vmatprep.subr.mxu0 0.0
            %4563 = vmatpush1.msra.mxu0 0.0
            %4564 = vmatprep.subr.mxu0 0.0
            %4565 = vmatpush1.msra.mxu0 0.0
            %4566 = vmatprep.subr.mxu0 0.0
            %4567 = vmatpush1.msra.mxu0 0.0
            %4568 = vmatprep.subr.mxu0 0.0
            %4569 = vmatpush1.msra.mxu0 0.0
            %4570 = vmatprep.subr.mxu0 0.0
            %4571 = vmatpush1.msra.mxu0 0.0
            %4572 = vmatprep.subr.mxu0 0.0
            %4573 = vmatpush1.msra.mxu0 0.0
            %4574 = vmatprep.mubr.f32.mxu0 0.0
            %v4575 = vand.u32 %v4235, 4294901760
            %v4576 = vsub.f32 %v4235, %v4575
            %4577 = vmatmul.mubr.f32.gmra.mrb[0].mxu0 %v4576
            %v4578 = vpop.f32.mrb[0].mxu0
            %v4579 = vadd.f32 %v4475, %v4578
            %v4580 = vpop.f32.mrb[0].mxu0
            %4581 = vdwg.mxu0
            %4582 = vmatprep.subr.mxu0 0.0
            %v4583 = vand.u32 %v481, 4294901760
            %4584 = vmatpush1.msra.mxu0 %v4583
            %4585 = vmatprep.subr.mxu0 0.0
            %v4586 = vand.u32 %v482, 4294901760
            %4587 = vmatpush1.msra.mxu0 %v4586
            %4588 = vmatprep.subr.mxu0 0.0
            %v4589 = vand.u32 %v483, 4294901760
            %4590 = vmatpush1.msra.mxu0 %v4589
            %4591 = vmatprep.subr.mxu0 0.0
            %v4592 = vand.u32 %v484, 4294901760
            %4593 = vmatpush1.msra.mxu0 %v4592
            %4594 = vmatprep.subr.mxu0 0.0
            %v4595 = vand.u32 %v485, 4294901760
            %4596 = vmatpush1.msra.mxu0 %v4595
            %4597 = vmatprep.subr.mxu0 0.0
            %v4598 = vand.u32 %v486, 4294901760
            %4599 = vmatpush1.msra.mxu0 %v4598
            %4600 = vmatprep.subr.mxu0 0.0
            %v4601 = vand.u32 %v487, 4294901760
            %4602 = vmatpush1.msra.mxu0 %v4601
            %4603 = vmatprep.subr.mxu0 0.0
            %v4604 = vand.u32 %v488, 4294901760
            %4605 = vmatpush1.msra.mxu0 %v4604
            %4606 = vmatprep.subr.mxu0 0.0
            %v4607 = vand.u32 %v489, 4294901760
            %4608 = vmatpush1.msra.mxu0 %v4607
            %4609 = vmatprep.subr.mxu0 0.0
            %v4610 = vand.u32 %v490, 4294901760
            %4611 = vmatpush1.msra.mxu0 %v4610
            %4612 = vmatprep.subr.mxu0 0.0
            %v4613 = vand.u32 %v491, 4294901760
            %4614 = vmatpush1.msra.mxu0 %v4613
            %4615 = vmatprep.subr.mxu0 0.0
            %v4616 = vand.u32 %v492, 4294901760
            %4617 = vmatpush1.msra.mxu0 %v4616
            %4618 = vmatprep.subr.mxu0 0.0
            %v4619 = vand.u32 %v493, 4294901760
            %4620 = vmatpush1.msra.mxu0 %v4619
            %4621 = vmatprep.subr.mxu0 0.0
            %v4622 = vand.u32 %v494, 4294901760
            %4623 = vmatpush1.msra.mxu0 %v4622
            %4624 = vmatprep.subr.mxu0 0.0
            %v4625 = vand.u32 %v495, 4294901760
            %4626 = vmatpush1.msra.mxu0 %v4625
            %4627 = vmatprep.subr.mxu0 0.0
            %v4628 = vand.u32 %v496, 4294901760
            %4629 = vmatpush1.msra.mxu0 %v4628
            %4630 = vmatprep.subr.mxu0 0.0
            %4631 = vmatpush1.msra.mxu0 0.0
            %4632 = vmatprep.subr.mxu0 0.0
            %4633 = vmatpush1.msra.mxu0 0.0
            %4634 = vmatprep.subr.mxu0 0.0
            %4635 = vmatpush1.msra.mxu0 0.0
            %4636 = vmatprep.subr.mxu0 0.0
            %4637 = vmatpush1.msra.mxu0 0.0
            %4638 = vmatprep.subr.mxu0 0.0
            %4639 = vmatpush1.msra.mxu0 0.0
            %4640 = vmatprep.subr.mxu0 0.0
            %4641 = vmatpush1.msra.mxu0 0.0
            %4642 = vmatprep.subr.mxu0 0.0
            %4643 = vmatpush1.msra.mxu0 0.0
            %4644 = vmatprep.subr.mxu0 0.0
            %4645 = vmatpush1.msra.mxu0 0.0
            %4646 = vmatprep.subr.mxu0 0.0
            %4647 = vmatpush1.msra.mxu0 0.0
            %4648 = vmatprep.subr.mxu0 0.0
            %4649 = vmatpush1.msra.mxu0 0.0
            %4650 = vmatprep.subr.mxu0 0.0
            %4651 = vmatpush1.msra.mxu0 0.0
            %4652 = vmatprep.subr.mxu0 0.0
            %4653 = vmatpush1.msra.mxu0 0.0
            %4654 = vmatprep.subr.mxu0 0.0
            %4655 = vmatpush1.msra.mxu0 0.0
            %4656 = vmatprep.subr.mxu0 0.0
            %4657 = vmatpush1.msra.mxu0 0.0
            %4658 = vmatprep.subr.mxu0 0.0
            %4659 = vmatpush1.msra.mxu0 0.0
            %4660 = vmatprep.subr.mxu0 0.0
            %4661 = vmatpush1.msra.mxu0 0.0
            %4662 = vmatprep.mubr.f32.mxu0 0.0
            %v4663 = vand.u32 %v4235, 4294901760
            %v4664 = vsub.f32 %v4235, %v4663
            %v4665 = vand.u32 %v4664, 4294901760
            %4666 = vmatmul.mubr.f32.gmra.mrb[0].mxu0 %v4665
            %v4667 = vpop.f32.mrb[0].mxu0
            %v4668 = vadd.f32 %v4579, %v4667
            %v4669 = vpop.f32.mrb[0].mxu0
            %4670 = vdwg.mxu0
            %4671 = vmatprep.subr.mxu0 0.0
            %v4672 = vand.u32 %v481, 4294901760
            %v4673 = vsub.f32 %v481, %v4672
            %v4674 = vand.u32 %v4673, 4294901760
            %4675 = vmatpush1.msra.mxu0 %v4674
            %4676 = vmatprep.subr.mxu0 0.0
            %v4677 = vand.u32 %v482, 4294901760
            %v4678 = vsub.f32 %v482, %v4677
            %v4679 = vand.u32 %v4678, 4294901760
            %4680 = vmatpush1.msra.mxu0 %v4679
            %4681 = vmatprep.subr.mxu0 0.0
            %v4682 = vand.u32 %v483, 4294901760
            %v4683 = vsub.f32 %v483, %v4682
            %v4684 = vand.u32 %v4683, 4294901760
            %4685 = vmatpush1.msra.mxu0 %v4684
            %4686 = vmatprep.subr.mxu0 0.0
            %v4687 = vand.u32 %v484, 4294901760
            %v4688 = vsub.f32 %v484, %v4687
            %v4689 = vand.u32 %v4688, 4294901760
            %4690 = vmatpush1.msra.mxu0 %v4689
            %4691 = vmatprep.subr.mxu0 0.0
            %v4692 = vand.u32 %v485, 4294901760
            %v4693 = vsub.f32 %v485, %v4692
            %v4694 = vand.u32 %v4693, 4294901760
            %4695 = vmatpush1.msra.mxu0 %v4694
            %4696 = vmatprep.subr.mxu0 0.0
            %v4697 = vand.u32 %v486, 4294901760
            %v4698 = vsub.f32 %v486, %v4697
            %v4699 = vand.u32 %v4698, 4294901760
            %4700 = vmatpush1.msra.mxu0 %v4699
            %4701 = vmatprep.subr.mxu0 0.0
            %v4702 = vand.u32 %v487, 4294901760
            %v4703 = vsub.f32 %v487, %v4702
            %v4704 = vand.u32 %v4703, 4294901760
            %4705 = vmatpush1.msra.mxu0 %v4704
            %4706 = vmatprep.subr.mxu0 0.0
            %v4707 = vand.u32 %v488, 4294901760
            %v4708 = vsub.f32 %v488, %v4707
            %v4709 = vand.u32 %v4708, 4294901760
            %4710 = vmatpush1.msra.mxu0 %v4709
            %4711 = vmatprep.subr.mxu0 0.0
            %v4712 = vand.u32 %v489, 4294901760
            %v4713 = vsub.f32 %v489, %v4712
            %v4714 = vand.u32 %v4713, 4294901760
            %4715 = vmatpush1.msra.mxu0 %v4714
            %4716 = vmatprep.subr.mxu0 0.0
            %v4717 = vand.u32 %v490, 4294901760
            %v4718 = vsub.f32 %v490, %v4717
            %v4719 = vand.u32 %v4718, 4294901760
            %4720 = vmatpush1.msra.mxu0 %v4719
            %4721 = vmatprep.subr.mxu0 0.0
            %v4722 = vand.u32 %v491, 4294901760
            %v4723 = vsub.f32 %v491, %v4722
            %v4724 = vand.u32 %v4723, 4294901760
            %4725 = vmatpush1.msra.mxu0 %v4724
            %4726 = vmatprep.subr.mxu0 0.0
            %v4727 = vand.u32 %v492, 4294901760
            %v4728 = vsub.f32 %v492, %v4727
            %v4729 = vand.u32 %v4728, 4294901760
            %4730 = vmatpush1.msra.mxu0 %v4729
            %4731 = vmatprep.subr.mxu0 0.0
            %v4732 = vand.u32 %v493, 4294901760
            %v4733 = vsub.f32 %v493, %v4732
            %v4734 = vand.u32 %v4733, 4294901760
            %4735 = vmatpush1.msra.mxu0 %v4734
            %4736 = vmatprep.subr.mxu0 0.0
            %v4737 = vand.u32 %v494, 4294901760
            %v4738 = vsub.f32 %v494, %v4737
            %v4739 = vand.u32 %v4738, 4294901760
            %4740 = vmatpush1.msra.mxu0 %v4739
            %4741 = vmatprep.subr.mxu0 0.0
            %v4742 = vand.u32 %v495, 4294901760
            %v4743 = vsub.f32 %v495, %v4742
            %v4744 = vand.u32 %v4743, 4294901760
            %4745 = vmatpush1.msra.mxu0 %v4744
            %4746 = vmatprep.subr.mxu0 0.0
            %v4747 = vand.u32 %v496, 4294901760
            %v4748 = vsub.f32 %v496, %v4747
            %v4749 = vand.u32 %v4748, 4294901760
            %4750 = vmatpush1.msra.mxu0 %v4749
            %4751 = vmatprep.subr.mxu0 0.0
            %4752 = vmatpush1.msra.mxu0 0.0
            %4753 = vmatprep.subr.mxu0 0.0
            %4754 = vmatpush1.msra.mxu0 0.0
            %4755 = vmatprep.subr.mxu0 0.0
            %4756 = vmatpush1.msra.mxu0 0.0
            %4757 = vmatprep.subr.mxu0 0.0
            %4758 = vmatpush1.msra.mxu0 0.0
            %4759 = vmatprep.subr.mxu0 0.0
            %4760 = vmatpush1.msra.mxu0 0.0
            %4761 = vmatprep.subr.mxu0 0.0
            %4762 = vmatpush1.msra.mxu0 0.0
            %4763 = vmatprep.subr.mxu0 0.0
            %4764 = vmatpush1.msra.mxu0 0.0
            %4765 = vmatprep.subr.mxu0 0.0
            %4766 = vmatpush1.msra.mxu0 0.0
            %4767 = vmatprep.subr.mxu0 0.0
            %4768 = vmatpush1.msra.mxu0 0.0
            %4769 = vmatprep.subr.mxu0 0.0
            %4770 = vmatpush1.msra.mxu0 0.0
            %4771 = vmatprep.subr.mxu0 0.0
            %4772 = vmatpush1.msra.mxu0 0.0
            %4773 = vmatprep.subr.mxu0 0.0
            %4774 = vmatpush1.msra.mxu0 0.0
            %4775 = vmatprep.subr.mxu0 0.0
            %4776 = vmatpush1.msra.mxu0 0.0
            %4777 = vmatprep.subr.mxu0 0.0
            %4778 = vmatpush1.msra.mxu0 0.0
            %4779 = vmatprep.subr.mxu0 0.0
            %4780 = vmatpush1.msra.mxu0 0.0
            %4781 = vmatprep.subr.mxu0 0.0
            %4782 = vmatpush1.msra.mxu0 0.0
            %4783 = vmatprep.mubr.f32.mxu0 0.0
            %v4784 = vand.u32 %v4235, 4294901760
            %4785 = vmatmul.mubr.f32.gmra.mrb[0].mxu0 %v4784
            %v4786 = vpop.f32.mrb[0].mxu0
            %v4787 = vadd.f32 %v4668, %v4786
            %v4788 = vpop.f32.mrb[0].mxu0
            %4789 = vdwg.mxu0
            %4790 = vmatprep.subr.mxu0 0.0
            %v4791 = vand.u32 %v481, 4294901760
            %4792 = vmatpush1.msra.mxu0 %v4791
            %4793 = vmatprep.subr.mxu0 0.0
            %v4794 = vand.u32 %v482, 4294901760
            %4795 = vmatpush1.msra.mxu0 %v4794
            %4796 = vmatprep.subr.mxu0 0.0
            %v4797 = vand.u32 %v483, 4294901760
            %4798 = vmatpush1.msra.mxu0 %v4797
            %4799 = vmatprep.subr.mxu0 0.0
            %v4800 = vand.u32 %v484, 4294901760
            %4801 = vmatpush1.msra.mxu0 %v4800
            %4802 = vmatprep.subr.mxu0 0.0
            %v4803 = vand.u32 %v485, 4294901760
            %4804 = vmatpush1.msra.mxu0 %v4803
            %4805 = vmatprep.subr.mxu0 0.0
            %v4806 = vand.u32 %v486, 4294901760
            %4807 = vmatpush1.msra.mxu0 %v4806
            %4808 = vmatprep.subr.mxu0 0.0
            %v4809 = vand.u32 %v487, 4294901760
            %4810 = vmatpush1.msra.mxu0 %v4809
            %4811 = vmatprep.subr.mxu0 0.0
            %v4812 = vand.u32 %v488, 4294901760
            %4813 = vmatpush1.msra.mxu0 %v4812
            %4814 = vmatprep.subr.mxu0 0.0
            %v4815 = vand.u32 %v489, 4294901760
            %4816 = vmatpush1.msra.mxu0 %v4815
            %4817 = vmatprep.subr.mxu0 0.0
            %v4818 = vand.u32 %v490, 4294901760
            %4819 = vmatpush1.msra.mxu0 %v4818
            %4820 = vmatprep.subr.mxu0 0.0
            %v4821 = vand.u32 %v491, 4294901760
            %4822 = vmatpush1.msra.mxu0 %v4821
            %4823 = vmatprep.subr.mxu0 0.0
            %v4824 = vand.u32 %v492, 4294901760
            %4825 = vmatpush1.msra.mxu0 %v4824
            %4826 = vmatprep.subr.mxu0 0.0
            %v4827 = vand.u32 %v493, 4294901760
            %4828 = vmatpush1.msra.mxu0 %v4827
            %4829 = vmatprep.subr.mxu0 0.0
            %v4830 = vand.u32 %v494, 4294901760
            %4831 = vmatpush1.msra.mxu0 %v4830
            %4832 = vmatprep.subr.mxu0 0.0
            %v4833 = vand.u32 %v495, 4294901760
            %4834 = vmatpush1.msra.mxu0 %v4833
            %4835 = vmatprep.subr.mxu0 0.0
            %v4836 = vand.u32 %v496, 4294901760
            %4837 = vmatpush1.msra.mxu0 %v4836
            %4838 = vmatprep.subr.mxu0 0.0
            %4839 = vmatpush1.msra.mxu0 0.0
            %4840 = vmatprep.subr.mxu0 0.0
            %4841 = vmatpush1.msra.mxu0 0.0
            %4842 = vmatprep.subr.mxu0 0.0
            %4843 = vmatpush1.msra.mxu0 0.0
            %4844 = vmatprep.subr.mxu0 0.0
            %4845 = vmatpush1.msra.mxu0 0.0
            %4846 = vmatprep.subr.mxu0 0.0
            %4847 = vmatpush1.msra.mxu0 0.0
            %4848 = vmatprep.subr.mxu0 0.0
            %4849 = vmatpush1.msra.mxu0 0.0
            %4850 = vmatprep.subr.mxu0 0.0
            %4851 = vmatpush1.msra.mxu0 0.0
            %4852 = vmatprep.subr.mxu0 0.0
            %4853 = vmatpush1.msra.mxu0 0.0
            %4854 = vmatprep.subr.mxu0 0.0
            %4855 = vmatpush1.msra.mxu0 0.0
            %4856 = vmatprep.subr.mxu0 0.0
            %4857 = vmatpush1.msra.mxu0 0.0
            %4858 = vmatprep.subr.mxu0 0.0
            %4859 = vmatpush1.msra.mxu0 0.0
            %4860 = vmatprep.subr.mxu0 0.0
            %4861 = vmatpush1.msra.mxu0 0.0
            %4862 = vmatprep.subr.mxu0 0.0
            %4863 = vmatpush1.msra.mxu0 0.0
            %4864 = vmatprep.subr.mxu0 0.0
            %4865 = vmatpush1.msra.mxu0 0.0
            %4866 = vmatprep.subr.mxu0 0.0
            %4867 = vmatpush1.msra.mxu0 0.0
            %4868 = vmatprep.subr.mxu0 0.0
            %4869 = vmatpush1.msra.mxu0 0.0
            %4870 = vmatprep.mubr.f32.mxu0 0.0
            %v4871 = vand.u32 %v4235, 4294901760
            %4872 = vmatmul.mubr.f32.gmra.mrb[0].mxu0 %v4871
            %v4873 = vpop.f32.mrb[0].mxu0
            %v4874 = vadd.f32 %v4787, %v4873
            %v4875 = vpop.f32.mrb[0].mxu0
            %4876 = vdwg.mxu0
            %v4877 = vmul.f32 %v2287, %v4874
            %v4878 = vadd.f32 %v3591, %v4877
            %v4879 = vmul.f32 %v2285, %v4874
            %v4880 = vadd.f32 %v2294, %v4879
            %4881 = vmatprep.subr.mxu0 0.0
            %v4882 = vand.u32 %v465, 4294901760
            %4883 = vmatpush1.msra.mxu0 %v4882
            %4884 = vmatprep.subr.mxu0 0.0
            %v4885 = vand.u32 %v466, 4294901760
            %4886 = vmatpush1.msra.mxu0 %v4885
            %4887 = vmatprep.subr.mxu0 0.0
            %v4888 = vand.u32 %v467, 4294901760
            %4889 = vmatpush1.msra.mxu0 %v4888
            %4890 = vmatprep.subr.mxu0 0.0
            %v4891 = vand.u32 %v468, 4294901760
            %4892 = vmatpush1.msra.mxu0 %v4891
            %4893 = vmatprep.subr.mxu0 0.0
            %v4894 = vand.u32 %v469, 4294901760
            %4895 = vmatpush1.msra.mxu0 %v4894
            %4896 = vmatprep.subr.mxu0 0.0
            %v4897 = vand.u32 %v470, 4294901760
            %4898 = vmatpush1.msra.mxu0 %v4897
            %4899 = vmatprep.subr.mxu0 0.0
            %v4900 = vand.u32 %v471, 4294901760
            %4901 = vmatpush1.msra.mxu0 %v4900
            %4902 = vmatprep.subr.mxu0 0.0
            %v4903 = vand.u32 %v472, 4294901760
            %4904 = vmatpush1.msra.mxu0 %v4903
            %4905 = vmatprep.subr.mxu0 0.0
            %v4906 = vand.u32 %v473, 4294901760
            %4907 = vmatpush1.msra.mxu0 %v4906
            %4908 = vmatprep.subr.mxu0 0.0
            %v4909 = vand.u32 %v474, 4294901760
            %4910 = vmatpush1.msra.mxu0 %v4909
            %4911 = vmatprep.subr.mxu0 0.0
            %v4912 = vand.u32 %v475, 4294901760
            %4913 = vmatpush1.msra.mxu0 %v4912
            %4914 = vmatprep.subr.mxu0 0.0
            %v4915 = vand.u32 %v476, 4294901760
            %4916 = vmatpush1.msra.mxu0 %v4915
            %4917 = vmatprep.subr.mxu0 0.0
            %v4918 = vand.u32 %v477, 4294901760
            %4919 = vmatpush1.msra.mxu0 %v4918
            %4920 = vmatprep.subr.mxu0 0.0
            %v4921 = vand.u32 %v478, 4294901760
            %4922 = vmatpush1.msra.mxu0 %v4921
            %4923 = vmatprep.subr.mxu0 0.0
            %v4924 = vand.u32 %v479, 4294901760
            %4925 = vmatpush1.msra.mxu0 %v4924
            %4926 = vmatprep.subr.mxu0 0.0
            %v4927 = vand.u32 %v480, 4294901760
            %4928 = vmatpush1.msra.mxu0 %v4927
            %4929 = vmatprep.subr.mxu0 0.0
            %4930 = vmatpush1.msra.mxu0 0.0
            %4931 = vmatprep.subr.mxu0 0.0
            %4932 = vmatpush1.msra.mxu0 0.0
            %4933 = vmatprep.subr.mxu0 0.0
            %4934 = vmatpush1.msra.mxu0 0.0
            %4935 = vmatprep.subr.mxu0 0.0
            %4936 = vmatpush1.msra.mxu0 0.0
            %4937 = vmatprep.subr.mxu0 0.0
            %4938 = vmatpush1.msra.mxu0 0.0
            %4939 = vmatprep.subr.mxu0 0.0
            %4940 = vmatpush1.msra.mxu0 0.0
            %4941 = vmatprep.subr.mxu0 0.0
            %4942 = vmatpush1.msra.mxu0 0.0
            %4943 = vmatprep.subr.mxu0 0.0
            %4944 = vmatpush1.msra.mxu0 0.0
            %4945 = vmatprep.subr.mxu0 0.0
            %4946 = vmatpush1.msra.mxu0 0.0
            %4947 = vmatprep.subr.mxu0 0.0
            %4948 = vmatpush1.msra.mxu0 0.0
            %4949 = vmatprep.subr.mxu0 0.0
            %4950 = vmatpush1.msra.mxu0 0.0
            %4951 = vmatprep.subr.mxu0 0.0
            %4952 = vmatpush1.msra.mxu0 0.0
            %4953 = vmatprep.subr.mxu0 0.0
            %4954 = vmatpush1.msra.mxu0 0.0
            %4955 = vmatprep.subr.mxu0 0.0
            %4956 = vmatpush1.msra.mxu0 0.0
            %4957 = vmatprep.subr.mxu0 0.0
            %4958 = vmatpush1.msra.mxu0 0.0
            %4959 = vmatprep.subr.mxu0 0.0
            %4960 = vmatpush1.msra.mxu0 0.0
            %4961 = vmatprep.mubr.f32.mxu0 0.0
            %v4962 = vand.u32 %v4880, 4294901760
            %v4963 = vsub.f32 %v4880, %v4962
            %v4964 = vand.u32 %v4963, 4294901760
            %v4965 = vsub.f32 %v4963, %v4964
            %v4966 = vand.u32 %v4965, 4294901760
            %4967 = vmatmul.mubr.f32.gmra.mrb[0].mxu0 %v4966
            %v4968 = vpop.f32.mrb[0].mxu0
            %v4969 = vadd.f32 %v2299, %v4968
            %v4970 = vpop.f32.mrb[0].mxu0
            %4971 = vdwg.mxu0
            %4972 = vmatprep.subr.mxu0 0.0
            %v4973 = vand.u32 %v465, 4294901760
            %v4974 = vsub.f32 %v465, %v4973
            %v4975 = vand.u32 %v4974, 4294901760
            %v4976 = vsub.f32 %v4974, %v4975
            %v4977 = vand.u32 %v4976, 4294901760
            %4978 = vmatpush1.msra.mxu0 %v4977
            %4979 = vmatprep.subr.mxu0 0.0
            %v4980 = vand.u32 %v466, 4294901760
            %v4981 = vsub.f32 %v466, %v4980
            %v4982 = vand.u32 %v4981, 4294901760
            %v4983 = vsub.f32 %v4981, %v4982
            %v4984 = vand.u32 %v4983, 4294901760
            %4985 = vmatpush1.msra.mxu0 %v4984
            %4986 = vmatprep.subr.mxu0 0.0
            %v4987 = vand.u32 %v467, 4294901760
            %v4988 = vsub.f32 %v467, %v4987
            %v4989 = vand.u32 %v4988, 4294901760
            %v4990 = vsub.f32 %v4988, %v4989
            %v4991 = vand.u32 %v4990, 4294901760
            %4992 = vmatpush1.msra.mxu0 %v4991
            %4993 = vmatprep.subr.mxu0 0.0
            %v4994 = vand.u32 %v468, 4294901760
            %v4995 = vsub.f32 %v468, %v4994
            %v4996 = vand.u32 %v4995, 4294901760
            %v4997 = vsub.f32 %v4995, %v4996
            %v4998 = vand.u32 %v4997, 4294901760
            %4999 = vmatpush1.msra.mxu0 %v4998
            %5000 = vmatprep.subr.mxu0 0.0
            %v5001 = vand.u32 %v469, 4294901760
            %v5002 = vsub.f32 %v469, %v5001
            %v5003 = vand.u32 %v5002, 4294901760
            %v5004 = vsub.f32 %v5002, %v5003
            %v5005 = vand.u32 %v5004, 4294901760
            %5006 = vmatpush1.msra.mxu0 %v5005
            %5007 = vmatprep.subr.mxu0 0.0
            %v5008 = vand.u32 %v470, 4294901760
            %v5009 = vsub.f32 %v470, %v5008
            %v5010 = vand.u32 %v5009, 4294901760
            %v5011 = vsub.f32 %v5009, %v5010
            %v5012 = vand.u32 %v5011, 4294901760
            %5013 = vmatpush1.msra.mxu0 %v5012
            %5014 = vmatprep.subr.mxu0 0.0
            %v5015 = vand.u32 %v471, 4294901760
            %v5016 = vsub.f32 %v471, %v5015
            %v5017 = vand.u32 %v5016, 4294901760
            %v5018 = vsub.f32 %v5016, %v5017
            %v5019 = vand.u32 %v5018, 4294901760
            %5020 = vmatpush1.msra.mxu0 %v5019
            %5021 = vmatprep.subr.mxu0 0.0
            %v5022 = vand.u32 %v472, 4294901760
            %v5023 = vsub.f32 %v472, %v5022
            %v5024 = vand.u32 %v5023, 4294901760
            %v5025 = vsub.f32 %v5023, %v5024
            %v5026 = vand.u32 %v5025, 4294901760
            %5027 = vmatpush1.msra.mxu0 %v5026
            %5028 = vmatprep.subr.mxu0 0.0
            %v5029 = vand.u32 %v473, 4294901760
            %v5030 = vsub.f32 %v473, %v5029
            %v5031 = vand.u32 %v5030, 4294901760
            %v5032 = vsub.f32 %v5030, %v5031
            %v5033 = vand.u32 %v5032, 4294901760
            %5034 = vmatpush1.msra.mxu0 %v5033
            %5035 = vmatprep.subr.mxu0 0.0
            %v5036 = vand.u32 %v474, 4294901760
            %v5037 = vsub.f32 %v474, %v5036
            %v5038 = vand.u32 %v5037, 4294901760
            %v5039 = vsub.f32 %v5037, %v5038
            %v5040 = vand.u32 %v5039, 4294901760
            %5041 = vmatpush1.msra.mxu0 %v5040
            %5042 = vmatprep.subr.mxu0 0.0
            %v5043 = vand.u32 %v475, 4294901760
            %v5044 = vsub.f32 %v475, %v5043
            %v5045 = vand.u32 %v5044, 4294901760
            %v5046 = vsub.f32 %v5044, %v5045
            %v5047 = vand.u32 %v5046, 4294901760
            %5048 = vmatpush1.msra.mxu0 %v5047
            %5049 = vmatprep.subr.mxu0 0.0
            %v5050 = vand.u32 %v476, 4294901760
            %v5051 = vsub.f32 %v476, %v5050
            %v5052 = vand.u32 %v5051, 4294901760
            %v5053 = vsub.f32 %v5051, %v5052
            %v5054 = vand.u32 %v5053, 4294901760
            %5055 = vmatpush1.msra.mxu0 %v5054
            %5056 = vmatprep.subr.mxu0 0.0
            %v5057 = vand.u32 %v477, 4294901760
            %v5058 = vsub.f32 %v477, %v5057
            %v5059 = vand.u32 %v5058, 4294901760
            %v5060 = vsub.f32 %v5058, %v5059
            %v5061 = vand.u32 %v5060, 4294901760
            %5062 = vmatpush1.msra.mxu0 %v5061
            %5063 = vmatprep.subr.mxu0 0.0
            %v5064 = vand.u32 %v478, 4294901760
            %v5065 = vsub.f32 %v478, %v5064
            %v5066 = vand.u32 %v5065, 4294901760
            %v5067 = vsub.f32 %v5065, %v5066
            %v5068 = vand.u32 %v5067, 4294901760
            %5069 = vmatpush1.msra.mxu0 %v5068
            %5070 = vmatprep.subr.mxu0 0.0
            %v5071 = vand.u32 %v479, 4294901760
            %v5072 = vsub.f32 %v479, %v5071
            %v5073 = vand.u32 %v5072, 4294901760
            %v5074 = vsub.f32 %v5072, %v5073
            %v5075 = vand.u32 %v5074, 4294901760
            %5076 = vmatpush1.msra.mxu0 %v5075
            %5077 = vmatprep.subr.mxu0 0.0
            %v5078 = vand.u32 %v480, 4294901760
            %v5079 = vsub.f32 %v480, %v5078
            %v5080 = vand.u32 %v5079, 4294901760
            %v5081 = vsub.f32 %v5079, %v5080
            %v5082 = vand.u32 %v5081, 4294901760
            %5083 = vmatpush1.msra.mxu0 %v5082
            %5084 = vmatprep.subr.mxu0 0.0
            %5085 = vmatpush1.msra.mxu0 0.0
            %5086 = vmatprep.subr.mxu0 0.0
            %5087 = vmatpush1.msra.mxu0 0.0
            %5088 = vmatprep.subr.mxu0 0.0
            %5089 = vmatpush1.msra.mxu0 0.0
            %5090 = vmatprep.subr.mxu0 0.0
            %5091 = vmatpush1.msra.mxu0 0.0
            %5092 = vmatprep.subr.mxu0 0.0
            %5093 = vmatpush1.msra.mxu0 0.0
            %5094 = vmatprep.subr.mxu0 0.0
            %5095 = vmatpush1.msra.mxu0 0.0
            %5096 = vmatprep.subr.mxu0 0.0
            %5097 = vmatpush1.msra.mxu0 0.0
            %5098 = vmatprep.subr.mxu0 0.0
            %5099 = vmatpush1.msra.mxu0 0.0
            %5100 = vmatprep.subr.mxu0 0.0
            %5101 = vmatpush1.msra.mxu0 0.0
            %5102 = vmatprep.subr.mxu0 0.0
            %5103 = vmatpush1.msra.mxu0 0.0
            %5104 = vmatprep.subr.mxu0 0.0
            %5105 = vmatpush1.msra.mxu0 0.0
            %5106 = vmatprep.subr.mxu0 0.0
            %5107 = vmatpush1.msra.mxu0 0.0
            %5108 = vmatprep.subr.mxu0 0.0
            %5109 = vmatpush1.msra.mxu0 0.0
            %5110 = vmatprep.subr.mxu0 0.0
            %5111 = vmatpush1.msra.mxu0 0.0
            %5112 = vmatprep.subr.mxu0 0.0
            %5113 = vmatpush1.msra.mxu0 0.0
            %5114 = vmatprep.subr.mxu0 0.0
            %5115 = vmatpush1.msra.mxu0 0.0
            %5116 = vmatprep.mubr.f32.mxu0 0.0
            %v5117 = vand.u32 %v4880, 4294901760
            %5118 = vmatmul.mubr.f32.gmra.mrb[0].mxu0 %v5117
            %v5119 = vpop.f32.mrb[0].mxu0
            %v5120 = vadd.f32 %v4969, %v5119
            %v5121 = vpop.f32.mrb[0].mxu0
            %5122 = vdwg.mxu0
            %5123 = vmatprep.subr.mxu0 0.0
            %v5124 = vand.u32 %v465, 4294901760
            %v5125 = vsub.f32 %v465, %v5124
            %5126 = vmatpush1.msra.mxu0 %v5125
            %5127 = vmatprep.subr.mxu0 0.0
            %v5128 = vand.u32 %v466, 4294901760
            %v5129 = vsub.f32 %v466, %v5128
            %5130 = vmatpush1.msra.mxu0 %v5129
            %5131 = vmatprep.subr.mxu0 0.0
            %v5132 = vand.u32 %v467, 4294901760
            %v5133 = vsub.f32 %v467, %v5132
            %5134 = vmatpush1.msra.mxu0 %v5133
            %5135 = vmatprep.subr.mxu0 0.0
            %v5136 = vand.u32 %v468, 4294901760
            %v5137 = vsub.f32 %v468, %v5136
            %5138 = vmatpush1.msra.mxu0 %v5137
            %5139 = vmatprep.subr.mxu0 0.0
            %v5140 = vand.u32 %v469, 4294901760
            %v5141 = vsub.f32 %v469, %v5140
            %5142 = vmatpush1.msra.mxu0 %v5141
            %5143 = vmatprep.subr.mxu0 0.0
            %v5144 = vand.u32 %v470, 4294901760
            %v5145 = vsub.f32 %v470, %v5144
            %5146 = vmatpush1.msra.mxu0 %v5145
            %5147 = vmatprep.subr.mxu0 0.0
            %v5148 = vand.u32 %v471, 4294901760
            %v5149 = vsub.f32 %v471, %v5148
            %5150 = vmatpush1.msra.mxu0 %v5149
            %5151 = vmatprep.subr.mxu0 0.0
            %v5152 = vand.u32 %v472, 4294901760
            %v5153 = vsub.f32 %v472, %v5152
            %5154 = vmatpush1.msra.mxu0 %v5153
            %5155 = vmatprep.subr.mxu0 0.0
            %v5156 = vand.u32 %v473, 4294901760
            %v5157 = vsub.f32 %v473, %v5156
            %5158 = vmatpush1.msra.mxu0 %v5157
            %5159 = vmatprep.subr.mxu0 0.0
            %v5160 = vand.u32 %v474, 4294901760
            %v5161 = vsub.f32 %v474, %v5160
            %5162 = vmatpush1.msra.mxu0 %v5161
            %5163 = vmatprep.subr.mxu0 0.0
            %v5164 = vand.u32 %v475, 4294901760
            %v5165 = vsub.f32 %v475, %v5164
            %5166 = vmatpush1.msra.mxu0 %v5165
            %5167 = vmatprep.subr.mxu0 0.0
            %v5168 = vand.u32 %v476, 4294901760
            %v5169 = vsub.f32 %v476, %v5168
            %5170 = vmatpush1.msra.mxu0 %v5169
            %5171 = vmatprep.subr.mxu0 0.0
            %v5172 = vand.u32 %v477, 4294901760
            %v5173 = vsub.f32 %v477, %v5172
            %5174 = vmatpush1.msra.mxu0 %v5173
            %5175 = vmatprep.subr.mxu0 0.0
            %v5176 = vand.u32 %v478, 4294901760
            %v5177 = vsub.f32 %v478, %v5176
            %5178 = vmatpush1.msra.mxu0 %v5177
            %5179 = vmatprep.subr.mxu0 0.0
            %v5180 = vand.u32 %v479, 4294901760
            %v5181 = vsub.f32 %v479, %v5180
            %5182 = vmatpush1.msra.mxu0 %v5181
            %5183 = vmatprep.subr.mxu0 0.0
            %v5184 = vand.u32 %v480, 4294901760
            %v5185 = vsub.f32 %v480, %v5184
            %5186 = vmatpush1.msra.mxu0 %v5185
            %5187 = vmatprep.subr.mxu0 0.0
            %5188 = vmatpush1.msra.mxu0 0.0
            %5189 = vmatprep.subr.mxu0 0.0
            %5190 = vmatpush1.msra.mxu0 0.0
            %5191 = vmatprep.subr.mxu0 0.0
            %5192 = vmatpush1.msra.mxu0 0.0
            %5193 = vmatprep.subr.mxu0 0.0
            %5194 = vmatpush1.msra.mxu0 0.0
            %5195 = vmatprep.subr.mxu0 0.0
            %5196 = vmatpush1.msra.mxu0 0.0
            %5197 = vmatprep.subr.mxu0 0.0
            %5198 = vmatpush1.msra.mxu0 0.0
            %5199 = vmatprep.subr.mxu0 0.0
            %5200 = vmatpush1.msra.mxu0 0.0
            %5201 = vmatprep.subr.mxu0 0.0
            %5202 = vmatpush1.msra.mxu0 0.0
            %5203 = vmatprep.subr.mxu0 0.0
            %5204 = vmatpush1.msra.mxu0 0.0
            %5205 = vmatprep.subr.mxu0 0.0
            %5206 = vmatpush1.msra.mxu0 0.0
            %5207 = vmatprep.subr.mxu0 0.0
            %5208 = vmatpush1.msra.mxu0 0.0
            %5209 = vmatprep.subr.mxu0 0.0
            %5210 = vmatpush1.msra.mxu0 0.0
            %5211 = vmatprep.subr.mxu0 0.0
            %5212 = vmatpush1.msra.mxu0 0.0
            %5213 = vmatprep.subr.mxu0 0.0
            %5214 = vmatpush1.msra.mxu0 0.0
            %5215 = vmatprep.subr.mxu0 0.0
            %5216 = vmatpush1.msra.mxu0 0.0
            %5217 = vmatprep.subr.mxu0 0.0
            %5218 = vmatpush1.msra.mxu0 0.0
            %5219 = vmatprep.mubr.f32.mxu0 0.0
            %v5220 = vand.u32 %v4880, 4294901760
            %v5221 = vsub.f32 %v4880, %v5220
            %5222 = vmatmul.mubr.f32.gmra.mrb[0].mxu0 %v5221
            %v5223 = vpop.f32.mrb[0].mxu0
            %v5224 = vadd.f32 %v5120, %v5223
            %v5225 = vpop.f32.mrb[0].mxu0
            %5226 = vdwg.mxu0
            %5227 = vmatprep.subr.mxu0 0.0
            %v5228 = vand.u32 %v465, 4294901760
            %5229 = vmatpush1.msra.mxu0 %v5228
            %5230 = vmatprep.subr.mxu0 0.0
            %v5231 = vand.u32 %v466, 4294901760
            %5232 = vmatpush1.msra.mxu0 %v5231
            %5233 = vmatprep.subr.mxu0 0.0
            %v5234 = vand.u32 %v467, 4294901760
            %5235 = vmatpush1.msra.mxu0 %v5234
            %5236 = vmatprep.subr.mxu0 0.0
            %v5237 = vand.u32 %v468, 4294901760
            %5238 = vmatpush1.msra.mxu0 %v5237
            %5239 = vmatprep.subr.mxu0 0.0
            %v5240 = vand.u32 %v469, 4294901760
            %5241 = vmatpush1.msra.mxu0 %v5240
            %5242 = vmatprep.subr.mxu0 0.0
            %v5243 = vand.u32 %v470, 4294901760
            %5244 = vmatpush1.msra.mxu0 %v5243
            %5245 = vmatprep.subr.mxu0 0.0
            %v5246 = vand.u32 %v471, 4294901760
            %5247 = vmatpush1.msra.mxu0 %v5246
            %5248 = vmatprep.subr.mxu0 0.0
            %v5249 = vand.u32 %v472, 4294901760
            %5250 = vmatpush1.msra.mxu0 %v5249
            %5251 = vmatprep.subr.mxu0 0.0
            %v5252 = vand.u32 %v473, 4294901760
            %5253 = vmatpush1.msra.mxu0 %v5252
            %5254 = vmatprep.subr.mxu0 0.0
            %v5255 = vand.u32 %v474, 4294901760
            %5256 = vmatpush1.msra.mxu0 %v5255
            %5257 = vmatprep.subr.mxu0 0.0
            %v5258 = vand.u32 %v475, 4294901760
            %5259 = vmatpush1.msra.mxu0 %v5258
            %5260 = vmatprep.subr.mxu0 0.0
            %v5261 = vand.u32 %v476, 4294901760
            %5262 = vmatpush1.msra.mxu0 %v5261
            %5263 = vmatprep.subr.mxu0 0.0
            %v5264 = vand.u32 %v477, 4294901760
            %5265 = vmatpush1.msra.mxu0 %v5264
            %5266 = vmatprep.subr.mxu0 0.0
            %v5267 = vand.u32 %v478, 4294901760
            %5268 = vmatpush1.msra.mxu0 %v5267
            %5269 = vmatprep.subr.mxu0 0.0
            %v5270 = vand.u32 %v479, 4294901760
            %5271 = vmatpush1.msra.mxu0 %v5270
            %5272 = vmatprep.subr.mxu0 0.0
            %v5273 = vand.u32 %v480, 4294901760
            %5274 = vmatpush1.msra.mxu0 %v5273
            %5275 = vmatprep.subr.mxu0 0.0
            %5276 = vmatpush1.msra.mxu0 0.0
            %5277 = vmatprep.subr.mxu0 0.0
            %5278 = vmatpush1.msra.mxu0 0.0
            %5279 = vmatprep.subr.mxu0 0.0
            %5280 = vmatpush1.msra.mxu0 0.0
            %5281 = vmatprep.subr.mxu0 0.0
            %5282 = vmatpush1.msra.mxu0 0.0
            %5283 = vmatprep.subr.mxu0 0.0
            %5284 = vmatpush1.msra.mxu0 0.0
            %5285 = vmatprep.subr.mxu0 0.0
            %5286 = vmatpush1.msra.mxu0 0.0
            %5287 = vmatprep.subr.mxu0 0.0
            %5288 = vmatpush1.msra.mxu0 0.0
            %5289 = vmatprep.subr.mxu0 0.0
            %5290 = vmatpush1.msra.mxu0 0.0
            %5291 = vmatprep.subr.mxu0 0.0
            %5292 = vmatpush1.msra.mxu0 0.0
            %5293 = vmatprep.subr.mxu0 0.0
            %5294 = vmatpush1.msra.mxu0 0.0
            %5295 = vmatprep.subr.mxu0 0.0
            %5296 = vmatpush1.msra.mxu0 0.0
            %5297 = vmatprep.subr.mxu0 0.0
            %5298 = vmatpush1.msra.mxu0 0.0
            %5299 = vmatprep.subr.mxu0 0.0
            %5300 = vmatpush1.msra.mxu0 0.0
            %5301 = vmatprep.subr.mxu0 0.0
            %5302 = vmatpush1.msra.mxu0 0.0
            %5303 = vmatprep.subr.mxu0 0.0
            %5304 = vmatpush1.msra.mxu0 0.0
            %5305 = vmatprep.subr.mxu0 0.0
            %5306 = vmatpush1.msra.mxu0 0.0
            %5307 = vmatprep.mubr.f32.mxu0 0.0
            %v5308 = vand.u32 %v4880, 4294901760
            %v5309 = vsub.f32 %v4880, %v5308
            %v5310 = vand.u32 %v5309, 4294901760
            %5311 = vmatmul.mubr.f32.gmra.mrb[0].mxu0 %v5310
            %v5312 = vpop.f32.mrb[0].mxu0
            %v5313 = vadd.f32 %v5224, %v5312
            %v5314 = vpop.f32.mrb[0].mxu0
            %5315 = vdwg.mxu0
            %5316 = vmatprep.subr.mxu0 0.0
            %v5317 = vand.u32 %v465, 4294901760
            %v5318 = vsub.f32 %v465, %v5317
            %v5319 = vand.u32 %v5318, 4294901760
            %5320 = vmatpush1.msra.mxu0 %v5319
            %5321 = vmatprep.subr.mxu0 0.0
            %v5322 = vand.u32 %v466, 4294901760
            %v5323 = vsub.f32 %v466, %v5322
            %v5324 = vand.u32 %v5323, 4294901760
            %5325 = vmatpush1.msra.mxu0 %v5324
            %5326 = vmatprep.subr.mxu0 0.0
            %v5327 = vand.u32 %v467, 4294901760
            %v5328 = vsub.f32 %v467, %v5327
            %v5329 = vand.u32 %v5328, 4294901760
            %5330 = vmatpush1.msra.mxu0 %v5329
            %5331 = vmatprep.subr.mxu0 0.0
            %v5332 = vand.u32 %v468, 4294901760
            %v5333 = vsub.f32 %v468, %v5332
            %v5334 = vand.u32 %v5333, 4294901760
            %5335 = vmatpush1.msra.mxu0 %v5334
            %5336 = vmatprep.subr.mxu0 0.0
            %v5337 = vand.u32 %v469, 4294901760
            %v5338 = vsub.f32 %v469, %v5337
            %v5339 = vand.u32 %v5338, 4294901760
            %5340 = vmatpush1.msra.mxu0 %v5339
            %5341 = vmatprep.subr.mxu0 0.0
            %v5342 = vand.u32 %v470, 4294901760
            %v5343 = vsub.f32 %v470, %v5342
            %v5344 = vand.u32 %v5343, 4294901760
            %5345 = vmatpush1.msra.mxu0 %v5344
            %5346 = vmatprep.subr.mxu0 0.0
            %v5347 = vand.u32 %v471, 4294901760
            %v5348 = vsub.f32 %v471, %v5347
            %v5349 = vand.u32 %v5348, 4294901760
            %5350 = vmatpush1.msra.mxu0 %v5349
            %5351 = vmatprep.subr.mxu0 0.0
            %v5352 = vand.u32 %v472, 4294901760
            %v5353 = vsub.f32 %v472, %v5352
            %v5354 = vand.u32 %v5353, 4294901760
            %5355 = vmatpush1.msra.mxu0 %v5354
            %5356 = vmatprep.subr.mxu0 0.0
            %v5357 = vand.u32 %v473, 4294901760
            %v5358 = vsub.f32 %v473, %v5357
            %v5359 = vand.u32 %v5358, 4294901760
            %5360 = vmatpush1.msra.mxu0 %v5359
            %5361 = vmatprep.subr.mxu0 0.0
            %v5362 = vand.u32 %v474, 4294901760
            %v5363 = vsub.f32 %v474, %v5362
            %v5364 = vand.u32 %v5363, 4294901760
            %5365 = vmatpush1.msra.mxu0 %v5364
            %5366 = vmatprep.subr.mxu0 0.0
            %v5367 = vand.u32 %v475, 4294901760
            %v5368 = vsub.f32 %v475, %v5367
            %v5369 = vand.u32 %v5368, 4294901760
            %5370 = vmatpush1.msra.mxu0 %v5369
            %5371 = vmatprep.subr.mxu0 0.0
            %v5372 = vand.u32 %v476, 4294901760
            %v5373 = vsub.f32 %v476, %v5372
            %v5374 = vand.u32 %v5373, 4294901760
            %5375 = vmatpush1.msra.mxu0 %v5374
            %5376 = vmatprep.subr.mxu0 0.0
            %v5377 = vand.u32 %v477, 4294901760
            %v5378 = vsub.f32 %v477, %v5377
            %v5379 = vand.u32 %v5378, 4294901760
            %5380 = vmatpush1.msra.mxu0 %v5379
            %5381 = vmatprep.subr.mxu0 0.0
            %v5382 = vand.u32 %v478, 4294901760
            %v5383 = vsub.f32 %v478, %v5382
            %v5384 = vand.u32 %v5383, 4294901760
            %5385 = vmatpush1.msra.mxu0 %v5384
            %5386 = vmatprep.subr.mxu0 0.0
            %v5387 = vand.u32 %v479, 4294901760
            %v5388 = vsub.f32 %v479, %v5387
            %v5389 = vand.u32 %v5388, 4294901760
            %5390 = vmatpush1.msra.mxu0 %v5389
            %5391 = vmatprep.subr.mxu0 0.0
            %v5392 = vand.u32 %v480, 4294901760
            %v5393 = vsub.f32 %v480, %v5392
            %v5394 = vand.u32 %v5393, 4294901760
            %5395 = vmatpush1.msra.mxu0 %v5394
            %5396 = vmatprep.subr.mxu0 0.0
            %5397 = vmatpush1.msra.mxu0 0.0
            %5398 = vmatprep.subr.mxu0 0.0
            %5399 = vmatpush1.msra.mxu0 0.0
            %5400 = vmatprep.subr.mxu0 0.0
            %5401 = vmatpush1.msra.mxu0 0.0
            %5402 = vmatprep.subr.mxu0 0.0
            %5403 = vmatpush1.msra.mxu0 0.0
            %5404 = vmatprep.subr.mxu0 0.0
            %5405 = vmatpush1.msra.mxu0 0.0
            %5406 = vmatprep.subr.mxu0 0.0
            %5407 = vmatpush1.msra.mxu0 0.0
            %5408 = vmatprep.subr.mxu0 0.0
            %5409 = vmatpush1.msra.mxu0 0.0
            %5410 = vmatprep.subr.mxu0 0.0
            %5411 = vmatpush1.msra.mxu0 0.0
            %5412 = vmatprep.subr.mxu0 0.0
            %5413 = vmatpush1.msra.mxu0 0.0
            %5414 = vmatprep.subr.mxu0 0.0
            %5415 = vmatpush1.msra.mxu0 0.0
            %5416 = vmatprep.subr.mxu0 0.0
            %5417 = vmatpush1.msra.mxu0 0.0
            %5418 = vmatprep.subr.mxu0 0.0
            %5419 = vmatpush1.msra.mxu0 0.0
            %5420 = vmatprep.subr.mxu0 0.0
            %5421 = vmatpush1.msra.mxu0 0.0
            %5422 = vmatprep.subr.mxu0 0.0
            %5423 = vmatpush1.msra.mxu0 0.0
            %5424 = vmatprep.subr.mxu0 0.0
            %5425 = vmatpush1.msra.mxu0 0.0
            %5426 = vmatprep.subr.mxu0 0.0
            %5427 = vmatpush1.msra.mxu0 0.0
            %5428 = vmatprep.mubr.f32.mxu0 0.0
            %v5429 = vand.u32 %v4880, 4294901760
            %5430 = vmatmul.mubr.f32.gmra.mrb[0].mxu0 %v5429
            %v5431 = vpop.f32.mrb[0].mxu0
            %v5432 = vadd.f32 %v5313, %v5431
            %v5433 = vpop.f32.mrb[0].mxu0
            %5434 = vdwg.mxu0
            %5435 = vmatprep.subr.mxu0 0.0
            %v5436 = vand.u32 %v465, 4294901760
            %5437 = vmatpush1.msra.mxu0 %v5436
            %5438 = vmatprep.subr.mxu0 0.0
            %v5439 = vand.u32 %v466, 4294901760
            %5440 = vmatpush1.msra.mxu0 %v5439
            %5441 = vmatprep.subr.mxu0 0.0
            %v5442 = vand.u32 %v467, 4294901760
            %5443 = vmatpush1.msra.mxu0 %v5442
            %5444 = vmatprep.subr.mxu0 0.0
            %v5445 = vand.u32 %v468, 4294901760
            %5446 = vmatpush1.msra.mxu0 %v5445
            %5447 = vmatprep.subr.mxu0 0.0
            %v5448 = vand.u32 %v469, 4294901760
            %5449 = vmatpush1.msra.mxu0 %v5448
            %5450 = vmatprep.subr.mxu0 0.0
            %v5451 = vand.u32 %v470, 4294901760
            %5452 = vmatpush1.msra.mxu0 %v5451
            %5453 = vmatprep.subr.mxu0 0.0
            %v5454 = vand.u32 %v471, 4294901760
            %5455 = vmatpush1.msra.mxu0 %v5454
            %5456 = vmatprep.subr.mxu0 0.0
            %v5457 = vand.u32 %v472, 4294901760
            %5458 = vmatpush1.msra.mxu0 %v5457
            %5459 = vmatprep.subr.mxu0 0.0
            %v5460 = vand.u32 %v473, 4294901760
            %5461 = vmatpush1.msra.mxu0 %v5460
            %5462 = vmatprep.subr.mxu0 0.0
            %v5463 = vand.u32 %v474, 4294901760
            %5464 = vmatpush1.msra.mxu0 %v5463
            %5465 = vmatprep.subr.mxu0 0.0
            %v5466 = vand.u32 %v475, 4294901760
            %5467 = vmatpush1.msra.mxu0 %v5466
            %5468 = vmatprep.subr.mxu0 0.0
            %v5469 = vand.u32 %v476, 4294901760
            %5470 = vmatpush1.msra.mxu0 %v5469
            %5471 = vmatprep.subr.mxu0 0.0
            %v5472 = vand.u32 %v477, 4294901760
            %5473 = vmatpush1.msra.mxu0 %v5472
            %5474 = vmatprep.subr.mxu0 0.0
            %v5475 = vand.u32 %v478, 4294901760
            %5476 = vmatpush1.msra.mxu0 %v5475
            %5477 = vmatprep.subr.mxu0 0.0
            %v5478 = vand.u32 %v479, 4294901760
            %5479 = vmatpush1.msra.mxu0 %v5478
            %5480 = vmatprep.subr.mxu0 0.0
            %v5481 = vand.u32 %v480, 4294901760
            %5482 = vmatpush1.msra.mxu0 %v5481
            %5483 = vmatprep.subr.mxu0 0.0
            %5484 = vmatpush1.msra.mxu0 0.0
            %5485 = vmatprep.subr.mxu0 0.0
            %5486 = vmatpush1.msra.mxu0 0.0
            %5487 = vmatprep.subr.mxu0 0.0
            %5488 = vmatpush1.msra.mxu0 0.0
            %5489 = vmatprep.subr.mxu0 0.0
            %5490 = vmatpush1.msra.mxu0 0.0
            %5491 = vmatprep.subr.mxu0 0.0
            %5492 = vmatpush1.msra.mxu0 0.0
            %5493 = vmatprep.subr.mxu0 0.0
            %5494 = vmatpush1.msra.mxu0 0.0
            %5495 = vmatprep.subr.mxu0 0.0
            %5496 = vmatpush1.msra.mxu0 0.0
            %5497 = vmatprep.subr.mxu0 0.0
            %5498 = vmatpush1.msra.mxu0 0.0
            %5499 = vmatprep.subr.mxu0 0.0
            %5500 = vmatpush1.msra.mxu0 0.0
            %5501 = vmatprep.subr.mxu0 0.0
            %5502 = vmatpush1.msra.mxu0 0.0
            %5503 = vmatprep.subr.mxu0 0.0
            %5504 = vmatpush1.msra.mxu0 0.0
            %5505 = vmatprep.subr.mxu0 0.0
            %5506 = vmatpush1.msra.mxu0 0.0
            %5507 = vmatprep.subr.mxu0 0.0
            %5508 = vmatpush1.msra.mxu0 0.0
            %5509 = vmatprep.subr.mxu0 0.0
            %5510 = vmatpush1.msra.mxu0 0.0
            %5511 = vmatprep.subr.mxu0 0.0
            %5512 = vmatpush1.msra.mxu0 0.0
            %5513 = vmatprep.subr.mxu0 0.0
            %5514 = vmatpush1.msra.mxu0 0.0
            %5515 = vmatprep.mubr.f32.mxu0 0.0
            %v5516 = vand.u32 %v4880, 4294901760
            %5517 = vmatmul.mubr.f32.gmra.mrb[0].mxu0 %v5516
            %v5518 = vpop.f32.mrb[0].mxu0
            %v5519 = vadd.f32 %v5432, %v5518
            %v5520 = vpop.f32.mrb[0].mxu0
            %5521 = vdwg.mxu0
            %v5522 = vtanh.pop %v5519
            %5523 = vmatprep.subr.mxu0 0.0
            %v5524 = vand.u32 %v481, 4294901760
            %5525 = vmatpush1.msra.mxu0 %v5524
            %5526 = vmatprep.subr.mxu0 0.0
            %v5527 = vand.u32 %v482, 4294901760
            %5528 = vmatpush1.msra.mxu0 %v5527
            %5529 = vmatprep.subr.mxu0 0.0
            %v5530 = vand.u32 %v483, 4294901760
            %5531 = vmatpush1.msra.mxu0 %v5530
            %5532 = vmatprep.subr.mxu0 0.0
            %v5533 = vand.u32 %v484, 4294901760
            %5534 = vmatpush1.msra.mxu0 %v5533
            %5535 = vmatprep.subr.mxu0 0.0
            %v5536 = vand.u32 %v485, 4294901760
            %5537 = vmatpush1.msra.mxu0 %v5536
            %5538 = vmatprep.subr.mxu0 0.0
            %v5539 = vand.u32 %v486, 4294901760
            %5540 = vmatpush1.msra.mxu0 %v5539
            %5541 = vmatprep.subr.mxu0 0.0
            %v5542 = vand.u32 %v487, 4294901760
            %5543 = vmatpush1.msra.mxu0 %v5542
            %5544 = vmatprep.subr.mxu0 0.0
            %v5545 = vand.u32 %v488, 4294901760
            %5546 = vmatpush1.msra.mxu0 %v5545
            %5547 = vmatprep.subr.mxu0 0.0
            %v5548 = vand.u32 %v489, 4294901760
            %5549 = vmatpush1.msra.mxu0 %v5548
            %5550 = vmatprep.subr.mxu0 0.0
            %v5551 = vand.u32 %v490, 4294901760
            %5552 = vmatpush1.msra.mxu0 %v5551
            %5553 = vmatprep.subr.mxu0 0.0
            %v5554 = vand.u32 %v491, 4294901760
            %5555 = vmatpush1.msra.mxu0 %v5554
            %5556 = vmatprep.subr.mxu0 0.0
            %v5557 = vand.u32 %v492, 4294901760
            %5558 = vmatpush1.msra.mxu0 %v5557
            %5559 = vmatprep.subr.mxu0 0.0
            %v5560 = vand.u32 %v493, 4294901760
            %5561 = vmatpush1.msra.mxu0 %v5560
            %5562 = vmatprep.subr.mxu0 0.0
            %v5563 = vand.u32 %v494, 4294901760
            %5564 = vmatpush1.msra.mxu0 %v5563
            %5565 = vmatprep.subr.mxu0 0.0
            %v5566 = vand.u32 %v495, 4294901760
            %5567 = vmatpush1.msra.mxu0 %v5566
            %5568 = vmatprep.subr.mxu0 0.0
            %v5569 = vand.u32 %v496, 4294901760
            %5570 = vmatpush1.msra.mxu0 %v5569
            %5571 = vmatprep.subr.mxu0 0.0
            %5572 = vmatpush1.msra.mxu0 0.0
            %5573 = vmatprep.subr.mxu0 0.0
            %5574 = vmatpush1.msra.mxu0 0.0
            %5575 = vmatprep.subr.mxu0 0.0
            %5576 = vmatpush1.msra.mxu0 0.0
            %5577 = vmatprep.subr.mxu0 0.0
            %5578 = vmatpush1.msra.mxu0 0.0
            %5579 = vmatprep.subr.mxu0 0.0
            %5580 = vmatpush1.msra.mxu0 0.0
            %5581 = vmatprep.subr.mxu0 0.0
            %5582 = vmatpush1.msra.mxu0 0.0
            %5583 = vmatprep.subr.mxu0 0.0
            %5584 = vmatpush1.msra.mxu0 0.0
            %5585 = vmatprep.subr.mxu0 0.0
            %5586 = vmatpush1.msra.mxu0 0.0
            %5587 = vmatprep.subr.mxu0 0.0
            %5588 = vmatpush1.msra.mxu0 0.0
            %5589 = vmatprep.subr.mxu0 0.0
            %5590 = vmatpush1.msra.mxu0 0.0
            %5591 = vmatprep.subr.mxu0 0.0
            %5592 = vmatpush1.msra.mxu0 0.0
            %5593 = vmatprep.subr.mxu0 0.0
            %5594 = vmatpush1.msra.mxu0 0.0
            %5595 = vmatprep.subr.mxu0 0.0
            %5596 = vmatpush1.msra.mxu0 0.0
            %5597 = vmatprep.subr.mxu0 0.0
            %5598 = vmatpush1.msra.mxu0 0.0
            %5599 = vmatprep.subr.mxu0 0.0
            %5600 = vmatpush1.msra.mxu0 0.0
            %5601 = vmatprep.subr.mxu0 0.0
            %5602 = vmatpush1.msra.mxu0 0.0
            %5603 = vmatprep.mubr.f32.mxu0 0.0
            %v5604 = vand.u32 %v5522, 4294901760
            %v5605 = vsub.f32 %v5522, %v5604
            %v5606 = vand.u32 %v5605, 4294901760
            %v5607 = vsub.f32 %v5605, %v5606
            %v5608 = vand.u32 %v5607, 4294901760
            %5609 = vmatmul.mubr.f32.gmra.mrb[0].mxu0 %v5608
            %v5610 = vpop.f32.mrb[0].mxu0
            %v5611 = vadd.f32 %v2947, %v5610
            %v5612 = vpop.f32.mrb[0].mxu0
            %5613 = vdwg.mxu0
            %5614 = vmatprep.subr.mxu0 0.0
            %v5615 = vand.u32 %v481, 4294901760
            %v5616 = vsub.f32 %v481, %v5615
            %v5617 = vand.u32 %v5616, 4294901760
            %v5618 = vsub.f32 %v5616, %v5617
            %v5619 = vand.u32 %v5618, 4294901760
            %5620 = vmatpush1.msra.mxu0 %v5619
            %5621 = vmatprep.subr.mxu0 0.0
            %v5622 = vand.u32 %v482, 4294901760
            %v5623 = vsub.f32 %v482, %v5622
            %v5624 = vand.u32 %v5623, 4294901760
            %v5625 = vsub.f32 %v5623, %v5624
            %v5626 = vand.u32 %v5625, 4294901760
            %5627 = vmatpush1.msra.mxu0 %v5626
            %5628 = vmatprep.subr.mxu0 0.0
            %v5629 = vand.u32 %v483, 4294901760
            %v5630 = vsub.f32 %v483, %v5629
            %v5631 = vand.u32 %v5630, 4294901760
            %v5632 = vsub.f32 %v5630, %v5631
            %v5633 = vand.u32 %v5632, 4294901760
            %5634 = vmatpush1.msra.mxu0 %v5633
            %5635 = vmatprep.subr.mxu0 0.0
            %v5636 = vand.u32 %v484, 4294901760
            %v5637 = vsub.f32 %v484, %v5636
            %v5638 = vand.u32 %v5637, 4294901760
            %v5639 = vsub.f32 %v5637, %v5638
            %v5640 = vand.u32 %v5639, 4294901760
            %5641 = vmatpush1.msra.mxu0 %v5640
            %5642 = vmatprep.subr.mxu0 0.0
            %v5643 = vand.u32 %v485, 4294901760
            %v5644 = vsub.f32 %v485, %v5643
            %v5645 = vand.u32 %v5644, 4294901760
            %v5646 = vsub.f32 %v5644, %v5645
            %v5647 = vand.u32 %v5646, 4294901760
            %5648 = vmatpush1.msra.mxu0 %v5647
            %5649 = vmatprep.subr.mxu0 0.0
            %v5650 = vand.u32 %v486, 4294901760
            %v5651 = vsub.f32 %v486, %v5650
            %v5652 = vand.u32 %v5651, 4294901760
            %v5653 = vsub.f32 %v5651, %v5652
            %v5654 = vand.u32 %v5653, 4294901760
            %5655 = vmatpush1.msra.mxu0 %v5654
            %5656 = vmatprep.subr.mxu0 0.0
            %v5657 = vand.u32 %v487, 4294901760
            %v5658 = vsub.f32 %v487, %v5657
            %v5659 = vand.u32 %v5658, 4294901760
            %v5660 = vsub.f32 %v5658, %v5659
            %v5661 = vand.u32 %v5660, 4294901760
            %5662 = vmatpush1.msra.mxu0 %v5661
            %5663 = vmatprep.subr.mxu0 0.0
            %v5664 = vand.u32 %v488, 4294901760
            %v5665 = vsub.f32 %v488, %v5664
            %v5666 = vand.u32 %v5665, 4294901760
            %v5667 = vsub.f32 %v5665, %v5666
            %v5668 = vand.u32 %v5667, 4294901760
            %5669 = vmatpush1.msra.mxu0 %v5668
            %5670 = vmatprep.subr.mxu0 0.0
            %v5671 = vand.u32 %v489, 4294901760
            %v5672 = vsub.f32 %v489, %v5671
            %v5673 = vand.u32 %v5672, 4294901760
            %v5674 = vsub.f32 %v5672, %v5673
            %v5675 = vand.u32 %v5674, 4294901760
            %5676 = vmatpush1.msra.mxu0 %v5675
            %5677 = vmatprep.subr.mxu0 0.0
            %v5678 = vand.u32 %v490, 4294901760
            %v5679 = vsub.f32 %v490, %v5678
            %v5680 = vand.u32 %v5679, 4294901760
            %v5681 = vsub.f32 %v5679, %v5680
            %v5682 = vand.u32 %v5681, 4294901760
            %5683 = vmatpush1.msra.mxu0 %v5682
            %5684 = vmatprep.subr.mxu0 0.0
            %v5685 = vand.u32 %v491, 4294901760
            %v5686 = vsub.f32 %v491, %v5685
            %v5687 = vand.u32 %v5686, 4294901760
            %v5688 = vsub.f32 %v5686, %v5687
            %v5689 = vand.u32 %v5688, 4294901760
            %5690 = vmatpush1.msra.mxu0 %v5689
            %5691 = vmatprep.subr.mxu0 0.0
            %v5692 = vand.u32 %v492, 4294901760
            %v5693 = vsub.f32 %v492, %v5692
            %v5694 = vand.u32 %v5693, 4294901760
            %v5695 = vsub.f32 %v5693, %v5694
            %v5696 = vand.u32 %v5695, 4294901760
            %5697 = vmatpush1.msra.mxu0 %v5696
            %5698 = vmatprep.subr.mxu0 0.0
            %v5699 = vand.u32 %v493, 4294901760
            %v5700 = vsub.f32 %v493, %v5699
            %v5701 = vand.u32 %v5700, 4294901760
            %v5702 = vsub.f32 %v5700, %v5701
            %v5703 = vand.u32 %v5702, 4294901760
            %5704 = vmatpush1.msra.mxu0 %v5703
            %5705 = vmatprep.subr.mxu0 0.0
            %v5706 = vand.u32 %v494, 4294901760
            %v5707 = vsub.f32 %v494, %v5706
            %v5708 = vand.u32 %v5707, 4294901760
            %v5709 = vsub.f32 %v5707, %v5708
            %v5710 = vand.u32 %v5709, 4294901760
            %5711 = vmatpush1.msra.mxu0 %v5710
            %5712 = vmatprep.subr.mxu0 0.0
            %v5713 = vand.u32 %v495, 4294901760
            %v5714 = vsub.f32 %v495, %v5713
            %v5715 = vand.u32 %v5714, 4294901760
            %v5716 = vsub.f32 %v5714, %v5715
            %v5717 = vand.u32 %v5716, 4294901760
            %5718 = vmatpush1.msra.mxu0 %v5717
            %5719 = vmatprep.subr.mxu0 0.0
            %v5720 = vand.u32 %v496, 4294901760
            %v5721 = vsub.f32 %v496, %v5720
            %v5722 = vand.u32 %v5721, 4294901760
            %v5723 = vsub.f32 %v5721, %v5722
            %v5724 = vand.u32 %v5723, 4294901760
            %5725 = vmatpush1.msra.mxu0 %v5724
            %5726 = vmatprep.subr.mxu0 0.0
            %5727 = vmatpush1.msra.mxu0 0.0
            %5728 = vmatprep.subr.mxu0 0.0
            %5729 = vmatpush1.msra.mxu0 0.0
            %5730 = vmatprep.subr.mxu0 0.0
            %5731 = vmatpush1.msra.mxu0 0.0
            %5732 = vmatprep.subr.mxu0 0.0
            %5733 = vmatpush1.msra.mxu0 0.0
            %5734 = vmatprep.subr.mxu0 0.0
            %5735 = vmatpush1.msra.mxu0 0.0
            %5736 = vmatprep.subr.mxu0 0.0
            %5737 = vmatpush1.msra.mxu0 0.0
            %5738 = vmatprep.subr.mxu0 0.0
            %5739 = vmatpush1.msra.mxu0 0.0
            %5740 = vmatprep.subr.mxu0 0.0
            %5741 = vmatpush1.msra.mxu0 0.0
            %5742 = vmatprep.subr.mxu0 0.0
            %5743 = vmatpush1.msra.mxu0 0.0
            %5744 = vmatprep.subr.mxu0 0.0
            %5745 = vmatpush1.msra.mxu0 0.0
            %5746 = vmatprep.subr.mxu0 0.0
            %5747 = vmatpush1.msra.mxu0 0.0
            %5748 = vmatprep.subr.mxu0 0.0
            %5749 = vmatpush1.msra.mxu0 0.0
            %5750 = vmatprep.subr.mxu0 0.0
            %5751 = vmatpush1.msra.mxu0 0.0
            %5752 = vmatprep.subr.mxu0 0.0
            %5753 = vmatpush1.msra.mxu0 0.0
            %5754 = vmatprep.subr.mxu0 0.0
            %5755 = vmatpush1.msra.mxu0 0.0
            %5756 = vmatprep.subr.mxu0 0.0
            %5757 = vmatpush1.msra.mxu0 0.0
            %5758 = vmatprep.mubr.f32.mxu0 0.0
            %v5759 = vand.u32 %v5522, 4294901760
            %5760 = vmatmul.mubr.f32.gmra.mrb[0].mxu0 %v5759
            %v5761 = vpop.f32.mrb[0].mxu0
            %v5762 = vadd.f32 %v5611, %v5761
            %v5763 = vpop.f32.mrb[0].mxu0
            %5764 = vdwg.mxu0
            %5765 = vmatprep.subr.mxu0 0.0
            %v5766 = vand.u32 %v481, 4294901760
            %v5767 = vsub.f32 %v481, %v5766
            %5768 = vmatpush1.msra.mxu0 %v5767
            %5769 = vmatprep.subr.mxu0 0.0
            %v5770 = vand.u32 %v482, 4294901760
            %v5771 = vsub.f32 %v482, %v5770
            %5772 = vmatpush1.msra.mxu0 %v5771
            %5773 = vmatprep.subr.mxu0 0.0
            %v5774 = vand.u32 %v483, 4294901760
            %v5775 = vsub.f32 %v483, %v5774
            %5776 = vmatpush1.msra.mxu0 %v5775
            %5777 = vmatprep.subr.mxu0 0.0
            %v5778 = vand.u32 %v484, 4294901760
            %v5779 = vsub.f32 %v484, %v5778
            %5780 = vmatpush1.msra.mxu0 %v5779
            %5781 = vmatprep.subr.mxu0 0.0
            %v5782 = vand.u32 %v485, 4294901760
            %v5783 = vsub.f32 %v485, %v5782
            %5784 = vmatpush1.msra.mxu0 %v5783
            %5785 = vmatprep.subr.mxu0 0.0
            %v5786 = vand.u32 %v486, 4294901760
            %v5787 = vsub.f32 %v486, %v5786
            %5788 = vmatpush1.msra.mxu0 %v5787
            %5789 = vmatprep.subr.mxu0 0.0
            %v5790 = vand.u32 %v487, 4294901760
            %v5791 = vsub.f32 %v487, %v5790
            %5792 = vmatpush1.msra.mxu0 %v5791
            %5793 = vmatprep.subr.mxu0 0.0
            %v5794 = vand.u32 %v488, 4294901760
            %v5795 = vsub.f32 %v488, %v5794
            %5796 = vmatpush1.msra.mxu0 %v5795
            %5797 = vmatprep.subr.mxu0 0.0
            %v5798 = vand.u32 %v489, 4294901760
            %v5799 = vsub.f32 %v489, %v5798
            %5800 = vmatpush1.msra.mxu0 %v5799
            %5801 = vmatprep.subr.mxu0 0.0
            %v5802 = vand.u32 %v490, 4294901760
            %v5803 = vsub.f32 %v490, %v5802
            %5804 = vmatpush1.msra.mxu0 %v5803
            %5805 = vmatprep.subr.mxu0 0.0
            %v5806 = vand.u32 %v491, 4294901760
            %v5807 = vsub.f32 %v491, %v5806
            %5808 = vmatpush1.msra.mxu0 %v5807
            %5809 = vmatprep.subr.mxu0 0.0
            %v5810 = vand.u32 %v492, 4294901760
            %v5811 = vsub.f32 %v492, %v5810
            %5812 = vmatpush1.msra.mxu0 %v5811
            %5813 = vmatprep.subr.mxu0 0.0
            %v5814 = vand.u32 %v493, 4294901760
            %v5815 = vsub.f32 %v493, %v5814
            %5816 = vmatpush1.msra.mxu0 %v5815
            %5817 = vmatprep.subr.mxu0 0.0
            %v5818 = vand.u32 %v494, 4294901760
            %v5819 = vsub.f32 %v494, %v5818
            %5820 = vmatpush1.msra.mxu0 %v5819
            %5821 = vmatprep.subr.mxu0 0.0
            %v5822 = vand.u32 %v495, 4294901760
            %v5823 = vsub.f32 %v495, %v5822
            %5824 = vmatpush1.msra.mxu0 %v5823
            %5825 = vmatprep.subr.mxu0 0.0
            %v5826 = vand.u32 %v496, 4294901760
            %v5827 = vsub.f32 %v496, %v5826
            %5828 = vmatpush1.msra.mxu0 %v5827
            %5829 = vmatprep.subr.mxu0 0.0
            %5830 = vmatpush1.msra.mxu0 0.0
            %5831 = vmatprep.subr.mxu0 0.0
            %5832 = vmatpush1.msra.mxu0 0.0
            %5833 = vmatprep.subr.mxu0 0.0
            %5834 = vmatpush1.msra.mxu0 0.0
            %5835 = vmatprep.subr.mxu0 0.0
            %5836 = vmatpush1.msra.mxu0 0.0
            %5837 = vmatprep.subr.mxu0 0.0
            %5838 = vmatpush1.msra.mxu0 0.0
            %5839 = vmatprep.subr.mxu0 0.0
            %5840 = vmatpush1.msra.mxu0 0.0
            %5841 = vmatprep.subr.mxu0 0.0
            %5842 = vmatpush1.msra.mxu0 0.0
            %5843 = vmatprep.subr.mxu0 0.0
            %5844 = vmatpush1.msra.mxu0 0.0
            %5845 = vmatprep.subr.mxu0 0.0
            %5846 = vmatpush1.msra.mxu0 0.0
            %5847 = vmatprep.subr.mxu0 0.0
            %5848 = vmatpush1.msra.mxu0 0.0
            %5849 = vmatprep.subr.mxu0 0.0
            %5850 = vmatpush1.msra.mxu0 0.0
            %5851 = vmatprep.subr.mxu0 0.0
            %5852 = vmatpush1.msra.mxu0 0.0
            %5853 = vmatprep.subr.mxu0 0.0
            %5854 = vmatpush1.msra.mxu0 0.0
            %5855 = vmatprep.subr.mxu0 0.0
            %5856 = vmatpush1.msra.mxu0 0.0
            %5857 = vmatprep.subr.mxu0 0.0
            %5858 = vmatpush1.msra.mxu0 0.0
            %5859 = vmatprep.subr.mxu0 0.0
            %5860 = vmatpush1.msra.mxu0 0.0
            %5861 = vmatprep.mubr.f32.mxu0 0.0
            %v5862 = vand.u32 %v5522, 4294901760
            %v5863 = vsub.f32 %v5522, %v5862
            %5864 = vmatmul.mubr.f32.gmra.mrb[0].mxu0 %v5863
            %v5865 = vpop.f32.mrb[0].mxu0
            %v5866 = vadd.f32 %v5762, %v5865
            %v5867 = vpop.f32.mrb[0].mxu0
            %5868 = vdwg.mxu0
            %5869 = vmatprep.subr.mxu0 0.0
            %v5870 = vand.u32 %v481, 4294901760
            %5871 = vmatpush1.msra.mxu0 %v5870
            %5872 = vmatprep.subr.mxu0 0.0
            %v5873 = vand.u32 %v482, 4294901760
            %5874 = vmatpush1.msra.mxu0 %v5873
            %5875 = vmatprep.subr.mxu0 0.0
            %v5876 = vand.u32 %v483, 4294901760
            %5877 = vmatpush1.msra.mxu0 %v5876
            %5878 = vmatprep.subr.mxu0 0.0
            %v5879 = vand.u32 %v484, 4294901760
            %5880 = vmatpush1.msra.mxu0 %v5879
            %5881 = vmatprep.subr.mxu0 0.0
            %v5882 = vand.u32 %v485, 4294901760
            %5883 = vmatpush1.msra.mxu0 %v5882
            %5884 = vmatprep.subr.mxu0 0.0
            %v5885 = vand.u32 %v486, 4294901760
            %5886 = vmatpush1.msra.mxu0 %v5885
            %5887 = vmatprep.subr.mxu0 0.0
            %v5888 = vand.u32 %v487, 4294901760
            %5889 = vmatpush1.msra.mxu0 %v5888
            %5890 = vmatprep.subr.mxu0 0.0
            %v5891 = vand.u32 %v488, 4294901760
            %5892 = vmatpush1.msra.mxu0 %v5891
            %5893 = vmatprep.subr.mxu0 0.0
            %v5894 = vand.u32 %v489, 4294901760
            %5895 = vmatpush1.msra.mxu0 %v5894
            %5896 = vmatprep.subr.mxu0 0.0
            %v5897 = vand.u32 %v490, 4294901760
            %5898 = vmatpush1.msra.mxu0 %v5897
            %5899 = vmatprep.subr.mxu0 0.0
            %v5900 = vand.u32 %v491, 4294901760
            %5901 = vmatpush1.msra.mxu0 %v5900
            %5902 = vmatprep.subr.mxu0 0.0
            %v5903 = vand.u32 %v492, 4294901760
            %5904 = vmatpush1.msra.mxu0 %v5903
            %5905 = vmatprep.subr.mxu0 0.0
            %v5906 = vand.u32 %v493, 4294901760
            %5907 = vmatpush1.msra.mxu0 %v5906
            %5908 = vmatprep.subr.mxu0 0.0
            %v5909 = vand.u32 %v494, 4294901760
            %5910 = vmatpush1.msra.mxu0 %v5909
            %5911 = vmatprep.subr.mxu0 0.0
            %v5912 = vand.u32 %v495, 4294901760
            %5913 = vmatpush1.msra.mxu0 %v5912
            %5914 = vmatprep.subr.mxu0 0.0
            %v5915 = vand.u32 %v496, 4294901760
            %5916 = vmatpush1.msra.mxu0 %v5915
            %5917 = vmatprep.subr.mxu0 0.0
            %5918 = vmatpush1.msra.mxu0 0.0
            %5919 = vmatprep.subr.mxu0 0.0
            %5920 = vmatpush1.msra.mxu0 0.0
            %5921 = vmatprep.subr.mxu0 0.0
            %5922 = vmatpush1.msra.mxu0 0.0
            %5923 = vmatprep.subr.mxu0 0.0
            %5924 = vmatpush1.msra.mxu0 0.0
            %5925 = vmatprep.subr.mxu0 0.0
            %5926 = vmatpush1.msra.mxu0 0.0
            %5927 = vmatprep.subr.mxu0 0.0
            %5928 = vmatpush1.msra.mxu0 0.0
            %5929 = vmatprep.subr.mxu0 0.0
            %5930 = vmatpush1.msra.mxu0 0.0
            %5931 = vmatprep.subr.mxu0 0.0
            %5932 = vmatpush1.msra.mxu0 0.0
            %5933 = vmatprep.subr.mxu0 0.0
            %5934 = vmatpush1.msra.mxu0 0.0
            %5935 = vmatprep.subr.mxu0 0.0
            %5936 = vmatpush1.msra.mxu0 0.0
            %5937 = vmatprep.subr.mxu0 0.0
            %5938 = vmatpush1.msra.mxu0 0.0
            %5939 = vmatprep.subr.mxu0 0.0
            %5940 = vmatpush1.msra.mxu0 0.0
            %5941 = vmatprep.subr.mxu0 0.0
            %5942 = vmatpush1.msra.mxu0 0.0
            %5943 = vmatprep.subr.mxu0 0.0
            %5944 = vmatpush1.msra.mxu0 0.0
            %5945 = vmatprep.subr.mxu0 0.0
            %5946 = vmatpush1.msra.mxu0 0.0
            %5947 = vmatprep.subr.mxu0 0.0
            %5948 = vmatpush1.msra.mxu0 0.0
            %5949 = vmatprep.mubr.f32.mxu0 0.0
            %v5950 = vand.u32 %v5522, 4294901760
            %v5951 = vsub.f32 %v5522, %v5950
            %v5952 = vand.u32 %v5951, 4294901760
            %5953 = vmatmul.mubr.f32.gmra.mrb[0].mxu0 %v5952
            %v5954 = vpop.f32.mrb[0].mxu0
            %v5955 = vadd.f32 %v5866, %v5954
            %v5956 = vpop.f32.mrb[0].mxu0
            %5957 = vdwg.mxu0
            %5958 = vmatprep.subr.mxu0 0.0
            %v5959 = vand.u32 %v481, 4294901760
            %v5960 = vsub.f32 %v481, %v5959
            %v5961 = vand.u32 %v5960, 4294901760
            %5962 = vmatpush1.msra.mxu0 %v5961
            %5963 = vmatprep.subr.mxu0 0.0
            %v5964 = vand.u32 %v482, 4294901760
            %v5965 = vsub.f32 %v482, %v5964
            %v5966 = vand.u32 %v5965, 4294901760
            %5967 = vmatpush1.msra.mxu0 %v5966
            %5968 = vmatprep.subr.mxu0 0.0
            %v5969 = vand.u32 %v483, 4294901760
            %v5970 = vsub.f32 %v483, %v5969
            %v5971 = vand.u32 %v5970, 4294901760
            %5972 = vmatpush1.msra.mxu0 %v5971
            %5973 = vmatprep.subr.mxu0 0.0
            %v5974 = vand.u32 %v484, 4294901760
            %v5975 = vsub.f32 %v484, %v5974
            %v5976 = vand.u32 %v5975, 4294901760
            %5977 = vmatpush1.msra.mxu0 %v5976
            %5978 = vmatprep.subr.mxu0 0.0
            %v5979 = vand.u32 %v485, 4294901760
            %v5980 = vsub.f32 %v485, %v5979
            %v5981 = vand.u32 %v5980, 4294901760
            %5982 = vmatpush1.msra.mxu0 %v5981
            %5983 = vmatprep.subr.mxu0 0.0
            %v5984 = vand.u32 %v486, 4294901760
            %v5985 = vsub.f32 %v486, %v5984
            %v5986 = vand.u32 %v5985, 4294901760
            %5987 = vmatpush1.msra.mxu0 %v5986
            %5988 = vmatprep.subr.mxu0 0.0
            %v5989 = vand.u32 %v487, 4294901760
            %v5990 = vsub.f32 %v487, %v5989
            %v5991 = vand.u32 %v5990, 4294901760
            %5992 = vmatpush1.msra.mxu0 %v5991
            %5993 = vmatprep.subr.mxu0 0.0
            %v5994 = vand.u32 %v488, 4294901760
            %v5995 = vsub.f32 %v488, %v5994
            %v5996 = vand.u32 %v5995, 4294901760
            %5997 = vmatpush1.msra.mxu0 %v5996
            %5998 = vmatprep.subr.mxu0 0.0
            %v5999 = vand.u32 %v489, 4294901760
            %v6000 = vsub.f32 %v489, %v5999
            %v6001 = vand.u32 %v6000, 4294901760
            %6002 = vmatpush1.msra.mxu0 %v6001
            %6003 = vmatprep.subr.mxu0 0.0
            %v6004 = vand.u32 %v490, 4294901760
            %v6005 = vsub.f32 %v490, %v6004
            %v6006 = vand.u32 %v6005, 4294901760
            %6007 = vmatpush1.msra.mxu0 %v6006
            %6008 = vmatprep.subr.mxu0 0.0
            %v6009 = vand.u32 %v491, 4294901760
            %v6010 = vsub.f32 %v491, %v6009
            %v6011 = vand.u32 %v6010, 4294901760
            %6012 = vmatpush1.msra.mxu0 %v6011
            %6013 = vmatprep.subr.mxu0 0.0
            %v6014 = vand.u32 %v492, 4294901760
            %v6015 = vsub.f32 %v492, %v6014
            %v6016 = vand.u32 %v6015, 4294901760
            %6017 = vmatpush1.msra.mxu0 %v6016
            %6018 = vmatprep.subr.mxu0 0.0
            %v6019 = vand.u32 %v493, 4294901760
            %v6020 = vsub.f32 %v493, %v6019
            %v6021 = vand.u32 %v6020, 4294901760
            %6022 = vmatpush1.msra.mxu0 %v6021
            %6023 = vmatprep.subr.mxu0 0.0
            %v6024 = vand.u32 %v494, 4294901760
            %v6025 = vsub.f32 %v494, %v6024
            %v6026 = vand.u32 %v6025, 4294901760
            %6027 = vmatpush1.msra.mxu0 %v6026
            %6028 = vmatprep.subr.mxu0 0.0
            %v6029 = vand.u32 %v495, 4294901760
            %v6030 = vsub.f32 %v495, %v6029
            %v6031 = vand.u32 %v6030, 4294901760
            %6032 = vmatpush1.msra.mxu0 %v6031
            %6033 = vmatprep.subr.mxu0 0.0
            %v6034 = vand.u32 %v496, 4294901760
            %v6035 = vsub.f32 %v496, %v6034
            %v6036 = vand.u32 %v6035, 4294901760
            %6037 = vmatpush1.msra.mxu0 %v6036
            %6038 = vmatprep.subr.mxu0 0.0
            %6039 = vmatpush1.msra.mxu0 0.0
            %6040 = vmatprep.subr.mxu0 0.0
            %6041 = vmatpush1.msra.mxu0 0.0
            %6042 = vmatprep.subr.mxu0 0.0
            %6043 = vmatpush1.msra.mxu0 0.0
            %6044 = vmatprep.subr.mxu0 0.0
            %6045 = vmatpush1.msra.mxu0 0.0
            %6046 = vmatprep.subr.mxu0 0.0
            %6047 = vmatpush1.msra.mxu0 0.0
            %6048 = vmatprep.subr.mxu0 0.0
            %6049 = vmatpush1.msra.mxu0 0.0
            %6050 = vmatprep.subr.mxu0 0.0
            %6051 = vmatpush1.msra.mxu0 0.0
            %6052 = vmatprep.subr.mxu0 0.0
            %6053 = vmatpush1.msra.mxu0 0.0
            %6054 = vmatprep.subr.mxu0 0.0
            %6055 = vmatpush1.msra.mxu0 0.0
            %6056 = vmatprep.subr.mxu0 0.0
            %6057 = vmatpush1.msra.mxu0 0.0
            %6058 = vmatprep.subr.mxu0 0.0
            %6059 = vmatpush1.msra.mxu0 0.0
            %6060 = vmatprep.subr.mxu0 0.0
            %6061 = vmatpush1.msra.mxu0 0.0
            %6062 = vmatprep.subr.mxu0 0.0
            %6063 = vmatpush1.msra.mxu0 0.0
            %6064 = vmatprep.subr.mxu0 0.0
            %6065 = vmatpush1.msra.mxu0 0.0
            %6066 = vmatprep.subr.mxu0 0.0
            %6067 = vmatpush1.msra.mxu0 0.0
            %6068 = vmatprep.subr.mxu0 0.0
            %6069 = vmatpush1.msra.mxu0 0.0
            %6070 = vmatprep.mubr.f32.mxu0 0.0
            %v6071 = vand.u32 %v5522, 4294901760
            %6072 = vmatmul.mubr.f32.gmra.mrb[0].mxu0 %v6071
            %v6073 = vpop.f32.mrb[0].mxu0
            %v6074 = vadd.f32 %v5955, %v6073
            %v6075 = vpop.f32.mrb[0].mxu0
            %6076 = vdwg.mxu0
            %6077 = vmatprep.subr.mxu0 0.0
            %v6078 = vand.u32 %v481, 4294901760
            %6079 = vmatpush1.msra.mxu0 %v6078
            %6080 = vmatprep.subr.mxu0 0.0
            %v6081 = vand.u32 %v482, 4294901760
            %6082 = vmatpush1.msra.mxu0 %v6081
            %6083 = vmatprep.subr.mxu0 0.0
            %v6084 = vand.u32 %v483, 4294901760
            %6085 = vmatpush1.msra.mxu0 %v6084
            %6086 = vmatprep.subr.mxu0 0.0
            %v6087 = vand.u32 %v484, 4294901760
            %6088 = vmatpush1.msra.mxu0 %v6087
            %6089 = vmatprep.subr.mxu0 0.0
            %v6090 = vand.u32 %v485, 4294901760
            %6091 = vmatpush1.msra.mxu0 %v6090
            %6092 = vmatprep.subr.mxu0 0.0
            %v6093 = vand.u32 %v486, 4294901760
            %6094 = vmatpush1.msra.mxu0 %v6093
            %6095 = vmatprep.subr.mxu0 0.0
            %v6096 = vand.u32 %v487, 4294901760
            %6097 = vmatpush1.msra.mxu0 %v6096
            %6098 = vmatprep.subr.mxu0 0.0
            %v6099 = vand.u32 %v488, 4294901760
            %6100 = vmatpush1.msra.mxu0 %v6099
            %6101 = vmatprep.subr.mxu0 0.0
            %v6102 = vand.u32 %v489, 4294901760
            %6103 = vmatpush1.msra.mxu0 %v6102
            %6104 = vmatprep.subr.mxu0 0.0
            %v6105 = vand.u32 %v490, 4294901760
            %6106 = vmatpush1.msra.mxu0 %v6105
            %6107 = vmatprep.subr.mxu0 0.0
            %v6108 = vand.u32 %v491, 4294901760
            %6109 = vmatpush1.msra.mxu0 %v6108
            %6110 = vmatprep.subr.mxu0 0.0
            %v6111 = vand.u32 %v492, 4294901760
            %6112 = vmatpush1.msra.mxu0 %v6111
            %6113 = vmatprep.subr.mxu0 0.0
            %v6114 = vand.u32 %v493, 4294901760
            %6115 = vmatpush1.msra.mxu0 %v6114
            %6116 = vmatprep.subr.mxu0 0.0
            %v6117 = vand.u32 %v494, 4294901760
            %6118 = vmatpush1.msra.mxu0 %v6117
            %6119 = vmatprep.subr.mxu0 0.0
            %v6120 = vand.u32 %v495, 4294901760
            %6121 = vmatpush1.msra.mxu0 %v6120
            %6122 = vmatprep.subr.mxu0 0.0
            %v6123 = vand.u32 %v496, 4294901760
            %6124 = vmatpush1.msra.mxu0 %v6123
            %6125 = vmatprep.subr.mxu0 0.0
            %6126 = vmatpush1.msra.mxu0 0.0
            %6127 = vmatprep.subr.mxu0 0.0
            %6128 = vmatpush1.msra.mxu0 0.0
            %6129 = vmatprep.subr.mxu0 0.0
            %6130 = vmatpush1.msra.mxu0 0.0
            %6131 = vmatprep.subr.mxu0 0.0
            %6132 = vmatpush1.msra.mxu0 0.0
            %6133 = vmatprep.subr.mxu0 0.0
            %6134 = vmatpush1.msra.mxu0 0.0
            %6135 = vmatprep.subr.mxu0 0.0
            %6136 = vmatpush1.msra.mxu0 0.0
            %6137 = vmatprep.subr.mxu0 0.0
            %6138 = vmatpush1.msra.mxu0 0.0
            %6139 = vmatprep.subr.mxu0 0.0
            %6140 = vmatpush1.msra.mxu0 0.0
            %6141 = vmatprep.subr.mxu0 0.0
            %6142 = vmatpush1.msra.mxu0 0.0
            %6143 = vmatprep.subr.mxu0 0.0
            %6144 = vmatpush1.msra.mxu0 0.0
            %6145 = vmatprep.subr.mxu0 0.0
            %6146 = vmatpush1.msra.mxu0 0.0
            %6147 = vmatprep.subr.mxu0 0.0
            %6148 = vmatpush1.msra.mxu0 0.0
            %6149 = vmatprep.subr.mxu0 0.0
            %6150 = vmatpush1.msra.mxu0 0.0
            %6151 = vmatprep.subr.mxu0 0.0
            %6152 = vmatpush1.msra.mxu0 0.0
            %6153 = vmatprep.subr.mxu0 0.0
            %6154 = vmatpush1.msra.mxu0 0.0
            %6155 = vmatprep.subr.mxu0 0.0
            %6156 = vmatpush1.msra.mxu0 0.0
            %6157 = vmatprep.mubr.f32.mxu0 0.0
            %v6158 = vand.u32 %v5522, 4294901760
            %6159 = vmatmul.mubr.f32.gmra.mrb[0].mxu0 %v6158
            %v6160 = vpop.f32.mrb[0].mxu0
            %v6161 = vadd.f32 %v6074, %v6160
            %v6162 = vpop.f32.mrb[0].mxu0
            %6163 = vdwg.mxu0
            %v6164 = vmul.f32 %v2287, %v6161
            %v6165 = vadd.f32 %v4878, %v6164
            %v6166 = vmul.f32 %v2283, %v6161
            %v6167 = vadd.f32 %v2294, %v6166
            %6168 = vmatprep.subr.mxu0 0.0
            %v6169 = vand.u32 %v465, 4294901760
            %6170 = vmatpush1.msra.mxu0 %v6169
            %6171 = vmatprep.subr.mxu0 0.0
            %v6172 = vand.u32 %v466, 4294901760
            %6173 = vmatpush1.msra.mxu0 %v6172
            %6174 = vmatprep.subr.mxu0 0.0
            %v6175 = vand.u32 %v467, 4294901760
            %6176 = vmatpush1.msra.mxu0 %v6175
            %6177 = vmatprep.subr.mxu0 0.0
            %v6178 = vand.u32 %v468, 4294901760
            %6179 = vmatpush1.msra.mxu0 %v6178
            %6180 = vmatprep.subr.mxu0 0.0
            %v6181 = vand.u32 %v469, 4294901760
            %6182 = vmatpush1.msra.mxu0 %v6181
            %6183 = vmatprep.subr.mxu0 0.0
            %v6184 = vand.u32 %v470, 4294901760
            %6185 = vmatpush1.msra.mxu0 %v6184
            %6186 = vmatprep.subr.mxu0 0.0
            %v6187 = vand.u32 %v471, 4294901760
            %6188 = vmatpush1.msra.mxu0 %v6187
            %6189 = vmatprep.subr.mxu0 0.0
            %v6190 = vand.u32 %v472, 4294901760
            %6191 = vmatpush1.msra.mxu0 %v6190
            %6192 = vmatprep.subr.mxu0 0.0
            %v6193 = vand.u32 %v473, 4294901760
            %6194 = vmatpush1.msra.mxu0 %v6193
            %6195 = vmatprep.subr.mxu0 0.0
            %v6196 = vand.u32 %v474, 4294901760
            %6197 = vmatpush1.msra.mxu0 %v6196
            %6198 = vmatprep.subr.mxu0 0.0
            %v6199 = vand.u32 %v475, 4294901760
            %6200 = vmatpush1.msra.mxu0 %v6199
            %6201 = vmatprep.subr.mxu0 0.0
            %v6202 = vand.u32 %v476, 4294901760
            %6203 = vmatpush1.msra.mxu0 %v6202
            %6204 = vmatprep.subr.mxu0 0.0
            %v6205 = vand.u32 %v477, 4294901760
            %6206 = vmatpush1.msra.mxu0 %v6205
            %6207 = vmatprep.subr.mxu0 0.0
            %v6208 = vand.u32 %v478, 4294901760
            %6209 = vmatpush1.msra.mxu0 %v6208
            %6210 = vmatprep.subr.mxu0 0.0
            %v6211 = vand.u32 %v479, 4294901760
            %6212 = vmatpush1.msra.mxu0 %v6211
            %6213 = vmatprep.subr.mxu0 0.0
            %v6214 = vand.u32 %v480, 4294901760
            %6215 = vmatpush1.msra.mxu0 %v6214
            %6216 = vmatprep.subr.mxu0 0.0
            %6217 = vmatpush1.msra.mxu0 0.0
            %6218 = vmatprep.subr.mxu0 0.0
            %6219 = vmatpush1.msra.mxu0 0.0
            %6220 = vmatprep.subr.mxu0 0.0
            %6221 = vmatpush1.msra.mxu0 0.0
            %6222 = vmatprep.subr.mxu0 0.0
            %6223 = vmatpush1.msra.mxu0 0.0
            %6224 = vmatprep.subr.mxu0 0.0
            %6225 = vmatpush1.msra.mxu0 0.0
            %6226 = vmatprep.subr.mxu0 0.0
            %6227 = vmatpush1.msra.mxu0 0.0
            %6228 = vmatprep.subr.mxu0 0.0
            %6229 = vmatpush1.msra.mxu0 0.0
            %6230 = vmatprep.subr.mxu0 0.0
            %6231 = vmatpush1.msra.mxu0 0.0
            %6232 = vmatprep.subr.mxu0 0.0
            %6233 = vmatpush1.msra.mxu0 0.0
            %6234 = vmatprep.subr.mxu0 0.0
            %6235 = vmatpush1.msra.mxu0 0.0
            %6236 = vmatprep.subr.mxu0 0.0
            %6237 = vmatpush1.msra.mxu0 0.0
            %6238 = vmatprep.subr.mxu0 0.0
            %6239 = vmatpush1.msra.mxu0 0.0
            %6240 = vmatprep.subr.mxu0 0.0
            %6241 = vmatpush1.msra.mxu0 0.0
            %6242 = vmatprep.subr.mxu0 0.0
            %6243 = vmatpush1.msra.mxu0 0.0
            %6244 = vmatprep.subr.mxu0 0.0
            %6245 = vmatpush1.msra.mxu0 0.0
            %6246 = vmatprep.subr.mxu0 0.0
            %6247 = vmatpush1.msra.mxu0 0.0
            %6248 = vmatprep.mubr.f32.mxu0 0.0
            %v6249 = vand.u32 %v6167, 4294901760
            %v6250 = vsub.f32 %v6167, %v6249
            %v6251 = vand.u32 %v6250, 4294901760
            %v6252 = vsub.f32 %v6250, %v6251
            %v6253 = vand.u32 %v6252, 4294901760
            %6254 = vmatmul.mubr.f32.gmra.mrb[0].mxu0 %v6253
            %v6255 = vpop.f32.mrb[0].mxu0
            %v6256 = vadd.f32 %v2299, %v6255
            %v6257 = vpop.f32.mrb[0].mxu0
            %6258 = vdwg.mxu0
            %6259 = vmatprep.subr.mxu0 0.0
            %v6260 = vand.u32 %v465, 4294901760
            %v6261 = vsub.f32 %v465, %v6260
            %v6262 = vand.u32 %v6261, 4294901760
            %v6263 = vsub.f32 %v6261, %v6262
            %v6264 = vand.u32 %v6263, 4294901760
            %6265 = vmatpush1.msra.mxu0 %v6264
            %6266 = vmatprep.subr.mxu0 0.0
            %v6267 = vand.u32 %v466, 4294901760
            %v6268 = vsub.f32 %v466, %v6267
            %v6269 = vand.u32 %v6268, 4294901760
            %v6270 = vsub.f32 %v6268, %v6269
            %v6271 = vand.u32 %v6270, 4294901760
            %6272 = vmatpush1.msra.mxu0 %v6271
            %6273 = vmatprep.subr.mxu0 0.0
            %v6274 = vand.u32 %v467, 4294901760
            %v6275 = vsub.f32 %v467, %v6274
            %v6276 = vand.u32 %v6275, 4294901760
            %v6277 = vsub.f32 %v6275, %v6276
            %v6278 = vand.u32 %v6277, 4294901760
            %6279 = vmatpush1.msra.mxu0 %v6278
            %6280 = vmatprep.subr.mxu0 0.0
            %v6281 = vand.u32 %v468, 4294901760
            %v6282 = vsub.f32 %v468, %v6281
            %v6283 = vand.u32 %v6282, 4294901760
            %v6284 = vsub.f32 %v6282, %v6283
            %v6285 = vand.u32 %v6284, 4294901760
            %6286 = vmatpush1.msra.mxu0 %v6285
            %6287 = vmatprep.subr.mxu0 0.0
            %v6288 = vand.u32 %v469, 4294901760
            %v6289 = vsub.f32 %v469, %v6288
            %v6290 = vand.u32 %v6289, 4294901760
            %v6291 = vsub.f32 %v6289, %v6290
            %v6292 = vand.u32 %v6291, 4294901760
            %6293 = vmatpush1.msra.mxu0 %v6292
            %6294 = vmatprep.subr.mxu0 0.0
            %v6295 = vand.u32 %v470, 4294901760
            %v6296 = vsub.f32 %v470, %v6295
            %v6297 = vand.u32 %v6296, 4294901760
            %v6298 = vsub.f32 %v6296, %v6297
            %v6299 = vand.u32 %v6298, 4294901760
            %6300 = vmatpush1.msra.mxu0 %v6299
            %6301 = vmatprep.subr.mxu0 0.0
            %v6302 = vand.u32 %v471, 4294901760
            %v6303 = vsub.f32 %v471, %v6302
            %v6304 = vand.u32 %v6303, 4294901760
            %v6305 = vsub.f32 %v6303, %v6304
            %v6306 = vand.u32 %v6305, 4294901760
            %6307 = vmatpush1.msra.mxu0 %v6306
            %6308 = vmatprep.subr.mxu0 0.0
            %v6309 = vand.u32 %v472, 4294901760
            %v6310 = vsub.f32 %v472, %v6309
            %v6311 = vand.u32 %v6310, 4294901760
            %v6312 = vsub.f32 %v6310, %v6311
            %v6313 = vand.u32 %v6312, 4294901760
            %6314 = vmatpush1.msra.mxu0 %v6313
            %6315 = vmatprep.subr.mxu0 0.0
            %v6316 = vand.u32 %v473, 4294901760
            %v6317 = vsub.f32 %v473, %v6316
            %v6318 = vand.u32 %v6317, 4294901760
            %v6319 = vsub.f32 %v6317, %v6318
            %v6320 = vand.u32 %v6319, 4294901760
            %6321 = vmatpush1.msra.mxu0 %v6320
            %6322 = vmatprep.subr.mxu0 0.0
            %v6323 = vand.u32 %v474, 4294901760
            %v6324 = vsub.f32 %v474, %v6323
            %v6325 = vand.u32 %v6324, 4294901760
            %v6326 = vsub.f32 %v6324, %v6325
            %v6327 = vand.u32 %v6326, 4294901760
            %6328 = vmatpush1.msra.mxu0 %v6327
            %6329 = vmatprep.subr.mxu0 0.0
            %v6330 = vand.u32 %v475, 4294901760
            %v6331 = vsub.f32 %v475, %v6330
            %v6332 = vand.u32 %v6331, 4294901760
            %v6333 = vsub.f32 %v6331, %v6332
            %v6334 = vand.u32 %v6333, 4294901760
            %6335 = vmatpush1.msra.mxu0 %v6334
            %6336 = vmatprep.subr.mxu0 0.0
            %v6337 = vand.u32 %v476, 4294901760
            %v6338 = vsub.f32 %v476, %v6337
            %v6339 = vand.u32 %v6338, 4294901760
            %v6340 = vsub.f32 %v6338, %v6339
            %v6341 = vand.u32 %v6340, 4294901760
            %6342 = vmatpush1.msra.mxu0 %v6341
            %6343 = vmatprep.subr.mxu0 0.0
            %v6344 = vand.u32 %v477, 4294901760
            %v6345 = vsub.f32 %v477, %v6344
            %v6346 = vand.u32 %v6345, 4294901760
            %v6347 = vsub.f32 %v6345, %v6346
            %v6348 = vand.u32 %v6347, 4294901760
            %6349 = vmatpush1.msra.mxu0 %v6348
            %6350 = vmatprep.subr.mxu0 0.0
            %v6351 = vand.u32 %v478, 4294901760
            %v6352 = vsub.f32 %v478, %v6351
            %v6353 = vand.u32 %v6352, 4294901760
            %v6354 = vsub.f32 %v6352, %v6353
            %v6355 = vand.u32 %v6354, 4294901760
            %6356 = vmatpush1.msra.mxu0 %v6355
            %6357 = vmatprep.subr.mxu0 0.0
            %v6358 = vand.u32 %v479, 4294901760
            %v6359 = vsub.f32 %v479, %v6358
            %v6360 = vand.u32 %v6359, 4294901760
            %v6361 = vsub.f32 %v6359, %v6360
            %v6362 = vand.u32 %v6361, 4294901760
            %6363 = vmatpush1.msra.mxu0 %v6362
            %6364 = vmatprep.subr.mxu0 0.0
            %v6365 = vand.u32 %v480, 4294901760
            %v6366 = vsub.f32 %v480, %v6365
            %v6367 = vand.u32 %v6366, 4294901760
            %v6368 = vsub.f32 %v6366, %v6367
            %v6369 = vand.u32 %v6368, 4294901760
            %6370 = vmatpush1.msra.mxu0 %v6369
            %6371 = vmatprep.subr.mxu0 0.0
            %6372 = vmatpush1.msra.mxu0 0.0
            %6373 = vmatprep.subr.mxu0 0.0
            %6374 = vmatpush1.msra.mxu0 0.0
            %6375 = vmatprep.subr.mxu0 0.0
            %6376 = vmatpush1.msra.mxu0 0.0
            %6377 = vmatprep.subr.mxu0 0.0
            %6378 = vmatpush1.msra.mxu0 0.0
            %6379 = vmatprep.subr.mxu0 0.0
            %6380 = vmatpush1.msra.mxu0 0.0
            %6381 = vmatprep.subr.mxu0 0.0
            %6382 = vmatpush1.msra.mxu0 0.0
            %6383 = vmatprep.subr.mxu0 0.0
            %6384 = vmatpush1.msra.mxu0 0.0
            %6385 = vmatprep.subr.mxu0 0.0
            %6386 = vmatpush1.msra.mxu0 0.0
            %6387 = vmatprep.subr.mxu0 0.0
            %6388 = vmatpush1.msra.mxu0 0.0
            %6389 = vmatprep.subr.mxu0 0.0
            %6390 = vmatpush1.msra.mxu0 0.0
            %6391 = vmatprep.subr.mxu0 0.0
            %6392 = vmatpush1.msra.mxu0 0.0
            %6393 = vmatprep.subr.mxu0 0.0
            %6394 = vmatpush1.msra.mxu0 0.0
            %6395 = vmatprep.subr.mxu0 0.0
            %6396 = vmatpush1.msra.mxu0 0.0
            %6397 = vmatprep.subr.mxu0 0.0
            %6398 = vmatpush1.msra.mxu0 0.0
            %6399 = vmatprep.subr.mxu0 0.0
            %6400 = vmatpush1.msra.mxu0 0.0
            %6401 = vmatprep.subr.mxu0 0.0
            %6402 = vmatpush1.msra.mxu0 0.0
            %6403 = vmatprep.mubr.f32.mxu0 0.0
            %v6404 = vand.u32 %v6167, 4294901760
            %6405 = vmatmul.mubr.f32.gmra.mrb[0].mxu0 %v6404
            %v6406 = vpop.f32.mrb[0].mxu0
            %v6407 = vadd.f32 %v6256, %v6406
            %v6408 = vpop.f32.mrb[0].mxu0
            %6409 = vdwg.mxu0
            %6410 = vmatprep.subr.mxu0 0.0
            %v6411 = vand.u32 %v465, 4294901760
            %v6412 = vsub.f32 %v465, %v6411
            %6413 = vmatpush1.msra.mxu0 %v6412
            %6414 = vmatprep.subr.mxu0 0.0
            %v6415 = vand.u32 %v466, 4294901760
            %v6416 = vsub.f32 %v466, %v6415
            %6417 = vmatpush1.msra.mxu0 %v6416
            %6418 = vmatprep.subr.mxu0 0.0
            %v6419 = vand.u32 %v467, 4294901760
            %v6420 = vsub.f32 %v467, %v6419
            %6421 = vmatpush1.msra.mxu0 %v6420
            %6422 = vmatprep.subr.mxu0 0.0
            %v6423 = vand.u32 %v468, 4294901760
            %v6424 = vsub.f32 %v468, %v6423
            %6425 = vmatpush1.msra.mxu0 %v6424
            %6426 = vmatprep.subr.mxu0 0.0
            %v6427 = vand.u32 %v469, 4294901760
            %v6428 = vsub.f32 %v469, %v6427
            %6429 = vmatpush1.msra.mxu0 %v6428
            %6430 = vmatprep.subr.mxu0 0.0
            %v6431 = vand.u32 %v470, 4294901760
            %v6432 = vsub.f32 %v470, %v6431
            %6433 = vmatpush1.msra.mxu0 %v6432
            %6434 = vmatprep.subr.mxu0 0.0
            %v6435 = vand.u32 %v471, 4294901760
            %v6436 = vsub.f32 %v471, %v6435
            %6437 = vmatpush1.msra.mxu0 %v6436
            %6438 = vmatprep.subr.mxu0 0.0
            %v6439 = vand.u32 %v472, 4294901760
            %v6440 = vsub.f32 %v472, %v6439
            %6441 = vmatpush1.msra.mxu0 %v6440
            %6442 = vmatprep.subr.mxu0 0.0
            %v6443 = vand.u32 %v473, 4294901760
            %v6444 = vsub.f32 %v473, %v6443
            %6445 = vmatpush1.msra.mxu0 %v6444
            %6446 = vmatprep.subr.mxu0 0.0
            %v6447 = vand.u32 %v474, 4294901760
            %v6448 = vsub.f32 %v474, %v6447
            %6449 = vmatpush1.msra.mxu0 %v6448
            %6450 = vmatprep.subr.mxu0 0.0
            %v6451 = vand.u32 %v475, 4294901760
            %v6452 = vsub.f32 %v475, %v6451
            %6453 = vmatpush1.msra.mxu0 %v6452
            %6454 = vmatprep.subr.mxu0 0.0
            %v6455 = vand.u32 %v476, 4294901760
            %v6456 = vsub.f32 %v476, %v6455
            %6457 = vmatpush1.msra.mxu0 %v6456
            %6458 = vmatprep.subr.mxu0 0.0
            %v6459 = vand.u32 %v477, 4294901760
            %v6460 = vsub.f32 %v477, %v6459
            %6461 = vmatpush1.msra.mxu0 %v6460
            %6462 = vmatprep.subr.mxu0 0.0
            %v6463 = vand.u32 %v478, 4294901760
            %v6464 = vsub.f32 %v478, %v6463
            %6465 = vmatpush1.msra.mxu0 %v6464
            %6466 = vmatprep.subr.mxu0 0.0
            %v6467 = vand.u32 %v479, 4294901760
            %v6468 = vsub.f32 %v479, %v6467
            %6469 = vmatpush1.msra.mxu0 %v6468
            %6470 = vmatprep.subr.mxu0 0.0
            %v6471 = vand.u32 %v480, 4294901760
            %v6472 = vsub.f32 %v480, %v6471
            %6473 = vmatpush1.msra.mxu0 %v6472
            %6474 = vmatprep.subr.mxu0 0.0
            %6475 = vmatpush1.msra.mxu0 0.0
            %6476 = vmatprep.subr.mxu0 0.0
            %6477 = vmatpush1.msra.mxu0 0.0
            %6478 = vmatprep.subr.mxu0 0.0
            %6479 = vmatpush1.msra.mxu0 0.0
            %6480 = vmatprep.subr.mxu0 0.0
            %6481 = vmatpush1.msra.mxu0 0.0
            %6482 = vmatprep.subr.mxu0 0.0
            %6483 = vmatpush1.msra.mxu0 0.0
            %6484 = vmatprep.subr.mxu0 0.0
            %6485 = vmatpush1.msra.mxu0 0.0
            %6486 = vmatprep.subr.mxu0 0.0
            %6487 = vmatpush1.msra.mxu0 0.0
            %6488 = vmatprep.subr.mxu0 0.0
            %6489 = vmatpush1.msra.mxu0 0.0
            %6490 = vmatprep.subr.mxu0 0.0
            %6491 = vmatpush1.msra.mxu0 0.0
            %6492 = vmatprep.subr.mxu0 0.0
            %6493 = vmatpush1.msra.mxu0 0.0
            %6494 = vmatprep.subr.mxu0 0.0
            %6495 = vmatpush1.msra.mxu0 0.0
            %6496 = vmatprep.subr.mxu0 0.0
            %6497 = vmatpush1.msra.mxu0 0.0
            %6498 = vmatprep.subr.mxu0 0.0
            %6499 = vmatpush1.msra.mxu0 0.0
            %6500 = vmatprep.subr.mxu0 0.0
            %6501 = vmatpush1.msra.mxu0 0.0
            %6502 = vmatprep.subr.mxu0 0.0
            %6503 = vmatpush1.msra.mxu0 0.0
            %6504 = vmatprep.subr.mxu0 0.0
            %6505 = vmatpush1.msra.mxu0 0.0
            %6506 = vmatprep.mubr.f32.mxu0 0.0
            %v6507 = vand.u32 %v6167, 4294901760
            %v6508 = vsub.f32 %v6167, %v6507
            %6509 = vmatmul.mubr.f32.gmra.mrb[0].mxu0 %v6508
            %v6510 = vpop.f32.mrb[0].mxu0
            %v6511 = vadd.f32 %v6407, %v6510
            %v6512 = vpop.f32.mrb[0].mxu0
            %6513 = vdwg.mxu0
            %6514 = vmatprep.subr.mxu0 0.0
            %v6515 = vand.u32 %v465, 4294901760
            %6516 = vmatpush1.msra.mxu0 %v6515
            %6517 = vmatprep.subr.mxu0 0.0
            %v6518 = vand.u32 %v466, 4294901760
            %6519 = vmatpush1.msra.mxu0 %v6518
            %6520 = vmatprep.subr.mxu0 0.0
            %v6521 = vand.u32 %v467, 4294901760
            %6522 = vmatpush1.msra.mxu0 %v6521
            %6523 = vmatprep.subr.mxu0 0.0
            %v6524 = vand.u32 %v468, 4294901760
            %6525 = vmatpush1.msra.mxu0 %v6524
            %6526 = vmatprep.subr.mxu0 0.0
            %v6527 = vand.u32 %v469, 4294901760
            %6528 = vmatpush1.msra.mxu0 %v6527
            %6529 = vmatprep.subr.mxu0 0.0
            %v6530 = vand.u32 %v470, 4294901760
            %6531 = vmatpush1.msra.mxu0 %v6530
            %6532 = vmatprep.subr.mxu0 0.0
            %v6533 = vand.u32 %v471, 4294901760
            %6534 = vmatpush1.msra.mxu0 %v6533
            %6535 = vmatprep.subr.mxu0 0.0
            %v6536 = vand.u32 %v472, 4294901760
            %6537 = vmatpush1.msra.mxu0 %v6536
            %6538 = vmatprep.subr.mxu0 0.0
            %v6539 = vand.u32 %v473, 4294901760
            %6540 = vmatpush1.msra.mxu0 %v6539
            %6541 = vmatprep.subr.mxu0 0.0
            %v6542 = vand.u32 %v474, 4294901760
            %6543 = vmatpush1.msra.mxu0 %v6542
            %6544 = vmatprep.subr.mxu0 0.0
            %v6545 = vand.u32 %v475, 4294901760
            %6546 = vmatpush1.msra.mxu0 %v6545
            %6547 = vmatprep.subr.mxu0 0.0
            %v6548 = vand.u32 %v476, 4294901760
            %6549 = vmatpush1.msra.mxu0 %v6548
            %6550 = vmatprep.subr.mxu0 0.0
            %v6551 = vand.u32 %v477, 4294901760
            %6552 = vmatpush1.msra.mxu0 %v6551
            %6553 = vmatprep.subr.mxu0 0.0
            %v6554 = vand.u32 %v478, 4294901760
            %6555 = vmatpush1.msra.mxu0 %v6554
            %6556 = vmatprep.subr.mxu0 0.0
            %v6557 = vand.u32 %v479, 4294901760
            %6558 = vmatpush1.msra.mxu0 %v6557
            %6559 = vmatprep.subr.mxu0 0.0
            %v6560 = vand.u32 %v480, 4294901760
            %6561 = vmatpush1.msra.mxu0 %v6560
            %6562 = vmatprep.subr.mxu0 0.0
            %6563 = vmatpush1.msra.mxu0 0.0
            %6564 = vmatprep.subr.mxu0 0.0
            %6565 = vmatpush1.msra.mxu0 0.0
            %6566 = vmatprep.subr.mxu0 0.0
            %6567 = vmatpush1.msra.mxu0 0.0
            %6568 = vmatprep.subr.mxu0 0.0
            %6569 = vmatpush1.msra.mxu0 0.0
            %6570 = vmatprep.subr.mxu0 0.0
            %6571 = vmatpush1.msra.mxu0 0.0
            %6572 = vmatprep.subr.mxu0 0.0
            %6573 = vmatpush1.msra.mxu0 0.0
            %6574 = vmatprep.subr.mxu0 0.0
            %6575 = vmatpush1.msra.mxu0 0.0
            %6576 = vmatprep.subr.mxu0 0.0
            %6577 = vmatpush1.msra.mxu0 0.0
            %6578 = vmatprep.subr.mxu0 0.0
            %6579 = vmatpush1.msra.mxu0 0.0
            %6580 = vmatprep.subr.mxu0 0.0
            %6581 = vmatpush1.msra.mxu0 0.0
            %6582 = vmatprep.subr.mxu0 0.0
            %6583 = vmatpush1.msra.mxu0 0.0
            %6584 = vmatprep.subr.mxu0 0.0
            %6585 = vmatpush1.msra.mxu0 0.0
            %6586 = vmatprep.subr.mxu0 0.0
            %6587 = vmatpush1.msra.mxu0 0.0
            %6588 = vmatprep.subr.mxu0 0.0
            %6589 = vmatpush1.msra.mxu0 0.0
            %6590 = vmatprep.subr.mxu0 0.0
            %6591 = vmatpush1.msra.mxu0 0.0
            %6592 = vmatprep.subr.mxu0 0.0
            %6593 = vmatpush1.msra.mxu0 0.0
            %6594 = vmatprep.mubr.f32.mxu0 0.0
            %v6595 = vand.u32 %v6167, 4294901760
            %v6596 = vsub.f32 %v6167, %v6595
            %v6597 = vand.u32 %v6596, 4294901760
            %6598 = vmatmul.mubr.f32.gmra.mrb[0].mxu0 %v6597
            %v6599 = vpop.f32.mrb[0].mxu0
            %v6600 = vadd.f32 %v6511, %v6599
            %v6601 = vpop.f32.mrb[0].mxu0
            %6602 = vdwg.mxu0
            %6603 = vmatprep.subr.mxu0 0.0
            %v6604 = vand.u32 %v465, 4294901760
            %v6605 = vsub.f32 %v465, %v6604
            %v6606 = vand.u32 %v6605, 4294901760
            %6607 = vmatpush1.msra.mxu0 %v6606
            %6608 = vmatprep.subr.mxu0 0.0
            %v6609 = vand.u32 %v466, 4294901760
            %v6610 = vsub.f32 %v466, %v6609
            %v6611 = vand.u32 %v6610, 4294901760
            %6612 = vmatpush1.msra.mxu0 %v6611
            %6613 = vmatprep.subr.mxu0 0.0
            %v6614 = vand.u32 %v467, 4294901760
            %v6615 = vsub.f32 %v467, %v6614
            %v6616 = vand.u32 %v6615, 4294901760
            %6617 = vmatpush1.msra.mxu0 %v6616
            %6618 = vmatprep.subr.mxu0 0.0
            %v6619 = vand.u32 %v468, 4294901760
            %v6620 = vsub.f32 %v468, %v6619
            %v6621 = vand.u32 %v6620, 4294901760
            %6622 = vmatpush1.msra.mxu0 %v6621
            %6623 = vmatprep.subr.mxu0 0.0
            %v6624 = vand.u32 %v469, 4294901760
            %v6625 = vsub.f32 %v469, %v6624
            %v6626 = vand.u32 %v6625, 4294901760
            %6627 = vmatpush1.msra.mxu0 %v6626
            %6628 = vmatprep.subr.mxu0 0.0
            %v6629 = vand.u32 %v470, 4294901760
            %v6630 = vsub.f32 %v470, %v6629
            %v6631 = vand.u32 %v6630, 4294901760
            %6632 = vmatpush1.msra.mxu0 %v6631
            %6633 = vmatprep.subr.mxu0 0.0
            %v6634 = vand.u32 %v471, 4294901760
            %v6635 = vsub.f32 %v471, %v6634
            %v6636 = vand.u32 %v6635, 4294901760
            %6637 = vmatpush1.msra.mxu0 %v6636
            %6638 = vmatprep.subr.mxu0 0.0
            %v6639 = vand.u32 %v472, 4294901760
            %v6640 = vsub.f32 %v472, %v6639
            %v6641 = vand.u32 %v6640, 4294901760
            %6642 = vmatpush1.msra.mxu0 %v6641
            %6643 = vmatprep.subr.mxu0 0.0
            %v6644 = vand.u32 %v473, 4294901760
            %v6645 = vsub.f32 %v473, %v6644
            %v6646 = vand.u32 %v6645, 4294901760
            %6647 = vmatpush1.msra.mxu0 %v6646
            %6648 = vmatprep.subr.mxu0 0.0
            %v6649 = vand.u32 %v474, 4294901760
            %v6650 = vsub.f32 %v474, %v6649
            %v6651 = vand.u32 %v6650, 4294901760
            %6652 = vmatpush1.msra.mxu0 %v6651
            %6653 = vmatprep.subr.mxu0 0.0
            %v6654 = vand.u32 %v475, 4294901760
            %v6655 = vsub.f32 %v475, %v6654
            %v6656 = vand.u32 %v6655, 4294901760
            %6657 = vmatpush1.msra.mxu0 %v6656
            %6658 = vmatprep.subr.mxu0 0.0
            %v6659 = vand.u32 %v476, 4294901760
            %v6660 = vsub.f32 %v476, %v6659
            %v6661 = vand.u32 %v6660, 4294901760
            %6662 = vmatpush1.msra.mxu0 %v6661
            %6663 = vmatprep.subr.mxu0 0.0
            %v6664 = vand.u32 %v477, 4294901760
            %v6665 = vsub.f32 %v477, %v6664
            %v6666 = vand.u32 %v6665, 4294901760
            %6667 = vmatpush1.msra.mxu0 %v6666
            %6668 = vmatprep.subr.mxu0 0.0
            %v6669 = vand.u32 %v478, 4294901760
            %v6670 = vsub.f32 %v478, %v6669
            %v6671 = vand.u32 %v6670, 4294901760
            %6672 = vmatpush1.msra.mxu0 %v6671
            %6673 = vmatprep.subr.mxu0 0.0
            %v6674 = vand.u32 %v479, 4294901760
            %v6675 = vsub.f32 %v479, %v6674
            %v6676 = vand.u32 %v6675, 4294901760
            %6677 = vmatpush1.msra.mxu0 %v6676
            %6678 = vmatprep.subr.mxu0 0.0
            %v6679 = vand.u32 %v480, 4294901760
            %v6680 = vsub.f32 %v480, %v6679
            %v6681 = vand.u32 %v6680, 4294901760
            %6682 = vmatpush1.msra.mxu0 %v6681
            %6683 = vmatprep.subr.mxu0 0.0
            %6684 = vmatpush1.msra.mxu0 0.0
            %6685 = vmatprep.subr.mxu0 0.0
            %6686 = vmatpush1.msra.mxu0 0.0
            %6687 = vmatprep.subr.mxu0 0.0
            %6688 = vmatpush1.msra.mxu0 0.0
            %6689 = vmatprep.subr.mxu0 0.0
            %6690 = vmatpush1.msra.mxu0 0.0
            %6691 = vmatprep.subr.mxu0 0.0
            %6692 = vmatpush1.msra.mxu0 0.0
            %6693 = vmatprep.subr.mxu0 0.0
            %6694 = vmatpush1.msra.mxu0 0.0
            %6695 = vmatprep.subr.mxu0 0.0
            %6696 = vmatpush1.msra.mxu0 0.0
            %6697 = vmatprep.subr.mxu0 0.0
            %6698 = vmatpush1.msra.mxu0 0.0
            %6699 = vmatprep.subr.mxu0 0.0
            %6700 = vmatpush1.msra.mxu0 0.0
            %6701 = vmatprep.subr.mxu0 0.0
            %6702 = vmatpush1.msra.mxu0 0.0
            %6703 = vmatprep.subr.mxu0 0.0
            %6704 = vmatpush1.msra.mxu0 0.0
            %6705 = vmatprep.subr.mxu0 0.0
            %6706 = vmatpush1.msra.mxu0 0.0
            %6707 = vmatprep.subr.mxu0 0.0
            %6708 = vmatpush1.msra.mxu0 0.0
            %6709 = vmatprep.subr.mxu0 0.0
            %6710 = vmatpush1.msra.mxu0 0.0
            %6711 = vmatprep.subr.mxu0 0.0
            %6712 = vmatpush1.msra.mxu0 0.0
            %6713 = vmatprep.subr.mxu0 0.0
            %6714 = vmatpush1.msra.mxu0 0.0
            %6715 = vmatprep.mubr.f32.mxu0 0.0
            %v6716 = vand.u32 %v6167, 4294901760
            %6717 = vmatmul.mubr.f32.gmra.mrb[0].mxu0 %v6716
            %v6718 = vpop.f32.mrb[0].mxu0
            %v6719 = vadd.f32 %v6600, %v6718
            %v6720 = vpop.f32.mrb[0].mxu0
            %6721 = vdwg.mxu0
            %6722 = vmatprep.subr.mxu0 0.0
            %v6723 = vand.u32 %v465, 4294901760
            %6724 = vmatpush1.msra.mxu0 %v6723
            %6725 = vmatprep.subr.mxu0 0.0
            %v6726 = vand.u32 %v466, 4294901760
            %6727 = vmatpush1.msra.mxu0 %v6726
            %6728 = vmatprep.subr.mxu0 0.0
            %v6729 = vand.u32 %v467, 4294901760
            %6730 = vmatpush1.msra.mxu0 %v6729
            %6731 = vmatprep.subr.mxu0 0.0
            %v6732 = vand.u32 %v468, 4294901760
            %6733 = vmatpush1.msra.mxu0 %v6732
            %6734 = vmatprep.subr.mxu0 0.0
            %v6735 = vand.u32 %v469, 4294901760
            %6736 = vmatpush1.msra.mxu0 %v6735
            %6737 = vmatprep.subr.mxu0 0.0
            %v6738 = vand.u32 %v470, 4294901760
            %6739 = vmatpush1.msra.mxu0 %v6738
            %6740 = vmatprep.subr.mxu0 0.0
            %v6741 = vand.u32 %v471, 4294901760
            %6742 = vmatpush1.msra.mxu0 %v6741
            %6743 = vmatprep.subr.mxu0 0.0
            %v6744 = vand.u32 %v472, 4294901760
            %6745 = vmatpush1.msra.mxu0 %v6744
            %6746 = vmatprep.subr.mxu0 0.0
            %v6747 = vand.u32 %v473, 4294901760
            %6748 = vmatpush1.msra.mxu0 %v6747
            %6749 = vmatprep.subr.mxu0 0.0
            %v6750 = vand.u32 %v474, 4294901760
            %6751 = vmatpush1.msra.mxu0 %v6750
            %6752 = vmatprep.subr.mxu0 0.0
            %v6753 = vand.u32 %v475, 4294901760
            %6754 = vmatpush1.msra.mxu0 %v6753
            %6755 = vmatprep.subr.mxu0 0.0
            %v6756 = vand.u32 %v476, 4294901760
            %6757 = vmatpush1.msra.mxu0 %v6756
            %6758 = vmatprep.subr.mxu0 0.0
            %v6759 = vand.u32 %v477, 4294901760
            %6760 = vmatpush1.msra.mxu0 %v6759
            %6761 = vmatprep.subr.mxu0 0.0
            %v6762 = vand.u32 %v478, 4294901760
            %6763 = vmatpush1.msra.mxu0 %v6762
            %6764 = vmatprep.subr.mxu0 0.0
            %v6765 = vand.u32 %v479, 4294901760
            %6766 = vmatpush1.msra.mxu0 %v6765
            %6767 = vmatprep.subr.mxu0 0.0
            %v6768 = vand.u32 %v480, 4294901760
            %6769 = vmatpush1.msra.mxu0 %v6768
            %6770 = vmatprep.subr.mxu0 0.0
            %6771 = vmatpush1.msra.mxu0 0.0
            %6772 = vmatprep.subr.mxu0 0.0
            %6773 = vmatpush1.msra.mxu0 0.0
            %6774 = vmatprep.subr.mxu0 0.0
            %6775 = vmatpush1.msra.mxu0 0.0
            %6776 = vmatprep.subr.mxu0 0.0
            %6777 = vmatpush1.msra.mxu0 0.0
            %6778 = vmatprep.subr.mxu0 0.0
            %6779 = vmatpush1.msra.mxu0 0.0
            %6780 = vmatprep.subr.mxu0 0.0
            %6781 = vmatpush1.msra.mxu0 0.0
            %6782 = vmatprep.subr.mxu0 0.0
            %6783 = vmatpush1.msra.mxu0 0.0
            %6784 = vmatprep.subr.mxu0 0.0
            %6785 = vmatpush1.msra.mxu0 0.0
            %6786 = vmatprep.subr.mxu0 0.0
            %6787 = vmatpush1.msra.mxu0 0.0
            %6788 = vmatprep.subr.mxu0 0.0
            %6789 = vmatpush1.msra.mxu0 0.0
            %6790 = vmatprep.subr.mxu0 0.0
            %6791 = vmatpush1.msra.mxu0 0.0
            %6792 = vmatprep.subr.mxu0 0.0
            %6793 = vmatpush1.msra.mxu0 0.0
            %6794 = vmatprep.subr.mxu0 0.0
            %6795 = vmatpush1.msra.mxu0 0.0
            %6796 = vmatprep.subr.mxu0 0.0
            %6797 = vmatpush1.msra.mxu0 0.0
            %6798 = vmatprep.subr.mxu0 0.0
            %6799 = vmatpush1.msra.mxu0 0.0
            %6800 = vmatprep.subr.mxu0 0.0
            %6801 = vmatpush1.msra.mxu0 0.0
            %6802 = vmatprep.mubr.f32.mxu0 0.0
            %v6803 = vand.u32 %v6167, 4294901760
            %6804 = vmatmul.mubr.f32.gmra.mrb[0].mxu0 %v6803
            %v6805 = vpop.f32.mrb[0].mxu0
            %v6806 = vadd.f32 %v6719, %v6805
            %v6807 = vpop.f32.mrb[0].mxu0
            %6808 = vdwg.mxu0
            %v6809 = vtanh.pop %v6806
            %6810 = vmatprep.subr.mxu0 0.0
            %v6811 = vand.u32 %v481, 4294901760
            %6812 = vmatpush1.msra.mxu0 %v6811
            %6813 = vmatprep.subr.mxu0 0.0
            %v6814 = vand.u32 %v482, 4294901760
            %6815 = vmatpush1.msra.mxu0 %v6814
            %6816 = vmatprep.subr.mxu0 0.0
            %v6817 = vand.u32 %v483, 4294901760
            %6818 = vmatpush1.msra.mxu0 %v6817
            %6819 = vmatprep.subr.mxu0 0.0
            %v6820 = vand.u32 %v484, 4294901760
            %6821 = vmatpush1.msra.mxu0 %v6820
            %6822 = vmatprep.subr.mxu0 0.0
            %v6823 = vand.u32 %v485, 4294901760
            %6824 = vmatpush1.msra.mxu0 %v6823
            %6825 = vmatprep.subr.mxu0 0.0
            %v6826 = vand.u32 %v486, 4294901760
            %6827 = vmatpush1.msra.mxu0 %v6826
            %6828 = vmatprep.subr.mxu0 0.0
            %v6829 = vand.u32 %v487, 4294901760
            %6830 = vmatpush1.msra.mxu0 %v6829
            %6831 = vmatprep.subr.mxu0 0.0
            %v6832 = vand.u32 %v488, 4294901760
            %6833 = vmatpush1.msra.mxu0 %v6832
            %6834 = vmatprep.subr.mxu0 0.0
            %v6835 = vand.u32 %v489, 4294901760
            %6836 = vmatpush1.msra.mxu0 %v6835
            %6837 = vmatprep.subr.mxu0 0.0
            %v6838 = vand.u32 %v490, 4294901760
            %6839 = vmatpush1.msra.mxu0 %v6838
            %6840 = vmatprep.subr.mxu0 0.0
            %v6841 = vand.u32 %v491, 4294901760
            %6842 = vmatpush1.msra.mxu0 %v6841
            %6843 = vmatprep.subr.mxu0 0.0
            %v6844 = vand.u32 %v492, 4294901760
            %6845 = vmatpush1.msra.mxu0 %v6844
            %6846 = vmatprep.subr.mxu0 0.0
            %v6847 = vand.u32 %v493, 4294901760
            %6848 = vmatpush1.msra.mxu0 %v6847
            %6849 = vmatprep.subr.mxu0 0.0
            %v6850 = vand.u32 %v494, 4294901760
            %6851 = vmatpush1.msra.mxu0 %v6850
            %6852 = vmatprep.subr.mxu0 0.0
            %v6853 = vand.u32 %v495, 4294901760
            %6854 = vmatpush1.msra.mxu0 %v6853
            %6855 = vmatprep.subr.mxu0 0.0
            %v6856 = vand.u32 %v496, 4294901760
            %6857 = vmatpush1.msra.mxu0 %v6856
            %6858 = vmatprep.subr.mxu0 0.0
            %6859 = vmatpush1.msra.mxu0 0.0
            %6860 = vmatprep.subr.mxu0 0.0
            %6861 = vmatpush1.msra.mxu0 0.0
            %6862 = vmatprep.subr.mxu0 0.0
            %6863 = vmatpush1.msra.mxu0 0.0
            %6864 = vmatprep.subr.mxu0 0.0
            %6865 = vmatpush1.msra.mxu0 0.0
            %6866 = vmatprep.subr.mxu0 0.0
            %6867 = vmatpush1.msra.mxu0 0.0
            %6868 = vmatprep.subr.mxu0 0.0
            %6869 = vmatpush1.msra.mxu0 0.0
            %6870 = vmatprep.subr.mxu0 0.0
            %6871 = vmatpush1.msra.mxu0 0.0
            %6872 = vmatprep.subr.mxu0 0.0
            %6873 = vmatpush1.msra.mxu0 0.0
            %6874 = vmatprep.subr.mxu0 0.0
            %6875 = vmatpush1.msra.mxu0 0.0
            %6876 = vmatprep.subr.mxu0 0.0
            %6877 = vmatpush1.msra.mxu0 0.0
            %6878 = vmatprep.subr.mxu0 0.0
            %6879 = vmatpush1.msra.mxu0 0.0
            %6880 = vmatprep.subr.mxu0 0.0
            %6881 = vmatpush1.msra.mxu0 0.0
            %6882 = vmatprep.subr.mxu0 0.0
            %6883 = vmatpush1.msra.mxu0 0.0
            %6884 = vmatprep.subr.mxu0 0.0
            %6885 = vmatpush1.msra.mxu0 0.0
            %6886 = vmatprep.subr.mxu0 0.0
            %6887 = vmatpush1.msra.mxu0 0.0
            %6888 = vmatprep.subr.mxu0 0.0
            %6889 = vmatpush1.msra.mxu0 0.0
            %6890 = vmatprep.mubr.f32.mxu0 0.0
            %v6891 = vand.u32 %v6809, 4294901760
            %v6892 = vsub.f32 %v6809, %v6891
            %v6893 = vand.u32 %v6892, 4294901760
            %v6894 = vsub.f32 %v6892, %v6893
            %v6895 = vand.u32 %v6894, 4294901760
            %6896 = vmatmul.mubr.f32.gmra.mrb[0].mxu0 %v6895
            %v6897 = vpop.f32.mrb[0].mxu0
            %v6898 = vadd.f32 %v2947, %v6897
            %v6899 = vpop.f32.mrb[0].mxu0
            %6900 = vdwg.mxu0
            %6901 = vmatprep.subr.mxu0 0.0
            %v6902 = vand.u32 %v481, 4294901760
            %v6903 = vsub.f32 %v481, %v6902
            %v6904 = vand.u32 %v6903, 4294901760
            %v6905 = vsub.f32 %v6903, %v6904
            %v6906 = vand.u32 %v6905, 4294901760
            %6907 = vmatpush1.msra.mxu0 %v6906
            %6908 = vmatprep.subr.mxu0 0.0
            %v6909 = vand.u32 %v482, 4294901760
            %v6910 = vsub.f32 %v482, %v6909
            %v6911 = vand.u32 %v6910, 4294901760
            %v6912 = vsub.f32 %v6910, %v6911
            %v6913 = vand.u32 %v6912, 4294901760
            %6914 = vmatpush1.msra.mxu0 %v6913
            %6915 = vmatprep.subr.mxu0 0.0
            %v6916 = vand.u32 %v483, 4294901760
            %v6917 = vsub.f32 %v483, %v6916
            %v6918 = vand.u32 %v6917, 4294901760
            %v6919 = vsub.f32 %v6917, %v6918
            %v6920 = vand.u32 %v6919, 4294901760
            %6921 = vmatpush1.msra.mxu0 %v6920
            %6922 = vmatprep.subr.mxu0 0.0
            %v6923 = vand.u32 %v484, 4294901760
            %v6924 = vsub.f32 %v484, %v6923
            %v6925 = vand.u32 %v6924, 4294901760
            %v6926 = vsub.f32 %v6924, %v6925
            %v6927 = vand.u32 %v6926, 4294901760
            %6928 = vmatpush1.msra.mxu0 %v6927
            %6929 = vmatprep.subr.mxu0 0.0
            %v6930 = vand.u32 %v485, 4294901760
            %v6931 = vsub.f32 %v485, %v6930
            %v6932 = vand.u32 %v6931, 4294901760
            %v6933 = vsub.f32 %v6931, %v6932
            %v6934 = vand.u32 %v6933, 4294901760
            %6935 = vmatpush1.msra.mxu0 %v6934
            %6936 = vmatprep.subr.mxu0 0.0
            %v6937 = vand.u32 %v486, 4294901760
            %v6938 = vsub.f32 %v486, %v6937
            %v6939 = vand.u32 %v6938, 4294901760
            %v6940 = vsub.f32 %v6938, %v6939
            %v6941 = vand.u32 %v6940, 4294901760
            %6942 = vmatpush1.msra.mxu0 %v6941
            %6943 = vmatprep.subr.mxu0 0.0
            %v6944 = vand.u32 %v487, 4294901760
            %v6945 = vsub.f32 %v487, %v6944
            %v6946 = vand.u32 %v6945, 4294901760
            %v6947 = vsub.f32 %v6945, %v6946
            %v6948 = vand.u32 %v6947, 4294901760
            %6949 = vmatpush1.msra.mxu0 %v6948
            %6950 = vmatprep.subr.mxu0 0.0
            %v6951 = vand.u32 %v488, 4294901760
            %v6952 = vsub.f32 %v488, %v6951
            %v6953 = vand.u32 %v6952, 4294901760
            %v6954 = vsub.f32 %v6952, %v6953
            %v6955 = vand.u32 %v6954, 4294901760
            %6956 = vmatpush1.msra.mxu0 %v6955
            %6957 = vmatprep.subr.mxu0 0.0
            %v6958 = vand.u32 %v489, 4294901760
            %v6959 = vsub.f32 %v489, %v6958
            %v6960 = vand.u32 %v6959, 4294901760
            %v6961 = vsub.f32 %v6959, %v6960
            %v6962 = vand.u32 %v6961, 4294901760
            %6963 = vmatpush1.msra.mxu0 %v6962
            %6964 = vmatprep.subr.mxu0 0.0
            %v6965 = vand.u32 %v490, 4294901760
            %v6966 = vsub.f32 %v490, %v6965
            %v6967 = vand.u32 %v6966, 4294901760
            %v6968 = vsub.f32 %v6966, %v6967
            %v6969 = vand.u32 %v6968, 4294901760
            %6970 = vmatpush1.msra.mxu0 %v6969
            %6971 = vmatprep.subr.mxu0 0.0
            %v6972 = vand.u32 %v491, 4294901760
            %v6973 = vsub.f32 %v491, %v6972
            %v6974 = vand.u32 %v6973, 4294901760
            %v6975 = vsub.f32 %v6973, %v6974
            %v6976 = vand.u32 %v6975, 4294901760
            %6977 = vmatpush1.msra.mxu0 %v6976
            %6978 = vmatprep.subr.mxu0 0.0
            %v6979 = vand.u32 %v492, 4294901760
            %v6980 = vsub.f32 %v492, %v6979
            %v6981 = vand.u32 %v6980, 4294901760
            %v6982 = vsub.f32 %v6980, %v6981
            %v6983 = vand.u32 %v6982, 4294901760
            %6984 = vmatpush1.msra.mxu0 %v6983
            %6985 = vmatprep.subr.mxu0 0.0
            %v6986 = vand.u32 %v493, 4294901760
            %v6987 = vsub.f32 %v493, %v6986
            %v6988 = vand.u32 %v6987, 4294901760
            %v6989 = vsub.f32 %v6987, %v6988
            %v6990 = vand.u32 %v6989, 4294901760
            %6991 = vmatpush1.msra.mxu0 %v6990
            %6992 = vmatprep.subr.mxu0 0.0
            %v6993 = vand.u32 %v494, 4294901760
            %v6994 = vsub.f32 %v494, %v6993
            %v6995 = vand.u32 %v6994, 4294901760
            %v6996 = vsub.f32 %v6994, %v6995
            %v6997 = vand.u32 %v6996, 4294901760
            %6998 = vmatpush1.msra.mxu0 %v6997
            %6999 = vmatprep.subr.mxu0 0.0
            %v7000 = vand.u32 %v495, 4294901760
            %v7001 = vsub.f32 %v495, %v7000
            %v7002 = vand.u32 %v7001, 4294901760
            %v7003 = vsub.f32 %v7001, %v7002
            %v7004 = vand.u32 %v7003, 4294901760
            %7005 = vmatpush1.msra.mxu0 %v7004
            %7006 = vmatprep.subr.mxu0 0.0
            %v7007 = vand.u32 %v496, 4294901760
            %v7008 = vsub.f32 %v496, %v7007
            %v7009 = vand.u32 %v7008, 4294901760
            %v7010 = vsub.f32 %v7008, %v7009
            %v7011 = vand.u32 %v7010, 4294901760
            %7012 = vmatpush1.msra.mxu0 %v7011
            %7013 = vmatprep.subr.mxu0 0.0
            %7014 = vmatpush1.msra.mxu0 0.0
            %7015 = vmatprep.subr.mxu0 0.0
            %7016 = vmatpush1.msra.mxu0 0.0
            %7017 = vmatprep.subr.mxu0 0.0
            %7018 = vmatpush1.msra.mxu0 0.0
            %7019 = vmatprep.subr.mxu0 0.0
            %7020 = vmatpush1.msra.mxu0 0.0
            %7021 = vmatprep.subr.mxu0 0.0
            %7022 = vmatpush1.msra.mxu0 0.0
            %7023 = vmatprep.subr.mxu0 0.0
            %7024 = vmatpush1.msra.mxu0 0.0
            %7025 = vmatprep.subr.mxu0 0.0
            %7026 = vmatpush1.msra.mxu0 0.0
            %7027 = vmatprep.subr.mxu0 0.0
            %7028 = vmatpush1.msra.mxu0 0.0
            %7029 = vmatprep.subr.mxu0 0.0
            %7030 = vmatpush1.msra.mxu0 0.0
            %7031 = vmatprep.subr.mxu0 0.0
            %7032 = vmatpush1.msra.mxu0 0.0
            %7033 = vmatprep.subr.mxu0 0.0
            %7034 = vmatpush1.msra.mxu0 0.0
            %7035 = vmatprep.subr.mxu0 0.0
            %7036 = vmatpush1.msra.mxu0 0.0
            %7037 = vmatprep.subr.mxu0 0.0
            %7038 = vmatpush1.msra.mxu0 0.0
            %7039 = vmatprep.subr.mxu0 0.0
            %7040 = vmatpush1.msra.mxu0 0.0
            %7041 = vmatprep.subr.mxu0 0.0
            %7042 = vmatpush1.msra.mxu0 0.0
            %7043 = vmatprep.subr.mxu0 0.0
            %7044 = vmatpush1.msra.mxu0 0.0
            %7045 = vmatprep.mubr.f32.mxu0 0.0
            %v7046 = vand.u32 %v6809, 4294901760
            %7047 = vmatmul.mubr.f32.gmra.mrb[0].mxu0 %v7046
            %v7048 = vpop.f32.mrb[0].mxu0
            %v7049 = vadd.f32 %v6898, %v7048
            %v7050 = vpop.f32.mrb[0].mxu0
            %7051 = vdwg.mxu0
            %7052 = vmatprep.subr.mxu0 0.0
            %v7053 = vand.u32 %v481, 4294901760
            %v7054 = vsub.f32 %v481, %v7053
            %7055 = vmatpush1.msra.mxu0 %v7054
            %7056 = vmatprep.subr.mxu0 0.0
            %v7057 = vand.u32 %v482, 4294901760
            %v7058 = vsub.f32 %v482, %v7057
            %7059 = vmatpush1.msra.mxu0 %v7058
            %7060 = vmatprep.subr.mxu0 0.0
            %v7061 = vand.u32 %v483, 4294901760
            %v7062 = vsub.f32 %v483, %v7061
            %7063 = vmatpush1.msra.mxu0 %v7062
            %7064 = vmatprep.subr.mxu0 0.0
            %v7065 = vand.u32 %v484, 4294901760
            %v7066 = vsub.f32 %v484, %v7065
            %7067 = vmatpush1.msra.mxu0 %v7066
            %7068 = vmatprep.subr.mxu0 0.0
            %v7069 = vand.u32 %v485, 4294901760
            %v7070 = vsub.f32 %v485, %v7069
            %7071 = vmatpush1.msra.mxu0 %v7070
            %7072 = vmatprep.subr.mxu0 0.0
            %v7073 = vand.u32 %v486, 4294901760
            %v7074 = vsub.f32 %v486, %v7073
            %7075 = vmatpush1.msra.mxu0 %v7074
            %7076 = vmatprep.subr.mxu0 0.0
            %v7077 = vand.u32 %v487, 4294901760
            %v7078 = vsub.f32 %v487, %v7077
            %7079 = vmatpush1.msra.mxu0 %v7078
            %7080 = vmatprep.subr.mxu0 0.0
            %v7081 = vand.u32 %v488, 4294901760
            %v7082 = vsub.f32 %v488, %v7081
            %7083 = vmatpush1.msra.mxu0 %v7082
            %7084 = vmatprep.subr.mxu0 0.0
            %v7085 = vand.u32 %v489, 4294901760
            %v7086 = vsub.f32 %v489, %v7085
            %7087 = vmatpush1.msra.mxu0 %v7086
            %7088 = vmatprep.subr.mxu0 0.0
            %v7089 = vand.u32 %v490, 4294901760
            %v7090 = vsub.f32 %v490, %v7089
            %7091 = vmatpush1.msra.mxu0 %v7090
            %7092 = vmatprep.subr.mxu0 0.0
            %v7093 = vand.u32 %v491, 4294901760
            %v7094 = vsub.f32 %v491, %v7093
            %7095 = vmatpush1.msra.mxu0 %v7094
            %7096 = vmatprep.subr.mxu0 0.0
            %v7097 = vand.u32 %v492, 4294901760
            %v7098 = vsub.f32 %v492, %v7097
            %7099 = vmatpush1.msra.mxu0 %v7098
            %7100 = vmatprep.subr.mxu0 0.0
            %v7101 = vand.u32 %v493, 4294901760
            %v7102 = vsub.f32 %v493, %v7101
            %7103 = vmatpush1.msra.mxu0 %v7102
            %7104 = vmatprep.subr.mxu0 0.0
            %v7105 = vand.u32 %v494, 4294901760
            %v7106 = vsub.f32 %v494, %v7105
            %7107 = vmatpush1.msra.mxu0 %v7106
            %7108 = vmatprep.subr.mxu0 0.0
            %v7109 = vand.u32 %v495, 4294901760
            %v7110 = vsub.f32 %v495, %v7109
            %7111 = vmatpush1.msra.mxu0 %v7110
            %7112 = vmatprep.subr.mxu0 0.0
            %v7113 = vand.u32 %v496, 4294901760
            %v7114 = vsub.f32 %v496, %v7113
            %7115 = vmatpush1.msra.mxu0 %v7114
            %7116 = vmatprep.subr.mxu0 0.0
            %7117 = vmatpush1.msra.mxu0 0.0
            %7118 = vmatprep.subr.mxu0 0.0
            %7119 = vmatpush1.msra.mxu0 0.0
            %7120 = vmatprep.subr.mxu0 0.0
            %7121 = vmatpush1.msra.mxu0 0.0
            %7122 = vmatprep.subr.mxu0 0.0
            %7123 = vmatpush1.msra.mxu0 0.0
            %7124 = vmatprep.subr.mxu0 0.0
            %7125 = vmatpush1.msra.mxu0 0.0
            %7126 = vmatprep.subr.mxu0 0.0
            %7127 = vmatpush1.msra.mxu0 0.0
            %7128 = vmatprep.subr.mxu0 0.0
            %7129 = vmatpush1.msra.mxu0 0.0
            %7130 = vmatprep.subr.mxu0 0.0
            %7131 = vmatpush1.msra.mxu0 0.0
            %7132 = vmatprep.subr.mxu0 0.0
            %7133 = vmatpush1.msra.mxu0 0.0
            %7134 = vmatprep.subr.mxu0 0.0
            %7135 = vmatpush1.msra.mxu0 0.0
            %7136 = vmatprep.subr.mxu0 0.0
            %7137 = vmatpush1.msra.mxu0 0.0
            %7138 = vmatprep.subr.mxu0 0.0
            %7139 = vmatpush1.msra.mxu0 0.0
            %7140 = vmatprep.subr.mxu0 0.0
            %7141 = vmatpush1.msra.mxu0 0.0
            %7142 = vmatprep.subr.mxu0 0.0
            %7143 = vmatpush1.msra.mxu0 0.0
            %7144 = vmatprep.subr.mxu0 0.0
            %7145 = vmatpush1.msra.mxu0 0.0
            %7146 = vmatprep.subr.mxu0 0.0
            %7147 = vmatpush1.msra.mxu0 0.0
            %7148 = vmatprep.mubr.f32.mxu0 0.0
            %v7149 = vand.u32 %v6809, 4294901760
            %v7150 = vsub.f32 %v6809, %v7149
            %7151 = vmatmul.mubr.f32.gmra.mrb[0].mxu0 %v7150
            %v7152 = vpop.f32.mrb[0].mxu0
            %v7153 = vadd.f32 %v7049, %v7152
            %v7154 = vpop.f32.mrb[0].mxu0
            %7155 = vdwg.mxu0
            %7156 = vmatprep.subr.mxu0 0.0
            %v7157 = vand.u32 %v481, 4294901760
            %7158 = vmatpush1.msra.mxu0 %v7157
            %7159 = vmatprep.subr.mxu0 0.0
            %v7160 = vand.u32 %v482, 4294901760
            %7161 = vmatpush1.msra.mxu0 %v7160
            %7162 = vmatprep.subr.mxu0 0.0
            %v7163 = vand.u32 %v483, 4294901760
            %7164 = vmatpush1.msra.mxu0 %v7163
            %7165 = vmatprep.subr.mxu0 0.0
            %v7166 = vand.u32 %v484, 4294901760
            %7167 = vmatpush1.msra.mxu0 %v7166
            %7168 = vmatprep.subr.mxu0 0.0
            %v7169 = vand.u32 %v485, 4294901760
            %7170 = vmatpush1.msra.mxu0 %v7169
            %7171 = vmatprep.subr.mxu0 0.0
            %v7172 = vand.u32 %v486, 4294901760
            %7173 = vmatpush1.msra.mxu0 %v7172
            %7174 = vmatprep.subr.mxu0 0.0
            %v7175 = vand.u32 %v487, 4294901760
            %7176 = vmatpush1.msra.mxu0 %v7175
            %7177 = vmatprep.subr.mxu0 0.0
            %v7178 = vand.u32 %v488, 4294901760
            %7179 = vmatpush1.msra.mxu0 %v7178
            %7180 = vmatprep.subr.mxu0 0.0
            %v7181 = vand.u32 %v489, 4294901760
            %7182 = vmatpush1.msra.mxu0 %v7181
            %7183 = vmatprep.subr.mxu0 0.0
            %v7184 = vand.u32 %v490, 4294901760
            %7185 = vmatpush1.msra.mxu0 %v7184
            %7186 = vmatprep.subr.mxu0 0.0
            %v7187 = vand.u32 %v491, 4294901760
            %7188 = vmatpush1.msra.mxu0 %v7187
            %7189 = vmatprep.subr.mxu0 0.0
            %v7190 = vand.u32 %v492, 4294901760
            %7191 = vmatpush1.msra.mxu0 %v7190
            %7192 = vmatprep.subr.mxu0 0.0
            %v7193 = vand.u32 %v493, 4294901760
            %7194 = vmatpush1.msra.mxu0 %v7193
            %7195 = vmatprep.subr.mxu0 0.0
            %v7196 = vand.u32 %v494, 4294901760
            %7197 = vmatpush1.msra.mxu0 %v7196
            %7198 = vmatprep.subr.mxu0 0.0
            %v7199 = vand.u32 %v495, 4294901760
            %7200 = vmatpush1.msra.mxu0 %v7199
            %7201 = vmatprep.subr.mxu0 0.0
            %v7202 = vand.u32 %v496, 4294901760
            %7203 = vmatpush1.msra.mxu0 %v7202
            %7204 = vmatprep.subr.mxu0 0.0
            %7205 = vmatpush1.msra.mxu0 0.0
            %7206 = vmatprep.subr.mxu0 0.0
            %7207 = vmatpush1.msra.mxu0 0.0
            %7208 = vmatprep.subr.mxu0 0.0
            %7209 = vmatpush1.msra.mxu0 0.0
            %7210 = vmatprep.subr.mxu0 0.0
            %7211 = vmatpush1.msra.mxu0 0.0
            %7212 = vmatprep.subr.mxu0 0.0
            %7213 = vmatpush1.msra.mxu0 0.0
            %7214 = vmatprep.subr.mxu0 0.0
            %7215 = vmatpush1.msra.mxu0 0.0
            %7216 = vmatprep.subr.mxu0 0.0
            %7217 = vmatpush1.msra.mxu0 0.0
            %7218 = vmatprep.subr.mxu0 0.0
            %7219 = vmatpush1.msra.mxu0 0.0
            %7220 = vmatprep.subr.mxu0 0.0
            %7221 = vmatpush1.msra.mxu0 0.0
            %7222 = vmatprep.subr.mxu0 0.0
            %7223 = vmatpush1.msra.mxu0 0.0
            %7224 = vmatprep.subr.mxu0 0.0
            %7225 = vmatpush1.msra.mxu0 0.0
            %7226 = vmatprep.subr.mxu0 0.0
            %7227 = vmatpush1.msra.mxu0 0.0
            %7228 = vmatprep.subr.mxu0 0.0
            %7229 = vmatpush1.msra.mxu0 0.0
            %7230 = vmatprep.subr.mxu0 0.0
            %7231 = vmatpush1.msra.mxu0 0.0
            %7232 = vmatprep.subr.mxu0 0.0
            %7233 = vmatpush1.msra.mxu0 0.0
            %7234 = vmatprep.subr.mxu0 0.0
            %7235 = vmatpush1.msra.mxu0 0.0
            %7236 = vmatprep.mubr.f32.mxu0 0.0
            %v7237 = vand.u32 %v6809, 4294901760
            %v7238 = vsub.f32 %v6809, %v7237
            %v7239 = vand.u32 %v7238, 4294901760
            %7240 = vmatmul.mubr.f32.gmra.mrb[0].mxu0 %v7239
            %v7241 = vpop.f32.mrb[0].mxu0
            %v7242 = vadd.f32 %v7153, %v7241
            %v7243 = vpop.f32.mrb[0].mxu0
            %7244 = vdwg.mxu0
            %7245 = vmatprep.subr.mxu0 0.0
            %v7246 = vand.u32 %v481, 4294901760
            %v7247 = vsub.f32 %v481, %v7246
            %v7248 = vand.u32 %v7247, 4294901760
            %7249 = vmatpush1.msra.mxu0 %v7248
            %7250 = vmatprep.subr.mxu0 0.0
            %v7251 = vand.u32 %v482, 4294901760
            %v7252 = vsub.f32 %v482, %v7251
            %v7253 = vand.u32 %v7252, 4294901760
            %7254 = vmatpush1.msra.mxu0 %v7253
            %7255 = vmatprep.subr.mxu0 0.0
            %v7256 = vand.u32 %v483, 4294901760
            %v7257 = vsub.f32 %v483, %v7256
            %v7258 = vand.u32 %v7257, 4294901760
            %7259 = vmatpush1.msra.mxu0 %v7258
            %7260 = vmatprep.subr.mxu0 0.0
            %v7261 = vand.u32 %v484, 4294901760
            %v7262 = vsub.f32 %v484, %v7261
            %v7263 = vand.u32 %v7262, 4294901760
            %7264 = vmatpush1.msra.mxu0 %v7263
            %7265 = vmatprep.subr.mxu0 0.0
            %v7266 = vand.u32 %v485, 4294901760
            %v7267 = vsub.f32 %v485, %v7266
            %v7268 = vand.u32 %v7267, 4294901760
            %7269 = vmatpush1.msra.mxu0 %v7268
            %7270 = vmatprep.subr.mxu0 0.0
            %v7271 = vand.u32 %v486, 4294901760
            %v7272 = vsub.f32 %v486, %v7271
            %v7273 = vand.u32 %v7272, 4294901760
            %7274 = vmatpush1.msra.mxu0 %v7273
            %7275 = vmatprep.subr.mxu0 0.0
            %v7276 = vand.u32 %v487, 4294901760
            %v7277 = vsub.f32 %v487, %v7276
            %v7278 = vand.u32 %v7277, 4294901760
            %7279 = vmatpush1.msra.mxu0 %v7278
            %7280 = vmatprep.subr.mxu0 0.0
            %v7281 = vand.u32 %v488, 4294901760
            %v7282 = vsub.f32 %v488, %v7281
            %v7283 = vand.u32 %v7282, 4294901760
            %7284 = vmatpush1.msra.mxu0 %v7283
            %7285 = vmatprep.subr.mxu0 0.0
            %v7286 = vand.u32 %v489, 4294901760
            %v7287 = vsub.f32 %v489, %v7286
            %v7288 = vand.u32 %v7287, 4294901760
            %7289 = vmatpush1.msra.mxu0 %v7288
            %7290 = vmatprep.subr.mxu0 0.0
            %v7291 = vand.u32 %v490, 4294901760
            %v7292 = vsub.f32 %v490, %v7291
            %v7293 = vand.u32 %v7292, 4294901760
            %7294 = vmatpush1.msra.mxu0 %v7293
            %7295 = vmatprep.subr.mxu0 0.0
            %v7296 = vand.u32 %v491, 4294901760
            %v7297 = vsub.f32 %v491, %v7296
            %v7298 = vand.u32 %v7297, 4294901760
            %7299 = vmatpush1.msra.mxu0 %v7298
            %7300 = vmatprep.subr.mxu0 0.0
            %v7301 = vand.u32 %v492, 4294901760
            %v7302 = vsub.f32 %v492, %v7301
            %v7303 = vand.u32 %v7302, 4294901760
            %7304 = vmatpush1.msra.mxu0 %v7303
            %7305 = vmatprep.subr.mxu0 0.0
            %v7306 = vand.u32 %v493, 4294901760
            %v7307 = vsub.f32 %v493, %v7306
            %v7308 = vand.u32 %v7307, 4294901760
            %7309 = vmatpush1.msra.mxu0 %v7308
            %7310 = vmatprep.subr.mxu0 0.0
            %v7311 = vand.u32 %v494, 4294901760
            %v7312 = vsub.f32 %v494, %v7311
            %v7313 = vand.u32 %v7312, 4294901760
            %7314 = vmatpush1.msra.mxu0 %v7313
            %7315 = vmatprep.subr.mxu0 0.0
            %v7316 = vand.u32 %v495, 4294901760
            %v7317 = vsub.f32 %v495, %v7316
            %v7318 = vand.u32 %v7317, 4294901760
            %7319 = vmatpush1.msra.mxu0 %v7318
            %7320 = vmatprep.subr.mxu0 0.0
            %v7321 = vand.u32 %v496, 4294901760
            %v7322 = vsub.f32 %v496, %v7321
            %v7323 = vand.u32 %v7322, 4294901760
            %7324 = vmatpush1.msra.mxu0 %v7323
            %7325 = vmatprep.subr.mxu0 0.0
            %7326 = vmatpush1.msra.mxu0 0.0
            %7327 = vmatprep.subr.mxu0 0.0
            %7328 = vmatpush1.msra.mxu0 0.0
            %7329 = vmatprep.subr.mxu0 0.0
            %7330 = vmatpush1.msra.mxu0 0.0
            %7331 = vmatprep.subr.mxu0 0.0
            %7332 = vmatpush1.msra.mxu0 0.0
            %7333 = vmatprep.subr.mxu0 0.0
            %7334 = vmatpush1.msra.mxu0 0.0
            %7335 = vmatprep.subr.mxu0 0.0
            %7336 = vmatpush1.msra.mxu0 0.0
            %7337 = vmatprep.subr.mxu0 0.0
            %7338 = vmatpush1.msra.mxu0 0.0
            %7339 = vmatprep.subr.mxu0 0.0
            %7340 = vmatpush1.msra.mxu0 0.0
            %7341 = vmatprep.subr.mxu0 0.0
            %7342 = vmatpush1.msra.mxu0 0.0
            %7343 = vmatprep.subr.mxu0 0.0
            %7344 = vmatpush1.msra.mxu0 0.0
            %7345 = vmatprep.subr.mxu0 0.0
            %7346 = vmatpush1.msra.mxu0 0.0
            %7347 = vmatprep.subr.mxu0 0.0
            %7348 = vmatpush1.msra.mxu0 0.0
            %7349 = vmatprep.subr.mxu0 0.0
            %7350 = vmatpush1.msra.mxu0 0.0
            %7351 = vmatprep.subr.mxu0 0.0
            %7352 = vmatpush1.msra.mxu0 0.0
            %7353 = vmatprep.subr.mxu0 0.0
            %7354 = vmatpush1.msra.mxu0 0.0
            %7355 = vmatprep.subr.mxu0 0.0
            %7356 = vmatpush1.msra.mxu0 0.0
            %7357 = vmatprep.mubr.f32.mxu0 0.0
            %v7358 = vand.u32 %v6809, 4294901760
            %7359 = vmatmul.mubr.f32.gmra.mrb[0].mxu0 %v7358
            %v7360 = vpop.f32.mrb[0].mxu0
            %v7361 = vadd.f32 %v7242, %v7360
            %v7362 = vpop.f32.mrb[0].mxu0
            %7363 = vdwg.mxu0
            %7364 = vmatprep.subr.mxu0 0.0
            %v7365 = vand.u32 %v481, 4294901760
            %7366 = vmatpush1.msra.mxu0 %v7365
            %7367 = vmatprep.subr.mxu0 0.0
            %v7368 = vand.u32 %v482, 4294901760
            %7369 = vmatpush1.msra.mxu0 %v7368
            %7370 = vmatprep.subr.mxu0 0.0
            %v7371 = vand.u32 %v483, 4294901760
            %7372 = vmatpush1.msra.mxu0 %v7371
            %7373 = vmatprep.subr.mxu0 0.0
            %v7374 = vand.u32 %v484, 4294901760
            %7375 = vmatpush1.msra.mxu0 %v7374
            %7376 = vmatprep.subr.mxu0 0.0
            %v7377 = vand.u32 %v485, 4294901760
            %7378 = vmatpush1.msra.mxu0 %v7377
            %7379 = vmatprep.subr.mxu0 0.0
            %v7380 = vand.u32 %v486, 4294901760
            %7381 = vmatpush1.msra.mxu0 %v7380
            %7382 = vmatprep.subr.mxu0 0.0
            %v7383 = vand.u32 %v487, 4294901760
            %7384 = vmatpush1.msra.mxu0 %v7383
            %7385 = vmatprep.subr.mxu0 0.0
            %v7386 = vand.u32 %v488, 4294901760
            %7387 = vmatpush1.msra.mxu0 %v7386
            %7388 = vmatprep.subr.mxu0 0.0
            %v7389 = vand.u32 %v489, 4294901760
            %7390 = vmatpush1.msra.mxu0 %v7389
            %7391 = vmatprep.subr.mxu0 0.0
            %v7392 = vand.u32 %v490, 4294901760
            %7393 = vmatpush1.msra.mxu0 %v7392
            %7394 = vmatprep.subr.mxu0 0.0
            %v7395 = vand.u32 %v491, 4294901760
            %7396 = vmatpush1.msra.mxu0 %v7395
            %7397 = vmatprep.subr.mxu0 0.0
            %v7398 = vand.u32 %v492, 4294901760
            %7399 = vmatpush1.msra.mxu0 %v7398
            %7400 = vmatprep.subr.mxu0 0.0
            %v7401 = vand.u32 %v493, 4294901760
            %7402 = vmatpush1.msra.mxu0 %v7401
            %7403 = vmatprep.subr.mxu0 0.0
            %v7404 = vand.u32 %v494, 4294901760
            %7405 = vmatpush1.msra.mxu0 %v7404
            %7406 = vmatprep.subr.mxu0 0.0
            %v7407 = vand.u32 %v495, 4294901760
            %7408 = vmatpush1.msra.mxu0 %v7407
            %7409 = vmatprep.subr.mxu0 0.0
            %v7410 = vand.u32 %v496, 4294901760
            %7411 = vmatpush1.msra.mxu0 %v7410
            %7412 = vmatprep.subr.mxu0 0.0
            %7413 = vmatpush1.msra.mxu0 0.0
            %7414 = vmatprep.subr.mxu0 0.0
            %7415 = vmatpush1.msra.mxu0 0.0
            %7416 = vmatprep.subr.mxu0 0.0
            %7417 = vmatpush1.msra.mxu0 0.0
            %7418 = vmatprep.subr.mxu0 0.0
            %7419 = vmatpush1.msra.mxu0 0.0
            %7420 = vmatprep.subr.mxu0 0.0
            %7421 = vmatpush1.msra.mxu0 0.0
            %7422 = vmatprep.subr.mxu0 0.0
            %7423 = vmatpush1.msra.mxu0 0.0
            %7424 = vmatprep.subr.mxu0 0.0
            %7425 = vmatpush1.msra.mxu0 0.0
            %7426 = vmatprep.subr.mxu0 0.0
            %7427 = vmatpush1.msra.mxu0 0.0
            %7428 = vmatprep.subr.mxu0 0.0
            %7429 = vmatpush1.msra.mxu0 0.0
            %7430 = vmatprep.subr.mxu0 0.0
            %7431 = vmatpush1.msra.mxu0 0.0
            %7432 = vmatprep.subr.mxu0 0.0
            %7433 = vmatpush1.msra.mxu0 0.0
            %7434 = vmatprep.subr.mxu0 0.0
            %7435 = vmatpush1.msra.mxu0 0.0
            %7436 = vmatprep.subr.mxu0 0.0
            %7437 = vmatpush1.msra.mxu0 0.0
            %7438 = vmatprep.subr.mxu0 0.0
            %7439 = vmatpush1.msra.mxu0 0.0
            %7440 = vmatprep.subr.mxu0 0.0
            %7441 = vmatpush1.msra.mxu0 0.0
            %7442 = vmatprep.subr.mxu0 0.0
            %7443 = vmatpush1.msra.mxu0 0.0
            %7444 = vmatprep.mubr.f32.mxu0 0.0
            %v7445 = vand.u32 %v6809, 4294901760
            %7446 = vmatmul.mubr.f32.gmra.mrb[0].mxu0 %v7445
            %v7447 = vpop.f32.mrb[0].mxu0
            %v7448 = vadd.f32 %v7361, %v7447
            %v7449 = vpop.f32.mrb[0].mxu0
            %7450 = vdwg.mxu0
            %v7451 = vmul.f32 %v2286, %v7448
            %v7452 = vadd.f32 %v6165, %v7451
          $region80: #{tpu_custom_call.1} parent=72 // loop_footer
            %s2293 = sadd.s32 1, %s2289
          $region81: #{tpu_custom_call.1} parent=72 // loop_footer_branch
            %2288 = sbr.rel target = $region77
          $region82: #{tpu_custom_call.1} parent=72 // loop_exit
            _
          %s7453 = scalar_lea.vmem %s383, %s2277 [#allocation12]
          %7454 = vst [vmem:[%s7453] sm:$0x3] %v2294
        $region73: #{tpu_custom_call.1} parent=47 // loop_footer
          %s506 = sadd.s32 1, %s502
        $region74: #{tpu_custom_call.1} parent=47 // loop_footer_branch
          %501 = sbr.rel target = $region70
        $region75: #{tpu_custom_call.1} parent=47 // loop_exit
          _
        %7455 = vst [vmem:[#allocation2] sm:$0x3] %v507
        %7456 = vst [vmem:[#allocation3] sm:$0x3] %v508
        %s7457 = sand.u32 %s209, 1
        %s7458 = scalar_lea.sflag [#allocation6], %s7457
        %s7459 = sand.u32 %s209, 1
        %s7460 = smul.addr %s7459, 8
        %s7461 = scalar_lea.vmem [#allocation12], %s7460
        // Predicated region
        $region83: #{tpu_custom_call.1} parent=47 // pred_check
          %p7462 = pneg %p219
        $region84: #{tpu_custom_call.1} parent=47 // pred_check_branch
          %7464 = sbr.rel (%p7462) target = $region86
        $region85: #{tpu_custom_call.1} parent=47 // pred_region
          %s7465 = smul.u32 4, %s31
          %s7467 = ssub.s32 128, 128
          %7468 = vsyncadd %s7458, %s7467
          %s7469 = sadd.s32 %s30, %s7465
          %s7470 = smul.addr %s7469, 32
          %s7471 = scalar_lea.hbm %s7, %s7470
          %s7472 = sshll.u32 %s7461, 4
          %s7473 = int_to_ptr.vmem [resolvable:$true] %s7472
          %7478 = dma.vmem_to_hbm [thread:$0]  %s7473, 128, %s7471, %s7458, 32, 32, 2
        $region86: #{tpu_custom_call.1} parent=47 // pred_fallthru
          _
      $region48: #{tpu_custom_call.1} parent=5 // pred_fallthru
        _
      %p7479 = scmp.le.s32.totalorder 2, %s21
      // Predicated region
      $region87: #{tpu_custom_call.1} parent=5 // pred_check
        %p7480 = pneg %p7479
      $region88: #{tpu_custom_call.1} parent=5 // pred_check_branch
        %7482 = sbr.rel (%p7480) target = $region90
      $region89: #{tpu_custom_call.1} parent=5 // pred_region
        %s7483 = ssub.s32 %s21, 2
        // Predicated region
        $region91: #{tpu_custom_call.1} parent=89 // pred_check
          %p7484 = pneg %p225
        $region92: #{tpu_custom_call.1} parent=89 // pred_check_branch
          %7486 = sbr.rel (%p7484) target = $region94
        $region93: #{tpu_custom_call.1} parent=89 // pred_region
          %s7487 = sand.u32 %s210, 1
          %s7488 = scalar_lea.sflag [#allocation6], %s7487
          %s7489 = sand.u32 %s210, 1
          %s7490 = smul.addr %s7489, 8
          %s7491 = scalar_lea.vmem [#allocation12], %s7490
          %7492 = dma.done %s7488, 128
        $region94: #{tpu_custom_call.1} parent=89 // pred_fallthru
          _
      $region90: #{tpu_custom_call.1} parent=5 // pred_fallthru
        _
    $region6: #{tpu_custom_call.1} parent=1 // loop_footer
      %s25 = sadd.s32 1, %s21
    $region7: #{tpu_custom_call.1} parent=1 // loop_footer_branch
      %20 = sbr.rel target = $region3
    $region8: #{tpu_custom_call.1} parent=1 // loop_exit
      _
    %7493 = vsyncpa [#allocation5], 1
    %s7494 = scalar_lea.sflag [#allocation5], 1
    %7495 = vsyncpa %s7494, 1
    %7496 = vsyncpa [#allocation8], 1
    %7497 = vsyncpa [#allocation11], 1
    %7498 = vsyncpa [#allocation6], 1
    %s7499 = scalar_lea.sflag [#allocation6], 1
    %7500 = vsyncpa %s7499, 1

</llo_original>
